<compile_context>
chip_gen: v7x
topology: tpu7x:2x2x1
jax: 0.10.0
libtpu: 0.0.40
codegen_flags: <defaults>
</compile_context>

<pallas_src>
import functools

import jax
import jax.numpy as jnp
from jax import lax
from jax.experimental import pallas as pl
from jax.experimental.pallas import tpu as pltpu

LEAKY_SLOPE = 0.01   # nn.LeakyReLU() default
BN_EPS = 1e-5        # nn.BatchNorm2d default

# (kernel_size, Cin, Cout, has_bias, has_leaky_relu, has_batchnorm)
LAYER_DEFS = (
    (3, 3,  32, True,  True,  True),
    (3, 32, 32, True,  True,  True),
    (5, 32, 32, True,  True,  True),
    (3, 32, 64, True,  True,  True),
    (3, 64, 64, True,  True,  True),
    (5, 64, 64, True,  True,  False),
    (1, 64, 2,  False, False, False),   # 1x1 conv, bias=False, no activation
)
N_PARAM_ARRAYS = sum(1 + int(b) + 2 * int(bn)
                     for (_, _, _, b, _, bn) in LAYER_DEFS)

MAXPAD = 2                    # halo width covering both 3x3 and 5x5 'same' pads
_K1 = 3 * 3 * 3               # layer-1 im2col depth
_K1P = _K1 + ((-_K1) % 8)     # zero-padded to a sublane multiple (27 -> 32)


def _fused_cnn_kernel(x_ref, mask_ref, *refs, n_params, h_pad, w_pad):
    """Whole-network forward for one image; activations stay in VMEM.

    x_ref    : (1, 32, L) bf16  pre-built layer-1 im2col slab (K padded 27->32)
    mask_ref : (1, L)     f32   1.0 on interior padded-flat positions, 0.0 halo
    refs     : per-layer params (w (Cout,K) bf16 [, bias][, bn_scale, bn_shift]
               each (Cout,1) f32), then o_ref (1, 2, L) f32.
    L = h_pad * w_pad (padded-flat spatial axis, lane-dense).
    """
    params = refs[:n_params]
    o_ref = refs[n_params]
    L = h_pad * w_pad
    S = MAXPAD * w_pad + MAXPAD            # max tap shift = extension width

    interior = mask_ref[...] > 0.5         # (1, L) bool

    pit = iter(params)
    act = x_ref[0]                         # layer-1 slab (32, L) bf16
    n_layers = len(LAYER_DEFS)

    for li, (ks, cin, cout, has_b, has_relu, has_bn) in enumerate(LAYER_DEFS):
        w = next(pit)[...]                 # (Cout, K) bf16, lane-dense

        # ---- im2col slab: (K, L), one column per padded-flat pixel ----
        if li == 0 or ks == 1:
            slab = act                     # pre-built (layer 1) / pointwise (1x1)
        else:
            kh = ks // 2
            zext = jnp.zeros((cin, S), act.dtype)
            ext = jnp.concatenate([zext, act, zext], axis=1)    # (Cin, L+2S)
            taps = []
            for dy in range(ks):
                for dx in range(ks):
                    d = (dy - kh) * w_pad + (dx - kh)           # constant shift
                    taps.append(ext[:, S + d:S + d + L])        # (Cin, L)
            slab = jnp.concatenate(taps, axis=0)                # (ks*ks*Cin, L)

        # ---- one big-K matmul per layer, f32 accumulation ----
        acc = jnp.dot(w, slab, preferred_element_type=jnp.float32)   # (Cout, L)

        # ---- epilogue: bias -> LeakyReLU -> folded BN (eval mode) ----
        if has_b:
            acc = acc + next(pit)[...]                 # (Cout,1) lane-broadcast
        if has_relu:
            acc = jnp.where(acc >= 0, acc, LEAKY_SLOPE * acc)
        if has_bn:
            scale = next(pit)[...]
            shift = next(pit)[...]
            acc = acc * scale + shift

        # ---- route ----
        if li == n_layers - 1:
            o_ref[0] = acc.astype(o_ref.dtype)         # (2, L) lane-dense store
        else:
            if LAYER_DEFS[li + 1][0] > 1:
                # Next layer is spatial: its zero padding = zeroed halo columns.
                acc = jnp.where(interior, acc, 0.0)
            act = acc.astype(jnp.bfloat16)


def cnn_segment_forward(x_nchw, flat_params):
    """Full CNN_SEGMENT forward. Input NCHW (PyTorch layout), output NCHW."""
    N, C, H, W = x_nchw.shape
    h_pad, w_pad = H + 2 * MAXPAD, W + 2 * MAXPAD
    L = h_pad * w_pad
    S = MAXPAD * w_pad + MAXPAD

    # Layer-1 im2col slab in padded-flat, channel-major, lane-dense layout:
    # row (dy*3+dx)*3 + c, column q = padded-flat pixel index.
    xp = jnp.pad(x_nchw, ((0, 0), (0, 0), (MAXPAD, MAXPAD), (MAXPAD, MAXPAD)))
    pf = xp.reshape(N, C, L)
    ext = jnp.pad(pf, ((0, 0), (0, 0), (S, S)))
    taps = []
    for dy in range(3):
        for dx in range(3):
            d = (dy - 1) * w_pad + (dx - 1)
            taps.append(ext[:, :, S + d:S + d + L])
    slab1 = jnp.concatenate(taps, axis=1)                       # (N, 27, L)
    slab1 = jnp.pad(slab1, ((0, 0), (0, _K1P - _K1), (0, 0)))   # K 27 -> 32
    slab1 = slab1.astype(jnp.bfloat16)

    # Interior (non-halo) mask over the padded-flat axis.
    rows = jnp.arange(h_pad)[:, None]
    cols = jnp.arange(w_pad)[None, :]
    interior = ((rows >= MAXPAD) & (rows < MAXPAD + H) &
                (cols >= MAXPAD) & (cols < MAXPAD + W))
    mask = interior.reshape(1, L).astype(jnp.float32)

    kernel = functools.partial(_fused_cnn_kernel, n_params=len(flat_params),
                               h_pad=h_pad, w_pad=w_pad)

    in_specs = [pl.BlockSpec((1, _K1P, L), lambda n: (n, 0, 0)),
                pl.BlockSpec((1, L), lambda n: (0, 0))]
    for p in flat_params:
        in_specs.append(pl.BlockSpec(p.shape, lambda n: (0, 0)))  # all params 2-D

    out = pl.pallas_call(
        kernel,
        out_shape=jax.ShapeDtypeStruct((N, 2, L), jnp.float32),
        grid=(N,),
        in_specs=in_specs,
        out_specs=pl.BlockSpec((1, 2, L), lambda n: (n, 0, 0)),
        compiler_params=pltpu.CompilerParams(
            dimension_semantics=("parallel",),
            vmem_limit_bytes=32 * 1024 * 1024),
    )(slab1, mask, *flat_params)

    # (N, 2, L) padded-flat -> NCHW interior.
    out = out.reshape(N, 2, h_pad, w_pad)[:, :, MAXPAD:MAXPAD + H,
                                          MAXPAD:MAXPAD + W]
    return out


def init_params(key):
    """Deterministic params mirroring CNN_SEGMENT shapes (eval mode).

    Returns (flat_params for the kernel, structured copy for the reference).
    """
    flat, ref_layers = [], []
    for li, (ks, cin, cout, has_b, has_relu, has_bn) in enumerate(LAYER_DEFS):
        key, wkey, bkey = jax.random.split(key, 3)
        fan_in = cin * ks * ks
        bound = fan_in ** -0.5
        w = jax.random.uniform(wkey, (ks, ks, cin, cout), jnp.float32,
                               -bound, bound)
        w_bf = w.astype(jnp.bfloat16)
        # Kernel consumes (Cout, K), K ordered (dy, dx, cin) with cin fastest.
        w_flat = jnp.transpose(w_bf, (3, 0, 1, 2)).reshape(cout, ks * ks * cin)
        if li == 0:
            w_flat = jnp.pad(w_flat, ((0, 0), (0, _K1P - _K1)))
        flat.append(w_flat)

        layer = {"w": w_bf.astype(jnp.float32), "bias": None,
                 "relu": has_relu, "bn": has_bn, "scale": None, "shift": None}
        if has_b:
            b = jax.random.uniform(bkey, (cout,), jnp.float32, -bound, bound)
            flat.append(b.reshape(cout, 1))
            layer["bias"] = b
        if has_bn:
            # Fresh-module BatchNorm2d (eval): gamma=1, beta=0, mean=0, var=1.
            gamma = jnp.ones((cout,), jnp.float32)
            beta = jnp.zeros((cout,), jnp.float32)
            mean = jnp.zeros((cout,), jnp.float32)
            var = jnp.ones((cout,), jnp.float32)
            scale = gamma / jnp.sqrt(var + BN_EPS)
            shift = beta - mean * scale
            flat.append(scale.reshape(cout, 1))
            flat.append(shift.reshape(cout, 1))
            layer["scale"], layer["shift"] = scale, shift
        ref_layers.append(layer)
    assert len(flat) == N_PARAM_ARRAYS
    return flat, ref_layers


def reference_forward(x, ref_layers):
    """Pure-JAX (lax.conv) eval-mode reference, same bf16-rounded weights."""
    y = x
    for lyr in ref_layers:
        y = lax.conv_general_dilated(
            y, lyr["w"], window_strides=(1, 1), padding="SAME",
            dimension_numbers=("NCHW", "HWIO", "NCHW"))
        if lyr["bias"] is not None:
            y = y + lyr["bias"].reshape(1, -1, 1, 1)
        if lyr["relu"]:
            y = jnp.where(y >= 0, y, LEAKY_SLOPE * y)
        if lyr["bn"]:
            y = (y * lyr["scale"].reshape(1, -1, 1, 1)
                 + lyr["shift"].reshape(1, -1, 1, 1))
    return y


if __name__ == "__main__":
    key = jax.random.PRNGKey(0)
    key, xkey = jax.random.split(key)

    # Module-consistent small input: batch=2, in_channels=3, spatial 16x16.
    x = jax.random.normal(xkey, (2, 3, 16, 16), jnp.float32)
    params, ref_layers = init_params(key)

    out = jax.jit(lambda a: cnn_segment_forward(a, params))(x)
    out = jax.block_until_ready(out)

    assert out.shape == (2, 2, 16, 16), out.shape
    assert out.dtype == jnp.float32
    assert bool(jnp.all(jnp.isfinite(out)))

    # Correctness vs. an independent lax.conv reference (bf16 intermediates in
    # the kernel -> modest tolerance, normalized by the reference magnitude).
    ref = reference_forward(x, ref_layers)
    err = float(jnp.max(jnp.abs(out - ref)) / (jnp.max(jnp.abs(ref)) + 1e-6))
    assert err < 5e-2, f"normalized max error too large: {err}"

    print("KERNEL_OK")
</pallas_src>

<mosaic_0001>
module attributes {stable_mosaic.version = 11 : i64} {
  func.func @_fused_cnn_kernel(%arg0: i32, %arg1: memref<1x32x400xbf16, #tpu.memory_space<vmem>>, %arg2: memref<1x400xf32, #tpu.memory_space<vmem>>, %arg3: memref<32x32xbf16, #tpu.memory_space<vmem>>, %arg4: memref<32x1xf32, #tpu.memory_space<vmem>>, %arg5: memref<32x1xf32, #tpu.memory_space<vmem>>, %arg6: memref<32x1xf32, #tpu.memory_space<vmem>>, %arg7: memref<32x288xbf16, #tpu.memory_space<vmem>>, %arg8: memref<32x1xf32, #tpu.memory_space<vmem>>, %arg9: memref<32x1xf32, #tpu.memory_space<vmem>>, %arg10: memref<32x1xf32, #tpu.memory_space<vmem>>, %arg11: memref<32x800xbf16, #tpu.memory_space<vmem>>, %arg12: memref<32x1xf32, #tpu.memory_space<vmem>>, %arg13: memref<32x1xf32, #tpu.memory_space<vmem>>, %arg14: memref<32x1xf32, #tpu.memory_space<vmem>>, %arg15: memref<64x288xbf16, #tpu.memory_space<vmem>>, %arg16: memref<64x1xf32, #tpu.memory_space<vmem>>, %arg17: memref<64x1xf32, #tpu.memory_space<vmem>>, %arg18: memref<64x1xf32, #tpu.memory_space<vmem>>, %arg19: memref<64x576xbf16, #tpu.memory_space<vmem>>, %arg20: memref<64x1xf32, #tpu.memory_space<vmem>>, %arg21: memref<64x1xf32, #tpu.memory_space<vmem>>, %arg22: memref<64x1xf32, #tpu.memory_space<vmem>>, %arg23: memref<64x1600xbf16, #tpu.memory_space<vmem>>, %arg24: memref<64x1xf32, #tpu.memory_space<vmem>>, %arg25: memref<2x64xbf16, #tpu.memory_space<vmem>>, %arg26: memref<1x2x400xf32, #tpu.memory_space<vmem>>) attributes {dimension_semantics = [#tpu.dimension_semantics<parallel>], iteration_bounds = array<i64: 2>, scalar_prefetch = 0 : i64, scratch_operands = 0 : i64, tpu.core_type = #tpu.core_type<tc>, window_params = [{transform_indices = @transform_0, window_bounds = array<i64: 1, 32, 400>}, {pipeline_mode = #tpu.pipeline_mode<synchronous>, transform_indices = @transform_1, window_bounds = array<i64: 1, 400>}, {pipeline_mode = #tpu.pipeline_mode<synchronous>, transform_indices = @transform_2, window_bounds = array<i64: 32, 32>}, {pipeline_mode = #tpu.pipeline_mode<synchronous>, transform_indices = @transform_3, window_bounds = array<i64: 32, 1>}, {pipeline_mode = #tpu.pipeline_mode<synchronous>, transform_indices = @transform_4, window_bounds = array<i64: 32, 1>}, {pipeline_mode = #tpu.pipeline_mode<synchronous>, transform_indices = @transform_5, window_bounds = array<i64: 32, 1>}, {pipeline_mode = #tpu.pipeline_mode<synchronous>, transform_indices = @transform_6, window_bounds = array<i64: 32, 288>}, {pipeline_mode = #tpu.pipeline_mode<synchronous>, transform_indices = @transform_7, window_bounds = array<i64: 32, 1>}, {pipeline_mode = #tpu.pipeline_mode<synchronous>, transform_indices = @transform_8, window_bounds = array<i64: 32, 1>}, {pipeline_mode = #tpu.pipeline_mode<synchronous>, transform_indices = @transform_9, window_bounds = array<i64: 32, 1>}, {pipeline_mode = #tpu.pipeline_mode<synchronous>, transform_indices = @transform_10, window_bounds = array<i64: 32, 800>}, {pipeline_mode = #tpu.pipeline_mode<synchronous>, transform_indices = @transform_11, window_bounds = array<i64: 32, 1>}, {pipeline_mode = #tpu.pipeline_mode<synchronous>, transform_indices = @transform_12, window_bounds = array<i64: 32, 1>}, {pipeline_mode = #tpu.pipeline_mode<synchronous>, transform_indices = @transform_13, window_bounds = array<i64: 32, 1>}, {pipeline_mode = #tpu.pipeline_mode<synchronous>, transform_indices = @transform_14, window_bounds = array<i64: 64, 288>}, {pipeline_mode = #tpu.pipeline_mode<synchronous>, transform_indices = @transform_15, window_bounds = array<i64: 64, 1>}, {pipeline_mode = #tpu.pipeline_mode<synchronous>, transform_indices = @transform_16, window_bounds = array<i64: 64, 1>}, {pipeline_mode = #tpu.pipeline_mode<synchronous>, transform_indices = @transform_17, window_bounds = array<i64: 64, 1>}, {pipeline_mode = #tpu.pipeline_mode<synchronous>, transform_indices = @transform_18, window_bounds = array<i64: 64, 576>}, {pipeline_mode = #tpu.pipeline_mode<synchronous>, transform_indices = @transform_19, window_bounds = array<i64: 64, 1>}, {pipeline_mode = #tpu.pipeline_mode<synchronous>, transform_indices = @transform_20, window_bounds = array<i64: 64, 1>}, {pipeline_mode = #tpu.pipeline_mode<synchronous>, transform_indices = @transform_21, window_bounds = array<i64: 64, 1>}, {pipeline_mode = #tpu.pipeline_mode<synchronous>, transform_indices = @transform_22, window_bounds = array<i64: 64, 1600>}, {pipeline_mode = #tpu.pipeline_mode<synchronous>, transform_indices = @transform_23, window_bounds = array<i64: 64, 1>}, {pipeline_mode = #tpu.pipeline_mode<synchronous>, transform_indices = @transform_24, window_bounds = array<i64: 2, 64>}, {transform_indices = @transform_25, window_bounds = array<i64: 1, 2, 400>}]} {
    %c0 = arith.constant 0 : index
    %c0_0 = arith.constant 0 : index
    %0 = vector.load %arg2[%c0, %c0_0] : memref<1x400xf32, #tpu.memory_space<vmem>>, vector<1x400xf32>
    %cst = arith.constant 5.000000e-01 : f32
    %1 = vector.broadcast %cst : f32 to vector<1x400xf32>
    %2 = arith.cmpf ogt, %0, %1 : vector<1x400xf32>
    %c0_1 = arith.constant 0 : index
    %c0_2 = arith.constant 0 : index
    %c0_3 = arith.constant 0 : index
    %3 = vector.load %arg1[%c0_1, %c0_2, %c0_3] : memref<1x32x400xbf16, #tpu.memory_space<vmem>>, vector<1x32x400xbf16>
    %4 = vector.shape_cast %3 : vector<1x32x400xbf16> to vector<32x400xbf16>
    %c0_4 = arith.constant 0 : index
    %c0_5 = arith.constant 0 : index
    %5 = vector.load %arg3[%c0_4, %c0_5] : memref<32x32xbf16, #tpu.memory_space<vmem>>, vector<32x32xbf16>
    %cst_6 = arith.constant dense<0.000000e+00> : vector<32x400xf32>
    %6 = tpu.matmul %5, %4, %cst_6 {dimension_numbers = #tpu.dot_dimension_numbers<[1], [0], [0], [1], [0, 0, 1, 1], [], []>} : vector<32x32xbf16>, vector<32x400xbf16>, vector<32x400xf32> -> vector<32x400xf32>
    %c0_7 = arith.constant 0 : index
    %c0_8 = arith.constant 0 : index
    %7 = vector.load %arg4[%c0_7, %c0_8] : memref<32x1xf32, #tpu.memory_space<vmem>>, vector<32x1xf32>
    %8 = vector.broadcast %7 : vector<32x1xf32> to vector<32x400xf32>
    %9 = arith.addf %6, %8 : vector<32x400xf32>
    %cst_9 = arith.constant 0.000000e+00 : f32
    %10 = vector.broadcast %cst_9 : f32 to vector<32x400xf32>
    %11 = arith.cmpf oge, %9, %10 : vector<32x400xf32>
    %cst_10 = arith.constant 0.00999999977 : f32
    %12 = vector.broadcast %cst_10 : f32 to vector<32x400xf32>
    %13 = arith.mulf %12, %9 : vector<32x400xf32>
    %14 = arith.select %11, %9, %13 : vector<32x400xi1>, vector<32x400xf32>
    %c0_11 = arith.constant 0 : index
    %c0_12 = arith.constant 0 : index
    %15 = vector.load %arg5[%c0_11, %c0_12] : memref<32x1xf32, #tpu.memory_space<vmem>>, vector<32x1xf32>
    %c0_13 = arith.constant 0 : index
    %c0_14 = arith.constant 0 : index
    %16 = vector.load %arg6[%c0_13, %c0_14] : memref<32x1xf32, #tpu.memory_space<vmem>>, vector<32x1xf32>
    %17 = vector.broadcast %15 : vector<32x1xf32> to vector<32x400xf32>
    %18 = arith.mulf %14, %17 : vector<32x400xf32>
    %19 = vector.broadcast %16 : vector<32x1xf32> to vector<32x400xf32>
    %20 = arith.addf %18, %19 : vector<32x400xf32>
    %cst_15 = arith.constant 0.000000e+00 : f32
    %21 = vector.shape_cast %2 : vector<1x400xi1> to vector<1x400xi1>
    %22 = vector.broadcast %21 : vector<1x400xi1> to vector<32x400xi1>
    %23 = vector.broadcast %cst_15 : f32 to vector<32x400xf32>
    %24 = arith.select %22, %20, %23 : vector<32x400xi1>, vector<32x400xf32>
    %25 = arith.truncf %24 : vector<32x400xf32> to vector<32x400xbf16>
    %c0_16 = arith.constant 0 : index
    %c0_17 = arith.constant 0 : index
    %26 = vector.load %arg7[%c0_16, %c0_17] : memref<32x288xbf16, #tpu.memory_space<vmem>>, vector<32x288xbf16>
    %cst_18 = arith.constant 0.000000e+00 : bf16
    %27 = vector.broadcast %cst_18 : bf16 to vector<32x42xbf16>
    %28 = tpu.concatenate %27, %25, %27 in 1 : vector<32x42xbf16>, vector<32x400xbf16>, vector<32x42xbf16> -> vector<32x484xbf16>
    %29 = vector.extract_strided_slice %28 {offsets = [0, 21], sizes = [32, 400], strides = [1, 1]} : vector<32x484xbf16> to vector<32x400xbf16>
    %30 = vector.extract_strided_slice %28 {offsets = [0, 22], sizes = [32, 400], strides = [1, 1]} : vector<32x484xbf16> to vector<32x400xbf16>
    %31 = vector.extract_strided_slice %28 {offsets = [0, 23], sizes = [32, 400], strides = [1, 1]} : vector<32x484xbf16> to vector<32x400xbf16>
    %32 = vector.extract_strided_slice %28 {offsets = [0, 41], sizes = [32, 400], strides = [1, 1]} : vector<32x484xbf16> to vector<32x400xbf16>
    %33 = vector.extract_strided_slice %28 {offsets = [0, 42], sizes = [32, 400], strides = [1, 1]} : vector<32x484xbf16> to vector<32x400xbf16>
    %34 = vector.extract_strided_slice %28 {offsets = [0, 43], sizes = [32, 400], strides = [1, 1]} : vector<32x484xbf16> to vector<32x400xbf16>
    %35 = vector.extract_strided_slice %28 {offsets = [0, 61], sizes = [32, 400], strides = [1, 1]} : vector<32x484xbf16> to vector<32x400xbf16>
    %36 = vector.extract_strided_slice %28 {offsets = [0, 62], sizes = [32, 400], strides = [1, 1]} : vector<32x484xbf16> to vector<32x400xbf16>
    %37 = vector.extract_strided_slice %28 {offsets = [0, 63], sizes = [32, 400], strides = [1, 1]} : vector<32x484xbf16> to vector<32x400xbf16>
    %38 = tpu.concatenate %29, %30, %31, %32, %33, %34, %35, %36, %37 in 0 : vector<32x400xbf16>, vector<32x400xbf16>, vector<32x400xbf16>, vector<32x400xbf16>, vector<32x400xbf16>, vector<32x400xbf16>, vector<32x400xbf16>, vector<32x400xbf16>, vector<32x400xbf16> -> vector<288x400xbf16>
    %cst_19 = arith.constant dense<0.000000e+00> : vector<32x400xf32>
    %39 = tpu.matmul %26, %38, %cst_19 {dimension_numbers = #tpu.dot_dimension_numbers<[1], [0], [0], [1], [0, 0, 1, 1], [], []>} : vector<32x288xbf16>, vector<288x400xbf16>, vector<32x400xf32> -> vector<32x400xf32>
    %c0_20 = arith.constant 0 : index
    %c0_21 = arith.constant 0 : index
    %40 = vector.load %arg8[%c0_20, %c0_21] : memref<32x1xf32, #tpu.memory_space<vmem>>, vector<32x1xf32>
    %41 = vector.broadcast %40 : vector<32x1xf32> to vector<32x400xf32>
    %42 = arith.addf %39, %41 : vector<32x400xf32>
    %cst_22 = arith.constant 0.000000e+00 : f32
    %43 = vector.broadcast %cst_22 : f32 to vector<32x400xf32>
    %44 = arith.cmpf oge, %42, %43 : vector<32x400xf32>
    %cst_23 = arith.constant 0.00999999977 : f32
    %45 = vector.broadcast %cst_23 : f32 to vector<32x400xf32>
    %46 = arith.mulf %45, %42 : vector<32x400xf32>
    %47 = arith.select %44, %42, %46 : vector<32x400xi1>, vector<32x400xf32>
    %c0_24 = arith.constant 0 : index
    %c0_25 = arith.constant 0 : index
    %48 = vector.load %arg9[%c0_24, %c0_25] : memref<32x1xf32, #tpu.memory_space<vmem>>, vector<32x1xf32>
    %c0_26 = arith.constant 0 : index
    %c0_27 = arith.constant 0 : index
    %49 = vector.load %arg10[%c0_26, %c0_27] : memref<32x1xf32, #tpu.memory_space<vmem>>, vector<32x1xf32>
    %50 = vector.broadcast %48 : vector<32x1xf32> to vector<32x400xf32>
    %51 = arith.mulf %47, %50 : vector<32x400xf32>
    %52 = vector.broadcast %49 : vector<32x1xf32> to vector<32x400xf32>
    %53 = arith.addf %51, %52 : vector<32x400xf32>
    %cst_28 = arith.constant 0.000000e+00 : f32
    %54 = vector.shape_cast %2 : vector<1x400xi1> to vector<1x400xi1>
    %55 = vector.broadcast %54 : vector<1x400xi1> to vector<32x400xi1>
    %56 = vector.broadcast %cst_28 : f32 to vector<32x400xf32>
    %57 = arith.select %55, %53, %56 : vector<32x400xi1>, vector<32x400xf32>
    %58 = arith.truncf %57 : vector<32x400xf32> to vector<32x400xbf16>
    %c0_29 = arith.constant 0 : index
    %c0_30 = arith.constant 0 : index
    %59 = vector.load %arg11[%c0_29, %c0_30] : memref<32x800xbf16, #tpu.memory_space<vmem>>, vector<32x800xbf16>
    %cst_31 = arith.constant 0.000000e+00 : bf16
    %60 = vector.broadcast %cst_31 : bf16 to vector<32x42xbf16>
    %61 = tpu.concatenate %60, %58, %60 in 1 : vector<32x42xbf16>, vector<32x400xbf16>, vector<32x42xbf16> -> vector<32x484xbf16>
    %62 = vector.extract_strided_slice %61 {offsets = [0, 0], sizes = [32, 400], strides = [1, 1]} : vector<32x484xbf16> to vector<32x400xbf16>
    %63 = vector.extract_strided_slice %61 {offsets = [0, 1], sizes = [32, 400], strides = [1, 1]} : vector<32x484xbf16> to vector<32x400xbf16>
    %64 = vector.extract_strided_slice %61 {offsets = [0, 2], sizes = [32, 400], strides = [1, 1]} : vector<32x484xbf16> to vector<32x400xbf16>
    %65 = vector.extract_strided_slice %61 {offsets = [0, 3], sizes = [32, 400], strides = [1, 1]} : vector<32x484xbf16> to vector<32x400xbf16>
    %66 = vector.extract_strided_slice %61 {offsets = [0, 4], sizes = [32, 400], strides = [1, 1]} : vector<32x484xbf16> to vector<32x400xbf16>
    %67 = vector.extract_strided_slice %61 {offsets = [0, 20], sizes = [32, 400], strides = [1, 1]} : vector<32x484xbf16> to vector<32x400xbf16>
    %68 = vector.extract_strided_slice %61 {offsets = [0, 21], sizes = [32, 400], strides = [1, 1]} : vector<32x484xbf16> to vector<32x400xbf16>
    %69 = vector.extract_strided_slice %61 {offsets = [0, 22], sizes = [32, 400], strides = [1, 1]} : vector<32x484xbf16> to vector<32x400xbf16>
    %70 = vector.extract_strided_slice %61 {offsets = [0, 23], sizes = [32, 400], strides = [1, 1]} : vector<32x484xbf16> to vector<32x400xbf16>
    %71 = vector.extract_strided_slice %61 {offsets = [0, 24], sizes = [32, 400], strides = [1, 1]} : vector<32x484xbf16> to vector<32x400xbf16>
    %72 = vector.extract_strided_slice %61 {offsets = [0, 40], sizes = [32, 400], strides = [1, 1]} : vector<32x484xbf16> to vector<32x400xbf16>
    %73 = vector.extract_strided_slice %61 {offsets = [0, 41], sizes = [32, 400], strides = [1, 1]} : vector<32x484xbf16> to vector<32x400xbf16>
    %74 = vector.extract_strided_slice %61 {offsets = [0, 42], sizes = [32, 400], strides = [1, 1]} : vector<32x484xbf16> to vector<32x400xbf16>
    %75 = vector.extract_strided_slice %61 {offsets = [0, 43], sizes = [32, 400], strides = [1, 1]} : vector<32x484xbf16> to vector<32x400xbf16>
    %76 = vector.extract_strided_slice %61 {offsets = [0, 44], sizes = [32, 400], strides = [1, 1]} : vector<32x484xbf16> to vector<32x400xbf16>
    %77 = vector.extract_strided_slice %61 {offsets = [0, 60], sizes = [32, 400], strides = [1, 1]} : vector<32x484xbf16> to vector<32x400xbf16>
    %78 = vector.extract_strided_slice %61 {offsets = [0, 61], sizes = [32, 400], strides = [1, 1]} : vector<32x484xbf16> to vector<32x400xbf16>
    %79 = vector.extract_strided_slice %61 {offsets = [0, 62], sizes = [32, 400], strides = [1, 1]} : vector<32x484xbf16> to vector<32x400xbf16>
    %80 = vector.extract_strided_slice %61 {offsets = [0, 63], sizes = [32, 400], strides = [1, 1]} : vector<32x484xbf16> to vector<32x400xbf16>
    %81 = vector.extract_strided_slice %61 {offsets = [0, 64], sizes = [32, 400], strides = [1, 1]} : vector<32x484xbf16> to vector<32x400xbf16>
    %82 = vector.extract_strided_slice %61 {offsets = [0, 80], sizes = [32, 400], strides = [1, 1]} : vector<32x484xbf16> to vector<32x400xbf16>
    %83 = vector.extract_strided_slice %61 {offsets = [0, 81], sizes = [32, 400], strides = [1, 1]} : vector<32x484xbf16> to vector<32x400xbf16>
    %84 = vector.extract_strided_slice %61 {offsets = [0, 82], sizes = [32, 400], strides = [1, 1]} : vector<32x484xbf16> to vector<32x400xbf16>
    %85 = vector.extract_strided_slice %61 {offsets = [0, 83], sizes = [32, 400], strides = [1, 1]} : vector<32x484xbf16> to vector<32x400xbf16>
    %86 = vector.extract_strided_slice %61 {offsets = [0, 84], sizes = [32, 400], strides = [1, 1]} : vector<32x484xbf16> to vector<32x400xbf16>
    %87 = tpu.concatenate %62, %63, %64, %65, %66, %67, %68, %69, %70, %71, %72, %73, %74, %75, %76, %77 in 0 : vector<32x400xbf16>, vector<32x400xbf16>, vector<32x400xbf16>, vector<32x400xbf16>, vector<32x400xbf16>, vector<32x400xbf16>, vector<32x400xbf16>, vector<32x400xbf16>, vector<32x400xbf16>, vector<32x400xbf16>, vector<32x400xbf16>, vector<32x400xbf16>, vector<32x400xbf16>, vector<32x400xbf16>, vector<32x400xbf16>, vector<32x400xbf16> -> vector<512x400xbf16>
    %88 = tpu.concatenate %78, %79, %80, %81, %82, %83, %84, %85, %86 in 0 : vector<32x400xbf16>, vector<32x400xbf16>, vector<32x400xbf16>, vector<32x400xbf16>, vector<32x400xbf16>, vector<32x400xbf16>, vector<32x400xbf16>, vector<32x400xbf16>, vector<32x400xbf16> -> vector<288x400xbf16>
    %89 = tpu.concatenate %87, %88 in 0 : vector<512x400xbf16>, vector<288x400xbf16> -> vector<800x400xbf16>
    %cst_32 = arith.constant dense<0.000000e+00> : vector<32x400xf32>
    %90 = tpu.matmul %59, %89, %cst_32 {dimension_numbers = #tpu.dot_dimension_numbers<[1], [0], [0], [1], [0, 0, 1, 1], [], []>} : vector<32x800xbf16>, vector<800x400xbf16>, vector<32x400xf32> -> vector<32x400xf32>
    %c0_33 = arith.constant 0 : index
    %c0_34 = arith.constant 0 : index
    %91 = vector.load %arg12[%c0_33, %c0_34] : memref<32x1xf32, #tpu.memory_space<vmem>>, vector<32x1xf32>
    %92 = vector.broadcast %91 : vector<32x1xf32> to vector<32x400xf32>
    %93 = arith.addf %90, %92 : vector<32x400xf32>
    %cst_35 = arith.constant 0.000000e+00 : f32
    %94 = vector.broadcast %cst_35 : f32 to vector<32x400xf32>
    %95 = arith.cmpf oge, %93, %94 : vector<32x400xf32>
    %cst_36 = arith.constant 0.00999999977 : f32
    %96 = vector.broadcast %cst_36 : f32 to vector<32x400xf32>
    %97 = arith.mulf %96, %93 : vector<32x400xf32>
    %98 = arith.select %95, %93, %97 : vector<32x400xi1>, vector<32x400xf32>
    %c0_37 = arith.constant 0 : index
    %c0_38 = arith.constant 0 : index
    %99 = vector.load %arg13[%c0_37, %c0_38] : memref<32x1xf32, #tpu.memory_space<vmem>>, vector<32x1xf32>
    %c0_39 = arith.constant 0 : index
    %c0_40 = arith.constant 0 : index
    %100 = vector.load %arg14[%c0_39, %c0_40] : memref<32x1xf32, #tpu.memory_space<vmem>>, vector<32x1xf32>
    %101 = vector.broadcast %99 : vector<32x1xf32> to vector<32x400xf32>
    %102 = arith.mulf %98, %101 : vector<32x400xf32>
    %103 = vector.broadcast %100 : vector<32x1xf32> to vector<32x400xf32>
    %104 = arith.addf %102, %103 : vector<32x400xf32>
    %cst_41 = arith.constant 0.000000e+00 : f32
    %105 = vector.shape_cast %2 : vector<1x400xi1> to vector<1x400xi1>
    %106 = vector.broadcast %105 : vector<1x400xi1> to vector<32x400xi1>
    %107 = vector.broadcast %cst_41 : f32 to vector<32x400xf32>
    %108 = arith.select %106, %104, %107 : vector<32x400xi1>, vector<32x400xf32>
    %109 = arith.truncf %108 : vector<32x400xf32> to vector<32x400xbf16>
    %c0_42 = arith.constant 0 : index
    %c0_43 = arith.constant 0 : index
    %110 = vector.load %arg15[%c0_42, %c0_43] : memref<64x288xbf16, #tpu.memory_space<vmem>>, vector<64x288xbf16>
    %cst_44 = arith.constant 0.000000e+00 : bf16
    %111 = vector.broadcast %cst_44 : bf16 to vector<32x42xbf16>
    %112 = tpu.concatenate %111, %109, %111 in 1 : vector<32x42xbf16>, vector<32x400xbf16>, vector<32x42xbf16> -> vector<32x484xbf16>
    %113 = vector.extract_strided_slice %112 {offsets = [0, 21], sizes = [32, 400], strides = [1, 1]} : vector<32x484xbf16> to vector<32x400xbf16>
    %114 = vector.extract_strided_slice %112 {offsets = [0, 22], sizes = [32, 400], strides = [1, 1]} : vector<32x484xbf16> to vector<32x400xbf16>
    %115 = vector.extract_strided_slice %112 {offsets = [0, 23], sizes = [32, 400], strides = [1, 1]} : vector<32x484xbf16> to vector<32x400xbf16>
    %116 = vector.extract_strided_slice %112 {offsets = [0, 41], sizes = [32, 400], strides = [1, 1]} : vector<32x484xbf16> to vector<32x400xbf16>
    %117 = vector.extract_strided_slice %112 {offsets = [0, 42], sizes = [32, 400], strides = [1, 1]} : vector<32x484xbf16> to vector<32x400xbf16>
    %118 = vector.extract_strided_slice %112 {offsets = [0, 43], sizes = [32, 400], strides = [1, 1]} : vector<32x484xbf16> to vector<32x400xbf16>
    %119 = vector.extract_strided_slice %112 {offsets = [0, 61], sizes = [32, 400], strides = [1, 1]} : vector<32x484xbf16> to vector<32x400xbf16>
    %120 = vector.extract_strided_slice %112 {offsets = [0, 62], sizes = [32, 400], strides = [1, 1]} : vector<32x484xbf16> to vector<32x400xbf16>
    %121 = vector.extract_strided_slice %112 {offsets = [0, 63], sizes = [32, 400], strides = [1, 1]} : vector<32x484xbf16> to vector<32x400xbf16>
    %122 = tpu.concatenate %113, %114, %115, %116, %117, %118, %119, %120, %121 in 0 : vector<32x400xbf16>, vector<32x400xbf16>, vector<32x400xbf16>, vector<32x400xbf16>, vector<32x400xbf16>, vector<32x400xbf16>, vector<32x400xbf16>, vector<32x400xbf16>, vector<32x400xbf16> -> vector<288x400xbf16>
    %cst_45 = arith.constant dense<0.000000e+00> : vector<64x400xf32>
    %123 = tpu.matmul %110, %122, %cst_45 {dimension_numbers = #tpu.dot_dimension_numbers<[1], [0], [0], [1], [0, 0, 1, 1], [], []>} : vector<64x288xbf16>, vector<288x400xbf16>, vector<64x400xf32> -> vector<64x400xf32>
    %c0_46 = arith.constant 0 : index
    %c0_47 = arith.constant 0 : index
    %124 = vector.load %arg16[%c0_46, %c0_47] : memref<64x1xf32, #tpu.memory_space<vmem>>, vector<64x1xf32>
    %125 = vector.broadcast %124 : vector<64x1xf32> to vector<64x400xf32>
    %126 = arith.addf %123, %125 : vector<64x400xf32>
    %cst_48 = arith.constant 0.000000e+00 : f32
    %127 = vector.broadcast %cst_48 : f32 to vector<64x400xf32>
    %128 = arith.cmpf oge, %126, %127 : vector<64x400xf32>
    %cst_49 = arith.constant 0.00999999977 : f32
    %129 = vector.broadcast %cst_49 : f32 to vector<64x400xf32>
    %130 = arith.mulf %129, %126 : vector<64x400xf32>
    %131 = arith.select %128, %126, %130 : vector<64x400xi1>, vector<64x400xf32>
    %c0_50 = arith.constant 0 : index
    %c0_51 = arith.constant 0 : index
    %132 = vector.load %arg17[%c0_50, %c0_51] : memref<64x1xf32, #tpu.memory_space<vmem>>, vector<64x1xf32>
    %c0_52 = arith.constant 0 : index
    %c0_53 = arith.constant 0 : index
    %133 = vector.load %arg18[%c0_52, %c0_53] : memref<64x1xf32, #tpu.memory_space<vmem>>, vector<64x1xf32>
    %134 = vector.broadcast %132 : vector<64x1xf32> to vector<64x400xf32>
    %135 = arith.mulf %131, %134 : vector<64x400xf32>
    %136 = vector.broadcast %133 : vector<64x1xf32> to vector<64x400xf32>
    %137 = arith.addf %135, %136 : vector<64x400xf32>
    %cst_54 = arith.constant 0.000000e+00 : f32
    %138 = vector.shape_cast %2 : vector<1x400xi1> to vector<1x400xi1>
    %139 = vector.broadcast %138 : vector<1x400xi1> to vector<64x400xi1>
    %140 = vector.broadcast %cst_54 : f32 to vector<64x400xf32>
    %141 = arith.select %139, %137, %140 : vector<64x400xi1>, vector<64x400xf32>
    %142 = arith.truncf %141 : vector<64x400xf32> to vector<64x400xbf16>
    %c0_55 = arith.constant 0 : index
    %c0_56 = arith.constant 0 : index
    %143 = vector.load %arg19[%c0_55, %c0_56] : memref<64x576xbf16, #tpu.memory_space<vmem>>, vector<64x576xbf16>
    %cst_57 = arith.constant 0.000000e+00 : bf16
    %144 = vector.broadcast %cst_57 : bf16 to vector<64x42xbf16>
    %145 = tpu.concatenate %144, %142, %144 in 1 : vector<64x42xbf16>, vector<64x400xbf16>, vector<64x42xbf16> -> vector<64x484xbf16>
    %146 = vector.extract_strided_slice %145 {offsets = [0, 21], sizes = [64, 400], strides = [1, 1]} : vector<64x484xbf16> to vector<64x400xbf16>
    %147 = vector.extract_strided_slice %145 {offsets = [0, 22], sizes = [64, 400], strides = [1, 1]} : vector<64x484xbf16> to vector<64x400xbf16>
    %148 = vector.extract_strided_slice %145 {offsets = [0, 23], sizes = [64, 400], strides = [1, 1]} : vector<64x484xbf16> to vector<64x400xbf16>
    %149 = vector.extract_strided_slice %145 {offsets = [0, 41], sizes = [64, 400], strides = [1, 1]} : vector<64x484xbf16> to vector<64x400xbf16>
    %150 = vector.extract_strided_slice %145 {offsets = [0, 42], sizes = [64, 400], strides = [1, 1]} : vector<64x484xbf16> to vector<64x400xbf16>
    %151 = vector.extract_strided_slice %145 {offsets = [0, 43], sizes = [64, 400], strides = [1, 1]} : vector<64x484xbf16> to vector<64x400xbf16>
    %152 = vector.extract_strided_slice %145 {offsets = [0, 61], sizes = [64, 400], strides = [1, 1]} : vector<64x484xbf16> to vector<64x400xbf16>
    %153 = vector.extract_strided_slice %145 {offsets = [0, 62], sizes = [64, 400], strides = [1, 1]} : vector<64x484xbf16> to vector<64x400xbf16>
    %154 = vector.extract_strided_slice %145 {offsets = [0, 63], sizes = [64, 400], strides = [1, 1]} : vector<64x484xbf16> to vector<64x400xbf16>
    %155 = tpu.concatenate %146, %147, %148, %149, %150, %151, %152, %153, %154 in 0 : vector<64x400xbf16>, vector<64x400xbf16>, vector<64x400xbf16>, vector<64x400xbf16>, vector<64x400xbf16>, vector<64x400xbf16>, vector<64x400xbf16>, vector<64x400xbf16>, vector<64x400xbf16> -> vector<576x400xbf16>
    %cst_58 = arith.constant dense<0.000000e+00> : vector<64x400xf32>
    %156 = tpu.matmul %143, %155, %cst_58 {dimension_numbers = #tpu.dot_dimension_numbers<[1], [0], [0], [1], [0, 0, 1, 1], [], []>} : vector<64x576xbf16>, vector<576x400xbf16>, vector<64x400xf32> -> vector<64x400xf32>
    %c0_59 = arith.constant 0 : index
    %c0_60 = arith.constant 0 : index
    %157 = vector.load %arg20[%c0_59, %c0_60] : memref<64x1xf32, #tpu.memory_space<vmem>>, vector<64x1xf32>
    %158 = vector.broadcast %157 : vector<64x1xf32> to vector<64x400xf32>
    %159 = arith.addf %156, %158 : vector<64x400xf32>
    %cst_61 = arith.constant 0.000000e+00 : f32
    %160 = vector.broadcast %cst_61 : f32 to vector<64x400xf32>
    %161 = arith.cmpf oge, %159, %160 : vector<64x400xf32>
    %cst_62 = arith.constant 0.00999999977 : f32
    %162 = vector.broadcast %cst_62 : f32 to vector<64x400xf32>
    %163 = arith.mulf %162, %159 : vector<64x400xf32>
    %164 = arith.select %161, %159, %163 : vector<64x400xi1>, vector<64x400xf32>
    %c0_63 = arith.constant 0 : index
    %c0_64 = arith.constant 0 : index
    %165 = vector.load %arg21[%c0_63, %c0_64] : memref<64x1xf32, #tpu.memory_space<vmem>>, vector<64x1xf32>
    %c0_65 = arith.constant 0 : index
    %c0_66 = arith.constant 0 : index
    %166 = vector.load %arg22[%c0_65, %c0_66] : memref<64x1xf32, #tpu.memory_space<vmem>>, vector<64x1xf32>
    %167 = vector.broadcast %165 : vector<64x1xf32> to vector<64x400xf32>
    %168 = arith.mulf %164, %167 : vector<64x400xf32>
    %169 = vector.broadcast %166 : vector<64x1xf32> to vector<64x400xf32>
    %170 = arith.addf %168, %169 : vector<64x400xf32>
    %cst_67 = arith.constant 0.000000e+00 : f32
    %171 = vector.shape_cast %2 : vector<1x400xi1> to vector<1x400xi1>
    %172 = vector.broadcast %171 : vector<1x400xi1> to vector<64x400xi1>
    %173 = vector.broadcast %cst_67 : f32 to vector<64x400xf32>
    %174 = arith.select %172, %170, %173 : vector<64x400xi1>, vector<64x400xf32>
    %175 = arith.truncf %174 : vector<64x400xf32> to vector<64x400xbf16>
    %c0_68 = arith.constant 0 : index
    %c0_69 = arith.constant 0 : index
    %176 = vector.load %arg23[%c0_68, %c0_69] : memref<64x1600xbf16, #tpu.memory_space<vmem>>, vector<64x1600xbf16>
    %cst_70 = arith.constant 0.000000e+00 : bf16
    %177 = vector.broadcast %cst_70 : bf16 to vector<64x42xbf16>
    %178 = tpu.concatenate %177, %175, %177 in 1 : vector<64x42xbf16>, vector<64x400xbf16>, vector<64x42xbf16> -> vector<64x484xbf16>
    %179 = vector.extract_strided_slice %178 {offsets = [0, 0], sizes = [64, 400], strides = [1, 1]} : vector<64x484xbf16> to vector<64x400xbf16>
    %180 = vector.extract_strided_slice %178 {offsets = [0, 1], sizes = [64, 400], strides = [1, 1]} : vector<64x484xbf16> to vector<64x400xbf16>
    %181 = vector.extract_strided_slice %178 {offsets = [0, 2], sizes = [64, 400], strides = [1, 1]} : vector<64x484xbf16> to vector<64x400xbf16>
    %182 = vector.extract_strided_slice %178 {offsets = [0, 3], sizes = [64, 400], strides = [1, 1]} : vector<64x484xbf16> to vector<64x400xbf16>
    %183 = vector.extract_strided_slice %178 {offsets = [0, 4], sizes = [64, 400], strides = [1, 1]} : vector<64x484xbf16> to vector<64x400xbf16>
    %184 = vector.extract_strided_slice %178 {offsets = [0, 20], sizes = [64, 400], strides = [1, 1]} : vector<64x484xbf16> to vector<64x400xbf16>
    %185 = vector.extract_strided_slice %178 {offsets = [0, 21], sizes = [64, 400], strides = [1, 1]} : vector<64x484xbf16> to vector<64x400xbf16>
    %186 = vector.extract_strided_slice %178 {offsets = [0, 22], sizes = [64, 400], strides = [1, 1]} : vector<64x484xbf16> to vector<64x400xbf16>
    %187 = vector.extract_strided_slice %178 {offsets = [0, 23], sizes = [64, 400], strides = [1, 1]} : vector<64x484xbf16> to vector<64x400xbf16>
    %188 = vector.extract_strided_slice %178 {offsets = [0, 24], sizes = [64, 400], strides = [1, 1]} : vector<64x484xbf16> to vector<64x400xbf16>
    %189 = vector.extract_strided_slice %178 {offsets = [0, 40], sizes = [64, 400], strides = [1, 1]} : vector<64x484xbf16> to vector<64x400xbf16>
    %190 = vector.extract_strided_slice %178 {offsets = [0, 41], sizes = [64, 400], strides = [1, 1]} : vector<64x484xbf16> to vector<64x400xbf16>
    %191 = vector.extract_strided_slice %178 {offsets = [0, 42], sizes = [64, 400], strides = [1, 1]} : vector<64x484xbf16> to vector<64x400xbf16>
    %192 = vector.extract_strided_slice %178 {offsets = [0, 43], sizes = [64, 400], strides = [1, 1]} : vector<64x484xbf16> to vector<64x400xbf16>
    %193 = vector.extract_strided_slice %178 {offsets = [0, 44], sizes = [64, 400], strides = [1, 1]} : vector<64x484xbf16> to vector<64x400xbf16>
    %194 = vector.extract_strided_slice %178 {offsets = [0, 60], sizes = [64, 400], strides = [1, 1]} : vector<64x484xbf16> to vector<64x400xbf16>
    %195 = vector.extract_strided_slice %178 {offsets = [0, 61], sizes = [64, 400], strides = [1, 1]} : vector<64x484xbf16> to vector<64x400xbf16>
    %196 = vector.extract_strided_slice %178 {offsets = [0, 62], sizes = [64, 400], strides = [1, 1]} : vector<64x484xbf16> to vector<64x400xbf16>
    %197 = vector.extract_strided_slice %178 {offsets = [0, 63], sizes = [64, 400], strides = [1, 1]} : vector<64x484xbf16> to vector<64x400xbf16>
    %198 = vector.extract_strided_slice %178 {offsets = [0, 64], sizes = [64, 400], strides = [1, 1]} : vector<64x484xbf16> to vector<64x400xbf16>
    %199 = vector.extract_strided_slice %178 {offsets = [0, 80], sizes = [64, 400], strides = [1, 1]} : vector<64x484xbf16> to vector<64x400xbf16>
    %200 = vector.extract_strided_slice %178 {offsets = [0, 81], sizes = [64, 400], strides = [1, 1]} : vector<64x484xbf16> to vector<64x400xbf16>
    %201 = vector.extract_strided_slice %178 {offsets = [0, 82], sizes = [64, 400], strides = [1, 1]} : vector<64x484xbf16> to vector<64x400xbf16>
    %202 = vector.extract_strided_slice %178 {offsets = [0, 83], sizes = [64, 400], strides = [1, 1]} : vector<64x484xbf16> to vector<64x400xbf16>
    %203 = vector.extract_strided_slice %178 {offsets = [0, 84], sizes = [64, 400], strides = [1, 1]} : vector<64x484xbf16> to vector<64x400xbf16>
    %204 = tpu.concatenate %179, %180, %181, %182, %183, %184, %185, %186, %187, %188, %189, %190, %191, %192, %193, %194 in 0 : vector<64x400xbf16>, vector<64x400xbf16>, vector<64x400xbf16>, vector<64x400xbf16>, vector<64x400xbf16>, vector<64x400xbf16>, vector<64x400xbf16>, vector<64x400xbf16>, vector<64x400xbf16>, vector<64x400xbf16>, vector<64x400xbf16>, vector<64x400xbf16>, vector<64x400xbf16>, vector<64x400xbf16>, vector<64x400xbf16>, vector<64x400xbf16> -> vector<1024x400xbf16>
    %205 = tpu.concatenate %195, %196, %197, %198, %199, %200, %201, %202, %203 in 0 : vector<64x400xbf16>, vector<64x400xbf16>, vector<64x400xbf16>, vector<64x400xbf16>, vector<64x400xbf16>, vector<64x400xbf16>, vector<64x400xbf16>, vector<64x400xbf16>, vector<64x400xbf16> -> vector<576x400xbf16>
    %206 = tpu.concatenate %204, %205 in 0 : vector<1024x400xbf16>, vector<576x400xbf16> -> vector<1600x400xbf16>
    %cst_71 = arith.constant dense<0.000000e+00> : vector<64x400xf32>
    %207 = tpu.matmul %176, %206, %cst_71 {dimension_numbers = #tpu.dot_dimension_numbers<[1], [0], [0], [1], [0, 0, 1, 1], [], []>} : vector<64x1600xbf16>, vector<1600x400xbf16>, vector<64x400xf32> -> vector<64x400xf32>
    %c0_72 = arith.constant 0 : index
    %c0_73 = arith.constant 0 : index
    %208 = vector.load %arg24[%c0_72, %c0_73] : memref<64x1xf32, #tpu.memory_space<vmem>>, vector<64x1xf32>
    %209 = vector.broadcast %208 : vector<64x1xf32> to vector<64x400xf32>
    %210 = arith.addf %207, %209 : vector<64x400xf32>
    %cst_74 = arith.constant 0.000000e+00 : f32
    %211 = vector.broadcast %cst_74 : f32 to vector<64x400xf32>
    %212 = arith.cmpf oge, %210, %211 : vector<64x400xf32>
    %cst_75 = arith.constant 0.00999999977 : f32
    %213 = vector.broadcast %cst_75 : f32 to vector<64x400xf32>
    %214 = arith.mulf %213, %210 : vector<64x400xf32>
    %215 = arith.select %212, %210, %214 : vector<64x400xi1>, vector<64x400xf32>
    %216 = arith.truncf %215 : vector<64x400xf32> to vector<64x400xbf16>
    %c0_76 = arith.constant 0 : index
    %c0_77 = arith.constant 0 : index
    %217 = vector.load %arg25[%c0_76, %c0_77] : memref<2x64xbf16, #tpu.memory_space<vmem>>, vector<2x64xbf16>
    %cst_78 = arith.constant dense<0.000000e+00> : vector<2x400xf32>
    %218 = tpu.matmul %217, %216, %cst_78 {dimension_numbers = #tpu.dot_dimension_numbers<[1], [0], [0], [1], [0, 0, 1, 1], [], []>} : vector<2x64xbf16>, vector<64x400xbf16>, vector<2x400xf32> -> vector<2x400xf32>
    %c0_79 = arith.constant 0 : index
    %c0_80 = arith.constant 0 : index
    %c0_81 = arith.constant 0 : index
    %219 = vector.load %arg26[%c0_79, %c0_80, %c0_81] : memref<1x2x400xf32, #tpu.memory_space<vmem>>, vector<1x2x400xf32>
    %220 = vector.shape_cast %219 : vector<1x2x400xf32> to vector<2x400xf32>
    %221 = vector.shape_cast %218 : vector<2x400xf32> to vector<1x2x400xf32>
    tpu.vector_store %arg26[%c0_79, %c0_80, %c0_81], %221 {strides = array<i32>} : memref<1x2x400xf32, #tpu.memory_space<vmem>>, vector<1x2x400xf32>,
    return
  }
  func.func @transform_0(%arg0: i32) -> (i32, i32, i32) {
    %c0_i32 = arith.constant 0 : i32
    %c0_i32_0 = arith.constant 0 : i32
    %c0_i32_1 = arith.constant 0 : i32
    return %arg0, %c0_i32, %c0_i32_0 : i32, i32, i32
  }
  func.func @transform_1(%arg0: i32) -> (i32, i32) {
    %c0_i32 = arith.constant 0 : i32
    %c0_i32_0 = arith.constant 0 : i32
    %c0_i32_1 = arith.constant 0 : i32
    return %c0_i32, %c0_i32_0 : i32, i32
  }
  func.func @transform_2(%arg0: i32) -> (i32, i32) {
    %c0_i32 = arith.constant 0 : i32
    %c0_i32_0 = arith.constant 0 : i32
    %c0_i32_1 = arith.constant 0 : i32
    return %c0_i32, %c0_i32_0 : i32, i32
  }
  func.func @transform_3(%arg0: i32) -> (i32, i32) {
    %c0_i32 = arith.constant 0 : i32
    %c0_i32_0 = arith.constant 0 : i32
    %c0_i32_1 = arith.constant 0 : i32
    return %c0_i32, %c0_i32_0 : i32, i32
  }
  func.func @transform_4(%arg0: i32) -> (i32, i32) {
    %c0_i32 = arith.constant 0 : i32
    %c0_i32_0 = arith.constant 0 : i32
    %c0_i32_1 = arith.constant 0 : i32
    return %c0_i32, %c0_i32_0 : i32, i32
  }
  func.func @transform_5(%arg0: i32) -> (i32, i32) {
    %c0_i32 = arith.constant 0 : i32
    %c0_i32_0 = arith.constant 0 : i32
    %c0_i32_1 = arith.constant 0 : i32
    return %c0_i32, %c0_i32_0 : i32, i32
  }
  func.func @transform_6(%arg0: i32) -> (i32, i32) {
    %c0_i32 = arith.constant 0 : i32
    %c0_i32_0 = arith.constant 0 : i32
    %c0_i32_1 = arith.constant 0 : i32
    return %c0_i32, %c0_i32_0 : i32, i32
  }
  func.func @transform_7(%arg0: i32) -> (i32, i32) {
    %c0_i32 = arith.constant 0 : i32
    %c0_i32_0 = arith.constant 0 : i32
    %c0_i32_1 = arith.constant 0 : i32
    return %c0_i32, %c0_i32_0 : i32, i32
  }
  func.func @transform_8(%arg0: i32) -> (i32, i32) {
    %c0_i32 = arith.constant 0 : i32
    %c0_i32_0 = arith.constant 0 : i32
    %c0_i32_1 = arith.constant 0 : i32
    return %c0_i32, %c0_i32_0 : i32, i32
  }
  func.func @transform_9(%arg0: i32) -> (i32, i32) {
    %c0_i32 = arith.constant 0 : i32
    %c0_i32_0 = arith.constant 0 : i32
    %c0_i32_1 = arith.constant 0 : i32
    return %c0_i32, %c0_i32_0 : i32, i32
  }
  func.func @transform_10(%arg0: i32) -> (i32, i32) {
    %c0_i32 = arith.constant 0 : i32
    %c0_i32_0 = arith.constant 0 : i32
    %c0_i32_1 = arith.constant 0 : i32
    return %c0_i32, %c0_i32_0 : i32, i32
  }
  func.func @transform_11(%arg0: i32) -> (i32, i32) {
    %c0_i32 = arith.constant 0 : i32
    %c0_i32_0 = arith.constant 0 : i32
    %c0_i32_1 = arith.constant 0 : i32
    return %c0_i32, %c0_i32_0 : i32, i32
  }
  func.func @transform_12(%arg0: i32) -> (i32, i32) {
    %c0_i32 = arith.constant 0 : i32
    %c0_i32_0 = arith.constant 0 : i32
    %c0_i32_1 = arith.constant 0 : i32
    return %c0_i32, %c0_i32_0 : i32, i32
  }
  func.func @transform_13(%arg0: i32) -> (i32, i32) {
    %c0_i32 = arith.constant 0 : i32
    %c0_i32_0 = arith.constant 0 : i32
    %c0_i32_1 = arith.constant 0 : i32
    return %c0_i32, %c0_i32_0 : i32, i32
  }
  func.func @transform_14(%arg0: i32) -> (i32, i32) {
    %c0_i32 = arith.constant 0 : i32
    %c0_i32_0 = arith.constant 0 : i32
    %c0_i32_1 = arith.constant 0 : i32
    return %c0_i32, %c0_i32_0 : i32, i32
  }
  func.func @transform_15(%arg0: i32) -> (i32, i32) {
    %c0_i32 = arith.constant 0 : i32
    %c0_i32_0 = arith.constant 0 : i32
    %c0_i32_1 = arith.constant 0 : i32
    return %c0_i32, %c0_i32_0 : i32, i32
  }
  func.func @transform_16(%arg0: i32) -> (i32, i32) {
    %c0_i32 = arith.constant 0 : i32
    %c0_i32_0 = arith.constant 0 : i32
    %c0_i32_1 = arith.constant 0 : i32
    return %c0_i32, %c0_i32_0 : i32, i32
  }
  func.func @transform_17(%arg0: i32) -> (i32, i32) {
    %c0_i32 = arith.constant 0 : i32
    %c0_i32_0 = arith.constant 0 : i32
    %c0_i32_1 = arith.constant 0 : i32
    return %c0_i32, %c0_i32_0 : i32, i32
  }
  func.func @transform_18(%arg0: i32) -> (i32, i32) {
    %c0_i32 = arith.constant 0 : i32
    %c0_i32_0 = arith.constant 0 : i32
    %c0_i32_1 = arith.constant 0 : i32
    return %c0_i32, %c0_i32_0 : i32, i32
  }
  func.func @transform_19(%arg0: i32) -> (i32, i32) {
    %c0_i32 = arith.constant 0 : i32
    %c0_i32_0 = arith.constant 0 : i32
    %c0_i32_1 = arith.constant 0 : i32
    return %c0_i32, %c0_i32_0 : i32, i32
  }
  func.func @transform_20(%arg0: i32) -> (i32, i32) {
    %c0_i32 = arith.constant 0 : i32
    %c0_i32_0 = arith.constant 0 : i32
    %c0_i32_1 = arith.constant 0 : i32
    return %c0_i32, %c0_i32_0 : i32, i32
  }
  func.func @transform_21(%arg0: i32) -> (i32, i32) {
    %c0_i32 = arith.constant 0 : i32
    %c0_i32_0 = arith.constant 0 : i32
    %c0_i32_1 = arith.constant 0 : i32
    return %c0_i32, %c0_i32_0 : i32, i32
  }
  func.func @transform_22(%arg0: i32) -> (i32, i32) {
    %c0_i32 = arith.constant 0 : i32
    %c0_i32_0 = arith.constant 0 : i32
    %c0_i32_1 = arith.constant 0 : i32
    return %c0_i32, %c0_i32_0 : i32, i32
  }
  func.func @transform_23(%arg0: i32) -> (i32, i32) {
    %c0_i32 = arith.constant 0 : i32
    %c0_i32_0 = arith.constant 0 : i32
    %c0_i32_1 = arith.constant 0 : i32
    return %c0_i32, %c0_i32_0 : i32, i32
  }
  func.func @transform_24(%arg0: i32) -> (i32, i32) {
    %c0_i32 = arith.constant 0 : i32
    %c0_i32_0 = arith.constant 0 : i32
    %c0_i32_1 = arith.constant 0 : i32
    return %c0_i32, %c0_i32_0 : i32, i32
  }
  func.func @transform_25(%arg0: i32) -> (i32, i32, i32) {
    %c0_i32 = arith.constant 0 : i32
    %c0_i32_0 = arith.constant 0 : i32
    %c0_i32_1 = arith.constant 0 : i32
    return %arg0, %c0_i32, %c0_i32_0 : i32, i32, i32
  }
}

</mosaic_0001>

<llo_original>
// kernel: _lambda_.1
$region0: #{_lambda_.1}
  #allocation0 [shape = 'u32[]', space=smem, size = 0x4, offset = 0x4, fixed_abs, tag = 'smem constant byte address 0x4 - core index']
  #allocation1 [shape = 'u32[144,128]{1,0:T(1,128)}', space=vmem, size = 0x12000, scoped, tag = 'internal scratch']
  %s0 = inlined_call_operand.vmem [shape: bf16[2,32,400], index: 0, kind: input, shape index: {}]
  %s1 = inlined_call_operand.vmem [shape: f32[1,400], index: 1, kind: input, shape index: {}]
  %s2 = inlined_call_operand.vmem [shape: bf16[32,32], index: 2, kind: input, shape index: {}]
  %s3 = inlined_call_operand.vmem [shape: f32[32,1], index: 3, kind: input, shape index: {}]
  %s4 = inlined_call_operand.vmem [shape: f32[32,1], index: 4, kind: input, shape index: {}, may-alias: {4,8,12}]
  %s5 = inlined_call_operand.vmem [shape: f32[32,1], index: 5, kind: input, shape index: {}, may-alias: {5,9,13}]
  %s6 = inlined_call_operand.vmem [shape: bf16[32,288], index: 6, kind: input, shape index: {}]
  %s7 = inlined_call_operand.vmem [shape: f32[32,1], index: 7, kind: input, shape index: {}]
  %s8 = inlined_call_operand.vmem [shape: f32[32,1], index: 8, kind: input, shape index: {}, may-alias: {4,8,12}]
  %s9 = inlined_call_operand.vmem [shape: f32[32,1], index: 9, kind: input, shape index: {}, may-alias: {5,9,13}]
  %s10 = inlined_call_operand.vmem [shape: bf16[32,800], index: 10, kind: input, shape index: {}]
  %s11 = inlined_call_operand.vmem [shape: f32[32,1], index: 11, kind: input, shape index: {}]
  %s12 = inlined_call_operand.vmem [shape: f32[32,1], index: 12, kind: input, shape index: {}, may-alias: {4,8,12}]
  %s13 = inlined_call_operand.vmem [shape: f32[32,1], index: 13, kind: input, shape index: {}, may-alias: {5,9,13}]
  %s14 = inlined_call_operand.vmem [shape: bf16[64,288], index: 14, kind: input, shape index: {}]
  %s15 = inlined_call_operand.vmem [shape: f32[64,1], index: 15, kind: input, shape index: {}]
  %s16 = inlined_call_operand.vmem [shape: f32[64,1], index: 16, kind: input, shape index: {}, may-alias: {16,20}]
  %s17 = inlined_call_operand.vmem [shape: f32[64,1], index: 17, kind: input, shape index: {}, may-alias: {17,21}]
  %s18 = inlined_call_operand.vmem [shape: bf16[64,576], index: 18, kind: input, shape index: {}]
  %s19 = inlined_call_operand.vmem [shape: f32[64,1], index: 19, kind: input, shape index: {}]
  %s20 = inlined_call_operand.vmem [shape: f32[64,1], index: 20, kind: input, shape index: {}, may-alias: {16,20}]
  %s21 = inlined_call_operand.vmem [shape: f32[64,1], index: 21, kind: input, shape index: {}, may-alias: {17,21}]
  %s22 = inlined_call_operand.vmem [shape: bf16[64,1600], index: 22, kind: input, shape index: {}]
  %s23 = inlined_call_operand.vmem [shape: f32[64,1], index: 23, kind: input, shape index: {}]
  %s24 = inlined_call_operand.vmem [shape: bf16[2,64], index: 24, kind: input, shape index: {}]
  %s25 = inlined_call_operand.vmem [shape: f32[2,2,400], index: 25, kind: output, shape index: {}]
  %s26 = sld [smem:[#allocation0]]
  $region133: #{_lambda_.1} parent=0
    _
  %s28 = ssub.s32 1, %s26
  %s29 = scalar_select 0, %s28, %s26
  loop: start=0, step=1, limit=4
  $region2: #{_lambda_.1} parent=0 // loop_pre_header
    _
  $region3: #{_lambda_.1} parent=0 // loop_header
    %s31 = sphi 0, %s35
    %p32 = scmp.ge.s32.totalorder %s31, 4
    %s41 = sphi 0, %s43
    %s44 = sphi 0, %s41
    %s45 = sphi 0, %s44
    %s61 = sphi 0, %s45
    %s65 = sphi 0, %s65
    %s67 = sphi 0, %s65
    %s68 = sphi 0, %s67
    %s82 = sphi 0, %s68
    %s86 = sphi 0, %s86
    %s88 = sphi 0, %s86
    %s89 = sphi 0, %s88
    %s103 = sphi 0, %s89
    %s107 = sphi 0, %s107
    %s109 = sphi 0, %s107
    %s110 = sphi 0, %s109
    %s124 = sphi 0, %s110
    %s128 = sphi 0, %s128
    %s130 = sphi 0, %s128
    %s131 = sphi 0, %s130
    %s145 = sphi 0, %s131
    %s149 = sphi 0, %s149
    %s151 = sphi 0, %s149
    %s152 = sphi 0, %s151
    %s166 = sphi 0, %s152
    %s170 = sphi 0, %s170
    %s172 = sphi 0, %s170
    %s173 = sphi 0, %s172
    %s187 = sphi 0, %s173
    %s191 = sphi 0, %s191
    %s193 = sphi 0, %s191
    %s194 = sphi 0, %s193
    %s208 = sphi 0, %s194
    %s212 = sphi 0, %s212
    %s214 = sphi 0, %s212
    %s215 = sphi 0, %s214
    %s229 = sphi 0, %s215
    %s233 = sphi 0, %s233
    %s235 = sphi 0, %s233
    %s236 = sphi 0, %s235
    %s250 = sphi 0, %s236
    %s254 = sphi 0, %s254
    %s256 = sphi 0, %s254
    %s257 = sphi 0, %s256
    %s271 = sphi 0, %s257
    %s275 = sphi 0, %s275
    %s277 = sphi 0, %s275
    %s278 = sphi 0, %s277
    %s292 = sphi 0, %s278
    %s296 = sphi 0, %s296
    %s298 = sphi 0, %s296
    %s299 = sphi 0, %s298
    %s313 = sphi 0, %s299
    %s317 = sphi 0, %s317
    %s319 = sphi 0, %s317
    %s320 = sphi 0, %s319
    %s334 = sphi 0, %s320
    %s338 = sphi 0, %s338
    %s340 = sphi 0, %s338
    %s341 = sphi 0, %s340
    %s355 = sphi 0, %s341
    %s359 = sphi 0, %s359
    %s361 = sphi 0, %s359
    %s362 = sphi 0, %s361
    %s376 = sphi 0, %s362
    %s380 = sphi 0, %s380
    %s382 = sphi 0, %s380
    %s383 = sphi 0, %s382
    %s397 = sphi 0, %s383
    %s401 = sphi 0, %s401
    %s403 = sphi 0, %s401
    %s404 = sphi 0, %s403
    %s418 = sphi 0, %s404
    %s422 = sphi 0, %s422
    %s424 = sphi 0, %s422
    %s425 = sphi 0, %s424
    %s439 = sphi 0, %s425
    %s443 = sphi 0, %s443
    %s445 = sphi 0, %s443
    %s446 = sphi 0, %s445
    %s460 = sphi 0, %s446
    %s464 = sphi 0, %s464
    %s466 = sphi 0, %s464
    %s467 = sphi 0, %s466
    %s481 = sphi 0, %s467
    %s485 = sphi 0, %s485
    %s487 = sphi 0, %s485
    %s488 = sphi 0, %s487
    %s502 = sphi 0, %s488
    %s506 = sphi 0, %s506
    %s508 = sphi 0, %s506
    %s509 = sphi 0, %s508
    %s523 = sphi 0, %s509
    %s527 = sphi 0, %s527
    %s529 = sphi 0, %s527
    %s530 = sphi 0, %s529
    %s544 = sphi 0, %s530
    %s548 = sphi 0, %s548
    %s550 = sphi 0, %s548
    %s551 = sphi 0, %s550
    %s565 = sphi 0, %s551
    %s571 = sphi 0, %s573
    %s574 = sphi 0, %s571
    %s575 = sphi 0, %s574
    %s591 = sphi 0, %s575
  $region4: #{_lambda_.1} parent=0 // loop_header_branch
    %34 = sbr.rel (%p32) target = $region8
  $region5: #{_lambda_.1} parent=0 // loop_body
    %s36 = ssub.s32 %s31, 1
    %s37 = ssub.s32 %s31, 2
    %s38 = sadd.s32 %s31, 1
    %s39 = ssub.s32 %s31, %s38
    %p40 = scmp.eq.s32.totalorder %s39, 0
    %s42 = sadd.s32 %s41, 1
    %s43 = scalar_select %p40, %s41, %s42
    %p46 = pneg %p40
    %p47 = scmp.eq.s32.totalorder %s31, 1
    %p48 = por %p46, %p47
    %p49 = scmp.ne.s32.totalorder %s41, %s44
    %p50 = scmp.eq.s32.totalorder %s31, 0
    %p51 = por %p49, %p50
    %p52 = scmp.ne.s32.totalorder %s41, %s44
    %p53 = scmp.eq.s32.totalorder %s36, 1
    %p54 = por %p52, %p53
    %p55 = scmp.ne.s32.totalorder %s44, %s45
    %p56 = scmp.eq.s32.totalorder %s36, 0
    %p57 = por %p55, %p56
    %p58 = scmp.ne.s32.totalorder %s44, %s45
    %p59 = scmp.eq.s32.totalorder %s37, 1
    %p60 = por %p58, %p59
    %p62 = scmp.ne.s32.totalorder %s45, %s61
    %p63 = scmp.eq.s32.totalorder %s37, 0
    %p64 = por %p62, %p63
    %s66 = sadd.s32 %s65, 1
    %p69 = scmp.eq.s32.totalorder %s31, 1
    %p70 = scmp.ne.s32.totalorder %s65, %s67
    %p71 = scmp.eq.s32.totalorder %s31, 0
    %p72 = por %p70, %p71
    %p73 = scmp.ne.s32.totalorder %s65, %s67
    %p74 = scmp.eq.s32.totalorder %s36, 1
    %p75 = por %p73, %p74
    %p76 = scmp.ne.s32.totalorder %s67, %s68
    %p77 = scmp.eq.s32.totalorder %s36, 0
    %p78 = por %p76, %p77
    %p79 = scmp.ne.s32.totalorder %s67, %s68
    %p80 = scmp.eq.s32.totalorder %s37, 1
    %p81 = por %p79, %p80
    %p83 = scmp.ne.s32.totalorder %s68, %s82
    %p84 = scmp.eq.s32.totalorder %s37, 0
    %p85 = por %p83, %p84
    %s87 = sadd.s32 %s86, 1
    %p90 = scmp.eq.s32.totalorder %s31, 1
    %p91 = scmp.ne.s32.totalorder %s86, %s88
    %p92 = scmp.eq.s32.totalorder %s31, 0
    %p93 = por %p91, %p92
    %p94 = scmp.ne.s32.totalorder %s86, %s88
    %p95 = scmp.eq.s32.totalorder %s36, 1
    %p96 = por %p94, %p95
    %p97 = scmp.ne.s32.totalorder %s88, %s89
    %p98 = scmp.eq.s32.totalorder %s36, 0
    %p99 = por %p97, %p98
    %p100 = scmp.ne.s32.totalorder %s88, %s89
    %p101 = scmp.eq.s32.totalorder %s37, 1
    %p102 = por %p100, %p101
    %p104 = scmp.ne.s32.totalorder %s89, %s103
    %p105 = scmp.eq.s32.totalorder %s37, 0
    %p106 = por %p104, %p105
    %s108 = sadd.s32 %s107, 1
    %p111 = scmp.eq.s32.totalorder %s31, 1
    %p112 = scmp.ne.s32.totalorder %s107, %s109
    %p113 = scmp.eq.s32.totalorder %s31, 0
    %p114 = por %p112, %p113
    %p115 = scmp.ne.s32.totalorder %s107, %s109
    %p116 = scmp.eq.s32.totalorder %s36, 1
    %p117 = por %p115, %p116
    %p118 = scmp.ne.s32.totalorder %s109, %s110
    %p119 = scmp.eq.s32.totalorder %s36, 0
    %p120 = por %p118, %p119
    %p121 = scmp.ne.s32.totalorder %s109, %s110
    %p122 = scmp.eq.s32.totalorder %s37, 1
    %p123 = por %p121, %p122
    %p125 = scmp.ne.s32.totalorder %s110, %s124
    %p126 = scmp.eq.s32.totalorder %s37, 0
    %p127 = por %p125, %p126
    %s129 = sadd.s32 %s128, 1
    %p132 = scmp.eq.s32.totalorder %s31, 1
    %p133 = scmp.ne.s32.totalorder %s128, %s130
    %p134 = scmp.eq.s32.totalorder %s31, 0
    %p135 = por %p133, %p134
    %p136 = scmp.ne.s32.totalorder %s128, %s130
    %p137 = scmp.eq.s32.totalorder %s36, 1
    %p138 = por %p136, %p137
    %p139 = scmp.ne.s32.totalorder %s130, %s131
    %p140 = scmp.eq.s32.totalorder %s36, 0
    %p141 = por %p139, %p140
    %p142 = scmp.ne.s32.totalorder %s130, %s131
    %p143 = scmp.eq.s32.totalorder %s37, 1
    %p144 = por %p142, %p143
    %p146 = scmp.ne.s32.totalorder %s131, %s145
    %p147 = scmp.eq.s32.totalorder %s37, 0
    %p148 = por %p146, %p147
    %s150 = sadd.s32 %s149, 1
    %p153 = scmp.eq.s32.totalorder %s31, 1
    %p154 = scmp.ne.s32.totalorder %s149, %s151
    %p155 = scmp.eq.s32.totalorder %s31, 0
    %p156 = por %p154, %p155
    %p157 = scmp.ne.s32.totalorder %s149, %s151
    %p158 = scmp.eq.s32.totalorder %s36, 1
    %p159 = por %p157, %p158
    %p160 = scmp.ne.s32.totalorder %s151, %s152
    %p161 = scmp.eq.s32.totalorder %s36, 0
    %p162 = por %p160, %p161
    %p163 = scmp.ne.s32.totalorder %s151, %s152
    %p164 = scmp.eq.s32.totalorder %s37, 1
    %p165 = por %p163, %p164
    %p167 = scmp.ne.s32.totalorder %s152, %s166
    %p168 = scmp.eq.s32.totalorder %s37, 0
    %p169 = por %p167, %p168
    %s171 = sadd.s32 %s170, 1
    %p174 = scmp.eq.s32.totalorder %s31, 1
    %p175 = scmp.ne.s32.totalorder %s170, %s172
    %p176 = scmp.eq.s32.totalorder %s31, 0
    %p177 = por %p175, %p176
    %p178 = scmp.ne.s32.totalorder %s170, %s172
    %p179 = scmp.eq.s32.totalorder %s36, 1
    %p180 = por %p178, %p179
    %p181 = scmp.ne.s32.totalorder %s172, %s173
    %p182 = scmp.eq.s32.totalorder %s36, 0
    %p183 = por %p181, %p182
    %p184 = scmp.ne.s32.totalorder %s172, %s173
    %p185 = scmp.eq.s32.totalorder %s37, 1
    %p186 = por %p184, %p185
    %p188 = scmp.ne.s32.totalorder %s173, %s187
    %p189 = scmp.eq.s32.totalorder %s37, 0
    %p190 = por %p188, %p189
    %s192 = sadd.s32 %s191, 1
    %p195 = scmp.eq.s32.totalorder %s31, 1
    %p196 = scmp.ne.s32.totalorder %s191, %s193
    %p197 = scmp.eq.s32.totalorder %s31, 0
    %p198 = por %p196, %p197
    %p199 = scmp.ne.s32.totalorder %s191, %s193
    %p200 = scmp.eq.s32.totalorder %s36, 1
    %p201 = por %p199, %p200
    %p202 = scmp.ne.s32.totalorder %s193, %s194
    %p203 = scmp.eq.s32.totalorder %s36, 0
    %p204 = por %p202, %p203
    %p205 = scmp.ne.s32.totalorder %s193, %s194
    %p206 = scmp.eq.s32.totalorder %s37, 1
    %p207 = por %p205, %p206
    %p209 = scmp.ne.s32.totalorder %s194, %s208
    %p210 = scmp.eq.s32.totalorder %s37, 0
    %p211 = por %p209, %p210
    %s213 = sadd.s32 %s212, 1
    %p216 = scmp.eq.s32.totalorder %s31, 1
    %p217 = scmp.ne.s32.totalorder %s212, %s214
    %p218 = scmp.eq.s32.totalorder %s31, 0
    %p219 = por %p217, %p218
    %p220 = scmp.ne.s32.totalorder %s212, %s214
    %p221 = scmp.eq.s32.totalorder %s36, 1
    %p222 = por %p220, %p221
    %p223 = scmp.ne.s32.totalorder %s214, %s215
    %p224 = scmp.eq.s32.totalorder %s36, 0
    %p225 = por %p223, %p224
    %p226 = scmp.ne.s32.totalorder %s214, %s215
    %p227 = scmp.eq.s32.totalorder %s37, 1
    %p228 = por %p226, %p227
    %p230 = scmp.ne.s32.totalorder %s215, %s229
    %p231 = scmp.eq.s32.totalorder %s37, 0
    %p232 = por %p230, %p231
    %s234 = sadd.s32 %s233, 1
    %p237 = scmp.eq.s32.totalorder %s31, 1
    %p238 = scmp.ne.s32.totalorder %s233, %s235
    %p239 = scmp.eq.s32.totalorder %s31, 0
    %p240 = por %p238, %p239
    %p241 = scmp.ne.s32.totalorder %s233, %s235
    %p242 = scmp.eq.s32.totalorder %s36, 1
    %p243 = por %p241, %p242
    %p244 = scmp.ne.s32.totalorder %s235, %s236
    %p245 = scmp.eq.s32.totalorder %s36, 0
    %p246 = por %p244, %p245
    %p247 = scmp.ne.s32.totalorder %s235, %s236
    %p248 = scmp.eq.s32.totalorder %s37, 1
    %p249 = por %p247, %p248
    %p251 = scmp.ne.s32.totalorder %s236, %s250
    %p252 = scmp.eq.s32.totalorder %s37, 0
    %p253 = por %p251, %p252
    %s255 = sadd.s32 %s254, 1
    %p258 = scmp.eq.s32.totalorder %s31, 1
    %p259 = scmp.ne.s32.totalorder %s254, %s256
    %p260 = scmp.eq.s32.totalorder %s31, 0
    %p261 = por %p259, %p260
    %p262 = scmp.ne.s32.totalorder %s254, %s256
    %p263 = scmp.eq.s32.totalorder %s36, 1
    %p264 = por %p262, %p263
    %p265 = scmp.ne.s32.totalorder %s256, %s257
    %p266 = scmp.eq.s32.totalorder %s36, 0
    %p267 = por %p265, %p266
    %p268 = scmp.ne.s32.totalorder %s256, %s257
    %p269 = scmp.eq.s32.totalorder %s37, 1
    %p270 = por %p268, %p269
    %p272 = scmp.ne.s32.totalorder %s257, %s271
    %p273 = scmp.eq.s32.totalorder %s37, 0
    %p274 = por %p272, %p273
    %s276 = sadd.s32 %s275, 1
    %p279 = scmp.eq.s32.totalorder %s31, 1
    %p280 = scmp.ne.s32.totalorder %s275, %s277
    %p281 = scmp.eq.s32.totalorder %s31, 0
    %p282 = por %p280, %p281
    %p283 = scmp.ne.s32.totalorder %s275, %s277
    %p284 = scmp.eq.s32.totalorder %s36, 1
    %p285 = por %p283, %p284
    %p286 = scmp.ne.s32.totalorder %s277, %s278
    %p287 = scmp.eq.s32.totalorder %s36, 0
    %p288 = por %p286, %p287
    %p289 = scmp.ne.s32.totalorder %s277, %s278
    %p290 = scmp.eq.s32.totalorder %s37, 1
    %p291 = por %p289, %p290
    %p293 = scmp.ne.s32.totalorder %s278, %s292
    %p294 = scmp.eq.s32.totalorder %s37, 0
    %p295 = por %p293, %p294
    %s297 = sadd.s32 %s296, 1
    %p300 = scmp.eq.s32.totalorder %s31, 1
    %p301 = scmp.ne.s32.totalorder %s296, %s298
    %p302 = scmp.eq.s32.totalorder %s31, 0
    %p303 = por %p301, %p302
    %p304 = scmp.ne.s32.totalorder %s296, %s298
    %p305 = scmp.eq.s32.totalorder %s36, 1
    %p306 = por %p304, %p305
    %p307 = scmp.ne.s32.totalorder %s298, %s299
    %p308 = scmp.eq.s32.totalorder %s36, 0
    %p309 = por %p307, %p308
    %p310 = scmp.ne.s32.totalorder %s298, %s299
    %p311 = scmp.eq.s32.totalorder %s37, 1
    %p312 = por %p310, %p311
    %p314 = scmp.ne.s32.totalorder %s299, %s313
    %p315 = scmp.eq.s32.totalorder %s37, 0
    %p316 = por %p314, %p315
    %s318 = sadd.s32 %s317, 1
    %p321 = scmp.eq.s32.totalorder %s31, 1
    %p322 = scmp.ne.s32.totalorder %s317, %s319
    %p323 = scmp.eq.s32.totalorder %s31, 0
    %p324 = por %p322, %p323
    %p325 = scmp.ne.s32.totalorder %s317, %s319
    %p326 = scmp.eq.s32.totalorder %s36, 1
    %p327 = por %p325, %p326
    %p328 = scmp.ne.s32.totalorder %s319, %s320
    %p329 = scmp.eq.s32.totalorder %s36, 0
    %p330 = por %p328, %p329
    %p331 = scmp.ne.s32.totalorder %s319, %s320
    %p332 = scmp.eq.s32.totalorder %s37, 1
    %p333 = por %p331, %p332
    %p335 = scmp.ne.s32.totalorder %s320, %s334
    %p336 = scmp.eq.s32.totalorder %s37, 0
    %p337 = por %p335, %p336
    %s339 = sadd.s32 %s338, 1
    %p342 = scmp.eq.s32.totalorder %s31, 1
    %p343 = scmp.ne.s32.totalorder %s338, %s340
    %p344 = scmp.eq.s32.totalorder %s31, 0
    %p345 = por %p343, %p344
    %p346 = scmp.ne.s32.totalorder %s338, %s340
    %p347 = scmp.eq.s32.totalorder %s36, 1
    %p348 = por %p346, %p347
    %p349 = scmp.ne.s32.totalorder %s340, %s341
    %p350 = scmp.eq.s32.totalorder %s36, 0
    %p351 = por %p349, %p350
    %p352 = scmp.ne.s32.totalorder %s340, %s341
    %p353 = scmp.eq.s32.totalorder %s37, 1
    %p354 = por %p352, %p353
    %p356 = scmp.ne.s32.totalorder %s341, %s355
    %p357 = scmp.eq.s32.totalorder %s37, 0
    %p358 = por %p356, %p357
    %s360 = sadd.s32 %s359, 1
    %p363 = scmp.eq.s32.totalorder %s31, 1
    %p364 = scmp.ne.s32.totalorder %s359, %s361
    %p365 = scmp.eq.s32.totalorder %s31, 0
    %p366 = por %p364, %p365
    %p367 = scmp.ne.s32.totalorder %s359, %s361
    %p368 = scmp.eq.s32.totalorder %s36, 1
    %p369 = por %p367, %p368
    %p370 = scmp.ne.s32.totalorder %s361, %s362
    %p371 = scmp.eq.s32.totalorder %s36, 0
    %p372 = por %p370, %p371
    %p373 = scmp.ne.s32.totalorder %s361, %s362
    %p374 = scmp.eq.s32.totalorder %s37, 1
    %p375 = por %p373, %p374
    %p377 = scmp.ne.s32.totalorder %s362, %s376
    %p378 = scmp.eq.s32.totalorder %s37, 0
    %p379 = por %p377, %p378
    %s381 = sadd.s32 %s380, 1
    %p384 = scmp.eq.s32.totalorder %s31, 1
    %p385 = scmp.ne.s32.totalorder %s380, %s382
    %p386 = scmp.eq.s32.totalorder %s31, 0
    %p387 = por %p385, %p386
    %p388 = scmp.ne.s32.totalorder %s380, %s382
    %p389 = scmp.eq.s32.totalorder %s36, 1
    %p390 = por %p388, %p389
    %p391 = scmp.ne.s32.totalorder %s382, %s383
    %p392 = scmp.eq.s32.totalorder %s36, 0
    %p393 = por %p391, %p392
    %p394 = scmp.ne.s32.totalorder %s382, %s383
    %p395 = scmp.eq.s32.totalorder %s37, 1
    %p396 = por %p394, %p395
    %p398 = scmp.ne.s32.totalorder %s383, %s397
    %p399 = scmp.eq.s32.totalorder %s37, 0
    %p400 = por %p398, %p399
    %s402 = sadd.s32 %s401, 1
    %p405 = scmp.eq.s32.totalorder %s31, 1
    %p406 = scmp.ne.s32.totalorder %s401, %s403
    %p407 = scmp.eq.s32.totalorder %s31, 0
    %p408 = por %p406, %p407
    %p409 = scmp.ne.s32.totalorder %s401, %s403
    %p410 = scmp.eq.s32.totalorder %s36, 1
    %p411 = por %p409, %p410
    %p412 = scmp.ne.s32.totalorder %s403, %s404
    %p413 = scmp.eq.s32.totalorder %s36, 0
    %p414 = por %p412, %p413
    %p415 = scmp.ne.s32.totalorder %s403, %s404
    %p416 = scmp.eq.s32.totalorder %s37, 1
    %p417 = por %p415, %p416
    %p419 = scmp.ne.s32.totalorder %s404, %s418
    %p420 = scmp.eq.s32.totalorder %s37, 0
    %p421 = por %p419, %p420
    %s423 = sadd.s32 %s422, 1
    %p426 = scmp.eq.s32.totalorder %s31, 1
    %p427 = scmp.ne.s32.totalorder %s422, %s424
    %p428 = scmp.eq.s32.totalorder %s31, 0
    %p429 = por %p427, %p428
    %p430 = scmp.ne.s32.totalorder %s422, %s424
    %p431 = scmp.eq.s32.totalorder %s36, 1
    %p432 = por %p430, %p431
    %p433 = scmp.ne.s32.totalorder %s424, %s425
    %p434 = scmp.eq.s32.totalorder %s36, 0
    %p435 = por %p433, %p434
    %p436 = scmp.ne.s32.totalorder %s424, %s425
    %p437 = scmp.eq.s32.totalorder %s37, 1
    %p438 = por %p436, %p437
    %p440 = scmp.ne.s32.totalorder %s425, %s439
    %p441 = scmp.eq.s32.totalorder %s37, 0
    %p442 = por %p440, %p441
    %s444 = sadd.s32 %s443, 1
    %p447 = scmp.eq.s32.totalorder %s31, 1
    %p448 = scmp.ne.s32.totalorder %s443, %s445
    %p449 = scmp.eq.s32.totalorder %s31, 0
    %p450 = por %p448, %p449
    %p451 = scmp.ne.s32.totalorder %s443, %s445
    %p452 = scmp.eq.s32.totalorder %s36, 1
    %p453 = por %p451, %p452
    %p454 = scmp.ne.s32.totalorder %s445, %s446
    %p455 = scmp.eq.s32.totalorder %s36, 0
    %p456 = por %p454, %p455
    %p457 = scmp.ne.s32.totalorder %s445, %s446
    %p458 = scmp.eq.s32.totalorder %s37, 1
    %p459 = por %p457, %p458
    %p461 = scmp.ne.s32.totalorder %s446, %s460
    %p462 = scmp.eq.s32.totalorder %s37, 0
    %p463 = por %p461, %p462
    %s465 = sadd.s32 %s464, 1
    %p468 = scmp.eq.s32.totalorder %s31, 1
    %p469 = scmp.ne.s32.totalorder %s464, %s466
    %p470 = scmp.eq.s32.totalorder %s31, 0
    %p471 = por %p469, %p470
    %p472 = scmp.ne.s32.totalorder %s464, %s466
    %p473 = scmp.eq.s32.totalorder %s36, 1
    %p474 = por %p472, %p473
    %p475 = scmp.ne.s32.totalorder %s466, %s467
    %p476 = scmp.eq.s32.totalorder %s36, 0
    %p477 = por %p475, %p476
    %p478 = scmp.ne.s32.totalorder %s466, %s467
    %p479 = scmp.eq.s32.totalorder %s37, 1
    %p480 = por %p478, %p479
    %p482 = scmp.ne.s32.totalorder %s467, %s481
    %p483 = scmp.eq.s32.totalorder %s37, 0
    %p484 = por %p482, %p483
    %s486 = sadd.s32 %s485, 1
    %p489 = scmp.eq.s32.totalorder %s31, 1
    %p490 = scmp.ne.s32.totalorder %s485, %s487
    %p491 = scmp.eq.s32.totalorder %s31, 0
    %p492 = por %p490, %p491
    %p493 = scmp.ne.s32.totalorder %s485, %s487
    %p494 = scmp.eq.s32.totalorder %s36, 1
    %p495 = por %p493, %p494
    %p496 = scmp.ne.s32.totalorder %s487, %s488
    %p497 = scmp.eq.s32.totalorder %s36, 0
    %p498 = por %p496, %p497
    %p499 = scmp.ne.s32.totalorder %s487, %s488
    %p500 = scmp.eq.s32.totalorder %s37, 1
    %p501 = por %p499, %p500
    %p503 = scmp.ne.s32.totalorder %s488, %s502
    %p504 = scmp.eq.s32.totalorder %s37, 0
    %p505 = por %p503, %p504
    %s507 = sadd.s32 %s506, 1
    %p510 = scmp.eq.s32.totalorder %s31, 1
    %p511 = scmp.ne.s32.totalorder %s506, %s508
    %p512 = scmp.eq.s32.totalorder %s31, 0
    %p513 = por %p511, %p512
    %p514 = scmp.ne.s32.totalorder %s506, %s508
    %p515 = scmp.eq.s32.totalorder %s36, 1
    %p516 = por %p514, %p515
    %p517 = scmp.ne.s32.totalorder %s508, %s509
    %p518 = scmp.eq.s32.totalorder %s36, 0
    %p519 = por %p517, %p518
    %p520 = scmp.ne.s32.totalorder %s508, %s509
    %p521 = scmp.eq.s32.totalorder %s37, 1
    %p522 = por %p520, %p521
    %p524 = scmp.ne.s32.totalorder %s509, %s523
    %p525 = scmp.eq.s32.totalorder %s37, 0
    %p526 = por %p524, %p525
    %s528 = sadd.s32 %s527, 1
    %p531 = scmp.eq.s32.totalorder %s31, 1
    %p532 = scmp.ne.s32.totalorder %s527, %s529
    %p533 = scmp.eq.s32.totalorder %s31, 0
    %p534 = por %p532, %p533
    %p535 = scmp.ne.s32.totalorder %s527, %s529
    %p536 = scmp.eq.s32.totalorder %s36, 1
    %p537 = por %p535, %p536
    %p538 = scmp.ne.s32.totalorder %s529, %s530
    %p539 = scmp.eq.s32.totalorder %s36, 0
    %p540 = por %p538, %p539
    %p541 = scmp.ne.s32.totalorder %s529, %s530
    %p542 = scmp.eq.s32.totalorder %s37, 1
    %p543 = por %p541, %p542
    %p545 = scmp.ne.s32.totalorder %s530, %s544
    %p546 = scmp.eq.s32.totalorder %s37, 0
    %p547 = por %p545, %p546
    %s549 = sadd.s32 %s548, 1
    %p552 = scmp.eq.s32.totalorder %s31, 1
    %p553 = scmp.ne.s32.totalorder %s548, %s550
    %p554 = scmp.eq.s32.totalorder %s31, 0
    %p555 = por %p553, %p554
    %p556 = scmp.ne.s32.totalorder %s548, %s550
    %p557 = scmp.eq.s32.totalorder %s36, 1
    %p558 = por %p556, %p557
    %p559 = scmp.ne.s32.totalorder %s550, %s551
    %p560 = scmp.eq.s32.totalorder %s36, 0
    %p561 = por %p559, %p560
    %p562 = scmp.ne.s32.totalorder %s550, %s551
    %p563 = scmp.eq.s32.totalorder %s37, 1
    %p564 = por %p562, %p563
    %p566 = scmp.ne.s32.totalorder %s551, %s565
    %p567 = scmp.eq.s32.totalorder %s37, 0
    %p568 = por %p566, %p567
    %s569 = ssub.s32 %s31, %s38
    %p570 = scmp.eq.s32.totalorder %s569, 0
    %s572 = sadd.s32 %s571, 1
    %s573 = scalar_select %p570, %s571, %s572
    %p576 = pneg %p570
    %p577 = scmp.eq.s32.totalorder %s31, 1
    %p578 = por %p576, %p577
    %p579 = scmp.ne.s32.totalorder %s571, %s574
    %p580 = scmp.eq.s32.totalorder %s31, 0
    %p581 = por %p579, %p580
    %p582 = scmp.ne.s32.totalorder %s571, %s574
    %p583 = scmp.eq.s32.totalorder %s36, 1
    %p584 = por %p582, %p583
    %p585 = scmp.ne.s32.totalorder %s574, %s575
    %p586 = scmp.eq.s32.totalorder %s36, 0
    %p587 = por %p585, %p586
    %p588 = scmp.ne.s32.totalorder %s574, %s575
    %p589 = scmp.eq.s32.totalorder %s37, 1
    %p590 = por %p588, %p589
    %p592 = scmp.ne.s32.totalorder %s575, %s591
    %p593 = scmp.eq.s32.totalorder %s37, 0
    %p594 = por %p592, %p593
    %p595 = scmp.le.s32.totalorder 1, %s31
    %p596 = scmp.lt.s32.totalorder %s31, 3
    %p597 = pnand %p595, %p596
    %p598 = pneg %p597
    // Predicated region
    $region9: #{_lambda_.1} parent=5 // pred_check
      _
    $region10: #{_lambda_.1} parent=5 // pred_check_branch
      %600 = sbr.rel (%p597) target = $region12
    $region11: #{_lambda_.1} parent=5 // pred_region
      %s601 = ssub.s32 %s31, 1
      // Predicated region
      $region13: #{_lambda_.1} parent=11 // pred_check
        %p602 = pneg %p78
      $region14: #{_lambda_.1} parent=11 // pred_check_branch
        %604 = sbr.rel (%p602) target = $region16
      $region15: #{_lambda_.1} parent=11 // pred_region
        _
      $region16: #{_lambda_.1} parent=11 // pred_fallthru
        _
      // Predicated region
      $region17: #{_lambda_.1} parent=11 // pred_check
        %p605 = pneg %p99
      $region18: #{_lambda_.1} parent=11 // pred_check_branch
        %607 = sbr.rel (%p605) target = $region20
      $region19: #{_lambda_.1} parent=11 // pred_region
        _
      $region20: #{_lambda_.1} parent=11 // pred_fallthru
        _
      // Predicated region
      $region21: #{_lambda_.1} parent=11 // pred_check
        %p608 = pneg %p120
      $region22: #{_lambda_.1} parent=11 // pred_check_branch
        %610 = sbr.rel (%p608) target = $region24
      $region23: #{_lambda_.1} parent=11 // pred_region
        _
      $region24: #{_lambda_.1} parent=11 // pred_fallthru
        _
      // Predicated region
      $region25: #{_lambda_.1} parent=11 // pred_check
        %p611 = pneg %p141
      $region26: #{_lambda_.1} parent=11 // pred_check_branch
        %613 = sbr.rel (%p611) target = $region28
      $region27: #{_lambda_.1} parent=11 // pred_region
        _
      $region28: #{_lambda_.1} parent=11 // pred_fallthru
        _
      // Predicated region
      $region29: #{_lambda_.1} parent=11 // pred_check
        %p614 = pneg %p162
      $region30: #{_lambda_.1} parent=11 // pred_check_branch
        %616 = sbr.rel (%p614) target = $region32
      $region31: #{_lambda_.1} parent=11 // pred_region
        _
      $region32: #{_lambda_.1} parent=11 // pred_fallthru
        _
      // Predicated region
      $region33: #{_lambda_.1} parent=11 // pred_check
        %p617 = pneg %p183
      $region34: #{_lambda_.1} parent=11 // pred_check_branch
        %619 = sbr.rel (%p617) target = $region36
      $region35: #{_lambda_.1} parent=11 // pred_region
        _
      $region36: #{_lambda_.1} parent=11 // pred_fallthru
        _
      // Predicated region
      $region37: #{_lambda_.1} parent=11 // pred_check
        %p620 = pneg %p204
      $region38: #{_lambda_.1} parent=11 // pred_check_branch
        %622 = sbr.rel (%p620) target = $region40
      $region39: #{_lambda_.1} parent=11 // pred_region
        _
      $region40: #{_lambda_.1} parent=11 // pred_fallthru
        _
      // Predicated region
      $region41: #{_lambda_.1} parent=11 // pred_check
        %p623 = pneg %p225
      $region42: #{_lambda_.1} parent=11 // pred_check_branch
        %625 = sbr.rel (%p623) target = $region44
      $region43: #{_lambda_.1} parent=11 // pred_region
        _
      $region44: #{_lambda_.1} parent=11 // pred_fallthru
        _
      // Predicated region
      $region45: #{_lambda_.1} parent=11 // pred_check
        %p626 = pneg %p246
      $region46: #{_lambda_.1} parent=11 // pred_check_branch
        %628 = sbr.rel (%p626) target = $region48
      $region47: #{_lambda_.1} parent=11 // pred_region
        _
      $region48: #{_lambda_.1} parent=11 // pred_fallthru
        _
      // Predicated region
      $region49: #{_lambda_.1} parent=11 // pred_check
        %p629 = pneg %p267
      $region50: #{_lambda_.1} parent=11 // pred_check_branch
        %631 = sbr.rel (%p629) target = $region52
      $region51: #{_lambda_.1} parent=11 // pred_region
        _
      $region52: #{_lambda_.1} parent=11 // pred_fallthru
        _
      // Predicated region
      $region53: #{_lambda_.1} parent=11 // pred_check
        %p632 = pneg %p288
      $region54: #{_lambda_.1} parent=11 // pred_check_branch
        %634 = sbr.rel (%p632) target = $region56
      $region55: #{_lambda_.1} parent=11 // pred_region
        _
      $region56: #{_lambda_.1} parent=11 // pred_fallthru
        _
      // Predicated region
      $region57: #{_lambda_.1} parent=11 // pred_check
        %p635 = pneg %p309
      $region58: #{_lambda_.1} parent=11 // pred_check_branch
        %637 = sbr.rel (%p635) target = $region60
      $region59: #{_lambda_.1} parent=11 // pred_region
        _
      $region60: #{_lambda_.1} parent=11 // pred_fallthru
        _
      // Predicated region
      $region61: #{_lambda_.1} parent=11 // pred_check
        %p638 = pneg %p330
      $region62: #{_lambda_.1} parent=11 // pred_check_branch
        %640 = sbr.rel (%p638) target = $region64
      $region63: #{_lambda_.1} parent=11 // pred_region
        _
      $region64: #{_lambda_.1} parent=11 // pred_fallthru
        _
      // Predicated region
      $region65: #{_lambda_.1} parent=11 // pred_check
        %p641 = pneg %p351
      $region66: #{_lambda_.1} parent=11 // pred_check_branch
        %643 = sbr.rel (%p641) target = $region68
      $region67: #{_lambda_.1} parent=11 // pred_region
        _
      $region68: #{_lambda_.1} parent=11 // pred_fallthru
        _
      // Predicated region
      $region69: #{_lambda_.1} parent=11 // pred_check
        %p644 = pneg %p372
      $region70: #{_lambda_.1} parent=11 // pred_check_branch
        %646 = sbr.rel (%p644) target = $region72
      $region71: #{_lambda_.1} parent=11 // pred_region
        _
      $region72: #{_lambda_.1} parent=11 // pred_fallthru
        _
      // Predicated region
      $region73: #{_lambda_.1} parent=11 // pred_check
        %p647 = pneg %p393
      $region74: #{_lambda_.1} parent=11 // pred_check_branch
        %649 = sbr.rel (%p647) target = $region76
      $region75: #{_lambda_.1} parent=11 // pred_region
        _
      $region76: #{_lambda_.1} parent=11 // pred_fallthru
        _
      // Predicated region
      $region77: #{_lambda_.1} parent=11 // pred_check
        %p650 = pneg %p414
      $region78: #{_lambda_.1} parent=11 // pred_check_branch
        %652 = sbr.rel (%p650) target = $region80
      $region79: #{_lambda_.1} parent=11 // pred_region
        _
      $region80: #{_lambda_.1} parent=11 // pred_fallthru
        _
      // Predicated region
      $region81: #{_lambda_.1} parent=11 // pred_check
        %p653 = pneg %p435
      $region82: #{_lambda_.1} parent=11 // pred_check_branch
        %655 = sbr.rel (%p653) target = $region84
      $region83: #{_lambda_.1} parent=11 // pred_region
        _
      $region84: #{_lambda_.1} parent=11 // pred_fallthru
        _
      // Predicated region
      $region85: #{_lambda_.1} parent=11 // pred_check
        %p656 = pneg %p456
      $region86: #{_lambda_.1} parent=11 // pred_check_branch
        %658 = sbr.rel (%p656) target = $region88
      $region87: #{_lambda_.1} parent=11 // pred_region
        _
      $region88: #{_lambda_.1} parent=11 // pred_fallthru
        _
      // Predicated region
      $region89: #{_lambda_.1} parent=11 // pred_check
        %p659 = pneg %p477
      $region90: #{_lambda_.1} parent=11 // pred_check_branch
        %661 = sbr.rel (%p659) target = $region92
      $region91: #{_lambda_.1} parent=11 // pred_region
        _
      $region92: #{_lambda_.1} parent=11 // pred_fallthru
        _
      // Predicated region
      $region93: #{_lambda_.1} parent=11 // pred_check
        %p662 = pneg %p498
      $region94: #{_lambda_.1} parent=11 // pred_check_branch
        %664 = sbr.rel (%p662) target = $region96
      $region95: #{_lambda_.1} parent=11 // pred_region
        _
      $region96: #{_lambda_.1} parent=11 // pred_fallthru
        _
      // Predicated region
      $region97: #{_lambda_.1} parent=11 // pred_check
        %p665 = pneg %p519
      $region98: #{_lambda_.1} parent=11 // pred_check_branch
        %667 = sbr.rel (%p665) target = $region100
      $region99: #{_lambda_.1} parent=11 // pred_region
        _
      $region100: #{_lambda_.1} parent=11 // pred_fallthru
        _
      // Predicated region
      $region101: #{_lambda_.1} parent=11 // pred_check
        %p668 = pneg %p540
      $region102: #{_lambda_.1} parent=11 // pred_check_branch
        %670 = sbr.rel (%p668) target = $region104
      $region103: #{_lambda_.1} parent=11 // pred_region
        _
      $region104: #{_lambda_.1} parent=11 // pred_fallthru
        _
      // Predicated region
      $region105: #{_lambda_.1} parent=11 // pred_check
        %p671 = pneg %p561
      $region106: #{_lambda_.1} parent=11 // pred_check_branch
        %673 = sbr.rel (%p671) target = $region108
      $region107: #{_lambda_.1} parent=11 // pred_region
        _
      $region108: #{_lambda_.1} parent=11 // pred_fallthru
        _
    $region12: #{_lambda_.1} parent=5 // pred_fallthru
      _
    %p674 = scmp.lt.s32.totalorder %s31, 2
    // Predicated region
    $region109: #{_lambda_.1} parent=5 // pred_check
      %p675 = pneg %p674
    $region110: #{_lambda_.1} parent=5 // pred_check_branch
      %677 = sbr.rel (%p675) target = $region112
    $region111: #{_lambda_.1} parent=5 // pred_region
      // Predicated region
      $region113: #{_lambda_.1} parent=111 // pred_check
        %p678 = pneg %p51
      $region114: #{_lambda_.1} parent=111 // pred_check_branch
        %680 = sbr.rel (%p678) target = $region116
      $region115: #{_lambda_.1} parent=111 // pred_region
        %p681 = scmp.lt.s32.totalorder %s31, 1
        %s682 = scalar_select %p681, %s31, 1
        %s683 = smul.addr %s682, 16
        %s684 = smul.addr %s683, 4
        %s685 = scalar_lea.vmem %s0, %s684
      $region116: #{_lambda_.1} parent=111 // pred_fallthru
        _
    $region112: #{_lambda_.1} parent=5 // pred_fallthru
      _
    %p686 = scmp.le.s32.totalorder 1, %s31
    %p687 = scmp.lt.s32.totalorder %s31, 3
    %p688 = pnand %p686, %p687
    %p689 = pneg %p688
    // Predicated region
    $region117: #{_lambda_.1} parent=5 // pred_check
      _
    $region118: #{_lambda_.1} parent=5 // pred_check_branch
      %691 = sbr.rel (%p688) target = $region120
    $region119: #{_lambda_.1} parent=5 // pred_region
      %s692 = ssub.s32 %s31, 1
      %p693 = scmp.lt.s32.totalorder %s36, 1
      %s694 = scalar_select %p693, %s36, 1
      %s695 = smul.addr %s694, 16
      %s696 = smul.addr %s695, 4
      %s697 = scalar_lea.vmem %s0, %s696
      %p698 = pneg %p57
      %p699 = pneg %p54
      %p700 = pneg %p78
      %p701 = pneg %p75
      %p702 = pneg %p99
      %p703 = pneg %p96
      %p704 = pneg %p120
      %p705 = pneg %p117
      %p706 = pneg %p141
      %p707 = pneg %p138
      %p708 = pneg %p162
      %p709 = pneg %p159
      %p710 = pneg %p183
      %p711 = pneg %p180
      %p712 = pneg %p204
      %p713 = pneg %p201
      %p714 = pneg %p225
      %p715 = pneg %p222
      %p716 = pneg %p246
      %p717 = pneg %p243
      %p718 = pneg %p267
      %p719 = pneg %p264
      %p720 = pneg %p288
      %p721 = pneg %p285
      %p722 = pneg %p309
      %p723 = pneg %p306
      %p724 = pneg %p330
      %p725 = pneg %p327
      %p726 = pneg %p351
      %p727 = pneg %p348
      %p728 = pneg %p372
      %p729 = pneg %p369
      %p730 = pneg %p393
      %p731 = pneg %p390
      %p732 = pneg %p414
      %p733 = pneg %p411
      %p734 = pneg %p435
      %p735 = pneg %p432
      %p736 = pneg %p456
      %p737 = pneg %p453
      %p738 = pneg %p477
      %p739 = pneg %p474
      %p740 = pneg %p498
      %p741 = pneg %p495
      %p742 = pneg %p519
      %p743 = pneg %p516
      %p744 = pneg %p540
      %p745 = pneg %p537
      %p746 = pneg %p561
      %p747 = pneg %p558
      %p748 = pneg %p587
      %p749 = pneg %p584
      %p750 = scmp.lt.s32.totalorder %s36, 1
      %s751 = scalar_select %p750, %s36, 1
      %s752 = smul.addr %s751, 4
      %s753 = smul.addr %s752, 2
      %s754 = scalar_lea.vmem %s25, %s753
      %p755 = scmp.lt.s32.totalorder %s36, 1
      %s756 = scalar_select %p755, %s36, 1
      %s757 = smul.addr %s756, 16
      %s758 = smul.addr %s757, 4
      %s759 = scalar_lea.vmem %s0, %s758
      %p760 = scmp.lt.s32.totalorder %s36, 1
      %s761 = scalar_select %p760, %s36, 1
      %s762 = smul.addr %s761, 4
      %s763 = smul.addr %s762, 2
      %s764 = scalar_lea.vmem %s25, %s763
      %v766 = vld [vmem:[%s1] sm:$0xf]
      %vm767 = vcmp.gt.f32.partialorder %v766, 0.5
      %v768 = vld [vmem:[%s759] sm:$0xff]
      %v769 = vld [vmem:[%s759 + $0x8] sm:$0xff]
      %v770 = vld [vmem:[%s759 + $0x10] sm:$0xff]
      %v771 = vld [vmem:[%s759 + $0x18] sm:$0xff]
      %v772 = vld [vmem:[%s759 + $0x20] sm:$0xff]
      %v773 = vld [vmem:[%s759 + $0x28] sm:$0xff]
      %v774 = vld [vmem:[%s759 + $0x30] sm:$0xff]
      %v775 = vld [vmem:[%s759 + $0x38] sm:$0xff]
      %v776 = vld [vmem:[%s2] sm:$0xf]
      %v777 = vld [vmem:[%s2 + $0x4] sm:$0xf]
      %v778 = vld [vmem:[%s2 + $0x8] sm:$0xf]
      %v779 = vld [vmem:[%s2 + $0xc] sm:$0xf]
      %v780 = vld [vmem:[%s3] sm:$0xff]
      %v781 = vld [vmem:[%s3 + $0x8] sm:$0xff]
      %v782 = vld [vmem:[%s3 + $0x10] sm:$0xff]
      %v783 = vld [vmem:[%s3 + $0x18] sm:$0xff]
      %785 = vset.pattern.permute.xlu0 0
      %786 = vperm.xlu0 %785, %v780
      %v787 = vpop.permute.xlu0 %786
      %790 = vset.pattern.permute.xlu0 0
      %791 = vperm.xlu0 %790, %v781
      %v792 = vpop.permute.xlu0 %791
      %795 = vset.pattern.permute.xlu0 0
      %796 = vperm.xlu0 %795, %v782
      %v797 = vpop.permute.xlu0 %796
      %800 = vset.pattern.permute.xlu0 0
      %801 = vperm.xlu0 %800, %v783
      %v802 = vpop.permute.xlu0 %801
      %v808 = vunpack.c.l.b16 %v776
      %v809 = vunpack.c.l.b16 %v777
      %v810 = vunpack.c.l.b16 %v778
      %v811 = vunpack.c.l.b16 %v779
      %v812 = vpack.c.b16 %v809, %v808
      %v813 = vpack.c.b16 %v811, %v810
      %v822 = vunpack.c.l.b16 %v768
      %v823 = vunpack.c.h.b16 %v768
      %v824 = vunpack.c.l.b16 %v769
      %v825 = vunpack.c.h.b16 %v769
      %v826 = vunpack.c.l.b16 %v770
      %v827 = vunpack.c.h.b16 %v770
      %v828 = vunpack.c.l.b16 %v771
      %v829 = vunpack.c.h.b16 %v771
      %v830 = vunpack.c.l.b16 %v772
      %v831 = vunpack.c.h.b16 %v772
      %v832 = vunpack.c.l.b16 %v773
      %v833 = vunpack.c.h.b16 %v773
      %v834 = vunpack.c.l.b16 %v774
      %v835 = vunpack.c.h.b16 %v774
      %v836 = vunpack.c.l.b16 %v775
      %v837 = vunpack.c.h.b16 %v775
      %v838 = vpack.c.b16 %v826, %v822
      %v839 = vpack.c.b16 %v827, %v823
      %v840 = vpack.c.b16 %v828, %v824
      %v841 = vpack.c.b16 %v829, %v825
      %v842 = vpack.c.b16 %v834, %v830
      %v843 = vpack.c.b16 %v835, %v831
      %v844 = vpack.c.b16 %v836, %v832
      %v845 = vpack.c.b16 %v837, %v833
      %vm854 = vcmask 261120
      %v856 = vsel %vm854, %v812, 0
      %v859 = vsel %vm854, %v813, 0
      %861 = vmatprep.subr.bf16.mxu0 %v839
      %862 = vmatpush1.bf16.msra.mxu0 %v838
      %863 = vmatprep.subr.bf16.mxu0 %v843
      %864 = vmatpush1.bf16.msra.mxu0 %v842
      %865 = vmatprep.subr.bf16.mxu0 0
      %866 = vmatpush1.bf16.msra.mxu0 0
      %867 = vmatprep.subr.bf16.mxu0 0
      %868 = vmatpush1.bf16.msra.mxu0 0
      %869 = vmatprep.subr.bf16.mxu0 0
      %870 = vmatpush1.bf16.msra.mxu0 0
      %871 = vmatprep.subr.bf16.mxu0 0
      %872 = vmatpush1.bf16.msra.mxu0 0
      %873 = vmatprep.subr.bf16.mxu0 0
      %874 = vmatpush1.bf16.msra.mxu0 0
      %875 = vmatprep.subr.bf16.mxu0 0
      %876 = vmatpush1.bf16.msra.mxu0 0
      %877 = vmatprep.subr.bf16.mxu0 0
      %878 = vmatpush1.bf16.msra.mxu0 0
      %879 = vmatprep.subr.bf16.mxu0 0
      %880 = vmatpush1.bf16.msra.mxu0 0
      %881 = vmatprep.subr.bf16.mxu0 0
      %882 = vmatpush1.bf16.msra.mxu0 0
      %883 = vmatprep.subr.bf16.mxu0 0
      %884 = vmatpush1.bf16.msra.mxu0 0
      %885 = vmatprep.subr.bf16.mxu0 0
      %886 = vmatpush1.bf16.msra.mxu0 0
      %887 = vmatprep.subr.bf16.mxu0 0
      %888 = vmatpush1.bf16.msra.mxu0 0
      %889 = vmatprep.subr.bf16.mxu0 0
      %890 = vmatpush1.bf16.msra.mxu0 0
      %891 = vmatprep.subr.bf16.mxu0 0
      %892 = vmatpush1.bf16.msra.mxu0 0
      %893 = vmatprep.mubr.bf16.mxu0 0
      %894 = vmatmul.mubr.bf16.gmra.mrb[0].mxu0 %v856
      %v895 = vpop.f32.mrb[0].mxu0
      %v896 = vadd.f32 %v787, %v895
      %v897 = vpop.f32.mrb[0].mxu0
      %v898 = vadd.f32 %v787, %v897
      %v899 = vpop.f32.mrb[0].mxu0
      %v900 = vadd.f32 %v792, %v899
      %v901 = vpop.f32.mrb[0].mxu0
      %v902 = vadd.f32 %v792, %v901
      %903 = vmatprep.mubr.bf16.mxu0 0
      %904 = vmatmul.mubr.bf16.gmra.mrb[0].mxu0 %v859
      %v905 = vpop.f32.mrb[0].mxu0
      %v906 = vadd.f32 %v797, %v905
      %v907 = vpop.f32.mrb[0].mxu0
      %v908 = vadd.f32 %v797, %v907
      %v909 = vpop.f32.mrb[0].mxu0
      %v910 = vadd.f32 %v802, %v909
      %v911 = vpop.f32.mrb[0].mxu0
      %v912 = vadd.f32 %v802, %v911
      %913 = vdwg.mxu0
      %914 = vmatprep.subr.bf16.mxu0 %v841
      %915 = vmatpush1.bf16.msra.mxu0 %v840
      %916 = vmatprep.subr.bf16.mxu0 %v845
      %917 = vmatpush1.bf16.msra.mxu0 %v844
      %918 = vmatprep.subr.bf16.mxu0 0
      %919 = vmatpush1.bf16.msra.mxu0 0
      %920 = vmatprep.subr.bf16.mxu0 0
      %921 = vmatpush1.bf16.msra.mxu0 0
      %922 = vmatprep.subr.bf16.mxu0 0
      %923 = vmatpush1.bf16.msra.mxu0 0
      %924 = vmatprep.subr.bf16.mxu0 0
      %925 = vmatpush1.bf16.msra.mxu0 0
      %926 = vmatprep.subr.bf16.mxu0 0
      %927 = vmatpush1.bf16.msra.mxu0 0
      %928 = vmatprep.subr.bf16.mxu0 0
      %929 = vmatpush1.bf16.msra.mxu0 0
      %930 = vmatprep.subr.bf16.mxu0 0
      %931 = vmatpush1.bf16.msra.mxu0 0
      %932 = vmatprep.subr.bf16.mxu0 0
      %933 = vmatpush1.bf16.msra.mxu0 0
      %934 = vmatprep.subr.bf16.mxu0 0
      %935 = vmatpush1.bf16.msra.mxu0 0
      %936 = vmatprep.subr.bf16.mxu0 0
      %937 = vmatpush1.bf16.msra.mxu0 0
      %938 = vmatprep.subr.bf16.mxu0 0
      %939 = vmatpush1.bf16.msra.mxu0 0
      %940 = vmatprep.subr.bf16.mxu0 0
      %941 = vmatpush1.bf16.msra.mxu0 0
      %942 = vmatprep.subr.bf16.mxu0 0
      %943 = vmatpush1.bf16.msra.mxu0 0
      %944 = vmatprep.subr.bf16.mxu0 0
      %945 = vmatpush1.bf16.msra.mxu0 0
      %946 = vmatprep.mubr.bf16.mxu0 0
      %947 = vmatmul.mubr.bf16.gmra.mrb[0].mxu0 %v856
      %v948 = vpop.f32.mrb[0].mxu0
      %v949 = vadd.f32 %v787, %v948
      %v950 = vpop.f32.mrb[0].mxu0
      %v951 = vadd.f32 %v787, %v950
      %v952 = vpop.f32.mrb[0].mxu0
      %v953 = vadd.f32 %v792, %v952
      %v954 = vpop.f32.mrb[0].mxu0
      %v955 = vadd.f32 %v792, %v954
      %956 = vmatprep.mubr.bf16.mxu0 0
      %957 = vmatmul.mubr.bf16.gmra.mrb[0].mxu0 %v859
      %v958 = vpop.f32.mrb[0].mxu0
      %v959 = vadd.f32 %v797, %v958
      %v960 = vpop.f32.mrb[0].mxu0
      %v961 = vadd.f32 %v797, %v960
      %v962 = vpop.f32.mrb[0].mxu0
      %v963 = vadd.f32 %v802, %v962
      %v964 = vpop.f32.mrb[0].mxu0
      %v965 = vadd.f32 %v802, %v964
      %966 = vdwg.mxu0
      %vm967 = vcmp.ge.f32.partialorder %v896, 0.0
      %vm968 = vcmp.ge.f32.partialorder %v898, 0.0
      %vm969 = vcmp.ge.f32.partialorder %v949, 0.0
      %vm970 = vcmp.ge.f32.partialorder %v951, 0.0
      %vm971 = vcmp.ge.f32.partialorder %v900, 0.0
      %vm972 = vcmp.ge.f32.partialorder %v902, 0.0
      %vm973 = vcmp.ge.f32.partialorder %v953, 0.0
      %vm974 = vcmp.ge.f32.partialorder %v955, 0.0
      %vm975 = vcmp.ge.f32.partialorder %v906, 0.0
      %vm976 = vcmp.ge.f32.partialorder %v908, 0.0
      %vm977 = vcmp.ge.f32.partialorder %v959, 0.0
      %vm978 = vcmp.ge.f32.partialorder %v961, 0.0
      %vm979 = vcmp.ge.f32.partialorder %v910, 0.0
      %vm980 = vcmp.ge.f32.partialorder %v912, 0.0
      %vm981 = vcmp.ge.f32.partialorder %v963, 0.0
      %vm982 = vcmp.ge.f32.partialorder %v965, 0.0
      %v983 = vmul.f32 %v896, 0.01
      %v984 = vmul.f32 %v898, 0.01
      %v985 = vmul.f32 %v949, 0.01
      %v986 = vmul.f32 %v951, 0.01
      %v987 = vmul.f32 %v900, 0.01
      %v988 = vmul.f32 %v902, 0.01
      %v989 = vmul.f32 %v953, 0.01
      %v990 = vmul.f32 %v955, 0.01
      %v991 = vmul.f32 %v906, 0.01
      %v992 = vmul.f32 %v908, 0.01
      %v993 = vmul.f32 %v959, 0.01
      %v994 = vmul.f32 %v961, 0.01
      %v995 = vmul.f32 %v910, 0.01
      %v996 = vmul.f32 %v912, 0.01
      %v997 = vmul.f32 %v963, 0.01
      %v998 = vmul.f32 %v965, 0.01
      %v999 = vsel %vm967, %v896, %v983
      %v1000 = vsel %vm968, %v898, %v984
      %v1001 = vsel %vm969, %v949, %v985
      %v1002 = vsel %vm970, %v951, %v986
      %v1003 = vsel %vm971, %v900, %v987
      %v1004 = vsel %vm972, %v902, %v988
      %v1005 = vsel %vm973, %v953, %v989
      %v1006 = vsel %vm974, %v955, %v990
      %v1007 = vsel %vm975, %v906, %v991
      %v1008 = vsel %vm976, %v908, %v992
      %v1009 = vsel %vm977, %v959, %v993
      %v1010 = vsel %vm978, %v961, %v994
      %v1011 = vsel %vm979, %v910, %v995
      %v1012 = vsel %vm980, %v912, %v996
      %v1013 = vsel %vm981, %v963, %v997
      %v1014 = vsel %vm982, %v965, %v998
      %v1015 = vld [vmem:[%s4] sm:$0xff]
      %v1016 = vld [vmem:[%s4 + $0x8] sm:$0xff]
      %v1017 = vld [vmem:[%s4 + $0x10] sm:$0xff]
      %v1018 = vld [vmem:[%s4 + $0x18] sm:$0xff]
      %v1019 = vld [vmem:[%s5] sm:$0xff]
      %v1020 = vld [vmem:[%s5 + $0x8] sm:$0xff]
      %v1021 = vld [vmem:[%s5 + $0x10] sm:$0xff]
      %v1022 = vld [vmem:[%s5 + $0x18] sm:$0xff]
      %1024 = vset.pattern.permute.xlu0 0
      %1025 = vperm.xlu0 %1024, %v1015
      %v1026 = vpop.permute.xlu0 %1025
      %1029 = vset.pattern.permute.xlu0 0
      %1030 = vperm.xlu0 %1029, %v1016
      %v1031 = vpop.permute.xlu0 %1030
      %1034 = vset.pattern.permute.xlu0 0
      %1035 = vperm.xlu0 %1034, %v1017
      %v1036 = vpop.permute.xlu0 %1035
      %1039 = vset.pattern.permute.xlu0 0
      %1040 = vperm.xlu0 %1039, %v1018
      %v1041 = vpop.permute.xlu0 %1040
      %v1043 = vmul.f32 %v999, %v1026
      %v1044 = vmul.f32 %v1000, %v1026
      %v1045 = vmul.f32 %v1001, %v1026
      %v1046 = vmul.f32 %v1002, %v1026
      %v1047 = vmul.f32 %v1003, %v1031
      %v1048 = vmul.f32 %v1004, %v1031
      %v1049 = vmul.f32 %v1005, %v1031
      %v1050 = vmul.f32 %v1006, %v1031
      %v1051 = vmul.f32 %v1007, %v1036
      %v1052 = vmul.f32 %v1008, %v1036
      %v1053 = vmul.f32 %v1009, %v1036
      %v1054 = vmul.f32 %v1010, %v1036
      %v1055 = vmul.f32 %v1011, %v1041
      %v1056 = vmul.f32 %v1012, %v1041
      %v1057 = vmul.f32 %v1013, %v1041
      %v1058 = vmul.f32 %v1014, %v1041
      %1060 = vset.pattern.permute.xlu0 0
      %1061 = vperm.xlu0 %1060, %v1019
      %v1062 = vpop.permute.xlu0 %1061
      %1065 = vset.pattern.permute.xlu0 0
      %1066 = vperm.xlu0 %1065, %v1020
      %v1067 = vpop.permute.xlu0 %1066
      %1070 = vset.pattern.permute.xlu0 0
      %1071 = vperm.xlu0 %1070, %v1021
      %v1072 = vpop.permute.xlu0 %1071
      %1075 = vset.pattern.permute.xlu0 0
      %1076 = vperm.xlu0 %1075, %v1022
      %v1077 = vpop.permute.xlu0 %1076
      %v1079 = vadd.f32 %v1043, %v1062
      %v1080 = vadd.f32 %v1044, %v1062
      %v1081 = vadd.f32 %v1045, %v1062
      %v1082 = vadd.f32 %v1046, %v1062
      %v1083 = vadd.f32 %v1047, %v1067
      %v1084 = vadd.f32 %v1048, %v1067
      %v1085 = vadd.f32 %v1049, %v1067
      %v1086 = vadd.f32 %v1050, %v1067
      %v1087 = vadd.f32 %v1051, %v1072
      %v1088 = vadd.f32 %v1052, %v1072
      %v1089 = vadd.f32 %v1053, %v1072
      %v1090 = vadd.f32 %v1054, %v1072
      %v1091 = vadd.f32 %v1055, %v1077
      %v1092 = vadd.f32 %v1056, %v1077
      %v1093 = vadd.f32 %v1057, %v1077
      %v1094 = vadd.f32 %v1058, %v1077
      %v1095 = vsel %vm767, 1, 0
      %v1096 = vlaneseq
      %v1097 = vshrl.u32 %v1096, 7
      %v1098 = vsub.s32 0, %v1097
      %v1099 = vrot.slane %v1095, %v1098
      %v1100 = vlaneseq
      %v1101 = vshrl.u32 %v1100, 7
      %v1102 = vsub.s32 1, %v1101
      %v1103 = vrot.slane %v1095, %v1102
      %v1104 = vlaneseq
      %v1105 = vshrl.u32 %v1104, 7
      %v1106 = vsub.s32 2, %v1105
      %v1107 = vrot.slane %v1095, %v1106
      %v1108 = vlaneseq
      %v1109 = vshrl.u32 %v1108, 7
      %v1110 = vsub.s32 3, %v1109
      %v1111 = vrot.slane %v1095, %v1110
      %vm1112 = vcmp.eq.s32.totalorder %v1099, 1
      %vm1113 = vcmp.eq.s32.totalorder %v1103, 1
      %vm1114 = vcmp.eq.s32.totalorder %v1107, 1
      %vm1115 = vcmp.eq.s32.totalorder %v1111, 1
      %v1116 = vsel %vm1112, %v1079, 0.0
      %v1117 = vsel %vm1113, %v1080, 0.0
      %v1118 = vsel %vm1114, %v1081, 0.0
      %v1119 = vsel %vm1115, %v1082, 0.0
      %v1120 = vsel %vm1112, %v1083, 0.0
      %v1121 = vsel %vm1113, %v1084, 0.0
      %v1122 = vsel %vm1114, %v1085, 0.0
      %v1123 = vsel %vm1115, %v1086, 0.0
      %v1124 = vsel %vm1112, %v1087, 0.0
      %v1125 = vsel %vm1113, %v1088, 0.0
      %v1126 = vsel %vm1114, %v1089, 0.0
      %v1127 = vsel %vm1115, %v1090, 0.0
      %v1128 = vsel %vm1112, %v1091, 0.0
      %v1129 = vsel %vm1113, %v1092, 0.0
      %v1130 = vsel %vm1114, %v1093, 0.0
      %v1131 = vsel %vm1115, %v1094, 0.0
      %v1132 = vpack.c.bf16 %v1120, %v1116
      %v1133 = vpack.c.bf16 %v1121, %v1117
      %v1134 = vpack.c.bf16 %v1122, %v1118
      %v1135 = vpack.c.bf16 %v1123, %v1119
      %v1136 = vpack.c.bf16 %v1128, %v1124
      %v1137 = vpack.c.bf16 %v1129, %v1125
      %v1138 = vpack.c.bf16 %v1130, %v1126
      %v1139 = vpack.c.bf16 %v1131, %v1127
      %v1140 = vld [vmem:[%s6] sm:$0xff]
      %v1141 = vld [vmem:[%s6 + $0x8] sm:$0xf]
      %v1142 = vld [vmem:[%s6 + $0xc] sm:$0xff]
      %v1143 = vld [vmem:[%s6 + $0x14] sm:$0xf]
      %v1144 = vld [vmem:[%s6 + $0x18] sm:$0xff]
      %v1145 = vld [vmem:[%s6 + $0x20] sm:$0xf]
      %v1146 = vld [vmem:[%s6 + $0x24] sm:$0xff]
      %v1147 = vld [vmem:[%s6 + $0x2c] sm:$0xf]
      %1156 = vrot.lane.b32.xlu0 %v1132, 42
      %v1157 = vpop.permute.xlu0 %1156
      %1158 = vrot.lane.b32.xlu0 %v1133, 42
      %v1159 = vpop.permute.xlu0 %1158
      %1160 = vrot.lane.b32.xlu0 %v1134, 42
      %v1161 = vpop.permute.xlu0 %1160
      %1162 = vrot.lane.b32.xlu0 %v1135, 42
      %v1163 = vpop.permute.xlu0 %1162
      %1164 = vrot.lane.b32.xlu0 %v1136, 42
      %v1165 = vpop.permute.xlu0 %1164
      %1166 = vrot.lane.b32.xlu0 %v1137, 42
      %v1167 = vpop.permute.xlu0 %1166
      %1168 = vrot.lane.b32.xlu0 %v1138, 42
      %v1169 = vpop.permute.xlu0 %1168
      %1170 = vrot.lane.b32.xlu0 %v1139, 42
      %v1171 = vpop.permute.xlu0 %1170
      %vm1172 = vcmask 343040
      %v1173 = vsel %vm1172, %v1157, %v1159
      %v1174 = vsel %vm1172, %v1159, %v1161
      %v1175 = vsel %vm1172, %v1161, %v1163
      %v1176 = vsel %vm1172, %v1165, %v1167
      %v1177 = vsel %vm1172, %v1167, %v1169
      %v1178 = vsel %vm1172, %v1169, %v1171
      %vm1179 = vcmask 343040
      %v1182 = vsel %vm1179, 0, %v1157
      %v1184 = vsel %vm1179, 0, %v1165
      %vm1185 = vcmask 474112
      %v1187 = vsel %vm1185, %v1175, 0
      %v1189 = vsel %vm1185, %v1178, 0
      %1194 = vrot.lane.b32.xlu0 %v1182, 127
      %v1195 = vpop.permute.xlu0 %1194
      %1196 = vrot.lane.b32.xlu0 %v1173, 127
      %v1197 = vpop.permute.xlu0 %1196
      %1198 = vrot.lane.b32.xlu0 %v1174, 127
      %v1199 = vpop.permute.xlu0 %1198
      %1200 = vrot.lane.b32.xlu0 %v1187, 127
      %v1201 = vpop.permute.xlu0 %1200
      %1202 = vrot.lane.b32.xlu0 %v1184, 127
      %v1203 = vpop.permute.xlu0 %1202
      %1204 = vrot.lane.b32.xlu0 %v1176, 127
      %v1205 = vpop.permute.xlu0 %1204
      %1206 = vrot.lane.b32.xlu0 %v1177, 127
      %v1207 = vpop.permute.xlu0 %1206
      %1208 = vrot.lane.b32.xlu0 %v1189, 127
      %v1209 = vpop.permute.xlu0 %1208
      %vm1210 = vcmask 1039360
      %v1211 = vsel %vm1210, %v1195, %v1197
      %v1212 = vsel %vm1210, %v1197, %v1199
      %v1213 = vsel %vm1210, %v1199, %v1201
      %v1214 = vsel %vm1210, %v1203, %v1205
      %v1215 = vsel %vm1210, %v1205, %v1207
      %v1216 = vsel %vm1210, %v1207, %v1209
      %1217 = vrot.lane.b32.xlu0 %v1182, 126
      %v1218 = vpop.permute.xlu0 %1217
      %1219 = vrot.lane.b32.xlu0 %v1173, 126
      %v1220 = vpop.permute.xlu0 %1219
      %1221 = vrot.lane.b32.xlu0 %v1174, 126
      %v1222 = vpop.permute.xlu0 %1221
      %1223 = vrot.lane.b32.xlu0 %v1187, 126
      %v1224 = vpop.permute.xlu0 %1223
      %1225 = vrot.lane.b32.xlu0 %v1184, 126
      %v1226 = vpop.permute.xlu0 %1225
      %1227 = vrot.lane.b32.xlu0 %v1176, 126
      %v1228 = vpop.permute.xlu0 %1227
      %1229 = vrot.lane.b32.xlu0 %v1177, 126
      %v1230 = vpop.permute.xlu0 %1229
      %1231 = vrot.lane.b32.xlu0 %v1189, 126
      %v1232 = vpop.permute.xlu0 %1231
      %vm1233 = vcmask 1031168
      %v1234 = vsel %vm1233, %v1218, %v1220
      %v1235 = vsel %vm1233, %v1220, %v1222
      %v1236 = vsel %vm1233, %v1222, %v1224
      %v1237 = vsel %vm1233, %v1226, %v1228
      %v1238 = vsel %vm1233, %v1228, %v1230
      %v1239 = vsel %vm1233, %v1230, %v1232
      %1240 = vrot.lane.b32.xlu0 %v1182, 108
      %v1241 = vpop.permute.xlu0 %1240
      %1242 = vrot.lane.b32.xlu0 %v1173, 108
      %v1243 = vpop.permute.xlu0 %1242
      %1244 = vrot.lane.b32.xlu0 %v1174, 108
      %v1245 = vpop.permute.xlu0 %1244
      %1246 = vrot.lane.b32.xlu0 %v1187, 108
      %v1247 = vpop.permute.xlu0 %1246
      %1248 = vrot.lane.b32.xlu0 %v1184, 108
      %v1249 = vpop.permute.xlu0 %1248
      %1250 = vrot.lane.b32.xlu0 %v1176, 108
      %v1251 = vpop.permute.xlu0 %1250
      %1252 = vrot.lane.b32.xlu0 %v1177, 108
      %v1253 = vpop.permute.xlu0 %1252
      %1254 = vrot.lane.b32.xlu0 %v1189, 108
      %v1255 = vpop.permute.xlu0 %1254
      %vm1256 = vcmask 883712
      %v1257 = vsel %vm1256, %v1241, %v1243
      %v1258 = vsel %vm1256, %v1243, %v1245
      %v1259 = vsel %vm1256, %v1245, %v1247
      %v1260 = vsel %vm1256, %v1249, %v1251
      %v1261 = vsel %vm1256, %v1251, %v1253
      %v1262 = vsel %vm1256, %v1253, %v1255
      %1263 = vrot.lane.b32.xlu0 %v1182, 107
      %v1264 = vpop.permute.xlu0 %1263
      %1265 = vrot.lane.b32.xlu0 %v1173, 107
      %v1266 = vpop.permute.xlu0 %1265
      %1267 = vrot.lane.b32.xlu0 %v1174, 107
      %v1268 = vpop.permute.xlu0 %1267
      %1269 = vrot.lane.b32.xlu0 %v1187, 107
      %v1270 = vpop.permute.xlu0 %1269
      %1271 = vrot.lane.b32.xlu0 %v1184, 107
      %v1272 = vpop.permute.xlu0 %1271
      %1273 = vrot.lane.b32.xlu0 %v1176, 107
      %v1274 = vpop.permute.xlu0 %1273
      %1275 = vrot.lane.b32.xlu0 %v1177, 107
      %v1276 = vpop.permute.xlu0 %1275
      %1277 = vrot.lane.b32.xlu0 %v1189, 107
      %v1278 = vpop.permute.xlu0 %1277
      %vm1279 = vcmask 875520
      %v1280 = vsel %vm1279, %v1264, %v1266
      %v1281 = vsel %vm1279, %v1266, %v1268
      %v1282 = vsel %vm1279, %v1268, %v1270
      %v1283 = vsel %vm1279, %v1272, %v1274
      %v1284 = vsel %vm1279, %v1274, %v1276
      %v1285 = vsel %vm1279, %v1276, %v1278
      %1286 = vrot.lane.b32.xlu0 %v1182, 106
      %v1287 = vpop.permute.xlu0 %1286
      %1288 = vrot.lane.b32.xlu0 %v1173, 106
      %v1289 = vpop.permute.xlu0 %1288
      %1290 = vrot.lane.b32.xlu0 %v1174, 106
      %v1291 = vpop.permute.xlu0 %1290
      %1292 = vrot.lane.b32.xlu0 %v1187, 106
      %v1293 = vpop.permute.xlu0 %1292
      %1294 = vrot.lane.b32.xlu0 %v1184, 106
      %v1295 = vpop.permute.xlu0 %1294
      %1296 = vrot.lane.b32.xlu0 %v1176, 106
      %v1297 = vpop.permute.xlu0 %1296
      %1298 = vrot.lane.b32.xlu0 %v1177, 106
      %v1299 = vpop.permute.xlu0 %1298
      %1300 = vrot.lane.b32.xlu0 %v1189, 106
      %v1301 = vpop.permute.xlu0 %1300
      %vm1302 = vcmask 867328
      %v1303 = vsel %vm1302, %v1287, %v1289
      %v1304 = vsel %vm1302, %v1289, %v1291
      %v1305 = vsel %vm1302, %v1291, %v1293
      %v1306 = vsel %vm1302, %v1295, %v1297
      %v1307 = vsel %vm1302, %v1297, %v1299
      %v1308 = vsel %vm1302, %v1299, %v1301
      %1309 = vrot.lane.b32.xlu0 %v1182, 88
      %v1310 = vpop.permute.xlu0 %1309
      %1311 = vrot.lane.b32.xlu0 %v1173, 88
      %v1312 = vpop.permute.xlu0 %1311
      %1313 = vrot.lane.b32.xlu0 %v1174, 88
      %v1314 = vpop.permute.xlu0 %1313
      %1315 = vrot.lane.b32.xlu0 %v1187, 88
      %v1316 = vpop.permute.xlu0 %1315
      %1317 = vrot.lane.b32.xlu0 %v1184, 88
      %v1318 = vpop.permute.xlu0 %1317
      %1319 = vrot.lane.b32.xlu0 %v1176, 88
      %v1320 = vpop.permute.xlu0 %1319
      %1321 = vrot.lane.b32.xlu0 %v1177, 88
      %v1322 = vpop.permute.xlu0 %1321
      %1323 = vrot.lane.b32.xlu0 %v1189, 88
      %v1324 = vpop.permute.xlu0 %1323
      %vm1325 = vcmask 719872
      %v1326 = vsel %vm1325, %v1310, %v1312
      %v1327 = vsel %vm1325, %v1312, %v1314
      %v1328 = vsel %vm1325, %v1314, %v1316
      %v1329 = vsel %vm1325, %v1318, %v1320
      %v1330 = vsel %vm1325, %v1320, %v1322
      %v1331 = vsel %vm1325, %v1322, %v1324
      %1332 = vrot.lane.b32.xlu0 %v1182, 87
      %v1333 = vpop.permute.xlu0 %1332
      %1334 = vrot.lane.b32.xlu0 %v1173, 87
      %v1335 = vpop.permute.xlu0 %1334
      %1336 = vrot.lane.b32.xlu0 %v1174, 87
      %v1337 = vpop.permute.xlu0 %1336
      %1338 = vrot.lane.b32.xlu0 %v1187, 87
      %v1339 = vpop.permute.xlu0 %1338
      %1340 = vrot.lane.b32.xlu0 %v1184, 87
      %v1341 = vpop.permute.xlu0 %1340
      %1342 = vrot.lane.b32.xlu0 %v1176, 87
      %v1343 = vpop.permute.xlu0 %1342
      %1344 = vrot.lane.b32.xlu0 %v1177, 87
      %v1345 = vpop.permute.xlu0 %1344
      %1346 = vrot.lane.b32.xlu0 %v1189, 87
      %v1347 = vpop.permute.xlu0 %1346
      %vm1348 = vcmask 711680
      %v1349 = vsel %vm1348, %v1333, %v1335
      %v1350 = vsel %vm1348, %v1335, %v1337
      %v1351 = vsel %vm1348, %v1337, %v1339
      %v1352 = vsel %vm1348, %v1341, %v1343
      %v1353 = vsel %vm1348, %v1343, %v1345
      %v1354 = vsel %vm1348, %v1345, %v1347
      %1355 = vrot.lane.b32.xlu0 %v1182, 86
      %v1356 = vpop.permute.xlu0 %1355
      %1357 = vrot.lane.b32.xlu0 %v1173, 86
      %v1358 = vpop.permute.xlu0 %1357
      %1359 = vrot.lane.b32.xlu0 %v1174, 86
      %v1360 = vpop.permute.xlu0 %1359
      %1361 = vrot.lane.b32.xlu0 %v1187, 86
      %v1362 = vpop.permute.xlu0 %1361
      %1363 = vrot.lane.b32.xlu0 %v1184, 86
      %v1364 = vpop.permute.xlu0 %1363
      %1365 = vrot.lane.b32.xlu0 %v1176, 86
      %v1366 = vpop.permute.xlu0 %1365
      %1367 = vrot.lane.b32.xlu0 %v1177, 86
      %v1368 = vpop.permute.xlu0 %1367
      %1369 = vrot.lane.b32.xlu0 %v1189, 86
      %v1370 = vpop.permute.xlu0 %1369
      %vm1371 = vcmask 703488
      %v1372 = vsel %vm1371, %v1356, %v1358
      %v1373 = vsel %vm1371, %v1358, %v1360
      %v1374 = vsel %vm1371, %v1360, %v1362
      %v1375 = vsel %vm1371, %v1364, %v1366
      %v1376 = vsel %vm1371, %v1366, %v1368
      %v1377 = vsel %vm1371, %v1368, %v1370
      %v1378 = vld [vmem:[%s7] sm:$0xff]
      %v1379 = vld [vmem:[%s7 + $0x8] sm:$0xff]
      %v1380 = vld [vmem:[%s7 + $0x10] sm:$0xff]
      %v1381 = vld [vmem:[%s7 + $0x18] sm:$0xff]
      %1383 = vset.pattern.permute.xlu0 0
      %1384 = vperm.xlu0 %1383, %v1378
      %v1385 = vpop.permute.xlu0 %1384
      %1388 = vset.pattern.permute.xlu0 0
      %1389 = vperm.xlu0 %1388, %v1379
      %v1390 = vpop.permute.xlu0 %1389
      %1393 = vset.pattern.permute.xlu0 0
      %1394 = vperm.xlu0 %1393, %v1380
      %v1395 = vpop.permute.xlu0 %1394
      %1398 = vset.pattern.permute.xlu0 0
      %1399 = vperm.xlu0 %1398, %v1381
      %v1400 = vpop.permute.xlu0 %1399
      %v1410 = vunpack.c.l.b16 %v1140
      %v1411 = vunpack.c.h.b16 %v1140
      %v1412 = vunpack.c.l.b16 %v1141
      %v1413 = vunpack.c.l.b16 %v1142
      %v1414 = vunpack.c.h.b16 %v1142
      %v1415 = vunpack.c.l.b16 %v1143
      %v1416 = vunpack.c.l.b16 %v1144
      %v1417 = vunpack.c.h.b16 %v1144
      %v1418 = vunpack.c.l.b16 %v1145
      %v1419 = vunpack.c.l.b16 %v1146
      %v1420 = vunpack.c.h.b16 %v1146
      %v1421 = vunpack.c.l.b16 %v1147
      %v1422 = vpack.c.b16 %v1413, %v1410
      %v1423 = vpack.c.b16 %v1414, %v1411
      %v1424 = vpack.c.b16 %v1415, %v1412
      %v1425 = vpack.c.b16 %v1419, %v1416
      %v1426 = vpack.c.b16 %v1420, %v1417
      %v1427 = vpack.c.b16 %v1421, %v1418
      %1432 = vrot.lane.b32.xlu0 %v1211, 107
      %v1433 = vpop.permute.xlu0 %1432
      %1434 = vrot.lane.b32.xlu0 %v1212, 107
      %v1435 = vpop.permute.xlu0 %1434
      %1436 = vrot.lane.b32.xlu0 %v1213, 107
      %v1437 = vpop.permute.xlu0 %1436
      %1438 = vrot.lane.b32.xlu0 %v1201, 107
      %v1439 = vpop.permute.xlu0 %1438
      %1440 = vrot.lane.b32.xlu0 %v1214, 107
      %v1441 = vpop.permute.xlu0 %1440
      %1442 = vrot.lane.b32.xlu0 %v1215, 107
      %v1443 = vpop.permute.xlu0 %1442
      %1444 = vrot.lane.b32.xlu0 %v1216, 107
      %v1445 = vpop.permute.xlu0 %1444
      %1446 = vrot.lane.b32.xlu0 %v1209, 107
      %v1447 = vpop.permute.xlu0 %1446
      %1448 = vrot.lane.b32.xlu0 %v1234, 107
      %v1449 = vpop.permute.xlu0 %1448
      %1450 = vrot.lane.b32.xlu0 %v1235, 107
      %v1451 = vpop.permute.xlu0 %1450
      %1452 = vrot.lane.b32.xlu0 %v1236, 107
      %v1453 = vpop.permute.xlu0 %1452
      %1454 = vrot.lane.b32.xlu0 %v1224, 107
      %v1455 = vpop.permute.xlu0 %1454
      %1456 = vrot.lane.b32.xlu0 %v1237, 107
      %v1457 = vpop.permute.xlu0 %1456
      %1458 = vrot.lane.b32.xlu0 %v1238, 107
      %v1459 = vpop.permute.xlu0 %1458
      %1460 = vrot.lane.b32.xlu0 %v1239, 107
      %v1461 = vpop.permute.xlu0 %1460
      %1462 = vrot.lane.b32.xlu0 %v1232, 107
      %v1463 = vpop.permute.xlu0 %1462
      %1464 = vrot.lane.b32.xlu0 %v1257, 107
      %v1465 = vpop.permute.xlu0 %1464
      %1466 = vrot.lane.b32.xlu0 %v1258, 107
      %v1467 = vpop.permute.xlu0 %1466
      %1468 = vrot.lane.b32.xlu0 %v1259, 107
      %v1469 = vpop.permute.xlu0 %1468
      %1470 = vrot.lane.b32.xlu0 %v1247, 107
      %v1471 = vpop.permute.xlu0 %1470
      %1472 = vrot.lane.b32.xlu0 %v1260, 107
      %v1473 = vpop.permute.xlu0 %1472
      %1474 = vrot.lane.b32.xlu0 %v1261, 107
      %v1475 = vpop.permute.xlu0 %1474
      %1476 = vrot.lane.b32.xlu0 %v1262, 107
      %v1477 = vpop.permute.xlu0 %1476
      %1478 = vrot.lane.b32.xlu0 %v1255, 107
      %v1479 = vpop.permute.xlu0 %1478
      %1480 = vrot.lane.b32.xlu0 %v1280, 107
      %v1481 = vpop.permute.xlu0 %1480
      %1482 = vrot.lane.b32.xlu0 %v1281, 107
      %v1483 = vpop.permute.xlu0 %1482
      %1484 = vrot.lane.b32.xlu0 %v1282, 107
      %v1485 = vpop.permute.xlu0 %1484
      %1486 = vrot.lane.b32.xlu0 %v1270, 107
      %v1487 = vpop.permute.xlu0 %1486
      %1488 = vrot.lane.b32.xlu0 %v1283, 107
      %v1489 = vpop.permute.xlu0 %1488
      %1490 = vrot.lane.b32.xlu0 %v1284, 107
      %v1491 = vpop.permute.xlu0 %1490
      %1492 = vrot.lane.b32.xlu0 %v1285, 107
      %v1493 = vpop.permute.xlu0 %1492
      %1494 = vrot.lane.b32.xlu0 %v1278, 107
      %v1495 = vpop.permute.xlu0 %1494
      %1496 = vrot.lane.b32.xlu0 %v1303, 107
      %v1497 = vpop.permute.xlu0 %1496
      %1498 = vrot.lane.b32.xlu0 %v1304, 107
      %v1499 = vpop.permute.xlu0 %1498
      %1500 = vrot.lane.b32.xlu0 %v1305, 107
      %v1501 = vpop.permute.xlu0 %1500
      %1502 = vrot.lane.b32.xlu0 %v1293, 107
      %v1503 = vpop.permute.xlu0 %1502
      %1504 = vrot.lane.b32.xlu0 %v1306, 107
      %v1505 = vpop.permute.xlu0 %1504
      %1506 = vrot.lane.b32.xlu0 %v1307, 107
      %v1507 = vpop.permute.xlu0 %1506
      %1508 = vrot.lane.b32.xlu0 %v1308, 107
      %v1509 = vpop.permute.xlu0 %1508
      %1510 = vrot.lane.b32.xlu0 %v1301, 107
      %v1511 = vpop.permute.xlu0 %1510
      %1512 = vrot.lane.b32.xlu0 %v1326, 107
      %v1513 = vpop.permute.xlu0 %1512
      %1514 = vrot.lane.b32.xlu0 %v1327, 107
      %v1515 = vpop.permute.xlu0 %1514
      %1516 = vrot.lane.b32.xlu0 %v1328, 107
      %v1517 = vpop.permute.xlu0 %1516
      %1518 = vrot.lane.b32.xlu0 %v1316, 107
      %v1519 = vpop.permute.xlu0 %1518
      %1520 = vrot.lane.b32.xlu0 %v1329, 107
      %v1521 = vpop.permute.xlu0 %1520
      %1522 = vrot.lane.b32.xlu0 %v1330, 107
      %v1523 = vpop.permute.xlu0 %1522
      %1524 = vrot.lane.b32.xlu0 %v1331, 107
      %v1525 = vpop.permute.xlu0 %1524
      %1526 = vrot.lane.b32.xlu0 %v1324, 107
      %v1527 = vpop.permute.xlu0 %1526
      %1528 = vrot.lane.b32.xlu0 %v1349, 107
      %v1529 = vpop.permute.xlu0 %1528
      %1530 = vrot.lane.b32.xlu0 %v1350, 107
      %v1531 = vpop.permute.xlu0 %1530
      %1532 = vrot.lane.b32.xlu0 %v1351, 107
      %v1533 = vpop.permute.xlu0 %1532
      %1534 = vrot.lane.b32.xlu0 %v1339, 107
      %v1535 = vpop.permute.xlu0 %1534
      %1536 = vrot.lane.b32.xlu0 %v1352, 107
      %v1537 = vpop.permute.xlu0 %1536
      %1538 = vrot.lane.b32.xlu0 %v1353, 107
      %v1539 = vpop.permute.xlu0 %1538
      %1540 = vrot.lane.b32.xlu0 %v1354, 107
      %v1541 = vpop.permute.xlu0 %1540
      %1542 = vrot.lane.b32.xlu0 %v1347, 107
      %v1543 = vpop.permute.xlu0 %1542
      %1544 = vrot.lane.b32.xlu0 %v1372, 107
      %v1545 = vpop.permute.xlu0 %1544
      %1546 = vrot.lane.b32.xlu0 %v1373, 107
      %v1547 = vpop.permute.xlu0 %1546
      %1548 = vrot.lane.b32.xlu0 %v1374, 107
      %v1549 = vpop.permute.xlu0 %1548
      %1550 = vrot.lane.b32.xlu0 %v1362, 107
      %v1551 = vpop.permute.xlu0 %1550
      %1552 = vrot.lane.b32.xlu0 %v1375, 107
      %v1553 = vpop.permute.xlu0 %1552
      %1554 = vrot.lane.b32.xlu0 %v1376, 107
      %v1555 = vpop.permute.xlu0 %1554
      %1556 = vrot.lane.b32.xlu0 %v1377, 107
      %v1557 = vpop.permute.xlu0 %1556
      %1558 = vrot.lane.b32.xlu0 %v1370, 107
      %v1559 = vpop.permute.xlu0 %1558
      %v1560 = vsel %vm1279, %v1433, %v1435
      %v1561 = vsel %vm1279, %v1435, %v1437
      %v1562 = vsel %vm1279, %v1437, %v1439
      %v1563 = vsel %vm1279, %v1441, %v1443
      %v1564 = vsel %vm1279, %v1443, %v1445
      %v1565 = vsel %vm1279, %v1445, %v1447
      %v1566 = vsel %vm1279, %v1449, %v1451
      %v1567 = vsel %vm1279, %v1451, %v1453
      %v1568 = vsel %vm1279, %v1453, %v1455
      %v1569 = vsel %vm1279, %v1457, %v1459
      %v1570 = vsel %vm1279, %v1459, %v1461
      %v1571 = vsel %vm1279, %v1461, %v1463
      %v1572 = vsel %vm1279, %v1465, %v1467
      %v1573 = vsel %vm1279, %v1467, %v1469
      %v1574 = vsel %vm1279, %v1469, %v1471
      %v1575 = vsel %vm1279, %v1473, %v1475
      %v1576 = vsel %vm1279, %v1475, %v1477
      %v1577 = vsel %vm1279, %v1477, %v1479
      %v1578 = vsel %vm1279, %v1481, %v1483
      %v1579 = vsel %vm1279, %v1483, %v1485
      %v1580 = vsel %vm1279, %v1485, %v1487
      %v1581 = vsel %vm1279, %v1489, %v1491
      %v1582 = vsel %vm1279, %v1491, %v1493
      %v1583 = vsel %vm1279, %v1493, %v1495
      %v1584 = vsel %vm1279, %v1497, %v1499
      %v1585 = vsel %vm1279, %v1499, %v1501
      %v1586 = vsel %vm1279, %v1501, %v1503
      %v1587 = vsel %vm1279, %v1505, %v1507
      %v1588 = vsel %vm1279, %v1507, %v1509
      %v1589 = vsel %vm1279, %v1509, %v1511
      %v1590 = vsel %vm1279, %v1513, %v1515
      %v1591 = vsel %vm1279, %v1515, %v1517
      %v1592 = vsel %vm1279, %v1517, %v1519
      %v1593 = vsel %vm1279, %v1521, %v1523
      %v1594 = vsel %vm1279, %v1523, %v1525
      %v1595 = vsel %vm1279, %v1525, %v1527
      %v1596 = vsel %vm1279, %v1529, %v1531
      %v1597 = vsel %vm1279, %v1531, %v1533
      %v1598 = vsel %vm1279, %v1533, %v1535
      %v1599 = vsel %vm1279, %v1537, %v1539
      %v1600 = vsel %vm1279, %v1539, %v1541
      %v1601 = vsel %vm1279, %v1541, %v1543
      %v1602 = vsel %vm1279, %v1545, %v1547
      %v1603 = vsel %vm1279, %v1547, %v1549
      %v1604 = vsel %vm1279, %v1549, %v1551
      %v1605 = vsel %vm1279, %v1553, %v1555
      %v1606 = vsel %vm1279, %v1555, %v1557
      %v1607 = vsel %vm1279, %v1557, %v1559
      %v1681 = vsel %vm854, %v1424, 0
      %v1684 = vsel %vm854, %v1427, 0
      %1686 = vmatprep.subr.bf16.mxu0 %v1281
      %1687 = vmatpush1.bf16.msra.mxu0 %v1280
      %1688 = vmatprep.subr.bf16.mxu0 %v1284
      %1689 = vmatpush1.bf16.msra.mxu0 %v1283
      %1690 = vmatprep.subr.bf16.mxu0 %v1561
      %1691 = vmatpush1.bf16.msra.mxu0 %v1560
      %1692 = vmatprep.subr.bf16.mxu0 %v1564
      %1693 = vmatpush1.bf16.msra.mxu0 %v1563
      %1694 = vmatprep.subr.bf16.mxu0 %v1567
      %1695 = vmatpush1.bf16.msra.mxu0 %v1566
      %1696 = vmatprep.subr.bf16.mxu0 %v1570
      %1697 = vmatpush1.bf16.msra.mxu0 %v1569
      %1698 = vmatprep.subr.bf16.mxu0 %v1573
      %1699 = vmatpush1.bf16.msra.mxu0 %v1572
      %1700 = vmatprep.subr.bf16.mxu0 %v1576
      %1701 = vmatpush1.bf16.msra.mxu0 %v1575
      %1702 = vmatprep.subr.bf16.mxu0 %v1579
      %1703 = vmatpush1.bf16.msra.mxu0 %v1578
      %1704 = vmatprep.subr.bf16.mxu0 %v1582
      %1705 = vmatpush1.bf16.msra.mxu0 %v1581
      %1706 = vmatprep.subr.bf16.mxu0 %v1585
      %1707 = vmatpush1.bf16.msra.mxu0 %v1584
      %1708 = vmatprep.subr.bf16.mxu0 %v1588
      %1709 = vmatpush1.bf16.msra.mxu0 %v1587
      %1710 = vmatprep.subr.bf16.mxu0 %v1591
      %1711 = vmatpush1.bf16.msra.mxu0 %v1590
      %1712 = vmatprep.subr.bf16.mxu0 %v1594
      %1713 = vmatpush1.bf16.msra.mxu0 %v1593
      %1714 = vmatprep.subr.bf16.mxu0 %v1597
      %1715 = vmatpush1.bf16.msra.mxu0 %v1596
      %1716 = vmatprep.subr.bf16.mxu0 %v1600
      %1717 = vmatpush1.bf16.msra.mxu0 %v1599
      %1718 = vmatprep.mubr.bf16.mxu0 %v1423
      %1719 = vmatmul.mubr.bf16.gmra.mrb[0].mxu0 %v1422
      %v1720 = vpop.f32.mrb[0].mxu0
      %v1721 = vadd.f32 %v1385, %v1720
      %v1722 = vpop.f32.mrb[0].mxu0
      %v1723 = vadd.f32 %v1385, %v1722
      %v1724 = vpop.f32.mrb[0].mxu0
      %v1725 = vadd.f32 %v1390, %v1724
      %v1726 = vpop.f32.mrb[0].mxu0
      %v1727 = vadd.f32 %v1390, %v1726
      %1728 = vmatprep.mubr.bf16.mxu0 %v1426
      %1729 = vmatmul.mubr.bf16.gmra.mrb[0].mxu0 %v1425
      %v1730 = vpop.f32.mrb[0].mxu0
      %v1731 = vadd.f32 %v1395, %v1730
      %v1732 = vpop.f32.mrb[0].mxu0
      %v1733 = vadd.f32 %v1395, %v1732
      %v1734 = vpop.f32.mrb[0].mxu0
      %v1735 = vadd.f32 %v1400, %v1734
      %v1736 = vpop.f32.mrb[0].mxu0
      %v1737 = vadd.f32 %v1400, %v1736
      %1738 = vdwg.mxu0
      %1739 = vmatprep.subr.bf16.mxu0 %v1603
      %1740 = vmatpush1.bf16.msra.mxu0 %v1602
      %1741 = vmatprep.subr.bf16.mxu0 %v1606
      %1742 = vmatpush1.bf16.msra.mxu0 %v1605
      %1743 = vmatprep.subr.bf16.mxu0 0
      %1744 = vmatpush1.bf16.msra.mxu0 0
      %1745 = vmatprep.subr.bf16.mxu0 0
      %1746 = vmatpush1.bf16.msra.mxu0 0
      %1747 = vmatprep.subr.bf16.mxu0 0
      %1748 = vmatpush1.bf16.msra.mxu0 0
      %1749 = vmatprep.subr.bf16.mxu0 0
      %1750 = vmatpush1.bf16.msra.mxu0 0
      %1751 = vmatprep.subr.bf16.mxu0 0
      %1752 = vmatpush1.bf16.msra.mxu0 0
      %1753 = vmatprep.subr.bf16.mxu0 0
      %1754 = vmatpush1.bf16.msra.mxu0 0
      %1755 = vmatprep.subr.bf16.mxu0 0
      %1756 = vmatpush1.bf16.msra.mxu0 0
      %1757 = vmatprep.subr.bf16.mxu0 0
      %1758 = vmatpush1.bf16.msra.mxu0 0
      %1759 = vmatprep.subr.bf16.mxu0 0
      %1760 = vmatpush1.bf16.msra.mxu0 0
      %1761 = vmatprep.subr.bf16.mxu0 0
      %1762 = vmatpush1.bf16.msra.mxu0 0
      %1763 = vmatprep.subr.bf16.mxu0 0
      %1764 = vmatpush1.bf16.msra.mxu0 0
      %1765 = vmatprep.subr.bf16.mxu0 0
      %1766 = vmatpush1.bf16.msra.mxu0 0
      %1767 = vmatprep.subr.bf16.mxu0 0
      %1768 = vmatpush1.bf16.msra.mxu0 0
      %1769 = vmatprep.subr.bf16.mxu0 0
      %1770 = vmatpush1.bf16.msra.mxu0 0
      %1771 = vmatprep.mubr.bf16.mxu0 0
      %1772 = vmatmul.mubr.bf16.gmra.mrb[0].mxu0 %v1681
      %v1773 = vpop.f32.mrb[0].mxu0
      %v1774 = vadd.f32 %v1721, %v1773
      %v1775 = vpop.f32.mrb[0].mxu0
      %v1776 = vadd.f32 %v1723, %v1775
      %v1777 = vpop.f32.mrb[0].mxu0
      %v1778 = vadd.f32 %v1725, %v1777
      %v1779 = vpop.f32.mrb[0].mxu0
      %v1780 = vadd.f32 %v1727, %v1779
      %1781 = vmatprep.mubr.bf16.mxu0 0
      %1782 = vmatmul.mubr.bf16.gmra.mrb[0].mxu0 %v1684
      %v1783 = vpop.f32.mrb[0].mxu0
      %v1784 = vadd.f32 %v1731, %v1783
      %v1785 = vpop.f32.mrb[0].mxu0
      %v1786 = vadd.f32 %v1733, %v1785
      %v1787 = vpop.f32.mrb[0].mxu0
      %v1788 = vadd.f32 %v1735, %v1787
      %v1789 = vpop.f32.mrb[0].mxu0
      %v1790 = vadd.f32 %v1737, %v1789
      %1791 = vdwg.mxu0
      %1792 = vmatprep.subr.bf16.mxu0 %v1270
      %1793 = vmatpush1.bf16.msra.mxu0 %v1282
      %1794 = vmatprep.subr.bf16.mxu0 %v1278
      %1795 = vmatpush1.bf16.msra.mxu0 %v1285
      %1796 = vmatprep.subr.bf16.mxu0 %v1439
      %1797 = vmatpush1.bf16.msra.mxu0 %v1562
      %1798 = vmatprep.subr.bf16.mxu0 %v1447
      %1799 = vmatpush1.bf16.msra.mxu0 %v1565
      %1800 = vmatprep.subr.bf16.mxu0 %v1455
      %1801 = vmatpush1.bf16.msra.mxu0 %v1568
      %1802 = vmatprep.subr.bf16.mxu0 %v1463
      %1803 = vmatpush1.bf16.msra.mxu0 %v1571
      %1804 = vmatprep.subr.bf16.mxu0 %v1471
      %1805 = vmatpush1.bf16.msra.mxu0 %v1574
      %1806 = vmatprep.subr.bf16.mxu0 %v1479
      %1807 = vmatpush1.bf16.msra.mxu0 %v1577
      %1808 = vmatprep.subr.bf16.mxu0 %v1487
      %1809 = vmatpush1.bf16.msra.mxu0 %v1580
      %1810 = vmatprep.subr.bf16.mxu0 %v1495
      %1811 = vmatpush1.bf16.msra.mxu0 %v1583
      %1812 = vmatprep.subr.bf16.mxu0 %v1503
      %1813 = vmatpush1.bf16.msra.mxu0 %v1586
      %1814 = vmatprep.subr.bf16.mxu0 %v1511
      %1815 = vmatpush1.bf16.msra.mxu0 %v1589
      %1816 = vmatprep.subr.bf16.mxu0 %v1519
      %1817 = vmatpush1.bf16.msra.mxu0 %v1592
      %1818 = vmatprep.subr.bf16.mxu0 %v1527
      %1819 = vmatpush1.bf16.msra.mxu0 %v1595
      %1820 = vmatprep.subr.bf16.mxu0 %v1535
      %1821 = vmatpush1.bf16.msra.mxu0 %v1598
      %1822 = vmatprep.subr.bf16.mxu0 %v1543
      %1823 = vmatpush1.bf16.msra.mxu0 %v1601
      %1824 = vmatprep.mubr.bf16.mxu0 %v1423
      %1825 = vmatmul.mubr.bf16.gmra.mrb[0].mxu0 %v1422
      %v1826 = vpop.f32.mrb[0].mxu0
      %v1827 = vadd.f32 %v1385, %v1826
      %v1828 = vpop.f32.mrb[0].mxu0
      %v1829 = vadd.f32 %v1385, %v1828
      %v1830 = vpop.f32.mrb[0].mxu0
      %v1831 = vadd.f32 %v1390, %v1830
      %v1832 = vpop.f32.mrb[0].mxu0
      %v1833 = vadd.f32 %v1390, %v1832
      %1834 = vmatprep.mubr.bf16.mxu0 %v1426
      %1835 = vmatmul.mubr.bf16.gmra.mrb[0].mxu0 %v1425
      %v1836 = vpop.f32.mrb[0].mxu0
      %v1837 = vadd.f32 %v1395, %v1836
      %v1838 = vpop.f32.mrb[0].mxu0
      %v1839 = vadd.f32 %v1395, %v1838
      %v1840 = vpop.f32.mrb[0].mxu0
      %v1841 = vadd.f32 %v1400, %v1840
      %v1842 = vpop.f32.mrb[0].mxu0
      %v1843 = vadd.f32 %v1400, %v1842
      %1844 = vdwg.mxu0
      %1845 = vmatprep.subr.bf16.mxu0 %v1551
      %1846 = vmatpush1.bf16.msra.mxu0 %v1604
      %1847 = vmatprep.subr.bf16.mxu0 %v1559
      %1848 = vmatpush1.bf16.msra.mxu0 %v1607
      %1849 = vmatprep.subr.bf16.mxu0 0
      %1850 = vmatpush1.bf16.msra.mxu0 0
      %1851 = vmatprep.subr.bf16.mxu0 0
      %1852 = vmatpush1.bf16.msra.mxu0 0
      %1853 = vmatprep.subr.bf16.mxu0 0
      %1854 = vmatpush1.bf16.msra.mxu0 0
      %1855 = vmatprep.subr.bf16.mxu0 0
      %1856 = vmatpush1.bf16.msra.mxu0 0
      %1857 = vmatprep.subr.bf16.mxu0 0
      %1858 = vmatpush1.bf16.msra.mxu0 0
      %1859 = vmatprep.subr.bf16.mxu0 0
      %1860 = vmatpush1.bf16.msra.mxu0 0
      %1861 = vmatprep.subr.bf16.mxu0 0
      %1862 = vmatpush1.bf16.msra.mxu0 0
      %1863 = vmatprep.subr.bf16.mxu0 0
      %1864 = vmatpush1.bf16.msra.mxu0 0
      %1865 = vmatprep.subr.bf16.mxu0 0
      %1866 = vmatpush1.bf16.msra.mxu0 0
      %1867 = vmatprep.subr.bf16.mxu0 0
      %1868 = vmatpush1.bf16.msra.mxu0 0
      %1869 = vmatprep.subr.bf16.mxu0 0
      %1870 = vmatpush1.bf16.msra.mxu0 0
      %1871 = vmatprep.subr.bf16.mxu0 0
      %1872 = vmatpush1.bf16.msra.mxu0 0
      %1873 = vmatprep.subr.bf16.mxu0 0
      %1874 = vmatpush1.bf16.msra.mxu0 0
      %1875 = vmatprep.subr.bf16.mxu0 0
      %1876 = vmatpush1.bf16.msra.mxu0 0
      %1877 = vmatprep.mubr.bf16.mxu0 0
      %1878 = vmatmul.mubr.bf16.gmra.mrb[0].mxu0 %v1681
      %v1879 = vpop.f32.mrb[0].mxu0
      %v1880 = vadd.f32 %v1827, %v1879
      %v1881 = vpop.f32.mrb[0].mxu0
      %v1882 = vadd.f32 %v1829, %v1881
      %v1883 = vpop.f32.mrb[0].mxu0
      %v1884 = vadd.f32 %v1831, %v1883
      %v1885 = vpop.f32.mrb[0].mxu0
      %v1886 = vadd.f32 %v1833, %v1885
      %1887 = vmatprep.mubr.bf16.mxu0 0
      %1888 = vmatmul.mubr.bf16.gmra.mrb[0].mxu0 %v1684
      %v1889 = vpop.f32.mrb[0].mxu0
      %v1890 = vadd.f32 %v1837, %v1889
      %v1891 = vpop.f32.mrb[0].mxu0
      %v1892 = vadd.f32 %v1839, %v1891
      %v1893 = vpop.f32.mrb[0].mxu0
      %v1894 = vadd.f32 %v1841, %v1893
      %v1895 = vpop.f32.mrb[0].mxu0
      %v1896 = vadd.f32 %v1843, %v1895
      %1897 = vdwg.mxu0
      %vm1898 = vcmp.ge.f32.partialorder %v1774, 0.0
      %vm1899 = vcmp.ge.f32.partialorder %v1776, 0.0
      %vm1900 = vcmp.ge.f32.partialorder %v1880, 0.0
      %vm1901 = vcmp.ge.f32.partialorder %v1882, 0.0
      %vm1902 = vcmp.ge.f32.partialorder %v1778, 0.0
      %vm1903 = vcmp.ge.f32.partialorder %v1780, 0.0
      %vm1904 = vcmp.ge.f32.partialorder %v1884, 0.0
      %vm1905 = vcmp.ge.f32.partialorder %v1886, 0.0
      %vm1906 = vcmp.ge.f32.partialorder %v1784, 0.0
      %vm1907 = vcmp.ge.f32.partialorder %v1786, 0.0
      %vm1908 = vcmp.ge.f32.partialorder %v1890, 0.0
      %vm1909 = vcmp.ge.f32.partialorder %v1892, 0.0
      %vm1910 = vcmp.ge.f32.partialorder %v1788, 0.0
      %vm1911 = vcmp.ge.f32.partialorder %v1790, 0.0
      %vm1912 = vcmp.ge.f32.partialorder %v1894, 0.0
      %vm1913 = vcmp.ge.f32.partialorder %v1896, 0.0
      %v1914 = vmul.f32 %v1774, 0.01
      %v1915 = vmul.f32 %v1776, 0.01
      %v1916 = vmul.f32 %v1880, 0.01
      %v1917 = vmul.f32 %v1882, 0.01
      %v1918 = vmul.f32 %v1778, 0.01
      %v1919 = vmul.f32 %v1780, 0.01
      %v1920 = vmul.f32 %v1884, 0.01
      %v1921 = vmul.f32 %v1886, 0.01
      %v1922 = vmul.f32 %v1784, 0.01
      %v1923 = vmul.f32 %v1786, 0.01
      %v1924 = vmul.f32 %v1890, 0.01
      %v1925 = vmul.f32 %v1892, 0.01
      %v1926 = vmul.f32 %v1788, 0.01
      %v1927 = vmul.f32 %v1790, 0.01
      %v1928 = vmul.f32 %v1894, 0.01
      %v1929 = vmul.f32 %v1896, 0.01
      %v1930 = vsel %vm1898, %v1774, %v1914
      %v1931 = vsel %vm1899, %v1776, %v1915
      %v1932 = vsel %vm1900, %v1880, %v1916
      %v1933 = vsel %vm1901, %v1882, %v1917
      %v1934 = vsel %vm1902, %v1778, %v1918
      %v1935 = vsel %vm1903, %v1780, %v1919
      %v1936 = vsel %vm1904, %v1884, %v1920
      %v1937 = vsel %vm1905, %v1886, %v1921
      %v1938 = vsel %vm1906, %v1784, %v1922
      %v1939 = vsel %vm1907, %v1786, %v1923
      %v1940 = vsel %vm1908, %v1890, %v1924
      %v1941 = vsel %vm1909, %v1892, %v1925
      %v1942 = vsel %vm1910, %v1788, %v1926
      %v1943 = vsel %vm1911, %v1790, %v1927
      %v1944 = vsel %vm1912, %v1894, %v1928
      %v1945 = vsel %vm1913, %v1896, %v1929
      %v1946 = vld [vmem:[%s8] sm:$0xff]
      %v1947 = vld [vmem:[%s8 + $0x8] sm:$0xff]
      %v1948 = vld [vmem:[%s8 + $0x10] sm:$0xff]
      %v1949 = vld [vmem:[%s8 + $0x18] sm:$0xff]
      %v1950 = vld [vmem:[%s9] sm:$0xff]
      %v1951 = vld [vmem:[%s9 + $0x8] sm:$0xff]
      %v1952 = vld [vmem:[%s9 + $0x10] sm:$0xff]
      %v1953 = vld [vmem:[%s9 + $0x18] sm:$0xff]
      %1955 = vset.pattern.permute.xlu0 0
      %1956 = vperm.xlu0 %1955, %v1946
      %v1957 = vpop.permute.xlu0 %1956
      %1960 = vset.pattern.permute.xlu0 0
      %1961 = vperm.xlu0 %1960, %v1947
      %v1962 = vpop.permute.xlu0 %1961
      %1965 = vset.pattern.permute.xlu0 0
      %1966 = vperm.xlu0 %1965, %v1948
      %v1967 = vpop.permute.xlu0 %1966
      %1970 = vset.pattern.permute.xlu0 0
      %1971 = vperm.xlu0 %1970, %v1949
      %v1972 = vpop.permute.xlu0 %1971
      %v1974 = vmul.f32 %v1930, %v1957
      %v1975 = vmul.f32 %v1931, %v1957
      %v1976 = vmul.f32 %v1932, %v1957
      %v1977 = vmul.f32 %v1933, %v1957
      %v1978 = vmul.f32 %v1934, %v1962
      %v1979 = vmul.f32 %v1935, %v1962
      %v1980 = vmul.f32 %v1936, %v1962
      %v1981 = vmul.f32 %v1937, %v1962
      %v1982 = vmul.f32 %v1938, %v1967
      %v1983 = vmul.f32 %v1939, %v1967
      %v1984 = vmul.f32 %v1940, %v1967
      %v1985 = vmul.f32 %v1941, %v1967
      %v1986 = vmul.f32 %v1942, %v1972
      %v1987 = vmul.f32 %v1943, %v1972
      %v1988 = vmul.f32 %v1944, %v1972
      %v1989 = vmul.f32 %v1945, %v1972
      %1991 = vset.pattern.permute.xlu0 0
      %1992 = vperm.xlu0 %1991, %v1950
      %v1993 = vpop.permute.xlu0 %1992
      %1996 = vset.pattern.permute.xlu0 0
      %1997 = vperm.xlu0 %1996, %v1951
      %v1998 = vpop.permute.xlu0 %1997
      %2001 = vset.pattern.permute.xlu0 0
      %2002 = vperm.xlu0 %2001, %v1952
      %v2003 = vpop.permute.xlu0 %2002
      %2006 = vset.pattern.permute.xlu0 0
      %2007 = vperm.xlu0 %2006, %v1953
      %v2008 = vpop.permute.xlu0 %2007
      %v2010 = vadd.f32 %v1974, %v1993
      %v2011 = vadd.f32 %v1975, %v1993
      %v2012 = vadd.f32 %v1976, %v1993
      %v2013 = vadd.f32 %v1977, %v1993
      %v2014 = vadd.f32 %v1978, %v1998
      %v2015 = vadd.f32 %v1979, %v1998
      %v2016 = vadd.f32 %v1980, %v1998
      %v2017 = vadd.f32 %v1981, %v1998
      %v2018 = vadd.f32 %v1982, %v2003
      %v2019 = vadd.f32 %v1983, %v2003
      %v2020 = vadd.f32 %v1984, %v2003
      %v2021 = vadd.f32 %v1985, %v2003
      %v2022 = vadd.f32 %v1986, %v2008
      %v2023 = vadd.f32 %v1987, %v2008
      %v2024 = vadd.f32 %v1988, %v2008
      %v2025 = vadd.f32 %v1989, %v2008
      %v2026 = vsel %vm1112, %v2010, 0.0
      %v2027 = vsel %vm1113, %v2011, 0.0
      %v2028 = vsel %vm1114, %v2012, 0.0
      %v2029 = vsel %vm1115, %v2013, 0.0
      %v2030 = vsel %vm1112, %v2014, 0.0
      %v2031 = vsel %vm1113, %v2015, 0.0
      %v2032 = vsel %vm1114, %v2016, 0.0
      %v2033 = vsel %vm1115, %v2017, 0.0
      %v2034 = vsel %vm1112, %v2018, 0.0
      %v2035 = vsel %vm1113, %v2019, 0.0
      %v2036 = vsel %vm1114, %v2020, 0.0
      %v2037 = vsel %vm1115, %v2021, 0.0
      %v2038 = vsel %vm1112, %v2022, 0.0
      %v2039 = vsel %vm1113, %v2023, 0.0
      %v2040 = vsel %vm1114, %v2024, 0.0
      %v2041 = vsel %vm1115, %v2025, 0.0
      %v2042 = vpack.c.bf16 %v2030, %v2026
      %v2043 = vpack.c.bf16 %v2031, %v2027
      %v2044 = vpack.c.bf16 %v2032, %v2028
      %v2045 = vpack.c.bf16 %v2033, %v2029
      %v2046 = vpack.c.bf16 %v2038, %v2034
      %v2047 = vpack.c.bf16 %v2039, %v2035
      %v2048 = vpack.c.bf16 %v2040, %v2036
      %v2049 = vpack.c.bf16 %v2041, %v2037
      %v2050 = vld [vmem:[%s10] sm:$0xff]
      %v2051 = vld [vmem:[%s10 + $0x8] sm:$0xff]
      %v2052 = vld [vmem:[%s10 + $0x10] sm:$0xff]
      %v2053 = vld [vmem:[%s10 + $0x18] sm:$0xf]
      %v2054 = vld [vmem:[%s10 + $0x1c] sm:$0xff]
      %v2055 = vld [vmem:[%s10 + $0x24] sm:$0xff]
      %v2056 = vld [vmem:[%s10 + $0x2c] sm:$0xff]
      %v2057 = vld [vmem:[%s10 + $0x34] sm:$0xf]
      %v2058 = vld [vmem:[%s10 + $0x38] sm:$0xff]
      %v2059 = vld [vmem:[%s10 + $0x40] sm:$0xff]
      %v2060 = vld [vmem:[%s10 + $0x48] sm:$0xff]
      %v2061 = vld [vmem:[%s10 + $0x50] sm:$0xf]
      %v2062 = vld [vmem:[%s10 + $0x54] sm:$0xff]
      %v2063 = vld [vmem:[%s10 + $0x5c] sm:$0xff]
      %v2064 = vld [vmem:[%s10 + $0x64] sm:$0xff]
      %v2065 = vld [vmem:[%s10 + $0x6c] sm:$0xf]
      %2074 = vrot.lane.b32.xlu0 %v2042, 42
      %v2075 = vpop.permute.xlu0 %2074
      %2076 = vrot.lane.b32.xlu0 %v2043, 42
      %v2077 = vpop.permute.xlu0 %2076
      %2078 = vrot.lane.b32.xlu0 %v2044, 42
      %v2079 = vpop.permute.xlu0 %2078
      %2080 = vrot.lane.b32.xlu0 %v2045, 42
      %v2081 = vpop.permute.xlu0 %2080
      %2082 = vrot.lane.b32.xlu0 %v2046, 42
      %v2083 = vpop.permute.xlu0 %2082
      %2084 = vrot.lane.b32.xlu0 %v2047, 42
      %v2085 = vpop.permute.xlu0 %2084
      %2086 = vrot.lane.b32.xlu0 %v2048, 42
      %v2087 = vpop.permute.xlu0 %2086
      %2088 = vrot.lane.b32.xlu0 %v2049, 42
      %v2089 = vpop.permute.xlu0 %2088
      %v2090 = vsel %vm1172, %v2075, %v2077
      %v2091 = vsel %vm1172, %v2077, %v2079
      %v2092 = vsel %vm1172, %v2079, %v2081
      %v2093 = vsel %vm1172, %v2083, %v2085
      %v2094 = vsel %vm1172, %v2085, %v2087
      %v2095 = vsel %vm1172, %v2087, %v2089
      %v2101 = vsel %vm1179, 0, %v2075
      %v2104 = vsel %vm1179, 0, %v2083
      %v2107 = vsel %vm1185, %v2092, 0
      %v2110 = vsel %vm1185, %v2095, 0
      %2116 = vrot.lane.b32.xlu0 %v2101, 127
      %v2117 = vpop.permute.xlu0 %2116
      %2118 = vrot.lane.b32.xlu0 %v2090, 127
      %v2119 = vpop.permute.xlu0 %2118
      %2120 = vrot.lane.b32.xlu0 %v2091, 127
      %v2121 = vpop.permute.xlu0 %2120
      %2122 = vrot.lane.b32.xlu0 %v2107, 127
      %v2123 = vpop.permute.xlu0 %2122
      %2124 = vrot.lane.b32.xlu0 %v2104, 127
      %v2125 = vpop.permute.xlu0 %2124
      %2126 = vrot.lane.b32.xlu0 %v2093, 127
      %v2127 = vpop.permute.xlu0 %2126
      %2128 = vrot.lane.b32.xlu0 %v2094, 127
      %v2129 = vpop.permute.xlu0 %2128
      %2130 = vrot.lane.b32.xlu0 %v2110, 127
      %v2131 = vpop.permute.xlu0 %2130
      %v2132 = vsel %vm1210, %v2117, %v2119
      %v2133 = vsel %vm1210, %v2119, %v2121
      %v2134 = vsel %vm1210, %v2121, %v2123
      %v2135 = vsel %vm1210, %v2125, %v2127
      %v2136 = vsel %vm1210, %v2127, %v2129
      %v2137 = vsel %vm1210, %v2129, %v2131
      %2146 = vrot.lane.b32.xlu0 %v2101, 126
      %v2147 = vpop.permute.xlu0 %2146
      %2148 = vrot.lane.b32.xlu0 %v2090, 126
      %v2149 = vpop.permute.xlu0 %2148
      %2150 = vrot.lane.b32.xlu0 %v2091, 126
      %v2151 = vpop.permute.xlu0 %2150
      %2152 = vrot.lane.b32.xlu0 %v2107, 126
      %v2153 = vpop.permute.xlu0 %2152
      %2154 = vrot.lane.b32.xlu0 %v2104, 126
      %v2155 = vpop.permute.xlu0 %2154
      %2156 = vrot.lane.b32.xlu0 %v2093, 126
      %v2157 = vpop.permute.xlu0 %2156
      %2158 = vrot.lane.b32.xlu0 %v2094, 126
      %v2159 = vpop.permute.xlu0 %2158
      %2160 = vrot.lane.b32.xlu0 %v2110, 126
      %v2161 = vpop.permute.xlu0 %2160
      %v2162 = vsel %vm1233, %v2147, %v2149
      %v2163 = vsel %vm1233, %v2149, %v2151
      %v2164 = vsel %vm1233, %v2151, %v2153
      %v2165 = vsel %vm1233, %v2155, %v2157
      %v2166 = vsel %vm1233, %v2157, %v2159
      %v2167 = vsel %vm1233, %v2159, %v2161
      %2176 = vrot.lane.b32.xlu0 %v2101, 125
      %v2177 = vpop.permute.xlu0 %2176
      %2178 = vrot.lane.b32.xlu0 %v2090, 125
      %v2179 = vpop.permute.xlu0 %2178
      %2180 = vrot.lane.b32.xlu0 %v2091, 125
      %v2181 = vpop.permute.xlu0 %2180
      %2182 = vrot.lane.b32.xlu0 %v2107, 125
      %v2183 = vpop.permute.xlu0 %2182
      %2184 = vrot.lane.b32.xlu0 %v2104, 125
      %v2185 = vpop.permute.xlu0 %2184
      %2186 = vrot.lane.b32.xlu0 %v2093, 125
      %v2187 = vpop.permute.xlu0 %2186
      %2188 = vrot.lane.b32.xlu0 %v2094, 125
      %v2189 = vpop.permute.xlu0 %2188
      %2190 = vrot.lane.b32.xlu0 %v2110, 125
      %v2191 = vpop.permute.xlu0 %2190
      %vm2192 = vcmask 1022976
      %v2193 = vsel %vm2192, %v2177, %v2179
      %v2194 = vsel %vm2192, %v2179, %v2181
      %v2195 = vsel %vm2192, %v2181, %v2183
      %v2196 = vsel %vm2192, %v2185, %v2187
      %v2197 = vsel %vm2192, %v2187, %v2189
      %v2198 = vsel %vm2192, %v2189, %v2191
      %2207 = vrot.lane.b32.xlu0 %v2101, 124
      %v2208 = vpop.permute.xlu0 %2207
      %2209 = vrot.lane.b32.xlu0 %v2090, 124
      %v2210 = vpop.permute.xlu0 %2209
      %2211 = vrot.lane.b32.xlu0 %v2091, 124
      %v2212 = vpop.permute.xlu0 %2211
      %2213 = vrot.lane.b32.xlu0 %v2107, 124
      %v2214 = vpop.permute.xlu0 %2213
      %2215 = vrot.lane.b32.xlu0 %v2104, 124
      %v2216 = vpop.permute.xlu0 %2215
      %2217 = vrot.lane.b32.xlu0 %v2093, 124
      %v2218 = vpop.permute.xlu0 %2217
      %2219 = vrot.lane.b32.xlu0 %v2094, 124
      %v2220 = vpop.permute.xlu0 %2219
      %2221 = vrot.lane.b32.xlu0 %v2110, 124
      %v2222 = vpop.permute.xlu0 %2221
      %vm2223 = vcmask 1014784
      %v2224 = vsel %vm2223, %v2208, %v2210
      %v2225 = vsel %vm2223, %v2210, %v2212
      %v2226 = vsel %vm2223, %v2212, %v2214
      %v2227 = vsel %vm2223, %v2216, %v2218
      %v2228 = vsel %vm2223, %v2218, %v2220
      %v2229 = vsel %vm2223, %v2220, %v2222
      %2238 = vrot.lane.b32.xlu0 %v2101, 108
      %v2239 = vpop.permute.xlu0 %2238
      %2240 = vrot.lane.b32.xlu0 %v2090, 108
      %v2241 = vpop.permute.xlu0 %2240
      %2242 = vrot.lane.b32.xlu0 %v2091, 108
      %v2243 = vpop.permute.xlu0 %2242
      %2244 = vrot.lane.b32.xlu0 %v2107, 108
      %v2245 = vpop.permute.xlu0 %2244
      %2246 = vrot.lane.b32.xlu0 %v2104, 108
      %v2247 = vpop.permute.xlu0 %2246
      %2248 = vrot.lane.b32.xlu0 %v2093, 108
      %v2249 = vpop.permute.xlu0 %2248
      %2250 = vrot.lane.b32.xlu0 %v2094, 108
      %v2251 = vpop.permute.xlu0 %2250
      %2252 = vrot.lane.b32.xlu0 %v2110, 108
      %v2253 = vpop.permute.xlu0 %2252
      %v2254 = vsel %vm1256, %v2239, %v2241
      %v2255 = vsel %vm1256, %v2241, %v2243
      %v2256 = vsel %vm1256, %v2243, %v2245
      %v2257 = vsel %vm1256, %v2247, %v2249
      %v2258 = vsel %vm1256, %v2249, %v2251
      %v2259 = vsel %vm1256, %v2251, %v2253
      %2268 = vrot.lane.b32.xlu0 %v2101, 107
      %v2269 = vpop.permute.xlu0 %2268
      %2270 = vrot.lane.b32.xlu0 %v2090, 107
      %v2271 = vpop.permute.xlu0 %2270
      %2272 = vrot.lane.b32.xlu0 %v2091, 107
      %v2273 = vpop.permute.xlu0 %2272
      %2274 = vrot.lane.b32.xlu0 %v2107, 107
      %v2275 = vpop.permute.xlu0 %2274
      %2276 = vrot.lane.b32.xlu0 %v2104, 107
      %v2277 = vpop.permute.xlu0 %2276
      %2278 = vrot.lane.b32.xlu0 %v2093, 107
      %v2279 = vpop.permute.xlu0 %2278
      %2280 = vrot.lane.b32.xlu0 %v2094, 107
      %v2281 = vpop.permute.xlu0 %2280
      %2282 = vrot.lane.b32.xlu0 %v2110, 107
      %v2283 = vpop.permute.xlu0 %2282
      %v2284 = vsel %vm1279, %v2269, %v2271
      %v2285 = vsel %vm1279, %v2271, %v2273
      %v2286 = vsel %vm1279, %v2273, %v2275
      %v2287 = vsel %vm1279, %v2277, %v2279
      %v2288 = vsel %vm1279, %v2279, %v2281
      %v2289 = vsel %vm1279, %v2281, %v2283
      %2298 = vrot.lane.b32.xlu0 %v2101, 106
      %v2299 = vpop.permute.xlu0 %2298
      %2300 = vrot.lane.b32.xlu0 %v2090, 106
      %v2301 = vpop.permute.xlu0 %2300
      %2302 = vrot.lane.b32.xlu0 %v2091, 106
      %v2303 = vpop.permute.xlu0 %2302
      %2304 = vrot.lane.b32.xlu0 %v2107, 106
      %v2305 = vpop.permute.xlu0 %2304
      %2306 = vrot.lane.b32.xlu0 %v2104, 106
      %v2307 = vpop.permute.xlu0 %2306
      %2308 = vrot.lane.b32.xlu0 %v2093, 106
      %v2309 = vpop.permute.xlu0 %2308
      %2310 = vrot.lane.b32.xlu0 %v2094, 106
      %v2311 = vpop.permute.xlu0 %2310
      %2312 = vrot.lane.b32.xlu0 %v2110, 106
      %v2313 = vpop.permute.xlu0 %2312
      %v2314 = vsel %vm1302, %v2299, %v2301
      %v2315 = vsel %vm1302, %v2301, %v2303
      %v2316 = vsel %vm1302, %v2303, %v2305
      %v2317 = vsel %vm1302, %v2307, %v2309
      %v2318 = vsel %vm1302, %v2309, %v2311
      %v2319 = vsel %vm1302, %v2311, %v2313
      %2328 = vrot.lane.b32.xlu0 %v2101, 105
      %v2329 = vpop.permute.xlu0 %2328
      %2330 = vrot.lane.b32.xlu0 %v2090, 105
      %v2331 = vpop.permute.xlu0 %2330
      %2332 = vrot.lane.b32.xlu0 %v2091, 105
      %v2333 = vpop.permute.xlu0 %2332
      %2334 = vrot.lane.b32.xlu0 %v2107, 105
      %v2335 = vpop.permute.xlu0 %2334
      %2336 = vrot.lane.b32.xlu0 %v2104, 105
      %v2337 = vpop.permute.xlu0 %2336
      %2338 = vrot.lane.b32.xlu0 %v2093, 105
      %v2339 = vpop.permute.xlu0 %2338
      %2340 = vrot.lane.b32.xlu0 %v2094, 105
      %v2341 = vpop.permute.xlu0 %2340
      %2342 = vrot.lane.b32.xlu0 %v2110, 105
      %v2343 = vpop.permute.xlu0 %2342
      %vm2344 = vcmask 859136
      %v2345 = vsel %vm2344, %v2329, %v2331
      %v2346 = vsel %vm2344, %v2331, %v2333
      %v2347 = vsel %vm2344, %v2333, %v2335
      %v2348 = vsel %vm2344, %v2337, %v2339
      %v2349 = vsel %vm2344, %v2339, %v2341
      %v2350 = vsel %vm2344, %v2341, %v2343
      %2359 = vrot.lane.b32.xlu0 %v2101, 104
      %v2360 = vpop.permute.xlu0 %2359
      %2361 = vrot.lane.b32.xlu0 %v2090, 104
      %v2362 = vpop.permute.xlu0 %2361
      %2363 = vrot.lane.b32.xlu0 %v2091, 104
      %v2364 = vpop.permute.xlu0 %2363
      %2365 = vrot.lane.b32.xlu0 %v2107, 104
      %v2366 = vpop.permute.xlu0 %2365
      %2367 = vrot.lane.b32.xlu0 %v2104, 104
      %v2368 = vpop.permute.xlu0 %2367
      %2369 = vrot.lane.b32.xlu0 %v2093, 104
      %v2370 = vpop.permute.xlu0 %2369
      %2371 = vrot.lane.b32.xlu0 %v2094, 104
      %v2372 = vpop.permute.xlu0 %2371
      %2373 = vrot.lane.b32.xlu0 %v2110, 104
      %v2374 = vpop.permute.xlu0 %2373
      %vm2375 = vcmask 850944
      %v2376 = vsel %vm2375, %v2360, %v2362
      %v2377 = vsel %vm2375, %v2362, %v2364
      %v2378 = vsel %vm2375, %v2364, %v2366
      %v2379 = vsel %vm2375, %v2368, %v2370
      %v2380 = vsel %vm2375, %v2370, %v2372
      %v2381 = vsel %vm2375, %v2372, %v2374
      %2390 = vrot.lane.b32.xlu0 %v2101, 88
      %v2391 = vpop.permute.xlu0 %2390
      %2392 = vrot.lane.b32.xlu0 %v2090, 88
      %v2393 = vpop.permute.xlu0 %2392
      %2394 = vrot.lane.b32.xlu0 %v2091, 88
      %v2395 = vpop.permute.xlu0 %2394
      %2396 = vrot.lane.b32.xlu0 %v2107, 88
      %v2397 = vpop.permute.xlu0 %2396
      %2398 = vrot.lane.b32.xlu0 %v2104, 88
      %v2399 = vpop.permute.xlu0 %2398
      %2400 = vrot.lane.b32.xlu0 %v2093, 88
      %v2401 = vpop.permute.xlu0 %2400
      %2402 = vrot.lane.b32.xlu0 %v2094, 88
      %v2403 = vpop.permute.xlu0 %2402
      %2404 = vrot.lane.b32.xlu0 %v2110, 88
      %v2405 = vpop.permute.xlu0 %2404
      %v2406 = vsel %vm1325, %v2391, %v2393
      %v2407 = vsel %vm1325, %v2393, %v2395
      %v2408 = vsel %vm1325, %v2395, %v2397
      %v2409 = vsel %vm1325, %v2399, %v2401
      %v2410 = vsel %vm1325, %v2401, %v2403
      %v2411 = vsel %vm1325, %v2403, %v2405
      %2420 = vrot.lane.b32.xlu0 %v2101, 87
      %v2421 = vpop.permute.xlu0 %2420
      %2422 = vrot.lane.b32.xlu0 %v2090, 87
      %v2423 = vpop.permute.xlu0 %2422
      %2424 = vrot.lane.b32.xlu0 %v2091, 87
      %v2425 = vpop.permute.xlu0 %2424
      %2426 = vrot.lane.b32.xlu0 %v2107, 87
      %v2427 = vpop.permute.xlu0 %2426
      %2428 = vrot.lane.b32.xlu0 %v2104, 87
      %v2429 = vpop.permute.xlu0 %2428
      %2430 = vrot.lane.b32.xlu0 %v2093, 87
      %v2431 = vpop.permute.xlu0 %2430
      %2432 = vrot.lane.b32.xlu0 %v2094, 87
      %v2433 = vpop.permute.xlu0 %2432
      %2434 = vrot.lane.b32.xlu0 %v2110, 87
      %v2435 = vpop.permute.xlu0 %2434
      %v2436 = vsel %vm1348, %v2421, %v2423
      %v2437 = vsel %vm1348, %v2423, %v2425
      %v2438 = vsel %vm1348, %v2425, %v2427
      %v2439 = vsel %vm1348, %v2429, %v2431
      %v2440 = vsel %vm1348, %v2431, %v2433
      %v2441 = vsel %vm1348, %v2433, %v2435
      %2450 = vrot.lane.b32.xlu0 %v2101, 86
      %v2451 = vpop.permute.xlu0 %2450
      %2452 = vrot.lane.b32.xlu0 %v2090, 86
      %v2453 = vpop.permute.xlu0 %2452
      %2454 = vrot.lane.b32.xlu0 %v2091, 86
      %v2455 = vpop.permute.xlu0 %2454
      %2456 = vrot.lane.b32.xlu0 %v2107, 86
      %v2457 = vpop.permute.xlu0 %2456
      %2458 = vrot.lane.b32.xlu0 %v2104, 86
      %v2459 = vpop.permute.xlu0 %2458
      %2460 = vrot.lane.b32.xlu0 %v2093, 86
      %v2461 = vpop.permute.xlu0 %2460
      %2462 = vrot.lane.b32.xlu0 %v2094, 86
      %v2463 = vpop.permute.xlu0 %2462
      %2464 = vrot.lane.b32.xlu0 %v2110, 86
      %v2465 = vpop.permute.xlu0 %2464
      %v2466 = vsel %vm1371, %v2451, %v2453
      %v2467 = vsel %vm1371, %v2453, %v2455
      %v2468 = vsel %vm1371, %v2455, %v2457
      %v2469 = vsel %vm1371, %v2459, %v2461
      %v2470 = vsel %vm1371, %v2461, %v2463
      %v2471 = vsel %vm1371, %v2463, %v2465
      %2480 = vrot.lane.b32.xlu0 %v2101, 85
      %v2481 = vpop.permute.xlu0 %2480
      %2482 = vrot.lane.b32.xlu0 %v2090, 85
      %v2483 = vpop.permute.xlu0 %2482
      %2484 = vrot.lane.b32.xlu0 %v2091, 85
      %v2485 = vpop.permute.xlu0 %2484
      %2486 = vrot.lane.b32.xlu0 %v2107, 85
      %v2487 = vpop.permute.xlu0 %2486
      %2488 = vrot.lane.b32.xlu0 %v2104, 85
      %v2489 = vpop.permute.xlu0 %2488
      %2490 = vrot.lane.b32.xlu0 %v2093, 85
      %v2491 = vpop.permute.xlu0 %2490
      %2492 = vrot.lane.b32.xlu0 %v2094, 85
      %v2493 = vpop.permute.xlu0 %2492
      %2494 = vrot.lane.b32.xlu0 %v2110, 85
      %v2495 = vpop.permute.xlu0 %2494
      %vm2496 = vcmask 695296
      %v2497 = vsel %vm2496, %v2481, %v2483
      %v2498 = vsel %vm2496, %v2483, %v2485
      %v2499 = vsel %vm2496, %v2485, %v2487
      %v2500 = vsel %vm2496, %v2489, %v2491
      %v2501 = vsel %vm2496, %v2491, %v2493
      %v2502 = vsel %vm2496, %v2493, %v2495
      %2511 = vrot.lane.b32.xlu0 %v2101, 84
      %v2512 = vpop.permute.xlu0 %2511
      %2513 = vrot.lane.b32.xlu0 %v2090, 84
      %v2514 = vpop.permute.xlu0 %2513
      %2515 = vrot.lane.b32.xlu0 %v2091, 84
      %v2516 = vpop.permute.xlu0 %2515
      %2517 = vrot.lane.b32.xlu0 %v2107, 84
      %v2518 = vpop.permute.xlu0 %2517
      %2519 = vrot.lane.b32.xlu0 %v2104, 84
      %v2520 = vpop.permute.xlu0 %2519
      %2521 = vrot.lane.b32.xlu0 %v2093, 84
      %v2522 = vpop.permute.xlu0 %2521
      %2523 = vrot.lane.b32.xlu0 %v2094, 84
      %v2524 = vpop.permute.xlu0 %2523
      %2525 = vrot.lane.b32.xlu0 %v2110, 84
      %v2526 = vpop.permute.xlu0 %2525
      %vm2527 = vcmask 687104
      %v2528 = vsel %vm2527, %v2512, %v2514
      %v2529 = vsel %vm2527, %v2514, %v2516
      %v2530 = vsel %vm2527, %v2516, %v2518
      %v2531 = vsel %vm2527, %v2520, %v2522
      %v2532 = vsel %vm2527, %v2522, %v2524
      %v2533 = vsel %vm2527, %v2524, %v2526
      %2542 = vrot.lane.b32.xlu0 %v2101, 68
      %v2543 = vpop.permute.xlu0 %2542
      %2544 = vrot.lane.b32.xlu0 %v2090, 68
      %v2545 = vpop.permute.xlu0 %2544
      %2546 = vrot.lane.b32.xlu0 %v2091, 68
      %v2547 = vpop.permute.xlu0 %2546
      %2548 = vrot.lane.b32.xlu0 %v2107, 68
      %v2549 = vpop.permute.xlu0 %2548
      %2550 = vrot.lane.b32.xlu0 %v2104, 68
      %v2551 = vpop.permute.xlu0 %2550
      %2552 = vrot.lane.b32.xlu0 %v2093, 68
      %v2553 = vpop.permute.xlu0 %2552
      %2554 = vrot.lane.b32.xlu0 %v2094, 68
      %v2555 = vpop.permute.xlu0 %2554
      %2556 = vrot.lane.b32.xlu0 %v2110, 68
      %v2557 = vpop.permute.xlu0 %2556
      %vm2558 = vcmask 556032
      %v2559 = vsel %vm2558, %v2543, %v2545
      %v2560 = vsel %vm2558, %v2545, %v2547
      %v2561 = vsel %vm2558, %v2547, %v2549
      %v2562 = vsel %vm2558, %v2551, %v2553
      %v2563 = vsel %vm2558, %v2553, %v2555
      %v2564 = vsel %vm2558, %v2555, %v2557
      %2573 = vrot.lane.b32.xlu0 %v2101, 109
      %v2574 = vpop.permute.xlu0 %2573
      %2575 = vrot.lane.b32.xlu0 %v2090, 109
      %v2576 = vpop.permute.xlu0 %2575
      %2577 = vrot.lane.b32.xlu0 %v2091, 109
      %v2578 = vpop.permute.xlu0 %2577
      %2579 = vrot.lane.b32.xlu0 %v2107, 109
      %v2580 = vpop.permute.xlu0 %2579
      %2581 = vrot.lane.b32.xlu0 %v2104, 109
      %v2582 = vpop.permute.xlu0 %2581
      %2583 = vrot.lane.b32.xlu0 %v2093, 109
      %v2584 = vpop.permute.xlu0 %2583
      %2585 = vrot.lane.b32.xlu0 %v2094, 109
      %v2586 = vpop.permute.xlu0 %2585
      %2587 = vrot.lane.b32.xlu0 %v2110, 109
      %v2588 = vpop.permute.xlu0 %2587
      %vm2589 = vcmask 891904
      %v2590 = vsel %vm2589, %v2574, %v2576
      %v2591 = vsel %vm2589, %v2576, %v2578
      %v2592 = vsel %vm2589, %v2578, %v2580
      %v2593 = vsel %vm2589, %v2582, %v2584
      %v2594 = vsel %vm2589, %v2584, %v2586
      %v2595 = vsel %vm2589, %v2586, %v2588
      %2596 = vrot.lane.b32.xlu0 %v2101, 67
      %v2597 = vpop.permute.xlu0 %2596
      %2598 = vrot.lane.b32.xlu0 %v2090, 67
      %v2599 = vpop.permute.xlu0 %2598
      %2600 = vrot.lane.b32.xlu0 %v2091, 67
      %v2601 = vpop.permute.xlu0 %2600
      %2602 = vrot.lane.b32.xlu0 %v2107, 67
      %v2603 = vpop.permute.xlu0 %2602
      %2604 = vrot.lane.b32.xlu0 %v2104, 67
      %v2605 = vpop.permute.xlu0 %2604
      %2606 = vrot.lane.b32.xlu0 %v2093, 67
      %v2607 = vpop.permute.xlu0 %2606
      %2608 = vrot.lane.b32.xlu0 %v2094, 67
      %v2609 = vpop.permute.xlu0 %2608
      %2610 = vrot.lane.b32.xlu0 %v2110, 67
      %v2611 = vpop.permute.xlu0 %2610
      %2612 = vrot.lane.b32.xlu0 %v2132, 67
      %v2613 = vpop.permute.xlu0 %2612
      %2614 = vrot.lane.b32.xlu0 %v2133, 67
      %v2615 = vpop.permute.xlu0 %2614
      %2616 = vrot.lane.b32.xlu0 %v2134, 67
      %v2617 = vpop.permute.xlu0 %2616
      %2618 = vrot.lane.b32.xlu0 %v2123, 67
      %v2619 = vpop.permute.xlu0 %2618
      %2620 = vrot.lane.b32.xlu0 %v2135, 67
      %v2621 = vpop.permute.xlu0 %2620
      %2622 = vrot.lane.b32.xlu0 %v2136, 67
      %v2623 = vpop.permute.xlu0 %2622
      %2624 = vrot.lane.b32.xlu0 %v2137, 67
      %v2625 = vpop.permute.xlu0 %2624
      %2626 = vrot.lane.b32.xlu0 %v2131, 67
      %v2627 = vpop.permute.xlu0 %2626
      %2628 = vrot.lane.b32.xlu0 %v2162, 67
      %v2629 = vpop.permute.xlu0 %2628
      %2630 = vrot.lane.b32.xlu0 %v2163, 67
      %v2631 = vpop.permute.xlu0 %2630
      %2632 = vrot.lane.b32.xlu0 %v2164, 67
      %v2633 = vpop.permute.xlu0 %2632
      %2634 = vrot.lane.b32.xlu0 %v2153, 67
      %v2635 = vpop.permute.xlu0 %2634
      %2636 = vrot.lane.b32.xlu0 %v2165, 67
      %v2637 = vpop.permute.xlu0 %2636
      %2638 = vrot.lane.b32.xlu0 %v2166, 67
      %v2639 = vpop.permute.xlu0 %2638
      %2640 = vrot.lane.b32.xlu0 %v2167, 67
      %v2641 = vpop.permute.xlu0 %2640
      %2642 = vrot.lane.b32.xlu0 %v2161, 67
      %v2643 = vpop.permute.xlu0 %2642
      %2644 = vrot.lane.b32.xlu0 %v2193, 67
      %v2645 = vpop.permute.xlu0 %2644
      %2646 = vrot.lane.b32.xlu0 %v2194, 67
      %v2647 = vpop.permute.xlu0 %2646
      %2648 = vrot.lane.b32.xlu0 %v2195, 67
      %v2649 = vpop.permute.xlu0 %2648
      %2650 = vrot.lane.b32.xlu0 %v2183, 67
      %v2651 = vpop.permute.xlu0 %2650
      %2652 = vrot.lane.b32.xlu0 %v2196, 67
      %v2653 = vpop.permute.xlu0 %2652
      %2654 = vrot.lane.b32.xlu0 %v2197, 67
      %v2655 = vpop.permute.xlu0 %2654
      %2656 = vrot.lane.b32.xlu0 %v2198, 67
      %v2657 = vpop.permute.xlu0 %2656
      %2658 = vrot.lane.b32.xlu0 %v2191, 67
      %v2659 = vpop.permute.xlu0 %2658
      %2660 = vrot.lane.b32.xlu0 %v2590, 67
      %v2661 = vpop.permute.xlu0 %2660
      %2662 = vrot.lane.b32.xlu0 %v2591, 67
      %v2663 = vpop.permute.xlu0 %2662
      %2664 = vrot.lane.b32.xlu0 %v2592, 67
      %v2665 = vpop.permute.xlu0 %2664
      %2666 = vrot.lane.b32.xlu0 %v2580, 67
      %v2667 = vpop.permute.xlu0 %2666
      %2668 = vrot.lane.b32.xlu0 %v2593, 67
      %v2669 = vpop.permute.xlu0 %2668
      %2670 = vrot.lane.b32.xlu0 %v2594, 67
      %v2671 = vpop.permute.xlu0 %2670
      %2672 = vrot.lane.b32.xlu0 %v2595, 67
      %v2673 = vpop.permute.xlu0 %2672
      %2674 = vrot.lane.b32.xlu0 %v2588, 67
      %v2675 = vpop.permute.xlu0 %2674
      %2676 = vrot.lane.b32.xlu0 %v2254, 67
      %v2677 = vpop.permute.xlu0 %2676
      %2678 = vrot.lane.b32.xlu0 %v2255, 67
      %v2679 = vpop.permute.xlu0 %2678
      %2680 = vrot.lane.b32.xlu0 %v2256, 67
      %v2681 = vpop.permute.xlu0 %2680
      %2682 = vrot.lane.b32.xlu0 %v2245, 67
      %v2683 = vpop.permute.xlu0 %2682
      %2684 = vrot.lane.b32.xlu0 %v2257, 67
      %v2685 = vpop.permute.xlu0 %2684
      %2686 = vrot.lane.b32.xlu0 %v2258, 67
      %v2687 = vpop.permute.xlu0 %2686
      %2688 = vrot.lane.b32.xlu0 %v2259, 67
      %v2689 = vpop.permute.xlu0 %2688
      %2690 = vrot.lane.b32.xlu0 %v2253, 67
      %v2691 = vpop.permute.xlu0 %2690
      %2692 = vrot.lane.b32.xlu0 %v2284, 67
      %v2693 = vpop.permute.xlu0 %2692
      %2694 = vrot.lane.b32.xlu0 %v2285, 67
      %v2695 = vpop.permute.xlu0 %2694
      %2696 = vrot.lane.b32.xlu0 %v2286, 67
      %v2697 = vpop.permute.xlu0 %2696
      %2698 = vrot.lane.b32.xlu0 %v2275, 67
      %v2699 = vpop.permute.xlu0 %2698
      %2700 = vrot.lane.b32.xlu0 %v2287, 67
      %v2701 = vpop.permute.xlu0 %2700
      %2702 = vrot.lane.b32.xlu0 %v2288, 67
      %v2703 = vpop.permute.xlu0 %2702
      %2704 = vrot.lane.b32.xlu0 %v2289, 67
      %v2705 = vpop.permute.xlu0 %2704
      %2706 = vrot.lane.b32.xlu0 %v2283, 67
      %v2707 = vpop.permute.xlu0 %2706
      %2708 = vrot.lane.b32.xlu0 %v2314, 67
      %v2709 = vpop.permute.xlu0 %2708
      %2710 = vrot.lane.b32.xlu0 %v2315, 67
      %v2711 = vpop.permute.xlu0 %2710
      %2712 = vrot.lane.b32.xlu0 %v2316, 67
      %v2713 = vpop.permute.xlu0 %2712
      %2714 = vrot.lane.b32.xlu0 %v2305, 67
      %v2715 = vpop.permute.xlu0 %2714
      %2716 = vrot.lane.b32.xlu0 %v2317, 67
      %v2717 = vpop.permute.xlu0 %2716
      %2718 = vrot.lane.b32.xlu0 %v2318, 67
      %v2719 = vpop.permute.xlu0 %2718
      %2720 = vrot.lane.b32.xlu0 %v2319, 67
      %v2721 = vpop.permute.xlu0 %2720
      %2722 = vrot.lane.b32.xlu0 %v2313, 67
      %v2723 = vpop.permute.xlu0 %2722
      %2724 = vrot.lane.b32.xlu0 %v2345, 67
      %v2725 = vpop.permute.xlu0 %2724
      %2726 = vrot.lane.b32.xlu0 %v2346, 67
      %v2727 = vpop.permute.xlu0 %2726
      %2728 = vrot.lane.b32.xlu0 %v2347, 67
      %v2729 = vpop.permute.xlu0 %2728
      %2730 = vrot.lane.b32.xlu0 %v2335, 67
      %v2731 = vpop.permute.xlu0 %2730
      %2732 = vrot.lane.b32.xlu0 %v2348, 67
      %v2733 = vpop.permute.xlu0 %2732
      %2734 = vrot.lane.b32.xlu0 %v2349, 67
      %v2735 = vpop.permute.xlu0 %2734
      %2736 = vrot.lane.b32.xlu0 %v2350, 67
      %v2737 = vpop.permute.xlu0 %2736
      %2738 = vrot.lane.b32.xlu0 %v2343, 67
      %v2739 = vpop.permute.xlu0 %2738
      %vm2740 = vcmask 547840
      %v2741 = vsel %vm2740, %v2597, %v2599
      %v2742 = vsel %vm2740, %v2599, %v2601
      %v2743 = vsel %vm2740, %v2601, %v2603
      %v2744 = vsel %vm2740, %v2605, %v2607
      %v2745 = vsel %vm2740, %v2607, %v2609
      %v2746 = vsel %vm2740, %v2609, %v2611
      %v2747 = vsel %vm2740, %v2613, %v2615
      %v2748 = vsel %vm2740, %v2615, %v2617
      %v2749 = vsel %vm2740, %v2617, %v2619
      %v2750 = vsel %vm2740, %v2621, %v2623
      %v2751 = vsel %vm2740, %v2623, %v2625
      %v2752 = vsel %vm2740, %v2625, %v2627
      %v2753 = vsel %vm2740, %v2629, %v2631
      %v2754 = vsel %vm2740, %v2631, %v2633
      %v2755 = vsel %vm2740, %v2633, %v2635
      %v2756 = vsel %vm2740, %v2637, %v2639
      %v2757 = vsel %vm2740, %v2639, %v2641
      %v2758 = vsel %vm2740, %v2641, %v2643
      %v2759 = vsel %vm2740, %v2645, %v2647
      %v2760 = vsel %vm2740, %v2647, %v2649
      %v2761 = vsel %vm2740, %v2649, %v2651
      %v2762 = vsel %vm2740, %v2653, %v2655
      %v2763 = vsel %vm2740, %v2655, %v2657
      %v2764 = vsel %vm2740, %v2657, %v2659
      %v2765 = vsel %vm2740, %v2661, %v2663
      %v2766 = vsel %vm2740, %v2663, %v2665
      %v2767 = vsel %vm2740, %v2665, %v2667
      %v2768 = vsel %vm2740, %v2669, %v2671
      %v2769 = vsel %vm2740, %v2671, %v2673
      %v2770 = vsel %vm2740, %v2673, %v2675
      %v2771 = vsel %vm2740, %v2677, %v2679
      %v2772 = vsel %vm2740, %v2679, %v2681
      %v2773 = vsel %vm2740, %v2681, %v2683
      %v2774 = vsel %vm2740, %v2685, %v2687
      %v2775 = vsel %vm2740, %v2687, %v2689
      %v2776 = vsel %vm2740, %v2689, %v2691
      %v2777 = vsel %vm2740, %v2693, %v2695
      %v2778 = vsel %vm2740, %v2695, %v2697
      %v2779 = vsel %vm2740, %v2697, %v2699
      %v2780 = vsel %vm2740, %v2701, %v2703
      %v2781 = vsel %vm2740, %v2703, %v2705
      %v2782 = vsel %vm2740, %v2705, %v2707
      %v2783 = vsel %vm2740, %v2709, %v2711
      %v2784 = vsel %vm2740, %v2711, %v2713
      %v2785 = vsel %vm2740, %v2713, %v2715
      %v2786 = vsel %vm2740, %v2717, %v2719
      %v2787 = vsel %vm2740, %v2719, %v2721
      %v2788 = vsel %vm2740, %v2721, %v2723
      %v2789 = vsel %vm2740, %v2725, %v2727
      %v2790 = vsel %vm2740, %v2727, %v2729
      %v2791 = vsel %vm2740, %v2729, %v2731
      %v2792 = vsel %vm2740, %v2733, %v2735
      %v2793 = vsel %vm2740, %v2735, %v2737
      %v2794 = vsel %vm2740, %v2737, %v2739
      %v2867 = vld [vmem:[%s11] sm:$0xff]
      %v2868 = vld [vmem:[%s11 + $0x8] sm:$0xff]
      %v2869 = vld [vmem:[%s11 + $0x10] sm:$0xff]
      %v2870 = vld [vmem:[%s11 + $0x18] sm:$0xff]
      %2872 = vset.pattern.permute.xlu0 0
      %2873 = vperm.xlu0 %2872, %v2867
      %v2874 = vpop.permute.xlu0 %2873
      %2877 = vset.pattern.permute.xlu0 0
      %2878 = vperm.xlu0 %2877, %v2868
      %v2879 = vpop.permute.xlu0 %2878
      %2882 = vset.pattern.permute.xlu0 0
      %2883 = vperm.xlu0 %2882, %v2869
      %v2884 = vpop.permute.xlu0 %2883
      %2887 = vset.pattern.permute.xlu0 0
      %2888 = vperm.xlu0 %2887, %v2870
      %v2889 = vpop.permute.xlu0 %2888
      %v2907 = vunpack.c.l.b16 %v2050
      %v2908 = vunpack.c.h.b16 %v2050
      %v2909 = vunpack.c.l.b16 %v2051
      %v2910 = vunpack.c.h.b16 %v2051
      %v2911 = vunpack.c.l.b16 %v2052
      %v2912 = vunpack.c.h.b16 %v2052
      %v2913 = vunpack.c.l.b16 %v2053
      %v2914 = vunpack.c.l.b16 %v2054
      %v2915 = vunpack.c.h.b16 %v2054
      %v2916 = vunpack.c.l.b16 %v2055
      %v2917 = vunpack.c.h.b16 %v2055
      %v2918 = vunpack.c.l.b16 %v2056
      %v2919 = vunpack.c.h.b16 %v2056
      %v2920 = vunpack.c.l.b16 %v2057
      %v2921 = vunpack.c.l.b16 %v2058
      %v2922 = vunpack.c.h.b16 %v2058
      %v2923 = vunpack.c.l.b16 %v2059
      %v2924 = vunpack.c.h.b16 %v2059
      %v2925 = vunpack.c.l.b16 %v2060
      %v2926 = vunpack.c.h.b16 %v2060
      %v2927 = vunpack.c.l.b16 %v2061
      %v2928 = vunpack.c.l.b16 %v2062
      %v2929 = vunpack.c.h.b16 %v2062
      %v2930 = vunpack.c.l.b16 %v2063
      %v2931 = vunpack.c.h.b16 %v2063
      %v2932 = vunpack.c.l.b16 %v2064
      %v2933 = vunpack.c.h.b16 %v2064
      %v2934 = vunpack.c.l.b16 %v2065
      %v2935 = vpack.c.b16 %v2914, %v2907
      %v2936 = vpack.c.b16 %v2915, %v2908
      %v2937 = vpack.c.b16 %v2916, %v2909
      %v2938 = vpack.c.b16 %v2917, %v2910
      %v2939 = vpack.c.b16 %v2918, %v2911
      %v2940 = vpack.c.b16 %v2919, %v2912
      %v2941 = vpack.c.b16 %v2920, %v2913
      %v2942 = vpack.c.b16 %v2928, %v2921
      %v2943 = vpack.c.b16 %v2929, %v2922
      %v2944 = vpack.c.b16 %v2930, %v2923
      %v2945 = vpack.c.b16 %v2931, %v2924
      %v2946 = vpack.c.b16 %v2932, %v2925
      %v2947 = vpack.c.b16 %v2933, %v2926
      %v2948 = vpack.c.b16 %v2934, %v2927
      %v2962 = vsel %vm854, %v2941, 0
      %v2965 = vsel %vm854, %v2948, 0
      %2967 = vmatprep.subr.bf16.mxu0 %v2090
      %2968 = vmatpush1.bf16.msra.mxu0 %v2101
      %2969 = vmatprep.subr.bf16.mxu0 %v2093
      %2970 = vmatpush1.bf16.msra.mxu0 %v2104
      %2971 = vmatprep.subr.bf16.mxu0 %v2133
      %2972 = vmatpush1.bf16.msra.mxu0 %v2132
      %2973 = vmatprep.subr.bf16.mxu0 %v2136
      %2974 = vmatpush1.bf16.msra.mxu0 %v2135
      %2975 = vmatprep.subr.bf16.mxu0 %v2163
      %2976 = vmatpush1.bf16.msra.mxu0 %v2162
      %2977 = vmatprep.subr.bf16.mxu0 %v2166
      %2978 = vmatpush1.bf16.msra.mxu0 %v2165
      %2979 = vmatprep.subr.bf16.mxu0 %v2194
      %2980 = vmatpush1.bf16.msra.mxu0 %v2193
      %2981 = vmatprep.subr.bf16.mxu0 %v2197
      %2982 = vmatpush1.bf16.msra.mxu0 %v2196
      %2983 = vmatprep.subr.bf16.mxu0 %v2225
      %2984 = vmatpush1.bf16.msra.mxu0 %v2224
      %2985 = vmatprep.subr.bf16.mxu0 %v2228
      %2986 = vmatpush1.bf16.msra.mxu0 %v2227
      %2987 = vmatprep.subr.bf16.mxu0 %v2255
      %2988 = vmatpush1.bf16.msra.mxu0 %v2254
      %2989 = vmatprep.subr.bf16.mxu0 %v2258
      %2990 = vmatpush1.bf16.msra.mxu0 %v2257
      %2991 = vmatprep.subr.bf16.mxu0 %v2285
      %2992 = vmatpush1.bf16.msra.mxu0 %v2284
      %2993 = vmatprep.subr.bf16.mxu0 %v2288
      %2994 = vmatpush1.bf16.msra.mxu0 %v2287
      %2995 = vmatprep.subr.bf16.mxu0 %v2315
      %2996 = vmatpush1.bf16.msra.mxu0 %v2314
      %2997 = vmatprep.subr.bf16.mxu0 %v2318
      %2998 = vmatpush1.bf16.msra.mxu0 %v2317
      %2999 = vmatprep.mubr.bf16.mxu0 %v2936
      %3000 = vmatmul.mubr.bf16.gmra.mrb[0].mxu0 %v2935
      %v3001 = vpop.f32.mrb[0].mxu0
      %v3002 = vadd.f32 %v2874, %v3001
      %v3003 = vpop.f32.mrb[0].mxu0
      %v3004 = vadd.f32 %v2874, %v3003
      %v3005 = vpop.f32.mrb[0].mxu0
      %v3006 = vadd.f32 %v2879, %v3005
      %v3007 = vpop.f32.mrb[0].mxu0
      %v3008 = vadd.f32 %v2879, %v3007
      %3009 = vmatprep.mubr.bf16.mxu0 %v2943
      %3010 = vmatmul.mubr.bf16.gmra.mrb[0].mxu0 %v2942
      %v3011 = vpop.f32.mrb[0].mxu0
      %v3012 = vadd.f32 %v2884, %v3011
      %v3013 = vpop.f32.mrb[0].mxu0
      %v3014 = vadd.f32 %v2884, %v3013
      %v3015 = vpop.f32.mrb[0].mxu0
      %v3016 = vadd.f32 %v2889, %v3015
      %v3017 = vpop.f32.mrb[0].mxu0
      %v3018 = vadd.f32 %v2889, %v3017
      %3019 = vdwg.mxu0
      %3020 = vmatprep.subr.bf16.mxu0 %v2346
      %3021 = vmatpush1.bf16.msra.mxu0 %v2345
      %3022 = vmatprep.subr.bf16.mxu0 %v2349
      %3023 = vmatpush1.bf16.msra.mxu0 %v2348
      %3024 = vmatprep.subr.bf16.mxu0 %v2377
      %3025 = vmatpush1.bf16.msra.mxu0 %v2376
      %3026 = vmatprep.subr.bf16.mxu0 %v2380
      %3027 = vmatpush1.bf16.msra.mxu0 %v2379
      %3028 = vmatprep.subr.bf16.mxu0 %v2407
      %3029 = vmatpush1.bf16.msra.mxu0 %v2406
      %3030 = vmatprep.subr.bf16.mxu0 %v2410
      %3031 = vmatpush1.bf16.msra.mxu0 %v2409
      %3032 = vmatprep.subr.bf16.mxu0 %v2437
      %3033 = vmatpush1.bf16.msra.mxu0 %v2436
      %3034 = vmatprep.subr.bf16.mxu0 %v2440
      %3035 = vmatpush1.bf16.msra.mxu0 %v2439
      %3036 = vmatprep.subr.bf16.mxu0 %v2467
      %3037 = vmatpush1.bf16.msra.mxu0 %v2466
      %3038 = vmatprep.subr.bf16.mxu0 %v2470
      %3039 = vmatpush1.bf16.msra.mxu0 %v2469
      %3040 = vmatprep.subr.bf16.mxu0 %v2498
      %3041 = vmatpush1.bf16.msra.mxu0 %v2497
      %3042 = vmatprep.subr.bf16.mxu0 %v2501
      %3043 = vmatpush1.bf16.msra.mxu0 %v2500
      %3044 = vmatprep.subr.bf16.mxu0 %v2529
      %3045 = vmatpush1.bf16.msra.mxu0 %v2528
      %3046 = vmatprep.subr.bf16.mxu0 %v2532
      %3047 = vmatpush1.bf16.msra.mxu0 %v2531
      %3048 = vmatprep.subr.bf16.mxu0 %v2560
      %3049 = vmatpush1.bf16.msra.mxu0 %v2559
      %3050 = vmatprep.subr.bf16.mxu0 %v2563
      %3051 = vmatpush1.bf16.msra.mxu0 %v2562
      %3052 = vmatprep.mubr.bf16.mxu0 %v2938
      %3053 = vmatmul.mubr.bf16.gmra.mrb[0].mxu0 %v2937
      %v3054 = vpop.f32.mrb[0].mxu0
      %v3055 = vadd.f32 %v3002, %v3054
      %v3056 = vpop.f32.mrb[0].mxu0
      %v3057 = vadd.f32 %v3004, %v3056
      %v3058 = vpop.f32.mrb[0].mxu0
      %v3059 = vadd.f32 %v3006, %v3058
      %v3060 = vpop.f32.mrb[0].mxu0
      %v3061 = vadd.f32 %v3008, %v3060
      %3062 = vmatprep.mubr.bf16.mxu0 %v2945
      %3063 = vmatmul.mubr.bf16.gmra.mrb[0].mxu0 %v2944
      %v3064 = vpop.f32.mrb[0].mxu0
      %v3065 = vadd.f32 %v3012, %v3064
      %v3066 = vpop.f32.mrb[0].mxu0
      %v3067 = vadd.f32 %v3014, %v3066
      %v3068 = vpop.f32.mrb[0].mxu0
      %v3069 = vadd.f32 %v3016, %v3068
      %v3070 = vpop.f32.mrb[0].mxu0
      %v3071 = vadd.f32 %v3018, %v3070
      %3072 = vdwg.mxu0
      %3073 = vmatprep.subr.bf16.mxu0 %v2742
      %3074 = vmatpush1.bf16.msra.mxu0 %v2741
      %3075 = vmatprep.subr.bf16.mxu0 %v2745
      %3076 = vmatpush1.bf16.msra.mxu0 %v2744
      %3077 = vmatprep.subr.bf16.mxu0 %v2748
      %3078 = vmatpush1.bf16.msra.mxu0 %v2747
      %3079 = vmatprep.subr.bf16.mxu0 %v2751
      %3080 = vmatpush1.bf16.msra.mxu0 %v2750
      %3081 = vmatprep.subr.bf16.mxu0 %v2754
      %3082 = vmatpush1.bf16.msra.mxu0 %v2753
      %3083 = vmatprep.subr.bf16.mxu0 %v2757
      %3084 = vmatpush1.bf16.msra.mxu0 %v2756
      %3085 = vmatprep.subr.bf16.mxu0 %v2760
      %3086 = vmatpush1.bf16.msra.mxu0 %v2759
      %3087 = vmatprep.subr.bf16.mxu0 %v2763
      %3088 = vmatpush1.bf16.msra.mxu0 %v2762
      %3089 = vmatprep.subr.bf16.mxu0 %v2766
      %3090 = vmatpush1.bf16.msra.mxu0 %v2765
      %3091 = vmatprep.subr.bf16.mxu0 %v2769
      %3092 = vmatpush1.bf16.msra.mxu0 %v2768
      %3093 = vmatprep.subr.bf16.mxu0 %v2772
      %3094 = vmatpush1.bf16.msra.mxu0 %v2771
      %3095 = vmatprep.subr.bf16.mxu0 %v2775
      %3096 = vmatpush1.bf16.msra.mxu0 %v2774
      %3097 = vmatprep.subr.bf16.mxu0 %v2778
      %3098 = vmatpush1.bf16.msra.mxu0 %v2777
      %3099 = vmatprep.subr.bf16.mxu0 %v2781
      %3100 = vmatpush1.bf16.msra.mxu0 %v2780
      %3101 = vmatprep.subr.bf16.mxu0 %v2784
      %3102 = vmatpush1.bf16.msra.mxu0 %v2783
      %3103 = vmatprep.subr.bf16.mxu0 %v2787
      %3104 = vmatpush1.bf16.msra.mxu0 %v2786
      %3105 = vmatprep.mubr.bf16.mxu0 %v2940
      %3106 = vmatmul.mubr.bf16.gmra.mrb[0].mxu0 %v2939
      %v3107 = vpop.f32.mrb[0].mxu0
      %v3108 = vadd.f32 %v3055, %v3107
      %v3109 = vpop.f32.mrb[0].mxu0
      %v3110 = vadd.f32 %v3057, %v3109
      %v3111 = vpop.f32.mrb[0].mxu0
      %v3112 = vadd.f32 %v3059, %v3111
      %v3113 = vpop.f32.mrb[0].mxu0
      %v3114 = vadd.f32 %v3061, %v3113
      %3115 = vmatprep.mubr.bf16.mxu0 %v2947
      %3116 = vmatmul.mubr.bf16.gmra.mrb[0].mxu0 %v2946
      %v3117 = vpop.f32.mrb[0].mxu0
      %v3118 = vadd.f32 %v3065, %v3117
      %v3119 = vpop.f32.mrb[0].mxu0
      %v3120 = vadd.f32 %v3067, %v3119
      %v3121 = vpop.f32.mrb[0].mxu0
      %v3122 = vadd.f32 %v3069, %v3121
      %v3123 = vpop.f32.mrb[0].mxu0
      %v3124 = vadd.f32 %v3071, %v3123
      %3125 = vdwg.mxu0
      %3126 = vmatprep.subr.bf16.mxu0 %v2790
      %3127 = vmatpush1.bf16.msra.mxu0 %v2789
      %3128 = vmatprep.subr.bf16.mxu0 %v2793
      %3129 = vmatpush1.bf16.msra.mxu0 %v2792
      %3130 = vmatprep.subr.bf16.mxu0 0
      %3131 = vmatpush1.bf16.msra.mxu0 0
      %3132 = vmatprep.subr.bf16.mxu0 0
      %3133 = vmatpush1.bf16.msra.mxu0 0
      %3134 = vmatprep.subr.bf16.mxu0 0
      %3135 = vmatpush1.bf16.msra.mxu0 0
      %3136 = vmatprep.subr.bf16.mxu0 0
      %3137 = vmatpush1.bf16.msra.mxu0 0
      %3138 = vmatprep.subr.bf16.mxu0 0
      %3139 = vmatpush1.bf16.msra.mxu0 0
      %3140 = vmatprep.subr.bf16.mxu0 0
      %3141 = vmatpush1.bf16.msra.mxu0 0
      %3142 = vmatprep.subr.bf16.mxu0 0
      %3143 = vmatpush1.bf16.msra.mxu0 0
      %3144 = vmatprep.subr.bf16.mxu0 0
      %3145 = vmatpush1.bf16.msra.mxu0 0
      %3146 = vmatprep.subr.bf16.mxu0 0
      %3147 = vmatpush1.bf16.msra.mxu0 0
      %3148 = vmatprep.subr.bf16.mxu0 0
      %3149 = vmatpush1.bf16.msra.mxu0 0
      %3150 = vmatprep.subr.bf16.mxu0 0
      %3151 = vmatpush1.bf16.msra.mxu0 0
      %3152 = vmatprep.subr.bf16.mxu0 0
      %3153 = vmatpush1.bf16.msra.mxu0 0
      %3154 = vmatprep.subr.bf16.mxu0 0
      %3155 = vmatpush1.bf16.msra.mxu0 0
      %3156 = vmatprep.subr.bf16.mxu0 0
      %3157 = vmatpush1.bf16.msra.mxu0 0
      %3158 = vmatprep.mubr.bf16.mxu0 0
      %3159 = vmatmul.mubr.bf16.gmra.mrb[0].mxu0 %v2962
      %v3160 = vpop.f32.mrb[0].mxu0
      %v3161 = vadd.f32 %v3108, %v3160
      %v3162 = vpop.f32.mrb[0].mxu0
      %v3163 = vadd.f32 %v3110, %v3162
      %v3164 = vpop.f32.mrb[0].mxu0
      %v3165 = vadd.f32 %v3112, %v3164
      %v3166 = vpop.f32.mrb[0].mxu0
      %v3167 = vadd.f32 %v3114, %v3166
      %3168 = vmatprep.mubr.bf16.mxu0 0
      %3169 = vmatmul.mubr.bf16.gmra.mrb[0].mxu0 %v2965
      %v3170 = vpop.f32.mrb[0].mxu0
      %v3171 = vadd.f32 %v3118, %v3170
      %v3172 = vpop.f32.mrb[0].mxu0
      %v3173 = vadd.f32 %v3120, %v3172
      %v3174 = vpop.f32.mrb[0].mxu0
      %v3175 = vadd.f32 %v3122, %v3174
      %v3176 = vpop.f32.mrb[0].mxu0
      %v3177 = vadd.f32 %v3124, %v3176
      %3178 = vdwg.mxu0
      %3179 = vmatprep.subr.bf16.mxu0 %v2107
      %3180 = vmatpush1.bf16.msra.mxu0 %v2091
      %3181 = vmatprep.subr.bf16.mxu0 %v2110
      %3182 = vmatpush1.bf16.msra.mxu0 %v2094
      %3183 = vmatprep.subr.bf16.mxu0 %v2123
      %3184 = vmatpush1.bf16.msra.mxu0 %v2134
      %3185 = vmatprep.subr.bf16.mxu0 %v2131
      %3186 = vmatpush1.bf16.msra.mxu0 %v2137
      %3187 = vmatprep.subr.bf16.mxu0 %v2153
      %3188 = vmatpush1.bf16.msra.mxu0 %v2164
      %3189 = vmatprep.subr.bf16.mxu0 %v2161
      %3190 = vmatpush1.bf16.msra.mxu0 %v2167
      %3191 = vmatprep.subr.bf16.mxu0 %v2183
      %3192 = vmatpush1.bf16.msra.mxu0 %v2195
      %3193 = vmatprep.subr.bf16.mxu0 %v2191
      %3194 = vmatpush1.bf16.msra.mxu0 %v2198
      %3195 = vmatprep.subr.bf16.mxu0 %v2214
      %3196 = vmatpush1.bf16.msra.mxu0 %v2226
      %3197 = vmatprep.subr.bf16.mxu0 %v2222
      %3198 = vmatpush1.bf16.msra.mxu0 %v2229
      %3199 = vmatprep.subr.bf16.mxu0 %v2245
      %3200 = vmatpush1.bf16.msra.mxu0 %v2256
      %3201 = vmatprep.subr.bf16.mxu0 %v2253
      %3202 = vmatpush1.bf16.msra.mxu0 %v2259
      %3203 = vmatprep.subr.bf16.mxu0 %v2275
      %3204 = vmatpush1.bf16.msra.mxu0 %v2286
      %3205 = vmatprep.subr.bf16.mxu0 %v2283
      %3206 = vmatpush1.bf16.msra.mxu0 %v2289
      %3207 = vmatprep.subr.bf16.mxu0 %v2305
      %3208 = vmatpush1.bf16.msra.mxu0 %v2316
      %3209 = vmatprep.subr.bf16.mxu0 %v2313
      %3210 = vmatpush1.bf16.msra.mxu0 %v2319
      %3211 = vmatprep.mubr.bf16.mxu0 %v2936
      %3212 = vmatmul.mubr.bf16.gmra.mrb[0].mxu0 %v2935
      %v3213 = vpop.f32.mrb[0].mxu0
      %v3214 = vadd.f32 %v2874, %v3213
      %v3215 = vpop.f32.mrb[0].mxu0
      %v3216 = vadd.f32 %v2874, %v3215
      %v3217 = vpop.f32.mrb[0].mxu0
      %v3218 = vadd.f32 %v2879, %v3217
      %v3219 = vpop.f32.mrb[0].mxu0
      %v3220 = vadd.f32 %v2879, %v3219
      %3221 = vmatprep.mubr.bf16.mxu0 %v2943
      %3222 = vmatmul.mubr.bf16.gmra.mrb[0].mxu0 %v2942
      %v3223 = vpop.f32.mrb[0].mxu0
      %v3224 = vadd.f32 %v2884, %v3223
      %v3225 = vpop.f32.mrb[0].mxu0
      %v3226 = vadd.f32 %v2884, %v3225
      %v3227 = vpop.f32.mrb[0].mxu0
      %v3228 = vadd.f32 %v2889, %v3227
      %v3229 = vpop.f32.mrb[0].mxu0
      %v3230 = vadd.f32 %v2889, %v3229
      %3231 = vdwg.mxu0
      %3232 = vmatprep.subr.bf16.mxu0 %v2335
      %3233 = vmatpush1.bf16.msra.mxu0 %v2347
      %3234 = vmatprep.subr.bf16.mxu0 %v2343
      %3235 = vmatpush1.bf16.msra.mxu0 %v2350
      %3236 = vmatprep.subr.bf16.mxu0 %v2366
      %3237 = vmatpush1.bf16.msra.mxu0 %v2378
      %3238 = vmatprep.subr.bf16.mxu0 %v2374
      %3239 = vmatpush1.bf16.msra.mxu0 %v2381
      %3240 = vmatprep.subr.bf16.mxu0 %v2397
      %3241 = vmatpush1.bf16.msra.mxu0 %v2408
      %3242 = vmatprep.subr.bf16.mxu0 %v2405
      %3243 = vmatpush1.bf16.msra.mxu0 %v2411
      %3244 = vmatprep.subr.bf16.mxu0 %v2427
      %3245 = vmatpush1.bf16.msra.mxu0 %v2438
      %3246 = vmatprep.subr.bf16.mxu0 %v2435
      %3247 = vmatpush1.bf16.msra.mxu0 %v2441
      %3248 = vmatprep.subr.bf16.mxu0 %v2457
      %3249 = vmatpush1.bf16.msra.mxu0 %v2468
      %3250 = vmatprep.subr.bf16.mxu0 %v2465
      %3251 = vmatpush1.bf16.msra.mxu0 %v2471
      %3252 = vmatprep.subr.bf16.mxu0 %v2487
      %3253 = vmatpush1.bf16.msra.mxu0 %v2499
      %3254 = vmatprep.subr.bf16.mxu0 %v2495
      %3255 = vmatpush1.bf16.msra.mxu0 %v2502
      %3256 = vmatprep.subr.bf16.mxu0 %v2518
      %3257 = vmatpush1.bf16.msra.mxu0 %v2530
      %3258 = vmatprep.subr.bf16.mxu0 %v2526
      %3259 = vmatpush1.bf16.msra.mxu0 %v2533
      %3260 = vmatprep.subr.bf16.mxu0 %v2549
      %3261 = vmatpush1.bf16.msra.mxu0 %v2561
      %3262 = vmatprep.subr.bf16.mxu0 %v2557
      %3263 = vmatpush1.bf16.msra.mxu0 %v2564
      %3264 = vmatprep.mubr.bf16.mxu0 %v2938
      %3265 = vmatmul.mubr.bf16.gmra.mrb[0].mxu0 %v2937
      %v3266 = vpop.f32.mrb[0].mxu0
      %v3267 = vadd.f32 %v3214, %v3266
      %v3268 = vpop.f32.mrb[0].mxu0
      %v3269 = vadd.f32 %v3216, %v3268
      %v3270 = vpop.f32.mrb[0].mxu0
      %v3271 = vadd.f32 %v3218, %v3270
      %v3272 = vpop.f32.mrb[0].mxu0
      %v3273 = vadd.f32 %v3220, %v3272
      %3274 = vmatprep.mubr.bf16.mxu0 %v2945
      %3275 = vmatmul.mubr.bf16.gmra.mrb[0].mxu0 %v2944
      %v3276 = vpop.f32.mrb[0].mxu0
      %v3277 = vadd.f32 %v3224, %v3276
      %v3278 = vpop.f32.mrb[0].mxu0
      %v3279 = vadd.f32 %v3226, %v3278
      %v3280 = vpop.f32.mrb[0].mxu0
      %v3281 = vadd.f32 %v3228, %v3280
      %v3282 = vpop.f32.mrb[0].mxu0
      %v3283 = vadd.f32 %v3230, %v3282
      %3284 = vdwg.mxu0
      %3285 = vmatprep.subr.bf16.mxu0 %v2603
      %3286 = vmatpush1.bf16.msra.mxu0 %v2743
      %3287 = vmatprep.subr.bf16.mxu0 %v2611
      %3288 = vmatpush1.bf16.msra.mxu0 %v2746
      %3289 = vmatprep.subr.bf16.mxu0 %v2619
      %3290 = vmatpush1.bf16.msra.mxu0 %v2749
      %3291 = vmatprep.subr.bf16.mxu0 %v2627
      %3292 = vmatpush1.bf16.msra.mxu0 %v2752
      %3293 = vmatprep.subr.bf16.mxu0 %v2635
      %3294 = vmatpush1.bf16.msra.mxu0 %v2755
      %3295 = vmatprep.subr.bf16.mxu0 %v2643
      %3296 = vmatpush1.bf16.msra.mxu0 %v2758
      %3297 = vmatprep.subr.bf16.mxu0 %v2651
      %3298 = vmatpush1.bf16.msra.mxu0 %v2761
      %3299 = vmatprep.subr.bf16.mxu0 %v2659
      %3300 = vmatpush1.bf16.msra.mxu0 %v2764
      %3301 = vmatprep.subr.bf16.mxu0 %v2667
      %3302 = vmatpush1.bf16.msra.mxu0 %v2767
      %3303 = vmatprep.subr.bf16.mxu0 %v2675
      %3304 = vmatpush1.bf16.msra.mxu0 %v2770
      %3305 = vmatprep.subr.bf16.mxu0 %v2683
      %3306 = vmatpush1.bf16.msra.mxu0 %v2773
      %3307 = vmatprep.subr.bf16.mxu0 %v2691
      %3308 = vmatpush1.bf16.msra.mxu0 %v2776
      %3309 = vmatprep.subr.bf16.mxu0 %v2699
      %3310 = vmatpush1.bf16.msra.mxu0 %v2779
      %3311 = vmatprep.subr.bf16.mxu0 %v2707
      %3312 = vmatpush1.bf16.msra.mxu0 %v2782
      %3313 = vmatprep.subr.bf16.mxu0 %v2715
      %3314 = vmatpush1.bf16.msra.mxu0 %v2785
      %3315 = vmatprep.subr.bf16.mxu0 %v2723
      %3316 = vmatpush1.bf16.msra.mxu0 %v2788
      %3317 = vmatprep.mubr.bf16.mxu0 %v2940
      %3318 = vmatmul.mubr.bf16.gmra.mrb[0].mxu0 %v2939
      %v3319 = vpop.f32.mrb[0].mxu0
      %v3320 = vadd.f32 %v3267, %v3319
      %v3321 = vpop.f32.mrb[0].mxu0
      %v3322 = vadd.f32 %v3269, %v3321
      %v3323 = vpop.f32.mrb[0].mxu0
      %v3324 = vadd.f32 %v3271, %v3323
      %v3325 = vpop.f32.mrb[0].mxu0
      %v3326 = vadd.f32 %v3273, %v3325
      %3327 = vmatprep.mubr.bf16.mxu0 %v2947
      %3328 = vmatmul.mubr.bf16.gmra.mrb[0].mxu0 %v2946
      %v3329 = vpop.f32.mrb[0].mxu0
      %v3330 = vadd.f32 %v3277, %v3329
      %v3331 = vpop.f32.mrb[0].mxu0
      %v3332 = vadd.f32 %v3279, %v3331
      %v3333 = vpop.f32.mrb[0].mxu0
      %v3334 = vadd.f32 %v3281, %v3333
      %v3335 = vpop.f32.mrb[0].mxu0
      %v3336 = vadd.f32 %v3283, %v3335
      %3337 = vdwg.mxu0
      %3338 = vmatprep.subr.bf16.mxu0 %v2731
      %3339 = vmatpush1.bf16.msra.mxu0 %v2791
      %3340 = vmatprep.subr.bf16.mxu0 %v2739
      %3341 = vmatpush1.bf16.msra.mxu0 %v2794
      %3342 = vmatprep.subr.bf16.mxu0 0
      %3343 = vmatpush1.bf16.msra.mxu0 0
      %3344 = vmatprep.subr.bf16.mxu0 0
      %3345 = vmatpush1.bf16.msra.mxu0 0
      %3346 = vmatprep.subr.bf16.mxu0 0
      %3347 = vmatpush1.bf16.msra.mxu0 0
      %3348 = vmatprep.subr.bf16.mxu0 0
      %3349 = vmatpush1.bf16.msra.mxu0 0
      %3350 = vmatprep.subr.bf16.mxu0 0
      %3351 = vmatpush1.bf16.msra.mxu0 0
      %3352 = vmatprep.subr.bf16.mxu0 0
      %3353 = vmatpush1.bf16.msra.mxu0 0
      %3354 = vmatprep.subr.bf16.mxu0 0
      %3355 = vmatpush1.bf16.msra.mxu0 0
      %3356 = vmatprep.subr.bf16.mxu0 0
      %3357 = vmatpush1.bf16.msra.mxu0 0
      %3358 = vmatprep.subr.bf16.mxu0 0
      %3359 = vmatpush1.bf16.msra.mxu0 0
      %3360 = vmatprep.subr.bf16.mxu0 0
      %3361 = vmatpush1.bf16.msra.mxu0 0
      %3362 = vmatprep.subr.bf16.mxu0 0
      %3363 = vmatpush1.bf16.msra.mxu0 0
      %3364 = vmatprep.subr.bf16.mxu0 0
      %3365 = vmatpush1.bf16.msra.mxu0 0
      %3366 = vmatprep.subr.bf16.mxu0 0
      %3367 = vmatpush1.bf16.msra.mxu0 0
      %3368 = vmatprep.subr.bf16.mxu0 0
      %3369 = vmatpush1.bf16.msra.mxu0 0
      %3370 = vmatprep.mubr.bf16.mxu0 0
      %3371 = vmatmul.mubr.bf16.gmra.mrb[0].mxu0 %v2962
      %v3372 = vpop.f32.mrb[0].mxu0
      %v3373 = vadd.f32 %v3320, %v3372
      %v3374 = vpop.f32.mrb[0].mxu0
      %v3375 = vadd.f32 %v3322, %v3374
      %v3376 = vpop.f32.mrb[0].mxu0
      %v3377 = vadd.f32 %v3324, %v3376
      %v3378 = vpop.f32.mrb[0].mxu0
      %v3379 = vadd.f32 %v3326, %v3378
      %3380 = vmatprep.mubr.bf16.mxu0 0
      %3381 = vmatmul.mubr.bf16.gmra.mrb[0].mxu0 %v2965
      %v3382 = vpop.f32.mrb[0].mxu0
      %v3383 = vadd.f32 %v3330, %v3382
      %v3384 = vpop.f32.mrb[0].mxu0
      %v3385 = vadd.f32 %v3332, %v3384
      %v3386 = vpop.f32.mrb[0].mxu0
      %v3387 = vadd.f32 %v3334, %v3386
      %v3388 = vpop.f32.mrb[0].mxu0
      %v3389 = vadd.f32 %v3336, %v3388
      %3390 = vdwg.mxu0
      %vm3391 = vcmp.ge.f32.partialorder %v3161, 0.0
      %vm3392 = vcmp.ge.f32.partialorder %v3163, 0.0
      %vm3393 = vcmp.ge.f32.partialorder %v3373, 0.0
      %vm3394 = vcmp.ge.f32.partialorder %v3375, 0.0
      %vm3395 = vcmp.ge.f32.partialorder %v3165, 0.0
      %vm3396 = vcmp.ge.f32.partialorder %v3167, 0.0
      %vm3397 = vcmp.ge.f32.partialorder %v3377, 0.0
      %vm3398 = vcmp.ge.f32.partialorder %v3379, 0.0
      %vm3399 = vcmp.ge.f32.partialorder %v3171, 0.0
      %vm3400 = vcmp.ge.f32.partialorder %v3173, 0.0
      %vm3401 = vcmp.ge.f32.partialorder %v3383, 0.0
      %vm3402 = vcmp.ge.f32.partialorder %v3385, 0.0
      %vm3403 = vcmp.ge.f32.partialorder %v3175, 0.0
      %vm3404 = vcmp.ge.f32.partialorder %v3177, 0.0
      %vm3405 = vcmp.ge.f32.partialorder %v3387, 0.0
      %vm3406 = vcmp.ge.f32.partialorder %v3389, 0.0
      %v3407 = vmul.f32 %v3161, 0.01
      %v3408 = vmul.f32 %v3163, 0.01
      %v3409 = vmul.f32 %v3373, 0.01
      %v3410 = vmul.f32 %v3375, 0.01
      %v3411 = vmul.f32 %v3165, 0.01
      %v3412 = vmul.f32 %v3167, 0.01
      %v3413 = vmul.f32 %v3377, 0.01
      %v3414 = vmul.f32 %v3379, 0.01
      %v3415 = vmul.f32 %v3171, 0.01
      %v3416 = vmul.f32 %v3173, 0.01
      %v3417 = vmul.f32 %v3383, 0.01
      %v3418 = vmul.f32 %v3385, 0.01
      %v3419 = vmul.f32 %v3175, 0.01
      %v3420 = vmul.f32 %v3177, 0.01
      %v3421 = vmul.f32 %v3387, 0.01
      %v3422 = vmul.f32 %v3389, 0.01
      %v3423 = vsel %vm3391, %v3161, %v3407
      %v3424 = vsel %vm3392, %v3163, %v3408
      %v3425 = vsel %vm3393, %v3373, %v3409
      %v3426 = vsel %vm3394, %v3375, %v3410
      %v3427 = vsel %vm3395, %v3165, %v3411
      %v3428 = vsel %vm3396, %v3167, %v3412
      %v3429 = vsel %vm3397, %v3377, %v3413
      %v3430 = vsel %vm3398, %v3379, %v3414
      %v3431 = vsel %vm3399, %v3171, %v3415
      %v3432 = vsel %vm3400, %v3173, %v3416
      %v3433 = vsel %vm3401, %v3383, %v3417
      %v3434 = vsel %vm3402, %v3385, %v3418
      %v3435 = vsel %vm3403, %v3175, %v3419
      %v3436 = vsel %vm3404, %v3177, %v3420
      %v3437 = vsel %vm3405, %v3387, %v3421
      %v3438 = vsel %vm3406, %v3389, %v3422
      %v3439 = vld [vmem:[%s12] sm:$0xff]
      %v3440 = vld [vmem:[%s12 + $0x8] sm:$0xff]
      %v3441 = vld [vmem:[%s12 + $0x10] sm:$0xff]
      %v3442 = vld [vmem:[%s12 + $0x18] sm:$0xff]
      %v3443 = vld [vmem:[%s13] sm:$0xff]
      %v3444 = vld [vmem:[%s13 + $0x8] sm:$0xff]
      %v3445 = vld [vmem:[%s13 + $0x10] sm:$0xff]
      %v3446 = vld [vmem:[%s13 + $0x18] sm:$0xff]
      %3448 = vset.pattern.permute.xlu0 0
      %3449 = vperm.xlu0 %3448, %v3439
      %v3450 = vpop.permute.xlu0 %3449
      %3453 = vset.pattern.permute.xlu0 0
      %3454 = vperm.xlu0 %3453, %v3440
      %v3455 = vpop.permute.xlu0 %3454
      %3458 = vset.pattern.permute.xlu0 0
      %3459 = vperm.xlu0 %3458, %v3441
      %v3460 = vpop.permute.xlu0 %3459
      %3463 = vset.pattern.permute.xlu0 0
      %3464 = vperm.xlu0 %3463, %v3442
      %v3465 = vpop.permute.xlu0 %3464
      %v3467 = vmul.f32 %v3423, %v3450
      %v3468 = vmul.f32 %v3424, %v3450
      %v3469 = vmul.f32 %v3425, %v3450
      %v3470 = vmul.f32 %v3426, %v3450
      %v3471 = vmul.f32 %v3427, %v3455
      %v3472 = vmul.f32 %v3428, %v3455
      %v3473 = vmul.f32 %v3429, %v3455
      %v3474 = vmul.f32 %v3430, %v3455
      %v3475 = vmul.f32 %v3431, %v3460
      %v3476 = vmul.f32 %v3432, %v3460
      %v3477 = vmul.f32 %v3433, %v3460
      %v3478 = vmul.f32 %v3434, %v3460
      %v3479 = vmul.f32 %v3435, %v3465
      %v3480 = vmul.f32 %v3436, %v3465
      %v3481 = vmul.f32 %v3437, %v3465
      %v3482 = vmul.f32 %v3438, %v3465
      %3484 = vset.pattern.permute.xlu0 0
      %3485 = vperm.xlu0 %3484, %v3443
      %v3486 = vpop.permute.xlu0 %3485
      %3489 = vset.pattern.permute.xlu0 0
      %3490 = vperm.xlu0 %3489, %v3444
      %v3491 = vpop.permute.xlu0 %3490
      %3494 = vset.pattern.permute.xlu0 0
      %3495 = vperm.xlu0 %3494, %v3445
      %v3496 = vpop.permute.xlu0 %3495
      %3499 = vset.pattern.permute.xlu0 0
      %3500 = vperm.xlu0 %3499, %v3446
      %v3501 = vpop.permute.xlu0 %3500
      %v3503 = vadd.f32 %v3467, %v3486
      %v3504 = vadd.f32 %v3468, %v3486
      %v3505 = vadd.f32 %v3469, %v3486
      %v3506 = vadd.f32 %v3470, %v3486
      %v3507 = vadd.f32 %v3471, %v3491
      %v3508 = vadd.f32 %v3472, %v3491
      %v3509 = vadd.f32 %v3473, %v3491
      %v3510 = vadd.f32 %v3474, %v3491
      %v3511 = vadd.f32 %v3475, %v3496
      %v3512 = vadd.f32 %v3476, %v3496
      %v3513 = vadd.f32 %v3477, %v3496
      %v3514 = vadd.f32 %v3478, %v3496
      %v3515 = vadd.f32 %v3479, %v3501
      %v3516 = vadd.f32 %v3480, %v3501
      %v3517 = vadd.f32 %v3481, %v3501
      %v3518 = vadd.f32 %v3482, %v3501
      %v3519 = vsel %vm1112, %v3503, 0.0
      %v3520 = vsel %vm1113, %v3504, 0.0
      %v3521 = vsel %vm1114, %v3505, 0.0
      %v3522 = vsel %vm1115, %v3506, 0.0
      %v3523 = vsel %vm1112, %v3507, 0.0
      %v3524 = vsel %vm1113, %v3508, 0.0
      %v3525 = vsel %vm1114, %v3509, 0.0
      %v3526 = vsel %vm1115, %v3510, 0.0
      %v3527 = vsel %vm1112, %v3511, 0.0
      %v3528 = vsel %vm1113, %v3512, 0.0
      %v3529 = vsel %vm1114, %v3513, 0.0
      %v3530 = vsel %vm1115, %v3514, 0.0
      %v3531 = vsel %vm1112, %v3515, 0.0
      %v3532 = vsel %vm1113, %v3516, 0.0
      %v3533 = vsel %vm1114, %v3517, 0.0
      %v3534 = vsel %vm1115, %v3518, 0.0
      %v3535 = vpack.c.bf16 %v3523, %v3519
      %v3536 = vpack.c.bf16 %v3524, %v3520
      %v3537 = vpack.c.bf16 %v3525, %v3521
      %v3538 = vpack.c.bf16 %v3526, %v3522
      %v3539 = vpack.c.bf16 %v3531, %v3527
      %v3540 = vpack.c.bf16 %v3532, %v3528
      %v3541 = vpack.c.bf16 %v3533, %v3529
      %v3542 = vpack.c.bf16 %v3534, %v3530
      %v3543 = vld [vmem:[%s14] sm:$0xff]
      %v3544 = vld [vmem:[%s14 + $0x8] sm:$0xf]
      %v3545 = vld [vmem:[%s14 + $0xc] sm:$0xff]
      %v3546 = vld [vmem:[%s14 + $0x14] sm:$0xf]
      %v3547 = vld [vmem:[%s14 + $0x18] sm:$0xff]
      %v3548 = vld [vmem:[%s14 + $0x20] sm:$0xf]
      %v3549 = vld [vmem:[%s14 + $0x24] sm:$0xff]
      %v3550 = vld [vmem:[%s14 + $0x2c] sm:$0xf]
      %v3551 = vld [vmem:[%s14 + $0x30] sm:$0xff]
      %v3552 = vld [vmem:[%s14 + $0x38] sm:$0xf]
      %v3553 = vld [vmem:[%s14 + $0x3c] sm:$0xff]
      %v3554 = vld [vmem:[%s14 + $0x44] sm:$0xf]
      %v3555 = vld [vmem:[%s14 + $0x48] sm:$0xff]
      %v3556 = vld [vmem:[%s14 + $0x50] sm:$0xf]
      %v3557 = vld [vmem:[%s14 + $0x54] sm:$0xff]
      %v3558 = vld [vmem:[%s14 + $0x5c] sm:$0xf]
      %3567 = vrot.lane.b32.xlu0 %v3535, 42
      %v3568 = vpop.permute.xlu0 %3567
      %3569 = vrot.lane.b32.xlu0 %v3536, 42
      %v3570 = vpop.permute.xlu0 %3569
      %3571 = vrot.lane.b32.xlu0 %v3537, 42
      %v3572 = vpop.permute.xlu0 %3571
      %3573 = vrot.lane.b32.xlu0 %v3538, 42
      %v3574 = vpop.permute.xlu0 %3573
      %3575 = vrot.lane.b32.xlu0 %v3539, 42
      %v3576 = vpop.permute.xlu0 %3575
      %3577 = vrot.lane.b32.xlu0 %v3540, 42
      %v3578 = vpop.permute.xlu0 %3577
      %3579 = vrot.lane.b32.xlu0 %v3541, 42
      %v3580 = vpop.permute.xlu0 %3579
      %3581 = vrot.lane.b32.xlu0 %v3542, 42
      %v3582 = vpop.permute.xlu0 %3581
      %v3583 = vsel %vm1172, %v3568, %v3570
      %v3584 = vsel %vm1172, %v3570, %v3572
      %v3585 = vsel %vm1172, %v3572, %v3574
      %v3586 = vsel %vm1172, %v3576, %v3578
      %v3587 = vsel %vm1172, %v3578, %v3580
      %v3588 = vsel %vm1172, %v3580, %v3582
      %v3590 = vsel %vm1179, 0, %v3568
      %v3592 = vsel %vm1179, 0, %v3576
      %v3594 = vsel %vm1185, %v3585, 0
      %v3596 = vsel %vm1185, %v3588, 0
      %3601 = vrot.lane.b32.xlu0 %v3590, 127
      %v3602 = vpop.permute.xlu0 %3601
      %3603 = vrot.lane.b32.xlu0 %v3583, 127
      %v3604 = vpop.permute.xlu0 %3603
      %3605 = vrot.lane.b32.xlu0 %v3584, 127
      %v3606 = vpop.permute.xlu0 %3605
      %3607 = vrot.lane.b32.xlu0 %v3594, 127
      %v3608 = vpop.permute.xlu0 %3607
      %3609 = vrot.lane.b32.xlu0 %v3592, 127
      %v3610 = vpop.permute.xlu0 %3609
      %3611 = vrot.lane.b32.xlu0 %v3586, 127
      %v3612 = vpop.permute.xlu0 %3611
      %3613 = vrot.lane.b32.xlu0 %v3587, 127
      %v3614 = vpop.permute.xlu0 %3613
      %3615 = vrot.lane.b32.xlu0 %v3596, 127
      %v3616 = vpop.permute.xlu0 %3615
      %v3617 = vsel %vm1210, %v3602, %v3604
      %v3618 = vsel %vm1210, %v3604, %v3606
      %v3619 = vsel %vm1210, %v3606, %v3608
      %v3620 = vsel %vm1210, %v3610, %v3612
      %v3621 = vsel %vm1210, %v3612, %v3614
      %v3622 = vsel %vm1210, %v3614, %v3616
      %3623 = vrot.lane.b32.xlu0 %v3590, 126
      %v3624 = vpop.permute.xlu0 %3623
      %3625 = vrot.lane.b32.xlu0 %v3583, 126
      %v3626 = vpop.permute.xlu0 %3625
      %3627 = vrot.lane.b32.xlu0 %v3584, 126
      %v3628 = vpop.permute.xlu0 %3627
      %3629 = vrot.lane.b32.xlu0 %v3594, 126
      %v3630 = vpop.permute.xlu0 %3629
      %3631 = vrot.lane.b32.xlu0 %v3592, 126
      %v3632 = vpop.permute.xlu0 %3631
      %3633 = vrot.lane.b32.xlu0 %v3586, 126
      %v3634 = vpop.permute.xlu0 %3633
      %3635 = vrot.lane.b32.xlu0 %v3587, 126
      %v3636 = vpop.permute.xlu0 %3635
      %3637 = vrot.lane.b32.xlu0 %v3596, 126
      %v3638 = vpop.permute.xlu0 %3637
      %v3639 = vsel %vm1233, %v3624, %v3626
      %v3640 = vsel %vm1233, %v3626, %v3628
      %v3641 = vsel %vm1233, %v3628, %v3630
      %v3642 = vsel %vm1233, %v3632, %v3634
      %v3643 = vsel %vm1233, %v3634, %v3636
      %v3644 = vsel %vm1233, %v3636, %v3638
      %3645 = vrot.lane.b32.xlu0 %v3590, 108
      %v3646 = vpop.permute.xlu0 %3645
      %3647 = vrot.lane.b32.xlu0 %v3583, 108
      %v3648 = vpop.permute.xlu0 %3647
      %3649 = vrot.lane.b32.xlu0 %v3584, 108
      %v3650 = vpop.permute.xlu0 %3649
      %3651 = vrot.lane.b32.xlu0 %v3594, 108
      %v3652 = vpop.permute.xlu0 %3651
      %3653 = vrot.lane.b32.xlu0 %v3592, 108
      %v3654 = vpop.permute.xlu0 %3653
      %3655 = vrot.lane.b32.xlu0 %v3586, 108
      %v3656 = vpop.permute.xlu0 %3655
      %3657 = vrot.lane.b32.xlu0 %v3587, 108
      %v3658 = vpop.permute.xlu0 %3657
      %3659 = vrot.lane.b32.xlu0 %v3596, 108
      %v3660 = vpop.permute.xlu0 %3659
      %v3661 = vsel %vm1256, %v3646, %v3648
      %v3662 = vsel %vm1256, %v3648, %v3650
      %v3663 = vsel %vm1256, %v3650, %v3652
      %v3664 = vsel %vm1256, %v3654, %v3656
      %v3665 = vsel %vm1256, %v3656, %v3658
      %v3666 = vsel %vm1256, %v3658, %v3660
      %3667 = vrot.lane.b32.xlu0 %v3590, 107
      %v3668 = vpop.permute.xlu0 %3667
      %3669 = vrot.lane.b32.xlu0 %v3583, 107
      %v3670 = vpop.permute.xlu0 %3669
      %3671 = vrot.lane.b32.xlu0 %v3584, 107
      %v3672 = vpop.permute.xlu0 %3671
      %3673 = vrot.lane.b32.xlu0 %v3594, 107
      %v3674 = vpop.permute.xlu0 %3673
      %3675 = vrot.lane.b32.xlu0 %v3592, 107
      %v3676 = vpop.permute.xlu0 %3675
      %3677 = vrot.lane.b32.xlu0 %v3586, 107
      %v3678 = vpop.permute.xlu0 %3677
      %3679 = vrot.lane.b32.xlu0 %v3587, 107
      %v3680 = vpop.permute.xlu0 %3679
      %3681 = vrot.lane.b32.xlu0 %v3596, 107
      %v3682 = vpop.permute.xlu0 %3681
      %v3683 = vsel %vm1279, %v3668, %v3670
      %v3684 = vsel %vm1279, %v3670, %v3672
      %v3685 = vsel %vm1279, %v3672, %v3674
      %v3686 = vsel %vm1279, %v3676, %v3678
      %v3687 = vsel %vm1279, %v3678, %v3680
      %v3688 = vsel %vm1279, %v3680, %v3682
      %3689 = vrot.lane.b32.xlu0 %v3590, 106
      %v3690 = vpop.permute.xlu0 %3689
      %3691 = vrot.lane.b32.xlu0 %v3583, 106
      %v3692 = vpop.permute.xlu0 %3691
      %3693 = vrot.lane.b32.xlu0 %v3584, 106
      %v3694 = vpop.permute.xlu0 %3693
      %3695 = vrot.lane.b32.xlu0 %v3594, 106
      %v3696 = vpop.permute.xlu0 %3695
      %3697 = vrot.lane.b32.xlu0 %v3592, 106
      %v3698 = vpop.permute.xlu0 %3697
      %3699 = vrot.lane.b32.xlu0 %v3586, 106
      %v3700 = vpop.permute.xlu0 %3699
      %3701 = vrot.lane.b32.xlu0 %v3587, 106
      %v3702 = vpop.permute.xlu0 %3701
      %3703 = vrot.lane.b32.xlu0 %v3596, 106
      %v3704 = vpop.permute.xlu0 %3703
      %v3705 = vsel %vm1302, %v3690, %v3692
      %v3706 = vsel %vm1302, %v3692, %v3694
      %v3707 = vsel %vm1302, %v3694, %v3696
      %v3708 = vsel %vm1302, %v3698, %v3700
      %v3709 = vsel %vm1302, %v3700, %v3702
      %v3710 = vsel %vm1302, %v3702, %v3704
      %3711 = vrot.lane.b32.xlu0 %v3590, 88
      %v3712 = vpop.permute.xlu0 %3711
      %3713 = vrot.lane.b32.xlu0 %v3583, 88
      %v3714 = vpop.permute.xlu0 %3713
      %3715 = vrot.lane.b32.xlu0 %v3584, 88
      %v3716 = vpop.permute.xlu0 %3715
      %3717 = vrot.lane.b32.xlu0 %v3594, 88
      %v3718 = vpop.permute.xlu0 %3717
      %3719 = vrot.lane.b32.xlu0 %v3592, 88
      %v3720 = vpop.permute.xlu0 %3719
      %3721 = vrot.lane.b32.xlu0 %v3586, 88
      %v3722 = vpop.permute.xlu0 %3721
      %3723 = vrot.lane.b32.xlu0 %v3587, 88
      %v3724 = vpop.permute.xlu0 %3723
      %3725 = vrot.lane.b32.xlu0 %v3596, 88
      %v3726 = vpop.permute.xlu0 %3725
      %v3727 = vsel %vm1325, %v3712, %v3714
      %v3728 = vsel %vm1325, %v3714, %v3716
      %v3729 = vsel %vm1325, %v3716, %v3718
      %v3730 = vsel %vm1325, %v3720, %v3722
      %v3731 = vsel %vm1325, %v3722, %v3724
      %v3732 = vsel %vm1325, %v3724, %v3726
      %3733 = vrot.lane.b32.xlu0 %v3590, 87
      %v3734 = vpop.permute.xlu0 %3733
      %3735 = vrot.lane.b32.xlu0 %v3583, 87
      %v3736 = vpop.permute.xlu0 %3735
      %3737 = vrot.lane.b32.xlu0 %v3584, 87
      %v3738 = vpop.permute.xlu0 %3737
      %3739 = vrot.lane.b32.xlu0 %v3594, 87
      %v3740 = vpop.permute.xlu0 %3739
      %3741 = vrot.lane.b32.xlu0 %v3592, 87
      %v3742 = vpop.permute.xlu0 %3741
      %3743 = vrot.lane.b32.xlu0 %v3586, 87
      %v3744 = vpop.permute.xlu0 %3743
      %3745 = vrot.lane.b32.xlu0 %v3587, 87
      %v3746 = vpop.permute.xlu0 %3745
      %3747 = vrot.lane.b32.xlu0 %v3596, 87
      %v3748 = vpop.permute.xlu0 %3747
      %v3749 = vsel %vm1348, %v3734, %v3736
      %v3750 = vsel %vm1348, %v3736, %v3738
      %v3751 = vsel %vm1348, %v3738, %v3740
      %v3752 = vsel %vm1348, %v3742, %v3744
      %v3753 = vsel %vm1348, %v3744, %v3746
      %v3754 = vsel %vm1348, %v3746, %v3748
      %3755 = vrot.lane.b32.xlu0 %v3590, 86
      %v3756 = vpop.permute.xlu0 %3755
      %3757 = vrot.lane.b32.xlu0 %v3583, 86
      %v3758 = vpop.permute.xlu0 %3757
      %3759 = vrot.lane.b32.xlu0 %v3584, 86
      %v3760 = vpop.permute.xlu0 %3759
      %3761 = vrot.lane.b32.xlu0 %v3594, 86
      %v3762 = vpop.permute.xlu0 %3761
      %3763 = vrot.lane.b32.xlu0 %v3592, 86
      %v3764 = vpop.permute.xlu0 %3763
      %3765 = vrot.lane.b32.xlu0 %v3586, 86
      %v3766 = vpop.permute.xlu0 %3765
      %3767 = vrot.lane.b32.xlu0 %v3587, 86
      %v3768 = vpop.permute.xlu0 %3767
      %3769 = vrot.lane.b32.xlu0 %v3596, 86
      %v3770 = vpop.permute.xlu0 %3769
      %v3771 = vsel %vm1371, %v3756, %v3758
      %v3772 = vsel %vm1371, %v3758, %v3760
      %v3773 = vsel %vm1371, %v3760, %v3762
      %v3774 = vsel %vm1371, %v3764, %v3766
      %v3775 = vsel %vm1371, %v3766, %v3768
      %v3776 = vsel %vm1371, %v3768, %v3770
      %v3777 = vld [vmem:[%s15] sm:$0xff]
      %v3778 = vld [vmem:[%s15 + $0x8] sm:$0xff]
      %v3779 = vld [vmem:[%s15 + $0x10] sm:$0xff]
      %v3780 = vld [vmem:[%s15 + $0x18] sm:$0xff]
      %v3781 = vld [vmem:[%s15 + $0x20] sm:$0xff]
      %v3782 = vld [vmem:[%s15 + $0x28] sm:$0xff]
      %v3783 = vld [vmem:[%s15 + $0x30] sm:$0xff]
      %v3784 = vld [vmem:[%s15 + $0x38] sm:$0xff]
      %3786 = vset.pattern.permute.xlu0 0
      %3787 = vperm.xlu0 %3786, %v3777
      %v3788 = vpop.permute.xlu0 %3787
      %3791 = vset.pattern.permute.xlu0 0
      %3792 = vperm.xlu0 %3791, %v3778
      %v3793 = vpop.permute.xlu0 %3792
      %3796 = vset.pattern.permute.xlu0 0
      %3797 = vperm.xlu0 %3796, %v3779
      %v3798 = vpop.permute.xlu0 %3797
      %3801 = vset.pattern.permute.xlu0 0
      %3802 = vperm.xlu0 %3801, %v3780
      %v3803 = vpop.permute.xlu0 %3802
      %3806 = vset.pattern.permute.xlu0 0
      %3807 = vperm.xlu0 %3806, %v3781
      %v3808 = vpop.permute.xlu0 %3807
      %3811 = vset.pattern.permute.xlu0 0
      %3812 = vperm.xlu0 %3811, %v3782
      %v3813 = vpop.permute.xlu0 %3812
      %3816 = vset.pattern.permute.xlu0 0
      %3817 = vperm.xlu0 %3816, %v3783
      %v3818 = vpop.permute.xlu0 %3817
      %3821 = vset.pattern.permute.xlu0 0
      %3822 = vperm.xlu0 %3821, %v3784
      %v3823 = vpop.permute.xlu0 %3822
      %v3841 = vunpack.c.l.b16 %v3543
      %v3842 = vunpack.c.h.b16 %v3543
      %v3843 = vunpack.c.l.b16 %v3544
      %v3844 = vunpack.c.l.b16 %v3545
      %v3845 = vunpack.c.h.b16 %v3545
      %v3846 = vunpack.c.l.b16 %v3546
      %v3847 = vunpack.c.l.b16 %v3547
      %v3848 = vunpack.c.h.b16 %v3547
      %v3849 = vunpack.c.l.b16 %v3548
      %v3850 = vunpack.c.l.b16 %v3549
      %v3851 = vunpack.c.h.b16 %v3549
      %v3852 = vunpack.c.l.b16 %v3550
      %v3853 = vunpack.c.l.b16 %v3551
      %v3854 = vunpack.c.h.b16 %v3551
      %v3855 = vunpack.c.l.b16 %v3552
      %v3856 = vunpack.c.l.b16 %v3553
      %v3857 = vunpack.c.h.b16 %v3553
      %v3858 = vunpack.c.l.b16 %v3554
      %v3859 = vunpack.c.l.b16 %v3555
      %v3860 = vunpack.c.h.b16 %v3555
      %v3861 = vunpack.c.l.b16 %v3556
      %v3862 = vunpack.c.l.b16 %v3557
      %v3863 = vunpack.c.h.b16 %v3557
      %v3864 = vunpack.c.l.b16 %v3558
      %v3865 = vpack.c.b16 %v3844, %v3841
      %v3866 = vpack.c.b16 %v3845, %v3842
      %v3867 = vpack.c.b16 %v3846, %v3843
      %v3868 = vpack.c.b16 %v3850, %v3847
      %v3869 = vpack.c.b16 %v3851, %v3848
      %v3870 = vpack.c.b16 %v3852, %v3849
      %v3871 = vpack.c.b16 %v3856, %v3853
      %v3872 = vpack.c.b16 %v3857, %v3854
      %v3873 = vpack.c.b16 %v3858, %v3855
      %v3874 = vpack.c.b16 %v3862, %v3859
      %v3875 = vpack.c.b16 %v3863, %v3860
      %v3876 = vpack.c.b16 %v3864, %v3861
      %3885 = vrot.lane.b32.xlu0 %v3617, 107
      %v3886 = vpop.permute.xlu0 %3885
      %3887 = vrot.lane.b32.xlu0 %v3618, 107
      %v3888 = vpop.permute.xlu0 %3887
      %3889 = vrot.lane.b32.xlu0 %v3619, 107
      %v3890 = vpop.permute.xlu0 %3889
      %3891 = vrot.lane.b32.xlu0 %v3608, 107
      %v3892 = vpop.permute.xlu0 %3891
      %3893 = vrot.lane.b32.xlu0 %v3620, 107
      %v3894 = vpop.permute.xlu0 %3893
      %3895 = vrot.lane.b32.xlu0 %v3621, 107
      %v3896 = vpop.permute.xlu0 %3895
      %3897 = vrot.lane.b32.xlu0 %v3622, 107
      %v3898 = vpop.permute.xlu0 %3897
      %3899 = vrot.lane.b32.xlu0 %v3616, 107
      %v3900 = vpop.permute.xlu0 %3899
      %3901 = vrot.lane.b32.xlu0 %v3639, 107
      %v3902 = vpop.permute.xlu0 %3901
      %3903 = vrot.lane.b32.xlu0 %v3640, 107
      %v3904 = vpop.permute.xlu0 %3903
      %3905 = vrot.lane.b32.xlu0 %v3641, 107
      %v3906 = vpop.permute.xlu0 %3905
      %3907 = vrot.lane.b32.xlu0 %v3630, 107
      %v3908 = vpop.permute.xlu0 %3907
      %3909 = vrot.lane.b32.xlu0 %v3642, 107
      %v3910 = vpop.permute.xlu0 %3909
      %3911 = vrot.lane.b32.xlu0 %v3643, 107
      %v3912 = vpop.permute.xlu0 %3911
      %3913 = vrot.lane.b32.xlu0 %v3644, 107
      %v3914 = vpop.permute.xlu0 %3913
      %3915 = vrot.lane.b32.xlu0 %v3638, 107
      %v3916 = vpop.permute.xlu0 %3915
      %3917 = vrot.lane.b32.xlu0 %v3661, 107
      %v3918 = vpop.permute.xlu0 %3917
      %3919 = vrot.lane.b32.xlu0 %v3662, 107
      %v3920 = vpop.permute.xlu0 %3919
      %3921 = vrot.lane.b32.xlu0 %v3663, 107
      %v3922 = vpop.permute.xlu0 %3921
      %3923 = vrot.lane.b32.xlu0 %v3652, 107
      %v3924 = vpop.permute.xlu0 %3923
      %3925 = vrot.lane.b32.xlu0 %v3664, 107
      %v3926 = vpop.permute.xlu0 %3925
      %3927 = vrot.lane.b32.xlu0 %v3665, 107
      %v3928 = vpop.permute.xlu0 %3927
      %3929 = vrot.lane.b32.xlu0 %v3666, 107
      %v3930 = vpop.permute.xlu0 %3929
      %3931 = vrot.lane.b32.xlu0 %v3660, 107
      %v3932 = vpop.permute.xlu0 %3931
      %3933 = vrot.lane.b32.xlu0 %v3683, 107
      %v3934 = vpop.permute.xlu0 %3933
      %3935 = vrot.lane.b32.xlu0 %v3684, 107
      %v3936 = vpop.permute.xlu0 %3935
      %3937 = vrot.lane.b32.xlu0 %v3685, 107
      %v3938 = vpop.permute.xlu0 %3937
      %3939 = vrot.lane.b32.xlu0 %v3674, 107
      %v3940 = vpop.permute.xlu0 %3939
      %3941 = vrot.lane.b32.xlu0 %v3686, 107
      %v3942 = vpop.permute.xlu0 %3941
      %3943 = vrot.lane.b32.xlu0 %v3687, 107
      %v3944 = vpop.permute.xlu0 %3943
      %3945 = vrot.lane.b32.xlu0 %v3688, 107
      %v3946 = vpop.permute.xlu0 %3945
      %3947 = vrot.lane.b32.xlu0 %v3682, 107
      %v3948 = vpop.permute.xlu0 %3947
      %3949 = vrot.lane.b32.xlu0 %v3705, 107
      %v3950 = vpop.permute.xlu0 %3949
      %3951 = vrot.lane.b32.xlu0 %v3706, 107
      %v3952 = vpop.permute.xlu0 %3951
      %3953 = vrot.lane.b32.xlu0 %v3707, 107
      %v3954 = vpop.permute.xlu0 %3953
      %3955 = vrot.lane.b32.xlu0 %v3696, 107
      %v3956 = vpop.permute.xlu0 %3955
      %3957 = vrot.lane.b32.xlu0 %v3708, 107
      %v3958 = vpop.permute.xlu0 %3957
      %3959 = vrot.lane.b32.xlu0 %v3709, 107
      %v3960 = vpop.permute.xlu0 %3959
      %3961 = vrot.lane.b32.xlu0 %v3710, 107
      %v3962 = vpop.permute.xlu0 %3961
      %3963 = vrot.lane.b32.xlu0 %v3704, 107
      %v3964 = vpop.permute.xlu0 %3963
      %3965 = vrot.lane.b32.xlu0 %v3727, 107
      %v3966 = vpop.permute.xlu0 %3965
      %3967 = vrot.lane.b32.xlu0 %v3728, 107
      %v3968 = vpop.permute.xlu0 %3967
      %3969 = vrot.lane.b32.xlu0 %v3729, 107
      %v3970 = vpop.permute.xlu0 %3969
      %3971 = vrot.lane.b32.xlu0 %v3718, 107
      %v3972 = vpop.permute.xlu0 %3971
      %3973 = vrot.lane.b32.xlu0 %v3730, 107
      %v3974 = vpop.permute.xlu0 %3973
      %3975 = vrot.lane.b32.xlu0 %v3731, 107
      %v3976 = vpop.permute.xlu0 %3975
      %3977 = vrot.lane.b32.xlu0 %v3732, 107
      %v3978 = vpop.permute.xlu0 %3977
      %3979 = vrot.lane.b32.xlu0 %v3726, 107
      %v3980 = vpop.permute.xlu0 %3979
      %3981 = vrot.lane.b32.xlu0 %v3749, 107
      %v3982 = vpop.permute.xlu0 %3981
      %3983 = vrot.lane.b32.xlu0 %v3750, 107
      %v3984 = vpop.permute.xlu0 %3983
      %3985 = vrot.lane.b32.xlu0 %v3751, 107
      %v3986 = vpop.permute.xlu0 %3985
      %3987 = vrot.lane.b32.xlu0 %v3740, 107
      %v3988 = vpop.permute.xlu0 %3987
      %3989 = vrot.lane.b32.xlu0 %v3752, 107
      %v3990 = vpop.permute.xlu0 %3989
      %3991 = vrot.lane.b32.xlu0 %v3753, 107
      %v3992 = vpop.permute.xlu0 %3991
      %3993 = vrot.lane.b32.xlu0 %v3754, 107
      %v3994 = vpop.permute.xlu0 %3993
      %3995 = vrot.lane.b32.xlu0 %v3748, 107
      %v3996 = vpop.permute.xlu0 %3995
      %3997 = vrot.lane.b32.xlu0 %v3771, 107
      %v3998 = vpop.permute.xlu0 %3997
      %3999 = vrot.lane.b32.xlu0 %v3772, 107
      %v4000 = vpop.permute.xlu0 %3999
      %4001 = vrot.lane.b32.xlu0 %v3773, 107
      %v4002 = vpop.permute.xlu0 %4001
      %4003 = vrot.lane.b32.xlu0 %v3762, 107
      %v4004 = vpop.permute.xlu0 %4003
      %4005 = vrot.lane.b32.xlu0 %v3774, 107
      %v4006 = vpop.permute.xlu0 %4005
      %4007 = vrot.lane.b32.xlu0 %v3775, 107
      %v4008 = vpop.permute.xlu0 %4007
      %4009 = vrot.lane.b32.xlu0 %v3776, 107
      %v4010 = vpop.permute.xlu0 %4009
      %4011 = vrot.lane.b32.xlu0 %v3770, 107
      %v4012 = vpop.permute.xlu0 %4011
      %v4013 = vsel %vm1279, %v3886, %v3888
      %v4014 = vsel %vm1279, %v3888, %v3890
      %v4015 = vsel %vm1279, %v3890, %v3892
      %v4016 = vsel %vm1279, %v3894, %v3896
      %v4017 = vsel %vm1279, %v3896, %v3898
      %v4018 = vsel %vm1279, %v3898, %v3900
      %v4019 = vsel %vm1279, %v3902, %v3904
      %v4020 = vsel %vm1279, %v3904, %v3906
      %v4021 = vsel %vm1279, %v3906, %v3908
      %v4022 = vsel %vm1279, %v3910, %v3912
      %v4023 = vsel %vm1279, %v3912, %v3914
      %v4024 = vsel %vm1279, %v3914, %v3916
      %v4025 = vsel %vm1279, %v3918, %v3920
      %v4026 = vsel %vm1279, %v3920, %v3922
      %v4027 = vsel %vm1279, %v3922, %v3924
      %v4028 = vsel %vm1279, %v3926, %v3928
      %v4029 = vsel %vm1279, %v3928, %v3930
      %v4030 = vsel %vm1279, %v3930, %v3932
      %v4031 = vsel %vm1279, %v3934, %v3936
      %v4032 = vsel %vm1279, %v3936, %v3938
      %v4033 = vsel %vm1279, %v3938, %v3940
      %v4034 = vsel %vm1279, %v3942, %v3944
      %v4035 = vsel %vm1279, %v3944, %v3946
      %v4036 = vsel %vm1279, %v3946, %v3948
      %v4037 = vsel %vm1279, %v3950, %v3952
      %v4038 = vsel %vm1279, %v3952, %v3954
      %v4039 = vsel %vm1279, %v3954, %v3956
      %v4040 = vsel %vm1279, %v3958, %v3960
      %v4041 = vsel %vm1279, %v3960, %v3962
      %v4042 = vsel %vm1279, %v3962, %v3964
      %v4043 = vsel %vm1279, %v3966, %v3968
      %v4044 = vsel %vm1279, %v3968, %v3970
      %v4045 = vsel %vm1279, %v3970, %v3972
      %v4046 = vsel %vm1279, %v3974, %v3976
      %v4047 = vsel %vm1279, %v3976, %v3978
      %v4048 = vsel %vm1279, %v3978, %v3980
      %v4049 = vsel %vm1279, %v3982, %v3984
      %v4050 = vsel %vm1279, %v3984, %v3986
      %v4051 = vsel %vm1279, %v3986, %v3988
      %v4052 = vsel %vm1279, %v3990, %v3992
      %v4053 = vsel %vm1279, %v3992, %v3994
      %v4054 = vsel %vm1279, %v3994, %v3996
      %v4055 = vsel %vm1279, %v3998, %v4000
      %v4056 = vsel %vm1279, %v4000, %v4002
      %v4057 = vsel %vm1279, %v4002, %v4004
      %v4058 = vsel %vm1279, %v4006, %v4008
      %v4059 = vsel %vm1279, %v4008, %v4010
      %v4060 = vsel %vm1279, %v4010, %v4012
      %v4134 = vsel %vm854, %v3867, 0
      %v4137 = vsel %vm854, %v3870, 0
      %v4140 = vsel %vm854, %v3873, 0
      %v4143 = vsel %vm854, %v3876, 0
      %4145 = vmatprep.subr.bf16.mxu0 %v3684
      %4146 = vmatpush1.bf16.msra.mxu0 %v3683
      %4147 = vmatprep.subr.bf16.mxu0 %v3687
      %4148 = vmatpush1.bf16.msra.mxu0 %v3686
      %4149 = vmatprep.subr.bf16.mxu0 %v4014
      %4150 = vmatpush1.bf16.msra.mxu0 %v4013
      %4151 = vmatprep.subr.bf16.mxu0 %v4017
      %4152 = vmatpush1.bf16.msra.mxu0 %v4016
      %4153 = vmatprep.subr.bf16.mxu0 %v4020
      %4154 = vmatpush1.bf16.msra.mxu0 %v4019
      %4155 = vmatprep.subr.bf16.mxu0 %v4023
      %4156 = vmatpush1.bf16.msra.mxu0 %v4022
      %4157 = vmatprep.subr.bf16.mxu0 %v4026
      %4158 = vmatpush1.bf16.msra.mxu0 %v4025
      %4159 = vmatprep.subr.bf16.mxu0 %v4029
      %4160 = vmatpush1.bf16.msra.mxu0 %v4028
      %4161 = vmatprep.subr.bf16.mxu0 %v4032
      %4162 = vmatpush1.bf16.msra.mxu0 %v4031
      %4163 = vmatprep.subr.bf16.mxu0 %v4035
      %4164 = vmatpush1.bf16.msra.mxu0 %v4034
      %4165 = vmatprep.subr.bf16.mxu0 %v4038
      %4166 = vmatpush1.bf16.msra.mxu0 %v4037
      %4167 = vmatprep.subr.bf16.mxu0 %v4041
      %4168 = vmatpush1.bf16.msra.mxu0 %v4040
      %4169 = vmatprep.subr.bf16.mxu0 %v4044
      %4170 = vmatpush1.bf16.msra.mxu0 %v4043
      %4171 = vmatprep.subr.bf16.mxu0 %v4047
      %4172 = vmatpush1.bf16.msra.mxu0 %v4046
      %4173 = vmatprep.subr.bf16.mxu0 %v4050
      %4174 = vmatpush1.bf16.msra.mxu0 %v4049
      %4175 = vmatprep.subr.bf16.mxu0 %v4053
      %4176 = vmatpush1.bf16.msra.mxu0 %v4052
      %4177 = vmatprep.mubr.bf16.mxu0 %v3866
      %4178 = vmatmul.mubr.bf16.gmra.mrb[0].mxu0 %v3865
      %v4179 = vpop.f32.mrb[0].mxu0
      %v4180 = vadd.f32 %v3788, %v4179
      %v4181 = vpop.f32.mrb[0].mxu0
      %v4182 = vadd.f32 %v3788, %v4181
      %v4183 = vpop.f32.mrb[0].mxu0
      %v4184 = vadd.f32 %v3793, %v4183
      %v4185 = vpop.f32.mrb[0].mxu0
      %v4186 = vadd.f32 %v3793, %v4185
      %4187 = vmatprep.mubr.bf16.mxu0 %v3869
      %4188 = vmatmul.mubr.bf16.gmra.mrb[0].mxu0 %v3868
      %v4189 = vpop.f32.mrb[0].mxu0
      %v4190 = vadd.f32 %v3798, %v4189
      %v4191 = vpop.f32.mrb[0].mxu0
      %v4192 = vadd.f32 %v3798, %v4191
      %v4193 = vpop.f32.mrb[0].mxu0
      %v4194 = vadd.f32 %v3803, %v4193
      %v4195 = vpop.f32.mrb[0].mxu0
      %v4196 = vadd.f32 %v3803, %v4195
      %4197 = vmatprep.mubr.bf16.mxu0 %v3872
      %4198 = vmatmul.mubr.bf16.gmra.mrb[0].mxu0 %v3871
      %v4199 = vpop.f32.mrb[0].mxu0
      %v4200 = vadd.f32 %v3808, %v4199
      %v4201 = vpop.f32.mrb[0].mxu0
      %v4202 = vadd.f32 %v3808, %v4201
      %v4203 = vpop.f32.mrb[0].mxu0
      %v4204 = vadd.f32 %v3813, %v4203
      %v4205 = vpop.f32.mrb[0].mxu0
      %v4206 = vadd.f32 %v3813, %v4205
      %4207 = vmatprep.mubr.bf16.mxu0 %v3875
      %4208 = vmatmul.mubr.bf16.gmra.mrb[0].mxu0 %v3874
      %v4209 = vpop.f32.mrb[0].mxu0
      %v4210 = vadd.f32 %v3818, %v4209
      %v4211 = vpop.f32.mrb[0].mxu0
      %v4212 = vadd.f32 %v3818, %v4211
      %v4213 = vpop.f32.mrb[0].mxu0
      %v4214 = vadd.f32 %v3823, %v4213
      %v4215 = vpop.f32.mrb[0].mxu0
      %v4216 = vadd.f32 %v3823, %v4215
      %4217 = vdwg.mxu0
      %4218 = vmatprep.subr.bf16.mxu0 %v4056
      %4219 = vmatpush1.bf16.msra.mxu0 %v4055
      %4220 = vmatprep.subr.bf16.mxu0 %v4059
      %4221 = vmatpush1.bf16.msra.mxu0 %v4058
      %4222 = vmatprep.subr.bf16.mxu0 0
      %4223 = vmatpush1.bf16.msra.mxu0 0
      %4224 = vmatprep.subr.bf16.mxu0 0
      %4225 = vmatpush1.bf16.msra.mxu0 0
      %4226 = vmatprep.subr.bf16.mxu0 0
      %4227 = vmatpush1.bf16.msra.mxu0 0
      %4228 = vmatprep.subr.bf16.mxu0 0
      %4229 = vmatpush1.bf16.msra.mxu0 0
      %4230 = vmatprep.subr.bf16.mxu0 0
      %4231 = vmatpush1.bf16.msra.mxu0 0
      %4232 = vmatprep.subr.bf16.mxu0 0
      %4233 = vmatpush1.bf16.msra.mxu0 0
      %4234 = vmatprep.subr.bf16.mxu0 0
      %4235 = vmatpush1.bf16.msra.mxu0 0
      %4236 = vmatprep.subr.bf16.mxu0 0
      %4237 = vmatpush1.bf16.msra.mxu0 0
      %4238 = vmatprep.subr.bf16.mxu0 0
      %4239 = vmatpush1.bf16.msra.mxu0 0
      %4240 = vmatprep.subr.bf16.mxu0 0
      %4241 = vmatpush1.bf16.msra.mxu0 0
      %4242 = vmatprep.subr.bf16.mxu0 0
      %4243 = vmatpush1.bf16.msra.mxu0 0
      %4244 = vmatprep.subr.bf16.mxu0 0
      %4245 = vmatpush1.bf16.msra.mxu0 0
      %4246 = vmatprep.subr.bf16.mxu0 0
      %4247 = vmatpush1.bf16.msra.mxu0 0
      %4248 = vmatprep.subr.bf16.mxu0 0
      %4249 = vmatpush1.bf16.msra.mxu0 0
      %4250 = vmatprep.mubr.bf16.mxu0 0
      %4251 = vmatmul.mubr.bf16.gmra.mrb[0].mxu0 %v4134
      %v4252 = vpop.f32.mrb[0].mxu0
      %v4253 = vadd.f32 %v4180, %v4252
      %v4254 = vpop.f32.mrb[0].mxu0
      %v4255 = vadd.f32 %v4182, %v4254
      %v4256 = vpop.f32.mrb[0].mxu0
      %v4257 = vadd.f32 %v4184, %v4256
      %v4258 = vpop.f32.mrb[0].mxu0
      %v4259 = vadd.f32 %v4186, %v4258
      %4260 = vmatprep.mubr.bf16.mxu0 0
      %4261 = vmatmul.mubr.bf16.gmra.mrb[0].mxu0 %v4137
      %v4262 = vpop.f32.mrb[0].mxu0
      %v4263 = vadd.f32 %v4190, %v4262
      %v4264 = vpop.f32.mrb[0].mxu0
      %v4265 = vadd.f32 %v4192, %v4264
      %v4266 = vpop.f32.mrb[0].mxu0
      %v4267 = vadd.f32 %v4194, %v4266
      %v4268 = vpop.f32.mrb[0].mxu0
      %v4269 = vadd.f32 %v4196, %v4268
      %4270 = vmatprep.mubr.bf16.mxu0 0
      %4271 = vmatmul.mubr.bf16.gmra.mrb[0].mxu0 %v4140
      %v4272 = vpop.f32.mrb[0].mxu0
      %v4273 = vadd.f32 %v4200, %v4272
      %v4274 = vpop.f32.mrb[0].mxu0
      %v4275 = vadd.f32 %v4202, %v4274
      %v4276 = vpop.f32.mrb[0].mxu0
      %v4277 = vadd.f32 %v4204, %v4276
      %v4278 = vpop.f32.mrb[0].mxu0
      %v4279 = vadd.f32 %v4206, %v4278
      %4280 = vmatprep.mubr.bf16.mxu0 0
      %4281 = vmatmul.mubr.bf16.gmra.mrb[0].mxu0 %v4143
      %v4282 = vpop.f32.mrb[0].mxu0
      %v4283 = vadd.f32 %v4210, %v4282
      %v4284 = vpop.f32.mrb[0].mxu0
      %v4285 = vadd.f32 %v4212, %v4284
      %v4286 = vpop.f32.mrb[0].mxu0
      %v4287 = vadd.f32 %v4214, %v4286
      %v4288 = vpop.f32.mrb[0].mxu0
      %v4289 = vadd.f32 %v4216, %v4288
      %4290 = vdwg.mxu0
      %4291 = vmatprep.subr.bf16.mxu0 %v3674
      %4292 = vmatpush1.bf16.msra.mxu0 %v3685
      %4293 = vmatprep.subr.bf16.mxu0 %v3682
      %4294 = vmatpush1.bf16.msra.mxu0 %v3688
      %4295 = vmatprep.subr.bf16.mxu0 %v3892
      %4296 = vmatpush1.bf16.msra.mxu0 %v4015
      %4297 = vmatprep.subr.bf16.mxu0 %v3900
      %4298 = vmatpush1.bf16.msra.mxu0 %v4018
      %4299 = vmatprep.subr.bf16.mxu0 %v3908
      %4300 = vmatpush1.bf16.msra.mxu0 %v4021
      %4301 = vmatprep.subr.bf16.mxu0 %v3916
      %4302 = vmatpush1.bf16.msra.mxu0 %v4024
      %4303 = vmatprep.subr.bf16.mxu0 %v3924
      %4304 = vmatpush1.bf16.msra.mxu0 %v4027
      %4305 = vmatprep.subr.bf16.mxu0 %v3932
      %4306 = vmatpush1.bf16.msra.mxu0 %v4030
      %4307 = vmatprep.subr.bf16.mxu0 %v3940
      %4308 = vmatpush1.bf16.msra.mxu0 %v4033
      %4309 = vmatprep.subr.bf16.mxu0 %v3948
      %4310 = vmatpush1.bf16.msra.mxu0 %v4036
      %4311 = vmatprep.subr.bf16.mxu0 %v3956
      %4312 = vmatpush1.bf16.msra.mxu0 %v4039
      %4313 = vmatprep.subr.bf16.mxu0 %v3964
      %4314 = vmatpush1.bf16.msra.mxu0 %v4042
      %4315 = vmatprep.subr.bf16.mxu0 %v3972
      %4316 = vmatpush1.bf16.msra.mxu0 %v4045
      %4317 = vmatprep.subr.bf16.mxu0 %v3980
      %4318 = vmatpush1.bf16.msra.mxu0 %v4048
      %4319 = vmatprep.subr.bf16.mxu0 %v3988
      %4320 = vmatpush1.bf16.msra.mxu0 %v4051
      %4321 = vmatprep.subr.bf16.mxu0 %v3996
      %4322 = vmatpush1.bf16.msra.mxu0 %v4054
      %4323 = vmatprep.mubr.bf16.mxu0 %v3866
      %4324 = vmatmul.mubr.bf16.gmra.mrb[0].mxu0 %v3865
      %v4325 = vpop.f32.mrb[0].mxu0
      %v4326 = vadd.f32 %v3788, %v4325
      %v4327 = vpop.f32.mrb[0].mxu0
      %v4328 = vadd.f32 %v3788, %v4327
      %v4329 = vpop.f32.mrb[0].mxu0
      %v4330 = vadd.f32 %v3793, %v4329
      %v4331 = vpop.f32.mrb[0].mxu0
      %v4332 = vadd.f32 %v3793, %v4331
      %4333 = vmatprep.mubr.bf16.mxu0 %v3869
      %4334 = vmatmul.mubr.bf16.gmra.mrb[0].mxu0 %v3868
      %v4335 = vpop.f32.mrb[0].mxu0
      %v4336 = vadd.f32 %v3798, %v4335
      %v4337 = vpop.f32.mrb[0].mxu0
      %v4338 = vadd.f32 %v3798, %v4337
      %v4339 = vpop.f32.mrb[0].mxu0
      %v4340 = vadd.f32 %v3803, %v4339
      %v4341 = vpop.f32.mrb[0].mxu0
      %v4342 = vadd.f32 %v3803, %v4341
      %4343 = vmatprep.mubr.bf16.mxu0 %v3872
      %4344 = vmatmul.mubr.bf16.gmra.mrb[0].mxu0 %v3871
      %v4345 = vpop.f32.mrb[0].mxu0
      %v4346 = vadd.f32 %v3808, %v4345
      %v4347 = vpop.f32.mrb[0].mxu0
      %v4348 = vadd.f32 %v3808, %v4347
      %v4349 = vpop.f32.mrb[0].mxu0
      %v4350 = vadd.f32 %v3813, %v4349
      %v4351 = vpop.f32.mrb[0].mxu0
      %v4352 = vadd.f32 %v3813, %v4351
      %4353 = vmatprep.mubr.bf16.mxu0 %v3875
      %4354 = vmatmul.mubr.bf16.gmra.mrb[0].mxu0 %v3874
      %v4355 = vpop.f32.mrb[0].mxu0
      %v4356 = vadd.f32 %v3818, %v4355
      %v4357 = vpop.f32.mrb[0].mxu0
      %v4358 = vadd.f32 %v3818, %v4357
      %v4359 = vpop.f32.mrb[0].mxu0
      %v4360 = vadd.f32 %v3823, %v4359
      %v4361 = vpop.f32.mrb[0].mxu0
      %v4362 = vadd.f32 %v3823, %v4361
      %4363 = vdwg.mxu0
      %4364 = vmatprep.subr.bf16.mxu0 %v4004
      %4365 = vmatpush1.bf16.msra.mxu0 %v4057
      %4366 = vmatprep.subr.bf16.mxu0 %v4012
      %4367 = vmatpush1.bf16.msra.mxu0 %v4060
      %4368 = vmatprep.subr.bf16.mxu0 0
      %4369 = vmatpush1.bf16.msra.mxu0 0
      %4370 = vmatprep.subr.bf16.mxu0 0
      %4371 = vmatpush1.bf16.msra.mxu0 0
      %4372 = vmatprep.subr.bf16.mxu0 0
      %4373 = vmatpush1.bf16.msra.mxu0 0
      %4374 = vmatprep.subr.bf16.mxu0 0
      %4375 = vmatpush1.bf16.msra.mxu0 0
      %4376 = vmatprep.subr.bf16.mxu0 0
      %4377 = vmatpush1.bf16.msra.mxu0 0
      %4378 = vmatprep.subr.bf16.mxu0 0
      %4379 = vmatpush1.bf16.msra.mxu0 0
      %4380 = vmatprep.subr.bf16.mxu0 0
      %4381 = vmatpush1.bf16.msra.mxu0 0
      %4382 = vmatprep.subr.bf16.mxu0 0
      %4383 = vmatpush1.bf16.msra.mxu0 0
      %4384 = vmatprep.subr.bf16.mxu0 0
      %4385 = vmatpush1.bf16.msra.mxu0 0
      %4386 = vmatprep.subr.bf16.mxu0 0
      %4387 = vmatpush1.bf16.msra.mxu0 0
      %4388 = vmatprep.subr.bf16.mxu0 0
      %4389 = vmatpush1.bf16.msra.mxu0 0
      %4390 = vmatprep.subr.bf16.mxu0 0
      %4391 = vmatpush1.bf16.msra.mxu0 0
      %4392 = vmatprep.subr.bf16.mxu0 0
      %4393 = vmatpush1.bf16.msra.mxu0 0
      %4394 = vmatprep.subr.bf16.mxu0 0
      %4395 = vmatpush1.bf16.msra.mxu0 0
      %4396 = vmatprep.mubr.bf16.mxu0 0
      %4397 = vmatmul.mubr.bf16.gmra.mrb[0].mxu0 %v4134
      %v4398 = vpop.f32.mrb[0].mxu0
      %v4399 = vadd.f32 %v4326, %v4398
      %v4400 = vpop.f32.mrb[0].mxu0
      %v4401 = vadd.f32 %v4328, %v4400
      %v4402 = vpop.f32.mrb[0].mxu0
      %v4403 = vadd.f32 %v4330, %v4402
      %v4404 = vpop.f32.mrb[0].mxu0
      %v4405 = vadd.f32 %v4332, %v4404
      %4406 = vmatprep.mubr.bf16.mxu0 0
      %4407 = vmatmul.mubr.bf16.gmra.mrb[0].mxu0 %v4137
      %v4408 = vpop.f32.mrb[0].mxu0
      %v4409 = vadd.f32 %v4336, %v4408
      %v4410 = vpop.f32.mrb[0].mxu0
      %v4411 = vadd.f32 %v4338, %v4410
      %v4412 = vpop.f32.mrb[0].mxu0
      %v4413 = vadd.f32 %v4340, %v4412
      %v4414 = vpop.f32.mrb[0].mxu0
      %v4415 = vadd.f32 %v4342, %v4414
      %4416 = vmatprep.mubr.bf16.mxu0 0
      %4417 = vmatmul.mubr.bf16.gmra.mrb[0].mxu0 %v4140
      %v4418 = vpop.f32.mrb[0].mxu0
      %v4419 = vadd.f32 %v4346, %v4418
      %v4420 = vpop.f32.mrb[0].mxu0
      %v4421 = vadd.f32 %v4348, %v4420
      %v4422 = vpop.f32.mrb[0].mxu0
      %v4423 = vadd.f32 %v4350, %v4422
      %v4424 = vpop.f32.mrb[0].mxu0
      %v4425 = vadd.f32 %v4352, %v4424
      %4426 = vmatprep.mubr.bf16.mxu0 0
      %4427 = vmatmul.mubr.bf16.gmra.mrb[0].mxu0 %v4143
      %v4428 = vpop.f32.mrb[0].mxu0
      %v4429 = vadd.f32 %v4356, %v4428
      %v4430 = vpop.f32.mrb[0].mxu0
      %v4431 = vadd.f32 %v4358, %v4430
      %v4432 = vpop.f32.mrb[0].mxu0
      %v4433 = vadd.f32 %v4360, %v4432
      %v4434 = vpop.f32.mrb[0].mxu0
      %v4435 = vadd.f32 %v4362, %v4434
      %4436 = vdwg.mxu0
      %vm4437 = vcmp.ge.f32.partialorder %v4253, 0.0
      %vm4438 = vcmp.ge.f32.partialorder %v4255, 0.0
      %vm4439 = vcmp.ge.f32.partialorder %v4399, 0.0
      %vm4440 = vcmp.ge.f32.partialorder %v4401, 0.0
      %vm4441 = vcmp.ge.f32.partialorder %v4257, 0.0
      %vm4442 = vcmp.ge.f32.partialorder %v4259, 0.0
      %vm4443 = vcmp.ge.f32.partialorder %v4403, 0.0
      %vm4444 = vcmp.ge.f32.partialorder %v4405, 0.0
      %vm4445 = vcmp.ge.f32.partialorder %v4263, 0.0
      %vm4446 = vcmp.ge.f32.partialorder %v4265, 0.0
      %vm4447 = vcmp.ge.f32.partialorder %v4409, 0.0
      %vm4448 = vcmp.ge.f32.partialorder %v4411, 0.0
      %vm4449 = vcmp.ge.f32.partialorder %v4267, 0.0
      %vm4450 = vcmp.ge.f32.partialorder %v4269, 0.0
      %vm4451 = vcmp.ge.f32.partialorder %v4413, 0.0
      %vm4452 = vcmp.ge.f32.partialorder %v4415, 0.0
      %vm4453 = vcmp.ge.f32.partialorder %v4273, 0.0
      %vm4454 = vcmp.ge.f32.partialorder %v4275, 0.0
      %vm4455 = vcmp.ge.f32.partialorder %v4419, 0.0
      %vm4456 = vcmp.ge.f32.partialorder %v4421, 0.0
      %vm4457 = vcmp.ge.f32.partialorder %v4277, 0.0
      %vm4458 = vcmp.ge.f32.partialorder %v4279, 0.0
      %vm4459 = vcmp.ge.f32.partialorder %v4423, 0.0
      %vm4460 = vcmp.ge.f32.partialorder %v4425, 0.0
      %vm4461 = vcmp.ge.f32.partialorder %v4283, 0.0
      %vm4462 = vcmp.ge.f32.partialorder %v4285, 0.0
      %vm4463 = vcmp.ge.f32.partialorder %v4429, 0.0
      %vm4464 = vcmp.ge.f32.partialorder %v4431, 0.0
      %vm4465 = vcmp.ge.f32.partialorder %v4287, 0.0
      %vm4466 = vcmp.ge.f32.partialorder %v4289, 0.0
      %vm4467 = vcmp.ge.f32.partialorder %v4433, 0.0
      %vm4468 = vcmp.ge.f32.partialorder %v4435, 0.0
      %v4469 = vmul.f32 %v4253, 0.01
      %v4470 = vmul.f32 %v4255, 0.01
      %v4471 = vmul.f32 %v4399, 0.01
      %v4472 = vmul.f32 %v4401, 0.01
      %v4473 = vmul.f32 %v4257, 0.01
      %v4474 = vmul.f32 %v4259, 0.01
      %v4475 = vmul.f32 %v4403, 0.01
      %v4476 = vmul.f32 %v4405, 0.01
      %v4477 = vmul.f32 %v4263, 0.01
      %v4478 = vmul.f32 %v4265, 0.01
      %v4479 = vmul.f32 %v4409, 0.01
      %v4480 = vmul.f32 %v4411, 0.01
      %v4481 = vmul.f32 %v4267, 0.01
      %v4482 = vmul.f32 %v4269, 0.01
      %v4483 = vmul.f32 %v4413, 0.01
      %v4484 = vmul.f32 %v4415, 0.01
      %v4485 = vmul.f32 %v4273, 0.01
      %v4486 = vmul.f32 %v4275, 0.01
      %v4487 = vmul.f32 %v4419, 0.01
      %v4488 = vmul.f32 %v4421, 0.01
      %v4489 = vmul.f32 %v4277, 0.01
      %v4490 = vmul.f32 %v4279, 0.01
      %v4491 = vmul.f32 %v4423, 0.01
      %v4492 = vmul.f32 %v4425, 0.01
      %v4493 = vmul.f32 %v4283, 0.01
      %v4494 = vmul.f32 %v4285, 0.01
      %v4495 = vmul.f32 %v4429, 0.01
      %v4496 = vmul.f32 %v4431, 0.01
      %v4497 = vmul.f32 %v4287, 0.01
      %v4498 = vmul.f32 %v4289, 0.01
      %v4499 = vmul.f32 %v4433, 0.01
      %v4500 = vmul.f32 %v4435, 0.01
      %v4501 = vsel %vm4437, %v4253, %v4469
      %v4502 = vsel %vm4438, %v4255, %v4470
      %v4503 = vsel %vm4439, %v4399, %v4471
      %v4504 = vsel %vm4440, %v4401, %v4472
      %v4505 = vsel %vm4441, %v4257, %v4473
      %v4506 = vsel %vm4442, %v4259, %v4474
      %v4507 = vsel %vm4443, %v4403, %v4475
      %v4508 = vsel %vm4444, %v4405, %v4476
      %v4509 = vsel %vm4445, %v4263, %v4477
      %v4510 = vsel %vm4446, %v4265, %v4478
      %v4511 = vsel %vm4447, %v4409, %v4479
      %v4512 = vsel %vm4448, %v4411, %v4480
      %v4513 = vsel %vm4449, %v4267, %v4481
      %v4514 = vsel %vm4450, %v4269, %v4482
      %v4515 = vsel %vm4451, %v4413, %v4483
      %v4516 = vsel %vm4452, %v4415, %v4484
      %v4517 = vsel %vm4453, %v4273, %v4485
      %v4518 = vsel %vm4454, %v4275, %v4486
      %v4519 = vsel %vm4455, %v4419, %v4487
      %v4520 = vsel %vm4456, %v4421, %v4488
      %v4521 = vsel %vm4457, %v4277, %v4489
      %v4522 = vsel %vm4458, %v4279, %v4490
      %v4523 = vsel %vm4459, %v4423, %v4491
      %v4524 = vsel %vm4460, %v4425, %v4492
      %v4525 = vsel %vm4461, %v4283, %v4493
      %v4526 = vsel %vm4462, %v4285, %v4494
      %v4527 = vsel %vm4463, %v4429, %v4495
      %v4528 = vsel %vm4464, %v4431, %v4496
      %v4529 = vsel %vm4465, %v4287, %v4497
      %v4530 = vsel %vm4466, %v4289, %v4498
      %v4531 = vsel %vm4467, %v4433, %v4499
      %v4532 = vsel %vm4468, %v4435, %v4500
      %v4533 = vld [vmem:[%s16] sm:$0xff]
      %v4534 = vld [vmem:[%s16 + $0x8] sm:$0xff]
      %v4535 = vld [vmem:[%s16 + $0x10] sm:$0xff]
      %v4536 = vld [vmem:[%s16 + $0x18] sm:$0xff]
      %v4537 = vld [vmem:[%s16 + $0x20] sm:$0xff]
      %v4538 = vld [vmem:[%s16 + $0x28] sm:$0xff]
      %v4539 = vld [vmem:[%s16 + $0x30] sm:$0xff]
      %v4540 = vld [vmem:[%s16 + $0x38] sm:$0xff]
      %v4541 = vld [vmem:[%s17] sm:$0xff]
      %v4542 = vld [vmem:[%s17 + $0x8] sm:$0xff]
      %v4543 = vld [vmem:[%s17 + $0x10] sm:$0xff]
      %v4544 = vld [vmem:[%s17 + $0x18] sm:$0xff]
      %v4545 = vld [vmem:[%s17 + $0x20] sm:$0xff]
      %v4546 = vld [vmem:[%s17 + $0x28] sm:$0xff]
      %v4547 = vld [vmem:[%s17 + $0x30] sm:$0xff]
      %v4548 = vld [vmem:[%s17 + $0x38] sm:$0xff]
      %4550 = vset.pattern.permute.xlu0 0
      %4551 = vperm.xlu0 %4550, %v4533
      %v4552 = vpop.permute.xlu0 %4551
      %4555 = vset.pattern.permute.xlu0 0
      %4556 = vperm.xlu0 %4555, %v4534
      %v4557 = vpop.permute.xlu0 %4556
      %4560 = vset.pattern.permute.xlu0 0
      %4561 = vperm.xlu0 %4560, %v4535
      %v4562 = vpop.permute.xlu0 %4561
      %4565 = vset.pattern.permute.xlu0 0
      %4566 = vperm.xlu0 %4565, %v4536
      %v4567 = vpop.permute.xlu0 %4566
      %4570 = vset.pattern.permute.xlu0 0
      %4571 = vperm.xlu0 %4570, %v4537
      %v4572 = vpop.permute.xlu0 %4571
      %4575 = vset.pattern.permute.xlu0 0
      %4576 = vperm.xlu0 %4575, %v4538
      %v4577 = vpop.permute.xlu0 %4576
      %4580 = vset.pattern.permute.xlu0 0
      %4581 = vperm.xlu0 %4580, %v4539
      %v4582 = vpop.permute.xlu0 %4581
      %4585 = vset.pattern.permute.xlu0 0
      %4586 = vperm.xlu0 %4585, %v4540
      %v4587 = vpop.permute.xlu0 %4586
      %v4589 = vmul.f32 %v4501, %v4552
      %v4590 = vmul.f32 %v4502, %v4552
      %v4591 = vmul.f32 %v4503, %v4552
      %v4592 = vmul.f32 %v4504, %v4552
      %v4593 = vmul.f32 %v4505, %v4557
      %v4594 = vmul.f32 %v4506, %v4557
      %v4595 = vmul.f32 %v4507, %v4557
      %v4596 = vmul.f32 %v4508, %v4557
      %v4597 = vmul.f32 %v4509, %v4562
      %v4598 = vmul.f32 %v4510, %v4562
      %v4599 = vmul.f32 %v4511, %v4562
      %v4600 = vmul.f32 %v4512, %v4562
      %v4601 = vmul.f32 %v4513, %v4567
      %v4602 = vmul.f32 %v4514, %v4567
      %v4603 = vmul.f32 %v4515, %v4567
      %v4604 = vmul.f32 %v4516, %v4567
      %v4605 = vmul.f32 %v4517, %v4572
      %v4606 = vmul.f32 %v4518, %v4572
      %v4607 = vmul.f32 %v4519, %v4572
      %v4608 = vmul.f32 %v4520, %v4572
      %v4609 = vmul.f32 %v4521, %v4577
      %v4610 = vmul.f32 %v4522, %v4577
      %v4611 = vmul.f32 %v4523, %v4577
      %v4612 = vmul.f32 %v4524, %v4577
      %v4613 = vmul.f32 %v4525, %v4582
      %v4614 = vmul.f32 %v4526, %v4582
      %v4615 = vmul.f32 %v4527, %v4582
      %v4616 = vmul.f32 %v4528, %v4582
      %v4617 = vmul.f32 %v4529, %v4587
      %v4618 = vmul.f32 %v4530, %v4587
      %v4619 = vmul.f32 %v4531, %v4587
      %v4620 = vmul.f32 %v4532, %v4587
      %4622 = vset.pattern.permute.xlu0 0
      %4623 = vperm.xlu0 %4622, %v4541
      %v4624 = vpop.permute.xlu0 %4623
      %4627 = vset.pattern.permute.xlu0 0
      %4628 = vperm.xlu0 %4627, %v4542
      %v4629 = vpop.permute.xlu0 %4628
      %4632 = vset.pattern.permute.xlu0 0
      %4633 = vperm.xlu0 %4632, %v4543
      %v4634 = vpop.permute.xlu0 %4633
      %4637 = vset.pattern.permute.xlu0 0
      %4638 = vperm.xlu0 %4637, %v4544
      %v4639 = vpop.permute.xlu0 %4638
      %4642 = vset.pattern.permute.xlu0 0
      %4643 = vperm.xlu0 %4642, %v4545
      %v4644 = vpop.permute.xlu0 %4643
      %4647 = vset.pattern.permute.xlu0 0
      %4648 = vperm.xlu0 %4647, %v4546
      %v4649 = vpop.permute.xlu0 %4648
      %4652 = vset.pattern.permute.xlu0 0
      %4653 = vperm.xlu0 %4652, %v4547
      %v4654 = vpop.permute.xlu0 %4653
      %4657 = vset.pattern.permute.xlu0 0
      %4658 = vperm.xlu0 %4657, %v4548
      %v4659 = vpop.permute.xlu0 %4658
      %v4661 = vadd.f32 %v4589, %v4624
      %v4662 = vadd.f32 %v4590, %v4624
      %v4663 = vadd.f32 %v4591, %v4624
      %v4664 = vadd.f32 %v4592, %v4624
      %v4665 = vadd.f32 %v4593, %v4629
      %v4666 = vadd.f32 %v4594, %v4629
      %v4667 = vadd.f32 %v4595, %v4629
      %v4668 = vadd.f32 %v4596, %v4629
      %v4669 = vadd.f32 %v4597, %v4634
      %v4670 = vadd.f32 %v4598, %v4634
      %v4671 = vadd.f32 %v4599, %v4634
      %v4672 = vadd.f32 %v4600, %v4634
      %v4673 = vadd.f32 %v4601, %v4639
      %v4674 = vadd.f32 %v4602, %v4639
      %v4675 = vadd.f32 %v4603, %v4639
      %v4676 = vadd.f32 %v4604, %v4639
      %v4677 = vadd.f32 %v4605, %v4644
      %v4678 = vadd.f32 %v4606, %v4644
      %v4679 = vadd.f32 %v4607, %v4644
      %v4680 = vadd.f32 %v4608, %v4644
      %v4681 = vadd.f32 %v4609, %v4649
      %v4682 = vadd.f32 %v4610, %v4649
      %v4683 = vadd.f32 %v4611, %v4649
      %v4684 = vadd.f32 %v4612, %v4649
      %v4685 = vadd.f32 %v4613, %v4654
      %v4686 = vadd.f32 %v4614, %v4654
      %v4687 = vadd.f32 %v4615, %v4654
      %v4688 = vadd.f32 %v4616, %v4654
      %v4689 = vadd.f32 %v4617, %v4659
      %v4690 = vadd.f32 %v4618, %v4659
      %v4691 = vadd.f32 %v4619, %v4659
      %v4692 = vadd.f32 %v4620, %v4659
      %v4693 = vsel %vm1112, %v4661, 0.0
      %v4694 = vsel %vm1113, %v4662, 0.0
      %v4695 = vsel %vm1114, %v4663, 0.0
      %v4696 = vsel %vm1115, %v4664, 0.0
      %v4697 = vsel %vm1112, %v4665, 0.0
      %v4698 = vsel %vm1113, %v4666, 0.0
      %v4699 = vsel %vm1114, %v4667, 0.0
      %v4700 = vsel %vm1115, %v4668, 0.0
      %v4701 = vsel %vm1112, %v4669, 0.0
      %v4702 = vsel %vm1113, %v4670, 0.0
      %v4703 = vsel %vm1114, %v4671, 0.0
      %v4704 = vsel %vm1115, %v4672, 0.0
      %v4705 = vsel %vm1112, %v4673, 0.0
      %v4706 = vsel %vm1113, %v4674, 0.0
      %v4707 = vsel %vm1114, %v4675, 0.0
      %v4708 = vsel %vm1115, %v4676, 0.0
      %v4709 = vsel %vm1112, %v4677, 0.0
      %v4710 = vsel %vm1113, %v4678, 0.0
      %v4711 = vsel %vm1114, %v4679, 0.0
      %v4712 = vsel %vm1115, %v4680, 0.0
      %v4713 = vsel %vm1112, %v4681, 0.0
      %v4714 = vsel %vm1113, %v4682, 0.0
      %v4715 = vsel %vm1114, %v4683, 0.0
      %v4716 = vsel %vm1115, %v4684, 0.0
      %v4717 = vsel %vm1112, %v4685, 0.0
      %v4718 = vsel %vm1113, %v4686, 0.0
      %v4719 = vsel %vm1114, %v4687, 0.0
      %v4720 = vsel %vm1115, %v4688, 0.0
      %v4721 = vsel %vm1112, %v4689, 0.0
      %v4722 = vsel %vm1113, %v4690, 0.0
      %v4723 = vsel %vm1114, %v4691, 0.0
      %v4724 = vsel %vm1115, %v4692, 0.0
      %v4725 = vpack.c.bf16 %v4697, %v4693
      %v4726 = vpack.c.bf16 %v4698, %v4694
      %v4727 = vpack.c.bf16 %v4699, %v4695
      %v4728 = vpack.c.bf16 %v4700, %v4696
      %v4729 = vpack.c.bf16 %v4705, %v4701
      %v4730 = vpack.c.bf16 %v4706, %v4702
      %v4731 = vpack.c.bf16 %v4707, %v4703
      %v4732 = vpack.c.bf16 %v4708, %v4704
      %v4733 = vpack.c.bf16 %v4713, %v4709
      %v4734 = vpack.c.bf16 %v4714, %v4710
      %v4735 = vpack.c.bf16 %v4715, %v4711
      %v4736 = vpack.c.bf16 %v4716, %v4712
      %v4737 = vpack.c.bf16 %v4721, %v4717
      %v4738 = vpack.c.bf16 %v4722, %v4718
      %v4739 = vpack.c.bf16 %v4723, %v4719
      %v4740 = vpack.c.bf16 %v4724, %v4720
      %v4741 = vld [vmem:[%s18] sm:$0xff]
      %v4742 = vld [vmem:[%s18 + $0x8] sm:$0xff]
      %v4743 = vld [vmem:[%s18 + $0x10] sm:$0xf]
      %v4744 = vld [vmem:[%s18 + $0x14] sm:$0xff]
      %v4745 = vld [vmem:[%s18 + $0x1c] sm:$0xff]
      %v4746 = vld [vmem:[%s18 + $0x24] sm:$0xf]
      %v4747 = vld [vmem:[%s18 + $0x28] sm:$0xff]
      %v4748 = vld [vmem:[%s18 + $0x30] sm:$0xff]
      %v4749 = vld [vmem:[%s18 + $0x38] sm:$0xf]
      %v4750 = vld [vmem:[%s18 + $0x3c] sm:$0xff]
      %v4751 = vld [vmem:[%s18 + $0x44] sm:$0xff]
      %v4752 = vld [vmem:[%s18 + $0x4c] sm:$0xf]
      %v4753 = vld [vmem:[%s18 + $0x50] sm:$0xff]
      %v4754 = vld [vmem:[%s18 + $0x58] sm:$0xff]
      %v4755 = vld [vmem:[%s18 + $0x60] sm:$0xf]
      %v4756 = vld [vmem:[%s18 + $0x64] sm:$0xff]
      %v4757 = vld [vmem:[%s18 + $0x6c] sm:$0xff]
      %v4758 = vld [vmem:[%s18 + $0x74] sm:$0xf]
      %v4759 = vld [vmem:[%s18 + $0x78] sm:$0xff]
      %v4760 = vld [vmem:[%s18 + $0x80] sm:$0xff]
      %v4761 = vld [vmem:[%s18 + $0x88] sm:$0xf]
      %v4762 = vld [vmem:[%s18 + $0x8c] sm:$0xff]
      %v4763 = vld [vmem:[%s18 + $0x94] sm:$0xff]
      %v4764 = vld [vmem:[%s18 + $0x9c] sm:$0xf]
      %4781 = vrot.lane.b32.xlu0 %v4725, 42
      %v4782 = vpop.permute.xlu0 %4781
      %4783 = vrot.lane.b32.xlu0 %v4726, 42
      %v4784 = vpop.permute.xlu0 %4783
      %4785 = vrot.lane.b32.xlu0 %v4727, 42
      %v4786 = vpop.permute.xlu0 %4785
      %4787 = vrot.lane.b32.xlu0 %v4728, 42
      %v4788 = vpop.permute.xlu0 %4787
      %4789 = vrot.lane.b32.xlu0 %v4729, 42
      %v4790 = vpop.permute.xlu0 %4789
      %4791 = vrot.lane.b32.xlu0 %v4730, 42
      %v4792 = vpop.permute.xlu0 %4791
      %4793 = vrot.lane.b32.xlu0 %v4731, 42
      %v4794 = vpop.permute.xlu0 %4793
      %4795 = vrot.lane.b32.xlu0 %v4732, 42
      %v4796 = vpop.permute.xlu0 %4795
      %4797 = vrot.lane.b32.xlu0 %v4733, 42
      %v4798 = vpop.permute.xlu0 %4797
      %4799 = vrot.lane.b32.xlu0 %v4734, 42
      %v4800 = vpop.permute.xlu0 %4799
      %4801 = vrot.lane.b32.xlu0 %v4735, 42
      %v4802 = vpop.permute.xlu0 %4801
      %4803 = vrot.lane.b32.xlu0 %v4736, 42
      %v4804 = vpop.permute.xlu0 %4803
      %4805 = vrot.lane.b32.xlu0 %v4737, 42
      %v4806 = vpop.permute.xlu0 %4805
      %4807 = vrot.lane.b32.xlu0 %v4738, 42
      %v4808 = vpop.permute.xlu0 %4807
      %4809 = vrot.lane.b32.xlu0 %v4739, 42
      %v4810 = vpop.permute.xlu0 %4809
      %4811 = vrot.lane.b32.xlu0 %v4740, 42
      %v4812 = vpop.permute.xlu0 %4811
      %v4813 = vsel %vm1172, %v4782, %v4784
      %v4814 = vsel %vm1172, %v4784, %v4786
      %v4815 = vsel %vm1172, %v4786, %v4788
      %v4816 = vsel %vm1172, %v4790, %v4792
      %v4817 = vsel %vm1172, %v4792, %v4794
      %v4818 = vsel %vm1172, %v4794, %v4796
      %v4819 = vsel %vm1172, %v4798, %v4800
      %v4820 = vsel %vm1172, %v4800, %v4802
      %v4821 = vsel %vm1172, %v4802, %v4804
      %v4822 = vsel %vm1172, %v4806, %v4808
      %v4823 = vsel %vm1172, %v4808, %v4810
      %v4824 = vsel %vm1172, %v4810, %v4812
      %v4826 = vsel %vm1179, 0, %v4782
      %v4828 = vsel %vm1179, 0, %v4790
      %v4830 = vsel %vm1179, 0, %v4798
      %v4832 = vsel %vm1179, 0, %v4806
      %v4834 = vsel %vm1185, %v4815, 0
      %v4836 = vsel %vm1185, %v4818, 0
      %v4838 = vsel %vm1185, %v4821, 0
      %v4840 = vsel %vm1185, %v4824, 0
      %4849 = vrot.lane.b32.xlu0 %v4826, 127
      %v4850 = vpop.permute.xlu0 %4849
      %4851 = vrot.lane.b32.xlu0 %v4813, 127
      %v4852 = vpop.permute.xlu0 %4851
      %4853 = vrot.lane.b32.xlu0 %v4814, 127
      %v4854 = vpop.permute.xlu0 %4853
      %4855 = vrot.lane.b32.xlu0 %v4834, 127
      %v4856 = vpop.permute.xlu0 %4855
      %4857 = vrot.lane.b32.xlu0 %v4828, 127
      %v4858 = vpop.permute.xlu0 %4857
      %4859 = vrot.lane.b32.xlu0 %v4816, 127
      %v4860 = vpop.permute.xlu0 %4859
      %4861 = vrot.lane.b32.xlu0 %v4817, 127
      %v4862 = vpop.permute.xlu0 %4861
      %4863 = vrot.lane.b32.xlu0 %v4836, 127
      %v4864 = vpop.permute.xlu0 %4863
      %4865 = vrot.lane.b32.xlu0 %v4830, 127
      %v4866 = vpop.permute.xlu0 %4865
      %4867 = vrot.lane.b32.xlu0 %v4819, 127
      %v4868 = vpop.permute.xlu0 %4867
      %4869 = vrot.lane.b32.xlu0 %v4820, 127
      %v4870 = vpop.permute.xlu0 %4869
      %4871 = vrot.lane.b32.xlu0 %v4838, 127
      %v4872 = vpop.permute.xlu0 %4871
      %4873 = vrot.lane.b32.xlu0 %v4832, 127
      %v4874 = vpop.permute.xlu0 %4873
      %4875 = vrot.lane.b32.xlu0 %v4822, 127
      %v4876 = vpop.permute.xlu0 %4875
      %4877 = vrot.lane.b32.xlu0 %v4823, 127
      %v4878 = vpop.permute.xlu0 %4877
      %4879 = vrot.lane.b32.xlu0 %v4840, 127
      %v4880 = vpop.permute.xlu0 %4879
      %v4881 = vsel %vm1210, %v4850, %v4852
      %v4882 = vsel %vm1210, %v4852, %v4854
      %v4883 = vsel %vm1210, %v4854, %v4856
      %v4884 = vsel %vm1210, %v4858, %v4860
      %v4885 = vsel %vm1210, %v4860, %v4862
      %v4886 = vsel %vm1210, %v4862, %v4864
      %v4887 = vsel %vm1210, %v4866, %v4868
      %v4888 = vsel %vm1210, %v4868, %v4870
      %v4889 = vsel %vm1210, %v4870, %v4872
      %v4890 = vsel %vm1210, %v4874, %v4876
      %v4891 = vsel %vm1210, %v4876, %v4878
      %v4892 = vsel %vm1210, %v4878, %v4880
      %4893 = vrot.lane.b32.xlu0 %v4826, 126
      %v4894 = vpop.permute.xlu0 %4893
      %4895 = vrot.lane.b32.xlu0 %v4813, 126
      %v4896 = vpop.permute.xlu0 %4895
      %4897 = vrot.lane.b32.xlu0 %v4814, 126
      %v4898 = vpop.permute.xlu0 %4897
      %4899 = vrot.lane.b32.xlu0 %v4834, 126
      %v4900 = vpop.permute.xlu0 %4899
      %4901 = vrot.lane.b32.xlu0 %v4828, 126
      %v4902 = vpop.permute.xlu0 %4901
      %4903 = vrot.lane.b32.xlu0 %v4816, 126
      %v4904 = vpop.permute.xlu0 %4903
      %4905 = vrot.lane.b32.xlu0 %v4817, 126
      %v4906 = vpop.permute.xlu0 %4905
      %4907 = vrot.lane.b32.xlu0 %v4836, 126
      %v4908 = vpop.permute.xlu0 %4907
      %4909 = vrot.lane.b32.xlu0 %v4830, 126
      %v4910 = vpop.permute.xlu0 %4909
      %4911 = vrot.lane.b32.xlu0 %v4819, 126
      %v4912 = vpop.permute.xlu0 %4911
      %4913 = vrot.lane.b32.xlu0 %v4820, 126
      %v4914 = vpop.permute.xlu0 %4913
      %4915 = vrot.lane.b32.xlu0 %v4838, 126
      %v4916 = vpop.permute.xlu0 %4915
      %4917 = vrot.lane.b32.xlu0 %v4832, 126
      %v4918 = vpop.permute.xlu0 %4917
      %4919 = vrot.lane.b32.xlu0 %v4822, 126
      %v4920 = vpop.permute.xlu0 %4919
      %4921 = vrot.lane.b32.xlu0 %v4823, 126
      %v4922 = vpop.permute.xlu0 %4921
      %4923 = vrot.lane.b32.xlu0 %v4840, 126
      %v4924 = vpop.permute.xlu0 %4923
      %v4925 = vsel %vm1233, %v4894, %v4896
      %v4926 = vsel %vm1233, %v4896, %v4898
      %v4927 = vsel %vm1233, %v4898, %v4900
      %v4928 = vsel %vm1233, %v4902, %v4904
      %v4929 = vsel %vm1233, %v4904, %v4906
      %v4930 = vsel %vm1233, %v4906, %v4908
      %v4931 = vsel %vm1233, %v4910, %v4912
      %v4932 = vsel %vm1233, %v4912, %v4914
      %v4933 = vsel %vm1233, %v4914, %v4916
      %v4934 = vsel %vm1233, %v4918, %v4920
      %v4935 = vsel %vm1233, %v4920, %v4922
      %v4936 = vsel %vm1233, %v4922, %v4924
      %4937 = vrot.lane.b32.xlu0 %v4826, 108
      %v4938 = vpop.permute.xlu0 %4937
      %4939 = vrot.lane.b32.xlu0 %v4813, 108
      %v4940 = vpop.permute.xlu0 %4939
      %4941 = vrot.lane.b32.xlu0 %v4814, 108
      %v4942 = vpop.permute.xlu0 %4941
      %4943 = vrot.lane.b32.xlu0 %v4834, 108
      %v4944 = vpop.permute.xlu0 %4943
      %4945 = vrot.lane.b32.xlu0 %v4828, 108
      %v4946 = vpop.permute.xlu0 %4945
      %4947 = vrot.lane.b32.xlu0 %v4816, 108
      %v4948 = vpop.permute.xlu0 %4947
      %4949 = vrot.lane.b32.xlu0 %v4817, 108
      %v4950 = vpop.permute.xlu0 %4949
      %4951 = vrot.lane.b32.xlu0 %v4836, 108
      %v4952 = vpop.permute.xlu0 %4951
      %4953 = vrot.lane.b32.xlu0 %v4830, 108
      %v4954 = vpop.permute.xlu0 %4953
      %4955 = vrot.lane.b32.xlu0 %v4819, 108
      %v4956 = vpop.permute.xlu0 %4955
      %4957 = vrot.lane.b32.xlu0 %v4820, 108
      %v4958 = vpop.permute.xlu0 %4957
      %4959 = vrot.lane.b32.xlu0 %v4838, 108
      %v4960 = vpop.permute.xlu0 %4959
      %4961 = vrot.lane.b32.xlu0 %v4832, 108
      %v4962 = vpop.permute.xlu0 %4961
      %4963 = vrot.lane.b32.xlu0 %v4822, 108
      %v4964 = vpop.permute.xlu0 %4963
      %4965 = vrot.lane.b32.xlu0 %v4823, 108
      %v4966 = vpop.permute.xlu0 %4965
      %4967 = vrot.lane.b32.xlu0 %v4840, 108
      %v4968 = vpop.permute.xlu0 %4967
      %v4969 = vsel %vm1256, %v4938, %v4940
      %v4970 = vsel %vm1256, %v4940, %v4942
      %v4971 = vsel %vm1256, %v4942, %v4944
      %v4972 = vsel %vm1256, %v4946, %v4948
      %v4973 = vsel %vm1256, %v4948, %v4950
      %v4974 = vsel %vm1256, %v4950, %v4952
      %v4975 = vsel %vm1256, %v4954, %v4956
      %v4976 = vsel %vm1256, %v4956, %v4958
      %v4977 = vsel %vm1256, %v4958, %v4960
      %v4978 = vsel %vm1256, %v4962, %v4964
      %v4979 = vsel %vm1256, %v4964, %v4966
      %v4980 = vsel %vm1256, %v4966, %v4968
      %4981 = vrot.lane.b32.xlu0 %v4826, 107
      %v4982 = vpop.permute.xlu0 %4981
      %4983 = vrot.lane.b32.xlu0 %v4813, 107
      %v4984 = vpop.permute.xlu0 %4983
      %4985 = vrot.lane.b32.xlu0 %v4814, 107
      %v4986 = vpop.permute.xlu0 %4985
      %4987 = vrot.lane.b32.xlu0 %v4834, 107
      %v4988 = vpop.permute.xlu0 %4987
      %4989 = vrot.lane.b32.xlu0 %v4828, 107
      %v4990 = vpop.permute.xlu0 %4989
      %4991 = vrot.lane.b32.xlu0 %v4816, 107
      %v4992 = vpop.permute.xlu0 %4991
      %4993 = vrot.lane.b32.xlu0 %v4817, 107
      %v4994 = vpop.permute.xlu0 %4993
      %4995 = vrot.lane.b32.xlu0 %v4836, 107
      %v4996 = vpop.permute.xlu0 %4995
      %4997 = vrot.lane.b32.xlu0 %v4830, 107
      %v4998 = vpop.permute.xlu0 %4997
      %4999 = vrot.lane.b32.xlu0 %v4819, 107
      %v5000 = vpop.permute.xlu0 %4999
      %5001 = vrot.lane.b32.xlu0 %v4820, 107
      %v5002 = vpop.permute.xlu0 %5001
      %5003 = vrot.lane.b32.xlu0 %v4838, 107
      %v5004 = vpop.permute.xlu0 %5003
      %5005 = vrot.lane.b32.xlu0 %v4832, 107
      %v5006 = vpop.permute.xlu0 %5005
      %5007 = vrot.lane.b32.xlu0 %v4822, 107
      %v5008 = vpop.permute.xlu0 %5007
      %5009 = vrot.lane.b32.xlu0 %v4823, 107
      %v5010 = vpop.permute.xlu0 %5009
      %5011 = vrot.lane.b32.xlu0 %v4840, 107
      %v5012 = vpop.permute.xlu0 %5011
      %v5013 = vsel %vm1279, %v4982, %v4984
      %v5014 = vsel %vm1279, %v4984, %v4986
      %v5015 = vsel %vm1279, %v4986, %v4988
      %v5016 = vsel %vm1279, %v4990, %v4992
      %v5017 = vsel %vm1279, %v4992, %v4994
      %v5018 = vsel %vm1279, %v4994, %v4996
      %v5019 = vsel %vm1279, %v4998, %v5000
      %v5020 = vsel %vm1279, %v5000, %v5002
      %v5021 = vsel %vm1279, %v5002, %v5004
      %v5022 = vsel %vm1279, %v5006, %v5008
      %v5023 = vsel %vm1279, %v5008, %v5010
      %v5024 = vsel %vm1279, %v5010, %v5012
      %5025 = vrot.lane.b32.xlu0 %v4826, 106
      %v5026 = vpop.permute.xlu0 %5025
      %5027 = vrot.lane.b32.xlu0 %v4813, 106
      %v5028 = vpop.permute.xlu0 %5027
      %5029 = vrot.lane.b32.xlu0 %v4814, 106
      %v5030 = vpop.permute.xlu0 %5029
      %5031 = vrot.lane.b32.xlu0 %v4834, 106
      %v5032 = vpop.permute.xlu0 %5031
      %5033 = vrot.lane.b32.xlu0 %v4828, 106
      %v5034 = vpop.permute.xlu0 %5033
      %5035 = vrot.lane.b32.xlu0 %v4816, 106
      %v5036 = vpop.permute.xlu0 %5035
      %5037 = vrot.lane.b32.xlu0 %v4817, 106
      %v5038 = vpop.permute.xlu0 %5037
      %5039 = vrot.lane.b32.xlu0 %v4836, 106
      %v5040 = vpop.permute.xlu0 %5039
      %5041 = vrot.lane.b32.xlu0 %v4830, 106
      %v5042 = vpop.permute.xlu0 %5041
      %5043 = vrot.lane.b32.xlu0 %v4819, 106
      %v5044 = vpop.permute.xlu0 %5043
      %5045 = vrot.lane.b32.xlu0 %v4820, 106
      %v5046 = vpop.permute.xlu0 %5045
      %5047 = vrot.lane.b32.xlu0 %v4838, 106
      %v5048 = vpop.permute.xlu0 %5047
      %5049 = vrot.lane.b32.xlu0 %v4832, 106
      %v5050 = vpop.permute.xlu0 %5049
      %5051 = vrot.lane.b32.xlu0 %v4822, 106
      %v5052 = vpop.permute.xlu0 %5051
      %5053 = vrot.lane.b32.xlu0 %v4823, 106
      %v5054 = vpop.permute.xlu0 %5053
      %5055 = vrot.lane.b32.xlu0 %v4840, 106
      %v5056 = vpop.permute.xlu0 %5055
      %v5057 = vsel %vm1302, %v5026, %v5028
      %v5058 = vsel %vm1302, %v5028, %v5030
      %v5059 = vsel %vm1302, %v5030, %v5032
      %v5060 = vsel %vm1302, %v5034, %v5036
      %v5061 = vsel %vm1302, %v5036, %v5038
      %v5062 = vsel %vm1302, %v5038, %v5040
      %v5063 = vsel %vm1302, %v5042, %v5044
      %v5064 = vsel %vm1302, %v5044, %v5046
      %v5065 = vsel %vm1302, %v5046, %v5048
      %v5066 = vsel %vm1302, %v5050, %v5052
      %v5067 = vsel %vm1302, %v5052, %v5054
      %v5068 = vsel %vm1302, %v5054, %v5056
      %5069 = vrot.lane.b32.xlu0 %v4826, 88
      %v5070 = vpop.permute.xlu0 %5069
      %5071 = vrot.lane.b32.xlu0 %v4813, 88
      %v5072 = vpop.permute.xlu0 %5071
      %5073 = vrot.lane.b32.xlu0 %v4814, 88
      %v5074 = vpop.permute.xlu0 %5073
      %5075 = vrot.lane.b32.xlu0 %v4834, 88
      %v5076 = vpop.permute.xlu0 %5075
      %5077 = vrot.lane.b32.xlu0 %v4828, 88
      %v5078 = vpop.permute.xlu0 %5077
      %5079 = vrot.lane.b32.xlu0 %v4816, 88
      %v5080 = vpop.permute.xlu0 %5079
      %5081 = vrot.lane.b32.xlu0 %v4817, 88
      %v5082 = vpop.permute.xlu0 %5081
      %5083 = vrot.lane.b32.xlu0 %v4836, 88
      %v5084 = vpop.permute.xlu0 %5083
      %5085 = vrot.lane.b32.xlu0 %v4830, 88
      %v5086 = vpop.permute.xlu0 %5085
      %5087 = vrot.lane.b32.xlu0 %v4819, 88
      %v5088 = vpop.permute.xlu0 %5087
      %5089 = vrot.lane.b32.xlu0 %v4820, 88
      %v5090 = vpop.permute.xlu0 %5089
      %5091 = vrot.lane.b32.xlu0 %v4838, 88
      %v5092 = vpop.permute.xlu0 %5091
      %5093 = vrot.lane.b32.xlu0 %v4832, 88
      %v5094 = vpop.permute.xlu0 %5093
      %5095 = vrot.lane.b32.xlu0 %v4822, 88
      %v5096 = vpop.permute.xlu0 %5095
      %5097 = vrot.lane.b32.xlu0 %v4823, 88
      %v5098 = vpop.permute.xlu0 %5097
      %5099 = vrot.lane.b32.xlu0 %v4840, 88
      %v5100 = vpop.permute.xlu0 %5099
      %v5101 = vsel %vm1325, %v5070, %v5072
      %v5102 = vsel %vm1325, %v5072, %v5074
      %v5103 = vsel %vm1325, %v5074, %v5076
      %v5104 = vsel %vm1325, %v5078, %v5080
      %v5105 = vsel %vm1325, %v5080, %v5082
      %v5106 = vsel %vm1325, %v5082, %v5084
      %v5107 = vsel %vm1325, %v5086, %v5088
      %v5108 = vsel %vm1325, %v5088, %v5090
      %v5109 = vsel %vm1325, %v5090, %v5092
      %v5110 = vsel %vm1325, %v5094, %v5096
      %v5111 = vsel %vm1325, %v5096, %v5098
      %v5112 = vsel %vm1325, %v5098, %v5100
      %5113 = vrot.lane.b32.xlu0 %v4826, 87
      %v5114 = vpop.permute.xlu0 %5113
      %5115 = vrot.lane.b32.xlu0 %v4813, 87
      %v5116 = vpop.permute.xlu0 %5115
      %5117 = vrot.lane.b32.xlu0 %v4814, 87
      %v5118 = vpop.permute.xlu0 %5117
      %5119 = vrot.lane.b32.xlu0 %v4834, 87
      %v5120 = vpop.permute.xlu0 %5119
      %5121 = vrot.lane.b32.xlu0 %v4828, 87
      %v5122 = vpop.permute.xlu0 %5121
      %5123 = vrot.lane.b32.xlu0 %v4816, 87
      %v5124 = vpop.permute.xlu0 %5123
      %5125 = vrot.lane.b32.xlu0 %v4817, 87
      %v5126 = vpop.permute.xlu0 %5125
      %5127 = vrot.lane.b32.xlu0 %v4836, 87
      %v5128 = vpop.permute.xlu0 %5127
      %5129 = vrot.lane.b32.xlu0 %v4830, 87
      %v5130 = vpop.permute.xlu0 %5129
      %5131 = vrot.lane.b32.xlu0 %v4819, 87
      %v5132 = vpop.permute.xlu0 %5131
      %5133 = vrot.lane.b32.xlu0 %v4820, 87
      %v5134 = vpop.permute.xlu0 %5133
      %5135 = vrot.lane.b32.xlu0 %v4838, 87
      %v5136 = vpop.permute.xlu0 %5135
      %5137 = vrot.lane.b32.xlu0 %v4832, 87
      %v5138 = vpop.permute.xlu0 %5137
      %5139 = vrot.lane.b32.xlu0 %v4822, 87
      %v5140 = vpop.permute.xlu0 %5139
      %5141 = vrot.lane.b32.xlu0 %v4823, 87
      %v5142 = vpop.permute.xlu0 %5141
      %5143 = vrot.lane.b32.xlu0 %v4840, 87
      %v5144 = vpop.permute.xlu0 %5143
      %v5145 = vsel %vm1348, %v5114, %v5116
      %v5146 = vsel %vm1348, %v5116, %v5118
      %v5147 = vsel %vm1348, %v5118, %v5120
      %v5148 = vsel %vm1348, %v5122, %v5124
      %v5149 = vsel %vm1348, %v5124, %v5126
      %v5150 = vsel %vm1348, %v5126, %v5128
      %v5151 = vsel %vm1348, %v5130, %v5132
      %v5152 = vsel %vm1348, %v5132, %v5134
      %v5153 = vsel %vm1348, %v5134, %v5136
      %v5154 = vsel %vm1348, %v5138, %v5140
      %v5155 = vsel %vm1348, %v5140, %v5142
      %v5156 = vsel %vm1348, %v5142, %v5144
      %5157 = vrot.lane.b32.xlu0 %v4826, 86
      %v5158 = vpop.permute.xlu0 %5157
      %5159 = vrot.lane.b32.xlu0 %v4813, 86
      %v5160 = vpop.permute.xlu0 %5159
      %5161 = vrot.lane.b32.xlu0 %v4814, 86
      %v5162 = vpop.permute.xlu0 %5161
      %5163 = vrot.lane.b32.xlu0 %v4834, 86
      %v5164 = vpop.permute.xlu0 %5163
      %5165 = vrot.lane.b32.xlu0 %v4828, 86
      %v5166 = vpop.permute.xlu0 %5165
      %5167 = vrot.lane.b32.xlu0 %v4816, 86
      %v5168 = vpop.permute.xlu0 %5167
      %5169 = vrot.lane.b32.xlu0 %v4817, 86
      %v5170 = vpop.permute.xlu0 %5169
      %5171 = vrot.lane.b32.xlu0 %v4836, 86
      %v5172 = vpop.permute.xlu0 %5171
      %5173 = vrot.lane.b32.xlu0 %v4830, 86
      %v5174 = vpop.permute.xlu0 %5173
      %5175 = vrot.lane.b32.xlu0 %v4819, 86
      %v5176 = vpop.permute.xlu0 %5175
      %5177 = vrot.lane.b32.xlu0 %v4820, 86
      %v5178 = vpop.permute.xlu0 %5177
      %5179 = vrot.lane.b32.xlu0 %v4838, 86
      %v5180 = vpop.permute.xlu0 %5179
      %5181 = vrot.lane.b32.xlu0 %v4832, 86
      %v5182 = vpop.permute.xlu0 %5181
      %5183 = vrot.lane.b32.xlu0 %v4822, 86
      %v5184 = vpop.permute.xlu0 %5183
      %5185 = vrot.lane.b32.xlu0 %v4823, 86
      %v5186 = vpop.permute.xlu0 %5185
      %5187 = vrot.lane.b32.xlu0 %v4840, 86
      %v5188 = vpop.permute.xlu0 %5187
      %v5189 = vsel %vm1371, %v5158, %v5160
      %v5190 = vsel %vm1371, %v5160, %v5162
      %v5191 = vsel %vm1371, %v5162, %v5164
      %v5192 = vsel %vm1371, %v5166, %v5168
      %v5193 = vsel %vm1371, %v5168, %v5170
      %v5194 = vsel %vm1371, %v5170, %v5172
      %v5195 = vsel %vm1371, %v5174, %v5176
      %v5196 = vsel %vm1371, %v5176, %v5178
      %v5197 = vsel %vm1371, %v5178, %v5180
      %v5198 = vsel %vm1371, %v5182, %v5184
      %v5199 = vsel %vm1371, %v5184, %v5186
      %v5200 = vsel %vm1371, %v5186, %v5188
      %v5201 = vld [vmem:[%s19] sm:$0xff]
      %v5202 = vld [vmem:[%s19 + $0x8] sm:$0xff]
      %v5203 = vld [vmem:[%s19 + $0x10] sm:$0xff]
      %v5204 = vld [vmem:[%s19 + $0x18] sm:$0xff]
      %v5205 = vld [vmem:[%s19 + $0x20] sm:$0xff]
      %v5206 = vld [vmem:[%s19 + $0x28] sm:$0xff]
      %v5207 = vld [vmem:[%s19 + $0x30] sm:$0xff]
      %v5208 = vld [vmem:[%s19 + $0x38] sm:$0xff]
      %5210 = vset.pattern.permute.xlu0 0
      %5211 = vperm.xlu0 %5210, %v5201
      %v5212 = vpop.permute.xlu0 %5211
      %5215 = vset.pattern.permute.xlu0 0
      %5216 = vperm.xlu0 %5215, %v5202
      %v5217 = vpop.permute.xlu0 %5216
      %5220 = vset.pattern.permute.xlu0 0
      %5221 = vperm.xlu0 %5220, %v5203
      %v5222 = vpop.permute.xlu0 %5221
      %5225 = vset.pattern.permute.xlu0 0
      %5226 = vperm.xlu0 %5225, %v5204
      %v5227 = vpop.permute.xlu0 %5226
      %5230 = vset.pattern.permute.xlu0 0
      %5231 = vperm.xlu0 %5230, %v5205
      %v5232 = vpop.permute.xlu0 %5231
      %5235 = vset.pattern.permute.xlu0 0
      %5236 = vperm.xlu0 %5235, %v5206
      %v5237 = vpop.permute.xlu0 %5236
      %5240 = vset.pattern.permute.xlu0 0
      %5241 = vperm.xlu0 %5240, %v5207
      %v5242 = vpop.permute.xlu0 %5241
      %5245 = vset.pattern.permute.xlu0 0
      %5246 = vperm.xlu0 %5245, %v5208
      %v5247 = vpop.permute.xlu0 %5246
      %v5273 = vunpack.c.l.b16 %v4741
      %v5274 = vunpack.c.h.b16 %v4741
      %v5275 = vunpack.c.l.b16 %v4742
      %v5276 = vunpack.c.h.b16 %v4742
      %v5277 = vunpack.c.l.b16 %v4743
      %v5278 = vunpack.c.l.b16 %v4744
      %v5279 = vunpack.c.h.b16 %v4744
      %v5280 = vunpack.c.l.b16 %v4745
      %v5281 = vunpack.c.h.b16 %v4745
      %v5282 = vunpack.c.l.b16 %v4746
      %v5283 = vunpack.c.l.b16 %v4747
      %v5284 = vunpack.c.h.b16 %v4747
      %v5285 = vunpack.c.l.b16 %v4748
      %v5286 = vunpack.c.h.b16 %v4748
      %v5287 = vunpack.c.l.b16 %v4749
      %v5288 = vunpack.c.l.b16 %v4750
      %v5289 = vunpack.c.h.b16 %v4750
      %v5290 = vunpack.c.l.b16 %v4751
      %v5291 = vunpack.c.h.b16 %v4751
      %v5292 = vunpack.c.l.b16 %v4752
      %v5293 = vunpack.c.l.b16 %v4753
      %v5294 = vunpack.c.h.b16 %v4753
      %v5295 = vunpack.c.l.b16 %v4754
      %v5296 = vunpack.c.h.b16 %v4754
      %v5297 = vunpack.c.l.b16 %v4755
      %v5298 = vunpack.c.l.b16 %v4756
      %v5299 = vunpack.c.h.b16 %v4756
      %v5300 = vunpack.c.l.b16 %v4757
      %v5301 = vunpack.c.h.b16 %v4757
      %v5302 = vunpack.c.l.b16 %v4758
      %v5303 = vunpack.c.l.b16 %v4759
      %v5304 = vunpack.c.h.b16 %v4759
      %v5305 = vunpack.c.l.b16 %v4760
      %v5306 = vunpack.c.h.b16 %v4760
      %v5307 = vunpack.c.l.b16 %v4761
      %v5308 = vunpack.c.l.b16 %v4762
      %v5309 = vunpack.c.h.b16 %v4762
      %v5310 = vunpack.c.l.b16 %v4763
      %v5311 = vunpack.c.h.b16 %v4763
      %v5312 = vunpack.c.l.b16 %v4764
      %v5313 = vpack.c.b16 %v5278, %v5273
      %v5314 = vpack.c.b16 %v5279, %v5274
      %v5315 = vpack.c.b16 %v5280, %v5275
      %v5316 = vpack.c.b16 %v5281, %v5276
      %v5317 = vpack.c.b16 %v5282, %v5277
      %v5318 = vpack.c.b16 %v5288, %v5283
      %v5319 = vpack.c.b16 %v5289, %v5284
      %v5320 = vpack.c.b16 %v5290, %v5285
      %v5321 = vpack.c.b16 %v5291, %v5286
      %v5322 = vpack.c.b16 %v5292, %v5287
      %v5323 = vpack.c.b16 %v5298, %v5293
      %v5324 = vpack.c.b16 %v5299, %v5294
      %v5325 = vpack.c.b16 %v5300, %v5295
      %v5326 = vpack.c.b16 %v5301, %v5296
      %v5327 = vpack.c.b16 %v5302, %v5297
      %v5328 = vpack.c.b16 %v5308, %v5303
      %v5329 = vpack.c.b16 %v5309, %v5304
      %v5330 = vpack.c.b16 %v5310, %v5305
      %v5331 = vpack.c.b16 %v5311, %v5306
      %v5332 = vpack.c.b16 %v5312, %v5307
      %5349 = vrot.lane.b32.xlu0 %v4881, 107
      %v5350 = vpop.permute.xlu0 %5349
      %5351 = vrot.lane.b32.xlu0 %v4882, 107
      %v5352 = vpop.permute.xlu0 %5351
      %5353 = vrot.lane.b32.xlu0 %v4883, 107
      %v5354 = vpop.permute.xlu0 %5353
      %5355 = vrot.lane.b32.xlu0 %v4856, 107
      %v5356 = vpop.permute.xlu0 %5355
      %5357 = vrot.lane.b32.xlu0 %v4884, 107
      %v5358 = vpop.permute.xlu0 %5357
      %5359 = vrot.lane.b32.xlu0 %v4885, 107
      %v5360 = vpop.permute.xlu0 %5359
      %5361 = vrot.lane.b32.xlu0 %v4886, 107
      %v5362 = vpop.permute.xlu0 %5361
      %5363 = vrot.lane.b32.xlu0 %v4864, 107
      %v5364 = vpop.permute.xlu0 %5363
      %5365 = vrot.lane.b32.xlu0 %v4887, 107
      %v5366 = vpop.permute.xlu0 %5365
      %5367 = vrot.lane.b32.xlu0 %v4888, 107
      %v5368 = vpop.permute.xlu0 %5367
      %5369 = vrot.lane.b32.xlu0 %v4889, 107
      %v5370 = vpop.permute.xlu0 %5369
      %5371 = vrot.lane.b32.xlu0 %v4872, 107
      %v5372 = vpop.permute.xlu0 %5371
      %5373 = vrot.lane.b32.xlu0 %v4890, 107
      %v5374 = vpop.permute.xlu0 %5373
      %5375 = vrot.lane.b32.xlu0 %v4891, 107
      %v5376 = vpop.permute.xlu0 %5375
      %5377 = vrot.lane.b32.xlu0 %v4892, 107
      %v5378 = vpop.permute.xlu0 %5377
      %5379 = vrot.lane.b32.xlu0 %v4880, 107
      %v5380 = vpop.permute.xlu0 %5379
      %5381 = vrot.lane.b32.xlu0 %v4925, 107
      %v5382 = vpop.permute.xlu0 %5381
      %5383 = vrot.lane.b32.xlu0 %v4926, 107
      %v5384 = vpop.permute.xlu0 %5383
      %5385 = vrot.lane.b32.xlu0 %v4927, 107
      %v5386 = vpop.permute.xlu0 %5385
      %5387 = vrot.lane.b32.xlu0 %v4900, 107
      %v5388 = vpop.permute.xlu0 %5387
      %5389 = vrot.lane.b32.xlu0 %v4928, 107
      %v5390 = vpop.permute.xlu0 %5389
      %5391 = vrot.lane.b32.xlu0 %v4929, 107
      %v5392 = vpop.permute.xlu0 %5391
      %5393 = vrot.lane.b32.xlu0 %v4930, 107
      %v5394 = vpop.permute.xlu0 %5393
      %5395 = vrot.lane.b32.xlu0 %v4908, 107
      %v5396 = vpop.permute.xlu0 %5395
      %5397 = vrot.lane.b32.xlu0 %v4931, 107
      %v5398 = vpop.permute.xlu0 %5397
      %5399 = vrot.lane.b32.xlu0 %v4932, 107
      %v5400 = vpop.permute.xlu0 %5399
      %5401 = vrot.lane.b32.xlu0 %v4933, 107
      %v5402 = vpop.permute.xlu0 %5401
      %5403 = vrot.lane.b32.xlu0 %v4916, 107
      %v5404 = vpop.permute.xlu0 %5403
      %5405 = vrot.lane.b32.xlu0 %v4934, 107
      %v5406 = vpop.permute.xlu0 %5405
      %5407 = vrot.lane.b32.xlu0 %v4935, 107
      %v5408 = vpop.permute.xlu0 %5407
      %5409 = vrot.lane.b32.xlu0 %v4936, 107
      %v5410 = vpop.permute.xlu0 %5409
      %5411 = vrot.lane.b32.xlu0 %v4924, 107
      %v5412 = vpop.permute.xlu0 %5411
      %5413 = vrot.lane.b32.xlu0 %v4969, 107
      %v5414 = vpop.permute.xlu0 %5413
      %5415 = vrot.lane.b32.xlu0 %v4970, 107
      %v5416 = vpop.permute.xlu0 %5415
      %5417 = vrot.lane.b32.xlu0 %v4971, 107
      %v5418 = vpop.permute.xlu0 %5417
      %5419 = vrot.lane.b32.xlu0 %v4944, 107
      %v5420 = vpop.permute.xlu0 %5419
      %5421 = vrot.lane.b32.xlu0 %v4972, 107
      %v5422 = vpop.permute.xlu0 %5421
      %5423 = vrot.lane.b32.xlu0 %v4973, 107
      %v5424 = vpop.permute.xlu0 %5423
      %5425 = vrot.lane.b32.xlu0 %v4974, 107
      %v5426 = vpop.permute.xlu0 %5425
      %5427 = vrot.lane.b32.xlu0 %v4952, 107
      %v5428 = vpop.permute.xlu0 %5427
      %5429 = vrot.lane.b32.xlu0 %v4975, 107
      %v5430 = vpop.permute.xlu0 %5429
      %5431 = vrot.lane.b32.xlu0 %v4976, 107
      %v5432 = vpop.permute.xlu0 %5431
      %5433 = vrot.lane.b32.xlu0 %v4977, 107
      %v5434 = vpop.permute.xlu0 %5433
      %5435 = vrot.lane.b32.xlu0 %v4960, 107
      %v5436 = vpop.permute.xlu0 %5435
      %5437 = vrot.lane.b32.xlu0 %v4978, 107
      %v5438 = vpop.permute.xlu0 %5437
      %5439 = vrot.lane.b32.xlu0 %v4979, 107
      %v5440 = vpop.permute.xlu0 %5439
      %5441 = vrot.lane.b32.xlu0 %v4980, 107
      %v5442 = vpop.permute.xlu0 %5441
      %5443 = vrot.lane.b32.xlu0 %v4968, 107
      %v5444 = vpop.permute.xlu0 %5443
      %5445 = vrot.lane.b32.xlu0 %v5013, 107
      %v5446 = vpop.permute.xlu0 %5445
      %5447 = vrot.lane.b32.xlu0 %v5014, 107
      %v5448 = vpop.permute.xlu0 %5447
      %5449 = vrot.lane.b32.xlu0 %v5015, 107
      %v5450 = vpop.permute.xlu0 %5449
      %5451 = vrot.lane.b32.xlu0 %v4988, 107
      %v5452 = vpop.permute.xlu0 %5451
      %5453 = vrot.lane.b32.xlu0 %v5016, 107
      %v5454 = vpop.permute.xlu0 %5453
      %5455 = vrot.lane.b32.xlu0 %v5017, 107
      %v5456 = vpop.permute.xlu0 %5455
      %5457 = vrot.lane.b32.xlu0 %v5018, 107
      %v5458 = vpop.permute.xlu0 %5457
      %5459 = vrot.lane.b32.xlu0 %v4996, 107
      %v5460 = vpop.permute.xlu0 %5459
      %5461 = vrot.lane.b32.xlu0 %v5019, 107
      %v5462 = vpop.permute.xlu0 %5461
      %5463 = vrot.lane.b32.xlu0 %v5020, 107
      %v5464 = vpop.permute.xlu0 %5463
      %5465 = vrot.lane.b32.xlu0 %v5021, 107
      %v5466 = vpop.permute.xlu0 %5465
      %5467 = vrot.lane.b32.xlu0 %v5004, 107
      %v5468 = vpop.permute.xlu0 %5467
      %5469 = vrot.lane.b32.xlu0 %v5022, 107
      %v5470 = vpop.permute.xlu0 %5469
      %5471 = vrot.lane.b32.xlu0 %v5023, 107
      %v5472 = vpop.permute.xlu0 %5471
      %5473 = vrot.lane.b32.xlu0 %v5024, 107
      %v5474 = vpop.permute.xlu0 %5473
      %5475 = vrot.lane.b32.xlu0 %v5012, 107
      %v5476 = vpop.permute.xlu0 %5475
      %5477 = vrot.lane.b32.xlu0 %v5057, 107
      %v5478 = vpop.permute.xlu0 %5477
      %5479 = vrot.lane.b32.xlu0 %v5058, 107
      %v5480 = vpop.permute.xlu0 %5479
      %5481 = vrot.lane.b32.xlu0 %v5059, 107
      %v5482 = vpop.permute.xlu0 %5481
      %5483 = vrot.lane.b32.xlu0 %v5032, 107
      %v5484 = vpop.permute.xlu0 %5483
      %5485 = vrot.lane.b32.xlu0 %v5060, 107
      %v5486 = vpop.permute.xlu0 %5485
      %5487 = vrot.lane.b32.xlu0 %v5061, 107
      %v5488 = vpop.permute.xlu0 %5487
      %5489 = vrot.lane.b32.xlu0 %v5062, 107
      %v5490 = vpop.permute.xlu0 %5489
      %5491 = vrot.lane.b32.xlu0 %v5040, 107
      %v5492 = vpop.permute.xlu0 %5491
      %5493 = vrot.lane.b32.xlu0 %v5063, 107
      %v5494 = vpop.permute.xlu0 %5493
      %5495 = vrot.lane.b32.xlu0 %v5064, 107
      %v5496 = vpop.permute.xlu0 %5495
      %5497 = vrot.lane.b32.xlu0 %v5065, 107
      %v5498 = vpop.permute.xlu0 %5497
      %5499 = vrot.lane.b32.xlu0 %v5048, 107
      %v5500 = vpop.permute.xlu0 %5499
      %5501 = vrot.lane.b32.xlu0 %v5066, 107
      %v5502 = vpop.permute.xlu0 %5501
      %5503 = vrot.lane.b32.xlu0 %v5067, 107
      %v5504 = vpop.permute.xlu0 %5503
      %5505 = vrot.lane.b32.xlu0 %v5068, 107
      %v5506 = vpop.permute.xlu0 %5505
      %5507 = vrot.lane.b32.xlu0 %v5056, 107
      %v5508 = vpop.permute.xlu0 %5507
      %5509 = vrot.lane.b32.xlu0 %v5101, 107
      %v5510 = vpop.permute.xlu0 %5509
      %5511 = vrot.lane.b32.xlu0 %v5102, 107
      %v5512 = vpop.permute.xlu0 %5511
      %5513 = vrot.lane.b32.xlu0 %v5103, 107
      %v5514 = vpop.permute.xlu0 %5513
      %5515 = vrot.lane.b32.xlu0 %v5076, 107
      %v5516 = vpop.permute.xlu0 %5515
      %5517 = vrot.lane.b32.xlu0 %v5104, 107
      %v5518 = vpop.permute.xlu0 %5517
      %5519 = vrot.lane.b32.xlu0 %v5105, 107
      %v5520 = vpop.permute.xlu0 %5519
      %5521 = vrot.lane.b32.xlu0 %v5106, 107
      %v5522 = vpop.permute.xlu0 %5521
      %5523 = vrot.lane.b32.xlu0 %v5084, 107
      %v5524 = vpop.permute.xlu0 %5523
      %5525 = vrot.lane.b32.xlu0 %v5107, 107
      %v5526 = vpop.permute.xlu0 %5525
      %5527 = vrot.lane.b32.xlu0 %v5108, 107
      %v5528 = vpop.permute.xlu0 %5527
      %5529 = vrot.lane.b32.xlu0 %v5109, 107
      %v5530 = vpop.permute.xlu0 %5529
      %5531 = vrot.lane.b32.xlu0 %v5092, 107
      %v5532 = vpop.permute.xlu0 %5531
      %5533 = vrot.lane.b32.xlu0 %v5110, 107
      %v5534 = vpop.permute.xlu0 %5533
      %5535 = vrot.lane.b32.xlu0 %v5111, 107
      %v5536 = vpop.permute.xlu0 %5535
      %5537 = vrot.lane.b32.xlu0 %v5112, 107
      %v5538 = vpop.permute.xlu0 %5537
      %5539 = vrot.lane.b32.xlu0 %v5100, 107
      %v5540 = vpop.permute.xlu0 %5539
      %5541 = vrot.lane.b32.xlu0 %v5145, 107
      %v5542 = vpop.permute.xlu0 %5541
      %5543 = vrot.lane.b32.xlu0 %v5146, 107
      %v5544 = vpop.permute.xlu0 %5543
      %5545 = vrot.lane.b32.xlu0 %v5147, 107
      %v5546 = vpop.permute.xlu0 %5545
      %5547 = vrot.lane.b32.xlu0 %v5120, 107
      %v5548 = vpop.permute.xlu0 %5547
      %5549 = vrot.lane.b32.xlu0 %v5148, 107
      %v5550 = vpop.permute.xlu0 %5549
      %5551 = vrot.lane.b32.xlu0 %v5149, 107
      %v5552 = vpop.permute.xlu0 %5551
      %5553 = vrot.lane.b32.xlu0 %v5150, 107
      %v5554 = vpop.permute.xlu0 %5553
      %5555 = vrot.lane.b32.xlu0 %v5128, 107
      %v5556 = vpop.permute.xlu0 %5555
      %5557 = vrot.lane.b32.xlu0 %v5151, 107
      %v5558 = vpop.permute.xlu0 %5557
      %5559 = vrot.lane.b32.xlu0 %v5152, 107
      %v5560 = vpop.permute.xlu0 %5559
      %5561 = vrot.lane.b32.xlu0 %v5153, 107
      %v5562 = vpop.permute.xlu0 %5561
      %5563 = vrot.lane.b32.xlu0 %v5136, 107
      %v5564 = vpop.permute.xlu0 %5563
      %5565 = vrot.lane.b32.xlu0 %v5154, 107
      %v5566 = vpop.permute.xlu0 %5565
      %5567 = vrot.lane.b32.xlu0 %v5155, 107
      %v5568 = vpop.permute.xlu0 %5567
      %5569 = vrot.lane.b32.xlu0 %v5156, 107
      %v5570 = vpop.permute.xlu0 %5569
      %5571 = vrot.lane.b32.xlu0 %v5144, 107
      %v5572 = vpop.permute.xlu0 %5571
      %5573 = vrot.lane.b32.xlu0 %v5189, 107
      %v5574 = vpop.permute.xlu0 %5573
      %5575 = vrot.lane.b32.xlu0 %v5190, 107
      %v5576 = vpop.permute.xlu0 %5575
      %5577 = vrot.lane.b32.xlu0 %v5191, 107
      %v5578 = vpop.permute.xlu0 %5577
      %5579 = vrot.lane.b32.xlu0 %v5164, 107
      %v5580 = vpop.permute.xlu0 %5579
      %5581 = vrot.lane.b32.xlu0 %v5192, 107
      %v5582 = vpop.permute.xlu0 %5581
      %5583 = vrot.lane.b32.xlu0 %v5193, 107
      %v5584 = vpop.permute.xlu0 %5583
      %5585 = vrot.lane.b32.xlu0 %v5194, 107
      %v5586 = vpop.permute.xlu0 %5585
      %5587 = vrot.lane.b32.xlu0 %v5172, 107
      %v5588 = vpop.permute.xlu0 %5587
      %5589 = vrot.lane.b32.xlu0 %v5195, 107
      %v5590 = vpop.permute.xlu0 %5589
      %5591 = vrot.lane.b32.xlu0 %v5196, 107
      %v5592 = vpop.permute.xlu0 %5591
      %5593 = vrot.lane.b32.xlu0 %v5197, 107
      %v5594 = vpop.permute.xlu0 %5593
      %5595 = vrot.lane.b32.xlu0 %v5180, 107
      %v5596 = vpop.permute.xlu0 %5595
      %5597 = vrot.lane.b32.xlu0 %v5198, 107
      %v5598 = vpop.permute.xlu0 %5597
      %5599 = vrot.lane.b32.xlu0 %v5199, 107
      %v5600 = vpop.permute.xlu0 %5599
      %5601 = vrot.lane.b32.xlu0 %v5200, 107
      %v5602 = vpop.permute.xlu0 %5601
      %5603 = vrot.lane.b32.xlu0 %v5188, 107
      %v5604 = vpop.permute.xlu0 %5603
      %v5605 = vsel %vm1279, %v5350, %v5352
      %v5606 = vsel %vm1279, %v5352, %v5354
      %v5607 = vsel %vm1279, %v5354, %v5356
      %v5608 = vsel %vm1279, %v5358, %v5360
      %v5609 = vsel %vm1279, %v5360, %v5362
      %v5610 = vsel %vm1279, %v5362, %v5364
      %v5611 = vsel %vm1279, %v5366, %v5368
      %v5612 = vsel %vm1279, %v5368, %v5370
      %v5613 = vsel %vm1279, %v5370, %v5372
      %v5614 = vsel %vm1279, %v5374, %v5376
      %v5615 = vsel %vm1279, %v5376, %v5378
      %v5616 = vsel %vm1279, %v5378, %v5380
      %v5617 = vsel %vm1279, %v5382, %v5384
      %v5618 = vsel %vm1279, %v5384, %v5386
      %v5619 = vsel %vm1279, %v5386, %v5388
      %v5620 = vsel %vm1279, %v5390, %v5392
      %v5621 = vsel %vm1279, %v5392, %v5394
      %v5622 = vsel %vm1279, %v5394, %v5396
      %v5623 = vsel %vm1279, %v5398, %v5400
      %v5624 = vsel %vm1279, %v5400, %v5402
      %v5625 = vsel %vm1279, %v5402, %v5404
      %v5626 = vsel %vm1279, %v5406, %v5408
      %v5627 = vsel %vm1279, %v5408, %v5410
      %v5628 = vsel %vm1279, %v5410, %v5412
      %v5629 = vsel %vm1279, %v5414, %v5416
      %v5630 = vsel %vm1279, %v5416, %v5418
      %v5631 = vsel %vm1279, %v5418, %v5420
      %v5632 = vsel %vm1279, %v5422, %v5424
      %v5633 = vsel %vm1279, %v5424, %v5426
      %v5634 = vsel %vm1279, %v5426, %v5428
      %v5635 = vsel %vm1279, %v5430, %v5432
      %v5636 = vsel %vm1279, %v5432, %v5434
      %v5637 = vsel %vm1279, %v5434, %v5436
      %v5638 = vsel %vm1279, %v5438, %v5440
      %v5639 = vsel %vm1279, %v5440, %v5442
      %v5640 = vsel %vm1279, %v5442, %v5444
      %v5641 = vsel %vm1279, %v5446, %v5448
      %v5642 = vsel %vm1279, %v5448, %v5450
      %v5643 = vsel %vm1279, %v5450, %v5452
      %v5644 = vsel %vm1279, %v5454, %v5456
      %v5645 = vsel %vm1279, %v5456, %v5458
      %v5646 = vsel %vm1279, %v5458, %v5460
      %v5647 = vsel %vm1279, %v5462, %v5464
      %v5648 = vsel %vm1279, %v5464, %v5466
      %v5649 = vsel %vm1279, %v5466, %v5468
      %v5650 = vsel %vm1279, %v5470, %v5472
      %v5651 = vsel %vm1279, %v5472, %v5474
      %v5652 = vsel %vm1279, %v5474, %v5476
      %v5653 = vsel %vm1279, %v5478, %v5480
      %v5654 = vsel %vm1279, %v5480, %v5482
      %v5655 = vsel %vm1279, %v5482, %v5484
      %v5656 = vsel %vm1279, %v5486, %v5488
      %v5657 = vsel %vm1279, %v5488, %v5490
      %v5658 = vsel %vm1279, %v5490, %v5492
      %v5659 = vsel %vm1279, %v5494, %v5496
      %v5660 = vsel %vm1279, %v5496, %v5498
      %v5661 = vsel %vm1279, %v5498, %v5500
      %v5662 = vsel %vm1279, %v5502, %v5504
      %v5663 = vsel %vm1279, %v5504, %v5506
      %v5664 = vsel %vm1279, %v5506, %v5508
      %v5665 = vsel %vm1279, %v5510, %v5512
      %v5666 = vsel %vm1279, %v5512, %v5514
      %v5667 = vsel %vm1279, %v5514, %v5516
      %v5668 = vsel %vm1279, %v5518, %v5520
      %v5669 = vsel %vm1279, %v5520, %v5522
      %v5670 = vsel %vm1279, %v5522, %v5524
      %v5671 = vsel %vm1279, %v5526, %v5528
      %v5672 = vsel %vm1279, %v5528, %v5530
      %v5673 = vsel %vm1279, %v5530, %v5532
      %v5674 = vsel %vm1279, %v5534, %v5536
      %v5675 = vsel %vm1279, %v5536, %v5538
      %v5676 = vsel %vm1279, %v5538, %v5540
      %v5677 = vsel %vm1279, %v5542, %v5544
      %v5678 = vsel %vm1279, %v5544, %v5546
      %v5679 = vsel %vm1279, %v5546, %v5548
      %v5680 = vsel %vm1279, %v5550, %v5552
      %v5681 = vsel %vm1279, %v5552, %v5554
      %v5682 = vsel %vm1279, %v5554, %v5556
      %v5683 = vsel %vm1279, %v5558, %v5560
      %v5684 = vsel %vm1279, %v5560, %v5562
      %v5685 = vsel %vm1279, %v5562, %v5564
      %v5686 = vsel %vm1279, %v5566, %v5568
      %v5687 = vsel %vm1279, %v5568, %v5570
      %v5688 = vsel %vm1279, %v5570, %v5572
      %v5689 = vsel %vm1279, %v5574, %v5576
      %v5690 = vsel %vm1279, %v5576, %v5578
      %v5691 = vsel %vm1279, %v5578, %v5580
      %v5692 = vsel %vm1279, %v5582, %v5584
      %v5693 = vsel %vm1279, %v5584, %v5586
      %v5694 = vsel %vm1279, %v5586, %v5588
      %v5695 = vsel %vm1279, %v5590, %v5592
      %v5696 = vsel %vm1279, %v5592, %v5594
      %v5697 = vsel %vm1279, %v5594, %v5596
      %v5698 = vsel %vm1279, %v5598, %v5600
      %v5699 = vsel %vm1279, %v5600, %v5602
      %v5700 = vsel %vm1279, %v5602, %v5604
      %vm5845 = vcmask 523264
      %v5847 = vsel %vm5845, %v5317, 0
      %v5850 = vsel %vm5845, %v5322, 0
      %v5853 = vsel %vm5845, %v5327, 0
      %v5856 = vsel %vm5845, %v5332, 0
      %5858 = vmatprep.subr.bf16.mxu0 %v5014
      %5859 = vmatpush1.bf16.msra.mxu0 %v5013
      %5860 = vmatprep.subr.bf16.mxu0 %v5017
      %5861 = vmatpush1.bf16.msra.mxu0 %v5016
      %5862 = vmatprep.subr.bf16.mxu0 %v5020
      %5863 = vmatpush1.bf16.msra.mxu0 %v5019
      %5864 = vmatprep.subr.bf16.mxu0 %v5023
      %5865 = vmatpush1.bf16.msra.mxu0 %v5022
      %5866 = vmatprep.subr.bf16.mxu0 %v5606
      %5867 = vmatpush1.bf16.msra.mxu0 %v5605
      %5868 = vmatprep.subr.bf16.mxu0 %v5609
      %5869 = vmatpush1.bf16.msra.mxu0 %v5608
      %5870 = vmatprep.subr.bf16.mxu0 %v5612
      %5871 = vmatpush1.bf16.msra.mxu0 %v5611
      %5872 = vmatprep.subr.bf16.mxu0 %v5615
      %5873 = vmatpush1.bf16.msra.mxu0 %v5614
      %5874 = vmatprep.subr.bf16.mxu0 %v5618
      %5875 = vmatpush1.bf16.msra.mxu0 %v5617
      %5876 = vmatprep.subr.bf16.mxu0 %v5621
      %5877 = vmatpush1.bf16.msra.mxu0 %v5620
      %5878 = vmatprep.subr.bf16.mxu0 %v5624
      %5879 = vmatpush1.bf16.msra.mxu0 %v5623
      %5880 = vmatprep.subr.bf16.mxu0 %v5627
      %5881 = vmatpush1.bf16.msra.mxu0 %v5626
      %5882 = vmatprep.subr.bf16.mxu0 %v5630
      %5883 = vmatpush1.bf16.msra.mxu0 %v5629
      %5884 = vmatprep.subr.bf16.mxu0 %v5633
      %5885 = vmatpush1.bf16.msra.mxu0 %v5632
      %5886 = vmatprep.subr.bf16.mxu0 %v5636
      %5887 = vmatpush1.bf16.msra.mxu0 %v5635
      %5888 = vmatprep.subr.bf16.mxu0 %v5639
      %5889 = vmatpush1.bf16.msra.mxu0 %v5638
      %5890 = vmatprep.mubr.bf16.mxu0 %v5314
      %5891 = vmatmul.mubr.bf16.gmra.mrb[0].mxu0 %v5313
      %v5892 = vpop.f32.mrb[0].mxu0
      %v5893 = vadd.f32 %v5212, %v5892
      %v5894 = vpop.f32.mrb[0].mxu0
      %v5895 = vadd.f32 %v5212, %v5894
      %v5896 = vpop.f32.mrb[0].mxu0
      %v5897 = vadd.f32 %v5217, %v5896
      %v5898 = vpop.f32.mrb[0].mxu0
      %v5899 = vadd.f32 %v5217, %v5898
      %5900 = vmatprep.mubr.bf16.mxu0 %v5319
      %5901 = vmatmul.mubr.bf16.gmra.mrb[0].mxu0 %v5318
      %v5902 = vpop.f32.mrb[0].mxu0
      %v5903 = vadd.f32 %v5222, %v5902
      %v5904 = vpop.f32.mrb[0].mxu0
      %v5905 = vadd.f32 %v5222, %v5904
      %v5906 = vpop.f32.mrb[0].mxu0
      %v5907 = vadd.f32 %v5227, %v5906
      %v5908 = vpop.f32.mrb[0].mxu0
      %v5909 = vadd.f32 %v5227, %v5908
      %5910 = vmatprep.mubr.bf16.mxu0 %v5324
      %5911 = vmatmul.mubr.bf16.gmra.mrb[0].mxu0 %v5323
      %v5912 = vpop.f32.mrb[0].mxu0
      %v5913 = vadd.f32 %v5232, %v5912
      %v5914 = vpop.f32.mrb[0].mxu0
      %v5915 = vadd.f32 %v5232, %v5914
      %v5916 = vpop.f32.mrb[0].mxu0
      %v5917 = vadd.f32 %v5237, %v5916
      %v5918 = vpop.f32.mrb[0].mxu0
      %v5919 = vadd.f32 %v5237, %v5918
      %5920 = vmatprep.mubr.bf16.mxu0 %v5329
      %5921 = vmatmul.mubr.bf16.gmra.mrb[0].mxu0 %v5328
      %v5922 = vpop.f32.mrb[0].mxu0
      %v5923 = vadd.f32 %v5242, %v5922
      %v5924 = vpop.f32.mrb[0].mxu0
      %v5925 = vadd.f32 %v5242, %v5924
      %v5926 = vpop.f32.mrb[0].mxu0
      %v5927 = vadd.f32 %v5247, %v5926
      %v5928 = vpop.f32.mrb[0].mxu0
      %v5929 = vadd.f32 %v5247, %v5928
      %5930 = vdwg.mxu0
      %5931 = vmatprep.subr.bf16.mxu0 %v5642
      %5932 = vmatpush1.bf16.msra.mxu0 %v5641
      %5933 = vmatprep.subr.bf16.mxu0 %v5645
      %5934 = vmatpush1.bf16.msra.mxu0 %v5644
      %5935 = vmatprep.subr.bf16.mxu0 %v5648
      %5936 = vmatpush1.bf16.msra.mxu0 %v5647
      %5937 = vmatprep.subr.bf16.mxu0 %v5651
      %5938 = vmatpush1.bf16.msra.mxu0 %v5650
      %5939 = vmatprep.subr.bf16.mxu0 %v5654
      %5940 = vmatpush1.bf16.msra.mxu0 %v5653
      %5941 = vmatprep.subr.bf16.mxu0 %v5657
      %5942 = vmatpush1.bf16.msra.mxu0 %v5656
      %5943 = vmatprep.subr.bf16.mxu0 %v5660
      %5944 = vmatpush1.bf16.msra.mxu0 %v5659
      %5945 = vmatprep.subr.bf16.mxu0 %v5663
      %5946 = vmatpush1.bf16.msra.mxu0 %v5662
      %5947 = vmatprep.subr.bf16.mxu0 %v5666
      %5948 = vmatpush1.bf16.msra.mxu0 %v5665
      %5949 = vmatprep.subr.bf16.mxu0 %v5669
      %5950 = vmatpush1.bf16.msra.mxu0 %v5668
      %5951 = vmatprep.subr.bf16.mxu0 %v5672
      %5952 = vmatpush1.bf16.msra.mxu0 %v5671
      %5953 = vmatprep.subr.bf16.mxu0 %v5675
      %5954 = vmatpush1.bf16.msra.mxu0 %v5674
      %5955 = vmatprep.subr.bf16.mxu0 %v5678
      %5956 = vmatpush1.bf16.msra.mxu0 %v5677
      %5957 = vmatprep.subr.bf16.mxu0 %v5681
      %5958 = vmatpush1.bf16.msra.mxu0 %v5680
      %5959 = vmatprep.subr.bf16.mxu0 %v5684
      %5960 = vmatpush1.bf16.msra.mxu0 %v5683
      %5961 = vmatprep.subr.bf16.mxu0 %v5687
      %5962 = vmatpush1.bf16.msra.mxu0 %v5686
      %5963 = vmatprep.mubr.bf16.mxu0 %v5316
      %5964 = vmatmul.mubr.bf16.gmra.mrb[0].mxu0 %v5315
      %v5965 = vpop.f32.mrb[0].mxu0
      %v5966 = vadd.f32 %v5893, %v5965
      %v5967 = vpop.f32.mrb[0].mxu0
      %v5968 = vadd.f32 %v5895, %v5967
      %v5969 = vpop.f32.mrb[0].mxu0
      %v5970 = vadd.f32 %v5897, %v5969
      %v5971 = vpop.f32.mrb[0].mxu0
      %v5972 = vadd.f32 %v5899, %v5971
      %5973 = vmatprep.mubr.bf16.mxu0 %v5321
      %5974 = vmatmul.mubr.bf16.gmra.mrb[0].mxu0 %v5320
      %v5975 = vpop.f32.mrb[0].mxu0
      %v5976 = vadd.f32 %v5903, %v5975
      %v5977 = vpop.f32.mrb[0].mxu0
      %v5978 = vadd.f32 %v5905, %v5977
      %v5979 = vpop.f32.mrb[0].mxu0
      %v5980 = vadd.f32 %v5907, %v5979
      %v5981 = vpop.f32.mrb[0].mxu0
      %v5982 = vadd.f32 %v5909, %v5981
      %5983 = vmatprep.mubr.bf16.mxu0 %v5326
      %5984 = vmatmul.mubr.bf16.gmra.mrb[0].mxu0 %v5325
      %v5985 = vpop.f32.mrb[0].mxu0
      %v5986 = vadd.f32 %v5913, %v5985
      %v5987 = vpop.f32.mrb[0].mxu0
      %v5988 = vadd.f32 %v5915, %v5987
      %v5989 = vpop.f32.mrb[0].mxu0
      %v5990 = vadd.f32 %v5917, %v5989
      %v5991 = vpop.f32.mrb[0].mxu0
      %v5992 = vadd.f32 %v5919, %v5991
      %5993 = vmatprep.mubr.bf16.mxu0 %v5331
      %5994 = vmatmul.mubr.bf16.gmra.mrb[0].mxu0 %v5330
      %v5995 = vpop.f32.mrb[0].mxu0
      %v5996 = vadd.f32 %v5923, %v5995
      %v5997 = vpop.f32.mrb[0].mxu0
      %v5998 = vadd.f32 %v5925, %v5997
      %v5999 = vpop.f32.mrb[0].mxu0
      %v6000 = vadd.f32 %v5927, %v5999
      %v6001 = vpop.f32.mrb[0].mxu0
      %v6002 = vadd.f32 %v5929, %v6001
      %6003 = vdwg.mxu0
      %6004 = vmatprep.subr.bf16.mxu0 %v5690
      %6005 = vmatpush1.bf16.msra.mxu0 %v5689
      %6006 = vmatprep.subr.bf16.mxu0 %v5693
      %6007 = vmatpush1.bf16.msra.mxu0 %v5692
      %6008 = vmatprep.subr.bf16.mxu0 %v5696
      %6009 = vmatpush1.bf16.msra.mxu0 %v5695
      %6010 = vmatprep.subr.bf16.mxu0 %v5699
      %6011 = vmatpush1.bf16.msra.mxu0 %v5698
      %6012 = vmatprep.subr.bf16.mxu0 0
      %6013 = vmatpush1.bf16.msra.mxu0 0
      %6014 = vmatprep.subr.bf16.mxu0 0
      %6015 = vmatpush1.bf16.msra.mxu0 0
      %6016 = vmatprep.subr.bf16.mxu0 0
      %6017 = vmatpush1.bf16.msra.mxu0 0
      %6018 = vmatprep.subr.bf16.mxu0 0
      %6019 = vmatpush1.bf16.msra.mxu0 0
      %6020 = vmatprep.subr.bf16.mxu0 0
      %6021 = vmatpush1.bf16.msra.mxu0 0
      %6022 = vmatprep.subr.bf16.mxu0 0
      %6023 = vmatpush1.bf16.msra.mxu0 0
      %6024 = vmatprep.subr.bf16.mxu0 0
      %6025 = vmatpush1.bf16.msra.mxu0 0
      %6026 = vmatprep.subr.bf16.mxu0 0
      %6027 = vmatpush1.bf16.msra.mxu0 0
      %6028 = vmatprep.subr.bf16.mxu0 0
      %6029 = vmatpush1.bf16.msra.mxu0 0
      %6030 = vmatprep.subr.bf16.mxu0 0
      %6031 = vmatpush1.bf16.msra.mxu0 0
      %6032 = vmatprep.subr.bf16.mxu0 0
      %6033 = vmatpush1.bf16.msra.mxu0 0
      %6034 = vmatprep.subr.bf16.mxu0 0
      %6035 = vmatpush1.bf16.msra.mxu0 0
      %6036 = vmatprep.mubr.bf16.mxu0 0
      %6037 = vmatmul.mubr.bf16.gmra.mrb[0].mxu0 %v5847
      %v6038 = vpop.f32.mrb[0].mxu0
      %v6039 = vadd.f32 %v5966, %v6038
      %v6040 = vpop.f32.mrb[0].mxu0
      %v6041 = vadd.f32 %v5968, %v6040
      %v6042 = vpop.f32.mrb[0].mxu0
      %v6043 = vadd.f32 %v5970, %v6042
      %v6044 = vpop.f32.mrb[0].mxu0
      %v6045 = vadd.f32 %v5972, %v6044
      %6046 = vmatprep.mubr.bf16.mxu0 0
      %6047 = vmatmul.mubr.bf16.gmra.mrb[0].mxu0 %v5850
      %v6048 = vpop.f32.mrb[0].mxu0
      %v6049 = vadd.f32 %v5976, %v6048
      %v6050 = vpop.f32.mrb[0].mxu0
      %v6051 = vadd.f32 %v5978, %v6050
      %v6052 = vpop.f32.mrb[0].mxu0
      %v6053 = vadd.f32 %v5980, %v6052
      %v6054 = vpop.f32.mrb[0].mxu0
      %v6055 = vadd.f32 %v5982, %v6054
      %6056 = vmatprep.mubr.bf16.mxu0 0
      %6057 = vmatmul.mubr.bf16.gmra.mrb[0].mxu0 %v5853
      %v6058 = vpop.f32.mrb[0].mxu0
      %v6059 = vadd.f32 %v5986, %v6058
      %v6060 = vpop.f32.mrb[0].mxu0
      %v6061 = vadd.f32 %v5988, %v6060
      %v6062 = vpop.f32.mrb[0].mxu0
      %v6063 = vadd.f32 %v5990, %v6062
      %v6064 = vpop.f32.mrb[0].mxu0
      %v6065 = vadd.f32 %v5992, %v6064
      %6066 = vmatprep.mubr.bf16.mxu0 0
      %6067 = vmatmul.mubr.bf16.gmra.mrb[0].mxu0 %v5856
      %v6068 = vpop.f32.mrb[0].mxu0
      %v6069 = vadd.f32 %v5996, %v6068
      %v6070 = vpop.f32.mrb[0].mxu0
      %v6071 = vadd.f32 %v5998, %v6070
      %v6072 = vpop.f32.mrb[0].mxu0
      %v6073 = vadd.f32 %v6000, %v6072
      %v6074 = vpop.f32.mrb[0].mxu0
      %v6075 = vadd.f32 %v6002, %v6074
      %6076 = vdwg.mxu0
      %6077 = vmatprep.subr.bf16.mxu0 %v4988
      %6078 = vmatpush1.bf16.msra.mxu0 %v5015
      %6079 = vmatprep.subr.bf16.mxu0 %v4996
      %6080 = vmatpush1.bf16.msra.mxu0 %v5018
      %6081 = vmatprep.subr.bf16.mxu0 %v5004
      %6082 = vmatpush1.bf16.msra.mxu0 %v5021
      %6083 = vmatprep.subr.bf16.mxu0 %v5012
      %6084 = vmatpush1.bf16.msra.mxu0 %v5024
      %6085 = vmatprep.subr.bf16.mxu0 %v5356
      %6086 = vmatpush1.bf16.msra.mxu0 %v5607
      %6087 = vmatprep.subr.bf16.mxu0 %v5364
      %6088 = vmatpush1.bf16.msra.mxu0 %v5610
      %6089 = vmatprep.subr.bf16.mxu0 %v5372
      %6090 = vmatpush1.bf16.msra.mxu0 %v5613
      %6091 = vmatprep.subr.bf16.mxu0 %v5380
      %6092 = vmatpush1.bf16.msra.mxu0 %v5616
      %6093 = vmatprep.subr.bf16.mxu0 %v5388
      %6094 = vmatpush1.bf16.msra.mxu0 %v5619
      %6095 = vmatprep.subr.bf16.mxu0 %v5396
      %6096 = vmatpush1.bf16.msra.mxu0 %v5622
      %6097 = vmatprep.subr.bf16.mxu0 %v5404
      %6098 = vmatpush1.bf16.msra.mxu0 %v5625
      %6099 = vmatprep.subr.bf16.mxu0 %v5412
      %6100 = vmatpush1.bf16.msra.mxu0 %v5628
      %6101 = vmatprep.subr.bf16.mxu0 %v5420
      %6102 = vmatpush1.bf16.msra.mxu0 %v5631
      %6103 = vmatprep.subr.bf16.mxu0 %v5428
      %6104 = vmatpush1.bf16.msra.mxu0 %v5634
      %6105 = vmatprep.subr.bf16.mxu0 %v5436
      %6106 = vmatpush1.bf16.msra.mxu0 %v5637
      %6107 = vmatprep.subr.bf16.mxu0 %v5444
      %6108 = vmatpush1.bf16.msra.mxu0 %v5640
      %6109 = vmatprep.mubr.bf16.mxu0 %v5314
      %6110 = vmatmul.mubr.bf16.gmra.mrb[0].mxu0 %v5313
      %v6111 = vpop.f32.mrb[0].mxu0
      %v6112 = vadd.f32 %v5212, %v6111
      %v6113 = vpop.f32.mrb[0].mxu0
      %v6114 = vadd.f32 %v5212, %v6113
      %v6115 = vpop.f32.mrb[0].mxu0
      %v6116 = vadd.f32 %v5217, %v6115
      %v6117 = vpop.f32.mrb[0].mxu0
      %v6118 = vadd.f32 %v5217, %v6117
      %6119 = vmatprep.mubr.bf16.mxu0 %v5319
      %6120 = vmatmul.mubr.bf16.gmra.mrb[0].mxu0 %v5318
      %v6121 = vpop.f32.mrb[0].mxu0
      %v6122 = vadd.f32 %v5222, %v6121
      %v6123 = vpop.f32.mrb[0].mxu0
      %v6124 = vadd.f32 %v5222, %v6123
      %v6125 = vpop.f32.mrb[0].mxu0
      %v6126 = vadd.f32 %v5227, %v6125
      %v6127 = vpop.f32.mrb[0].mxu0
      %v6128 = vadd.f32 %v5227, %v6127
      %6129 = vmatprep.mubr.bf16.mxu0 %v5324
      %6130 = vmatmul.mubr.bf16.gmra.mrb[0].mxu0 %v5323
      %v6131 = vpop.f32.mrb[0].mxu0
      %v6132 = vadd.f32 %v5232, %v6131
      %v6133 = vpop.f32.mrb[0].mxu0
      %v6134 = vadd.f32 %v5232, %v6133
      %v6135 = vpop.f32.mrb[0].mxu0
      %v6136 = vadd.f32 %v5237, %v6135
      %v6137 = vpop.f32.mrb[0].mxu0
      %v6138 = vadd.f32 %v5237, %v6137
      %6139 = vmatprep.mubr.bf16.mxu0 %v5329
      %6140 = vmatmul.mubr.bf16.gmra.mrb[0].mxu0 %v5328
      %v6141 = vpop.f32.mrb[0].mxu0
      %v6142 = vadd.f32 %v5242, %v6141
      %v6143 = vpop.f32.mrb[0].mxu0
      %v6144 = vadd.f32 %v5242, %v6143
      %v6145 = vpop.f32.mrb[0].mxu0
      %v6146 = vadd.f32 %v5247, %v6145
      %v6147 = vpop.f32.mrb[0].mxu0
      %v6148 = vadd.f32 %v5247, %v6147
      %6149 = vdwg.mxu0
      %6150 = vmatprep.subr.bf16.mxu0 %v5452
      %6151 = vmatpush1.bf16.msra.mxu0 %v5643
      %6152 = vmatprep.subr.bf16.mxu0 %v5460
      %6153 = vmatpush1.bf16.msra.mxu0 %v5646
      %6154 = vmatprep.subr.bf16.mxu0 %v5468
      %6155 = vmatpush1.bf16.msra.mxu0 %v5649
      %6156 = vmatprep.subr.bf16.mxu0 %v5476
      %6157 = vmatpush1.bf16.msra.mxu0 %v5652
      %6158 = vmatprep.subr.bf16.mxu0 %v5484
      %6159 = vmatpush1.bf16.msra.mxu0 %v5655
      %6160 = vmatprep.subr.bf16.mxu0 %v5492
      %6161 = vmatpush1.bf16.msra.mxu0 %v5658
      %6162 = vmatprep.subr.bf16.mxu0 %v5500
      %6163 = vmatpush1.bf16.msra.mxu0 %v5661
      %6164 = vmatprep.subr.bf16.mxu0 %v5508
      %6165 = vmatpush1.bf16.msra.mxu0 %v5664
      %6166 = vmatprep.subr.bf16.mxu0 %v5516
      %6167 = vmatpush1.bf16.msra.mxu0 %v5667
      %6168 = vmatprep.subr.bf16.mxu0 %v5524
      %6169 = vmatpush1.bf16.msra.mxu0 %v5670
      %6170 = vmatprep.subr.bf16.mxu0 %v5532
      %6171 = vmatpush1.bf16.msra.mxu0 %v5673
      %6172 = vmatprep.subr.bf16.mxu0 %v5540
      %6173 = vmatpush1.bf16.msra.mxu0 %v5676
      %6174 = vmatprep.subr.bf16.mxu0 %v5548
      %6175 = vmatpush1.bf16.msra.mxu0 %v5679
      %6176 = vmatprep.subr.bf16.mxu0 %v5556
      %6177 = vmatpush1.bf16.msra.mxu0 %v5682
      %6178 = vmatprep.subr.bf16.mxu0 %v5564
      %6179 = vmatpush1.bf16.msra.mxu0 %v5685
      %6180 = vmatprep.subr.bf16.mxu0 %v5572
      %6181 = vmatpush1.bf16.msra.mxu0 %v5688
      %6182 = vmatprep.mubr.bf16.mxu0 %v5316
      %6183 = vmatmul.mubr.bf16.gmra.mrb[0].mxu0 %v5315
      %v6184 = vpop.f32.mrb[0].mxu0
      %v6185 = vadd.f32 %v6112, %v6184
      %v6186 = vpop.f32.mrb[0].mxu0
      %v6187 = vadd.f32 %v6114, %v6186
      %v6188 = vpop.f32.mrb[0].mxu0
      %v6189 = vadd.f32 %v6116, %v6188
      %v6190 = vpop.f32.mrb[0].mxu0
      %v6191 = vadd.f32 %v6118, %v6190
      %6192 = vmatprep.mubr.bf16.mxu0 %v5321
      %6193 = vmatmul.mubr.bf16.gmra.mrb[0].mxu0 %v5320
      %v6194 = vpop.f32.mrb[0].mxu0
      %v6195 = vadd.f32 %v6122, %v6194
      %v6196 = vpop.f32.mrb[0].mxu0
      %v6197 = vadd.f32 %v6124, %v6196
      %v6198 = vpop.f32.mrb[0].mxu0
      %v6199 = vadd.f32 %v6126, %v6198
      %v6200 = vpop.f32.mrb[0].mxu0
      %v6201 = vadd.f32 %v6128, %v6200
      %6202 = vmatprep.mubr.bf16.mxu0 %v5326
      %6203 = vmatmul.mubr.bf16.gmra.mrb[0].mxu0 %v5325
      %v6204 = vpop.f32.mrb[0].mxu0
      %v6205 = vadd.f32 %v6132, %v6204
      %v6206 = vpop.f32.mrb[0].mxu0
      %v6207 = vadd.f32 %v6134, %v6206
      %v6208 = vpop.f32.mrb[0].mxu0
      %v6209 = vadd.f32 %v6136, %v6208
      %v6210 = vpop.f32.mrb[0].mxu0
      %v6211 = vadd.f32 %v6138, %v6210
      %6212 = vmatprep.mubr.bf16.mxu0 %v5331
      %6213 = vmatmul.mubr.bf16.gmra.mrb[0].mxu0 %v5330
      %v6214 = vpop.f32.mrb[0].mxu0
      %v6215 = vadd.f32 %v6142, %v6214
      %v6216 = vpop.f32.mrb[0].mxu0
      %v6217 = vadd.f32 %v6144, %v6216
      %v6218 = vpop.f32.mrb[0].mxu0
      %v6219 = vadd.f32 %v6146, %v6218
      %v6220 = vpop.f32.mrb[0].mxu0
      %v6221 = vadd.f32 %v6148, %v6220
      %6222 = vdwg.mxu0
      %6223 = vmatprep.subr.bf16.mxu0 %v5580
      %6224 = vmatpush1.bf16.msra.mxu0 %v5691
      %6225 = vmatprep.subr.bf16.mxu0 %v5588
      %6226 = vmatpush1.bf16.msra.mxu0 %v5694
      %6227 = vmatprep.subr.bf16.mxu0 %v5596
      %6228 = vmatpush1.bf16.msra.mxu0 %v5697
      %6229 = vmatprep.subr.bf16.mxu0 %v5604
      %6230 = vmatpush1.bf16.msra.mxu0 %v5700
      %6231 = vmatprep.subr.bf16.mxu0 0
      %6232 = vmatpush1.bf16.msra.mxu0 0
      %6233 = vmatprep.subr.bf16.mxu0 0
      %6234 = vmatpush1.bf16.msra.mxu0 0
      %6235 = vmatprep.subr.bf16.mxu0 0
      %6236 = vmatpush1.bf16.msra.mxu0 0
      %6237 = vmatprep.subr.bf16.mxu0 0
      %6238 = vmatpush1.bf16.msra.mxu0 0
      %6239 = vmatprep.subr.bf16.mxu0 0
      %6240 = vmatpush1.bf16.msra.mxu0 0
      %6241 = vmatprep.subr.bf16.mxu0 0
      %6242 = vmatpush1.bf16.msra.mxu0 0
      %6243 = vmatprep.subr.bf16.mxu0 0
      %6244 = vmatpush1.bf16.msra.mxu0 0
      %6245 = vmatprep.subr.bf16.mxu0 0
      %6246 = vmatpush1.bf16.msra.mxu0 0
      %6247 = vmatprep.subr.bf16.mxu0 0
      %6248 = vmatpush1.bf16.msra.mxu0 0
      %6249 = vmatprep.subr.bf16.mxu0 0
      %6250 = vmatpush1.bf16.msra.mxu0 0
      %6251 = vmatprep.subr.bf16.mxu0 0
      %6252 = vmatpush1.bf16.msra.mxu0 0
      %6253 = vmatprep.subr.bf16.mxu0 0
      %6254 = vmatpush1.bf16.msra.mxu0 0
      %6255 = vmatprep.mubr.bf16.mxu0 0
      %6256 = vmatmul.mubr.bf16.gmra.mrb[0].mxu0 %v5847
      %v6257 = vpop.f32.mrb[0].mxu0
      %v6258 = vadd.f32 %v6185, %v6257
      %v6259 = vpop.f32.mrb[0].mxu0
      %v6260 = vadd.f32 %v6187, %v6259
      %v6261 = vpop.f32.mrb[0].mxu0
      %v6262 = vadd.f32 %v6189, %v6261
      %v6263 = vpop.f32.mrb[0].mxu0
      %v6264 = vadd.f32 %v6191, %v6263
      %6265 = vmatprep.mubr.bf16.mxu0 0
      %6266 = vmatmul.mubr.bf16.gmra.mrb[0].mxu0 %v5850
      %v6267 = vpop.f32.mrb[0].mxu0
      %v6268 = vadd.f32 %v6195, %v6267
      %v6269 = vpop.f32.mrb[0].mxu0
      %v6270 = vadd.f32 %v6197, %v6269
      %v6271 = vpop.f32.mrb[0].mxu0
      %v6272 = vadd.f32 %v6199, %v6271
      %v6273 = vpop.f32.mrb[0].mxu0
      %v6274 = vadd.f32 %v6201, %v6273
      %6275 = vmatprep.mubr.bf16.mxu0 0
      %6276 = vmatmul.mubr.bf16.gmra.mrb[0].mxu0 %v5853
      %v6277 = vpop.f32.mrb[0].mxu0
      %v6278 = vadd.f32 %v6205, %v6277
      %v6279 = vpop.f32.mrb[0].mxu0
      %v6280 = vadd.f32 %v6207, %v6279
      %v6281 = vpop.f32.mrb[0].mxu0
      %v6282 = vadd.f32 %v6209, %v6281
      %v6283 = vpop.f32.mrb[0].mxu0
      %v6284 = vadd.f32 %v6211, %v6283
      %6285 = vmatprep.mubr.bf16.mxu0 0
      %6286 = vmatmul.mubr.bf16.gmra.mrb[0].mxu0 %v5856
      %v6287 = vpop.f32.mrb[0].mxu0
      %v6288 = vadd.f32 %v6215, %v6287
      %v6289 = vpop.f32.mrb[0].mxu0
      %v6290 = vadd.f32 %v6217, %v6289
      %v6291 = vpop.f32.mrb[0].mxu0
      %v6292 = vadd.f32 %v6219, %v6291
      %v6293 = vpop.f32.mrb[0].mxu0
      %v6294 = vadd.f32 %v6221, %v6293
      %6295 = vdwg.mxu0
      %vm6296 = vcmp.ge.f32.partialorder %v6039, 0.0
      %vm6297 = vcmp.ge.f32.partialorder %v6041, 0.0
      %vm6298 = vcmp.ge.f32.partialorder %v6258, 0.0
      %vm6299 = vcmp.ge.f32.partialorder %v6260, 0.0
      %vm6300 = vcmp.ge.f32.partialorder %v6043, 0.0
      %vm6301 = vcmp.ge.f32.partialorder %v6045, 0.0
      %vm6302 = vcmp.ge.f32.partialorder %v6262, 0.0
      %vm6303 = vcmp.ge.f32.partialorder %v6264, 0.0
      %vm6304 = vcmp.ge.f32.partialorder %v6049, 0.0
      %vm6305 = vcmp.ge.f32.partialorder %v6051, 0.0
      %vm6306 = vcmp.ge.f32.partialorder %v6268, 0.0
      %vm6307 = vcmp.ge.f32.partialorder %v6270, 0.0
      %vm6308 = vcmp.ge.f32.partialorder %v6053, 0.0
      %vm6309 = vcmp.ge.f32.partialorder %v6055, 0.0
      %vm6310 = vcmp.ge.f32.partialorder %v6272, 0.0
      %vm6311 = vcmp.ge.f32.partialorder %v6274, 0.0
      %vm6312 = vcmp.ge.f32.partialorder %v6059, 0.0
      %vm6313 = vcmp.ge.f32.partialorder %v6061, 0.0
      %vm6314 = vcmp.ge.f32.partialorder %v6278, 0.0
      %vm6315 = vcmp.ge.f32.partialorder %v6280, 0.0
      %vm6316 = vcmp.ge.f32.partialorder %v6063, 0.0
      %vm6317 = vcmp.ge.f32.partialorder %v6065, 0.0
      %vm6318 = vcmp.ge.f32.partialorder %v6282, 0.0
      %vm6319 = vcmp.ge.f32.partialorder %v6284, 0.0
      %vm6320 = vcmp.ge.f32.partialorder %v6069, 0.0
      %vm6321 = vcmp.ge.f32.partialorder %v6071, 0.0
      %vm6322 = vcmp.ge.f32.partialorder %v6288, 0.0
      %vm6323 = vcmp.ge.f32.partialorder %v6290, 0.0
      %vm6324 = vcmp.ge.f32.partialorder %v6073, 0.0
      %vm6325 = vcmp.ge.f32.partialorder %v6075, 0.0
      %vm6326 = vcmp.ge.f32.partialorder %v6292, 0.0
      %vm6327 = vcmp.ge.f32.partialorder %v6294, 0.0
      %v6328 = vmul.f32 %v6039, 0.01
      %v6329 = vmul.f32 %v6041, 0.01
      %v6330 = vmul.f32 %v6258, 0.01
      %v6331 = vmul.f32 %v6260, 0.01
      %v6332 = vmul.f32 %v6043, 0.01
      %v6333 = vmul.f32 %v6045, 0.01
      %v6334 = vmul.f32 %v6262, 0.01
      %v6335 = vmul.f32 %v6264, 0.01
      %v6336 = vmul.f32 %v6049, 0.01
      %v6337 = vmul.f32 %v6051, 0.01
      %v6338 = vmul.f32 %v6268, 0.01
      %v6339 = vmul.f32 %v6270, 0.01
      %v6340 = vmul.f32 %v6053, 0.01
      %v6341 = vmul.f32 %v6055, 0.01
      %v6342 = vmul.f32 %v6272, 0.01
      %v6343 = vmul.f32 %v6274, 0.01
      %v6344 = vmul.f32 %v6059, 0.01
      %v6345 = vmul.f32 %v6061, 0.01
      %v6346 = vmul.f32 %v6278, 0.01
      %v6347 = vmul.f32 %v6280, 0.01
      %v6348 = vmul.f32 %v6063, 0.01
      %v6349 = vmul.f32 %v6065, 0.01
      %v6350 = vmul.f32 %v6282, 0.01
      %v6351 = vmul.f32 %v6284, 0.01
      %v6352 = vmul.f32 %v6069, 0.01
      %v6353 = vmul.f32 %v6071, 0.01
      %v6354 = vmul.f32 %v6288, 0.01
      %v6355 = vmul.f32 %v6290, 0.01
      %v6356 = vmul.f32 %v6073, 0.01
      %v6357 = vmul.f32 %v6075, 0.01
      %v6358 = vmul.f32 %v6292, 0.01
      %v6359 = vmul.f32 %v6294, 0.01
      %v6360 = vsel %vm6296, %v6039, %v6328
      %v6361 = vsel %vm6297, %v6041, %v6329
      %v6362 = vsel %vm6298, %v6258, %v6330
      %v6363 = vsel %vm6299, %v6260, %v6331
      %v6364 = vsel %vm6300, %v6043, %v6332
      %v6365 = vsel %vm6301, %v6045, %v6333
      %v6366 = vsel %vm6302, %v6262, %v6334
      %v6367 = vsel %vm6303, %v6264, %v6335
      %v6368 = vsel %vm6304, %v6049, %v6336
      %v6369 = vsel %vm6305, %v6051, %v6337
      %v6370 = vsel %vm6306, %v6268, %v6338
      %v6371 = vsel %vm6307, %v6270, %v6339
      %v6372 = vsel %vm6308, %v6053, %v6340
      %v6373 = vsel %vm6309, %v6055, %v6341
      %v6374 = vsel %vm6310, %v6272, %v6342
      %v6375 = vsel %vm6311, %v6274, %v6343
      %v6376 = vsel %vm6312, %v6059, %v6344
      %v6377 = vsel %vm6313, %v6061, %v6345
      %v6378 = vsel %vm6314, %v6278, %v6346
      %v6379 = vsel %vm6315, %v6280, %v6347
      %v6380 = vsel %vm6316, %v6063, %v6348
      %v6381 = vsel %vm6317, %v6065, %v6349
      %v6382 = vsel %vm6318, %v6282, %v6350
      %v6383 = vsel %vm6319, %v6284, %v6351
      %v6384 = vsel %vm6320, %v6069, %v6352
      %v6385 = vsel %vm6321, %v6071, %v6353
      %v6386 = vsel %vm6322, %v6288, %v6354
      %v6387 = vsel %vm6323, %v6290, %v6355
      %v6388 = vsel %vm6324, %v6073, %v6356
      %v6389 = vsel %vm6325, %v6075, %v6357
      %v6390 = vsel %vm6326, %v6292, %v6358
      %v6391 = vsel %vm6327, %v6294, %v6359
      %v6392 = vld [vmem:[%s20] sm:$0xff]
      %v6393 = vld [vmem:[%s20 + $0x8] sm:$0xff]
      %v6394 = vld [vmem:[%s20 + $0x10] sm:$0xff]
      %v6395 = vld [vmem:[%s20 + $0x18] sm:$0xff]
      %v6396 = vld [vmem:[%s20 + $0x20] sm:$0xff]
      %v6397 = vld [vmem:[%s20 + $0x28] sm:$0xff]
      %v6398 = vld [vmem:[%s20 + $0x30] sm:$0xff]
      %v6399 = vld [vmem:[%s20 + $0x38] sm:$0xff]
      %v6400 = vld [vmem:[%s21] sm:$0xff]
      %v6401 = vld [vmem:[%s21 + $0x8] sm:$0xff]
      %v6402 = vld [vmem:[%s21 + $0x10] sm:$0xff]
      %v6403 = vld [vmem:[%s21 + $0x18] sm:$0xff]
      %v6404 = vld [vmem:[%s21 + $0x20] sm:$0xff]
      %v6405 = vld [vmem:[%s21 + $0x28] sm:$0xff]
      %v6406 = vld [vmem:[%s21 + $0x30] sm:$0xff]
      %v6407 = vld [vmem:[%s21 + $0x38] sm:$0xff]
      %6409 = vset.pattern.permute.xlu0 0
      %6410 = vperm.xlu0 %6409, %v6392
      %v6411 = vpop.permute.xlu0 %6410
      %6414 = vset.pattern.permute.xlu0 0
      %6415 = vperm.xlu0 %6414, %v6393
      %v6416 = vpop.permute.xlu0 %6415
      %6419 = vset.pattern.permute.xlu0 0
      %6420 = vperm.xlu0 %6419, %v6394
      %v6421 = vpop.permute.xlu0 %6420
      %6424 = vset.pattern.permute.xlu0 0
      %6425 = vperm.xlu0 %6424, %v6395
      %v6426 = vpop.permute.xlu0 %6425
      %6429 = vset.pattern.permute.xlu0 0
      %6430 = vperm.xlu0 %6429, %v6396
      %v6431 = vpop.permute.xlu0 %6430
      %6434 = vset.pattern.permute.xlu0 0
      %6435 = vperm.xlu0 %6434, %v6397
      %v6436 = vpop.permute.xlu0 %6435
      %6439 = vset.pattern.permute.xlu0 0
      %6440 = vperm.xlu0 %6439, %v6398
      %v6441 = vpop.permute.xlu0 %6440
      %6444 = vset.pattern.permute.xlu0 0
      %6445 = vperm.xlu0 %6444, %v6399
      %v6446 = vpop.permute.xlu0 %6445
      %v6448 = vmul.f32 %v6360, %v6411
      %v6449 = vmul.f32 %v6361, %v6411
      %v6450 = vmul.f32 %v6362, %v6411
      %v6451 = vmul.f32 %v6363, %v6411
      %v6452 = vmul.f32 %v6364, %v6416
      %v6453 = vmul.f32 %v6365, %v6416
      %v6454 = vmul.f32 %v6366, %v6416
      %v6455 = vmul.f32 %v6367, %v6416
      %v6456 = vmul.f32 %v6368, %v6421
      %v6457 = vmul.f32 %v6369, %v6421
      %v6458 = vmul.f32 %v6370, %v6421
      %v6459 = vmul.f32 %v6371, %v6421
      %v6460 = vmul.f32 %v6372, %v6426
      %v6461 = vmul.f32 %v6373, %v6426
      %v6462 = vmul.f32 %v6374, %v6426
      %v6463 = vmul.f32 %v6375, %v6426
      %v6464 = vmul.f32 %v6376, %v6431
      %v6465 = vmul.f32 %v6377, %v6431
      %v6466 = vmul.f32 %v6378, %v6431
      %v6467 = vmul.f32 %v6379, %v6431
      %v6468 = vmul.f32 %v6380, %v6436
      %v6469 = vmul.f32 %v6381, %v6436
      %v6470 = vmul.f32 %v6382, %v6436
      %v6471 = vmul.f32 %v6383, %v6436
      %v6472 = vmul.f32 %v6384, %v6441
      %v6473 = vmul.f32 %v6385, %v6441
      %v6474 = vmul.f32 %v6386, %v6441
      %v6475 = vmul.f32 %v6387, %v6441
      %v6476 = vmul.f32 %v6388, %v6446
      %v6477 = vmul.f32 %v6389, %v6446
      %v6478 = vmul.f32 %v6390, %v6446
      %v6479 = vmul.f32 %v6391, %v6446
      %6481 = vset.pattern.permute.xlu0 0
      %6482 = vperm.xlu0 %6481, %v6400
      %v6483 = vpop.permute.xlu0 %6482
      %6486 = vset.pattern.permute.xlu0 0
      %6487 = vperm.xlu0 %6486, %v6401
      %v6488 = vpop.permute.xlu0 %6487
      %6491 = vset.pattern.permute.xlu0 0
      %6492 = vperm.xlu0 %6491, %v6402
      %v6493 = vpop.permute.xlu0 %6492
      %6496 = vset.pattern.permute.xlu0 0
      %6497 = vperm.xlu0 %6496, %v6403
      %v6498 = vpop.permute.xlu0 %6497
      %6501 = vset.pattern.permute.xlu0 0
      %6502 = vperm.xlu0 %6501, %v6404
      %v6503 = vpop.permute.xlu0 %6502
      %6506 = vset.pattern.permute.xlu0 0
      %6507 = vperm.xlu0 %6506, %v6405
      %v6508 = vpop.permute.xlu0 %6507
      %6511 = vset.pattern.permute.xlu0 0
      %6512 = vperm.xlu0 %6511, %v6406
      %v6513 = vpop.permute.xlu0 %6512
      %6516 = vset.pattern.permute.xlu0 0
      %6517 = vperm.xlu0 %6516, %v6407
      %v6518 = vpop.permute.xlu0 %6517
      %v6520 = vadd.f32 %v6448, %v6483
      %v6521 = vadd.f32 %v6449, %v6483
      %v6522 = vadd.f32 %v6450, %v6483
      %v6523 = vadd.f32 %v6451, %v6483
      %v6524 = vadd.f32 %v6452, %v6488
      %v6525 = vadd.f32 %v6453, %v6488
      %v6526 = vadd.f32 %v6454, %v6488
      %v6527 = vadd.f32 %v6455, %v6488
      %v6528 = vadd.f32 %v6456, %v6493
      %v6529 = vadd.f32 %v6457, %v6493
      %v6530 = vadd.f32 %v6458, %v6493
      %v6531 = vadd.f32 %v6459, %v6493
      %v6532 = vadd.f32 %v6460, %v6498
      %v6533 = vadd.f32 %v6461, %v6498
      %v6534 = vadd.f32 %v6462, %v6498
      %v6535 = vadd.f32 %v6463, %v6498
      %v6536 = vadd.f32 %v6464, %v6503
      %v6537 = vadd.f32 %v6465, %v6503
      %v6538 = vadd.f32 %v6466, %v6503
      %v6539 = vadd.f32 %v6467, %v6503
      %v6540 = vadd.f32 %v6468, %v6508
      %v6541 = vadd.f32 %v6469, %v6508
      %v6542 = vadd.f32 %v6470, %v6508
      %v6543 = vadd.f32 %v6471, %v6508
      %v6544 = vadd.f32 %v6472, %v6513
      %v6545 = vadd.f32 %v6473, %v6513
      %v6546 = vadd.f32 %v6474, %v6513
      %v6547 = vadd.f32 %v6475, %v6513
      %v6548 = vadd.f32 %v6476, %v6518
      %v6549 = vadd.f32 %v6477, %v6518
      %v6550 = vadd.f32 %v6478, %v6518
      %v6551 = vadd.f32 %v6479, %v6518
      %v6552 = vsel %vm1112, %v6520, 0.0
      %v6553 = vsel %vm1113, %v6521, 0.0
      %v6554 = vsel %vm1114, %v6522, 0.0
      %v6555 = vsel %vm1115, %v6523, 0.0
      %v6556 = vsel %vm1112, %v6524, 0.0
      %v6557 = vsel %vm1113, %v6525, 0.0
      %v6558 = vsel %vm1114, %v6526, 0.0
      %v6559 = vsel %vm1115, %v6527, 0.0
      %v6560 = vsel %vm1112, %v6528, 0.0
      %v6561 = vsel %vm1113, %v6529, 0.0
      %v6562 = vsel %vm1114, %v6530, 0.0
      %v6563 = vsel %vm1115, %v6531, 0.0
      %v6564 = vsel %vm1112, %v6532, 0.0
      %v6565 = vsel %vm1113, %v6533, 0.0
      %v6566 = vsel %vm1114, %v6534, 0.0
      %v6567 = vsel %vm1115, %v6535, 0.0
      %v6568 = vsel %vm1112, %v6536, 0.0
      %v6569 = vsel %vm1113, %v6537, 0.0
      %v6570 = vsel %vm1114, %v6538, 0.0
      %v6571 = vsel %vm1115, %v6539, 0.0
      %v6572 = vsel %vm1112, %v6540, 0.0
      %v6573 = vsel %vm1113, %v6541, 0.0
      %v6574 = vsel %vm1114, %v6542, 0.0
      %v6575 = vsel %vm1115, %v6543, 0.0
      %v6576 = vsel %vm1112, %v6544, 0.0
      %v6577 = vsel %vm1113, %v6545, 0.0
      %v6578 = vsel %vm1114, %v6546, 0.0
      %v6579 = vsel %vm1115, %v6547, 0.0
      %v6580 = vsel %vm1112, %v6548, 0.0
      %v6581 = vsel %vm1113, %v6549, 0.0
      %v6582 = vsel %vm1114, %v6550, 0.0
      %v6583 = vsel %vm1115, %v6551, 0.0
      %v6584 = vpack.c.bf16 %v6556, %v6552
      %v6585 = vpack.c.bf16 %v6557, %v6553
      %v6586 = vpack.c.bf16 %v6558, %v6554
      %v6587 = vpack.c.bf16 %v6559, %v6555
      %v6588 = vpack.c.bf16 %v6564, %v6560
      %v6589 = vpack.c.bf16 %v6565, %v6561
      %v6590 = vpack.c.bf16 %v6566, %v6562
      %v6591 = vpack.c.bf16 %v6567, %v6563
      %v6592 = vpack.c.bf16 %v6572, %v6568
      %v6593 = vpack.c.bf16 %v6573, %v6569
      %v6594 = vpack.c.bf16 %v6574, %v6570
      %v6595 = vpack.c.bf16 %v6575, %v6571
      %v6596 = vpack.c.bf16 %v6580, %v6576
      %v6597 = vpack.c.bf16 %v6581, %v6577
      %v6598 = vpack.c.bf16 %v6582, %v6578
      %v6599 = vpack.c.bf16 %v6583, %v6579
      %v6600 = vld [vmem:[%s22] sm:$0xff]
      %v6601 = vld [vmem:[%s22 + $0x8] sm:$0xff]
      %v6602 = vld [vmem:[%s22 + $0x10] sm:$0xff]
      %v6603 = vld [vmem:[%s22 + $0x18] sm:$0xff]
      %v6604 = vld [vmem:[%s22 + $0x20] sm:$0xff]
      %v6605 = vld [vmem:[%s22 + $0x28] sm:$0xff]
      %v6606 = vld [vmem:[%s22 + $0x30] sm:$0xf]
      %v6607 = vld [vmem:[%s22 + $0x34] sm:$0xff]
      %v6608 = vld [vmem:[%s22 + $0x3c] sm:$0xff]
      %v6609 = vld [vmem:[%s22 + $0x44] sm:$0xff]
      %v6610 = vld [vmem:[%s22 + $0x4c] sm:$0xff]
      %v6611 = vld [vmem:[%s22 + $0x54] sm:$0xff]
      %v6612 = vld [vmem:[%s22 + $0x5c] sm:$0xff]
      %v6613 = vld [vmem:[%s22 + $0x64] sm:$0xf]
      %v6614 = vld [vmem:[%s22 + $0x68] sm:$0xff]
      %v6615 = vld [vmem:[%s22 + $0x70] sm:$0xff]
      %v6616 = vld [vmem:[%s22 + $0x78] sm:$0xff]
      %v6617 = vld [vmem:[%s22 + $0x80] sm:$0xff]
      %v6618 = vld [vmem:[%s22 + $0x88] sm:$0xff]
      %v6619 = vld [vmem:[%s22 + $0x90] sm:$0xff]
      %v6620 = vld [vmem:[%s22 + $0x98] sm:$0xf]
      %v6621 = vld [vmem:[%s22 + $0x9c] sm:$0xff]
      %v6622 = vld [vmem:[%s22 + $0xa4] sm:$0xff]
      %v6623 = vld [vmem:[%s22 + $0xac] sm:$0xff]
      %v6624 = vld [vmem:[%s22 + $0xb4] sm:$0xff]
      %v6625 = vld [vmem:[%s22 + $0xbc] sm:$0xff]
      %v6626 = vld [vmem:[%s22 + $0xc4] sm:$0xff]
      %v6627 = vld [vmem:[%s22 + $0xcc] sm:$0xf]
      %v6628 = vld [vmem:[%s22 + $0xd0] sm:$0xff]
      %v6629 = vld [vmem:[%s22 + $0xd8] sm:$0xff]
      %v6630 = vld [vmem:[%s22 + $0xe0] sm:$0xff]
      %v6631 = vld [vmem:[%s22 + $0xe8] sm:$0xff]
      %v6632 = vld [vmem:[%s22 + $0xf0] sm:$0xff]
      %v6633 = vld [vmem:[%s22 + $0xf8] sm:$0xff]
      %v6634 = vld [vmem:[%s22 + $0x100] sm:$0xf]
      %v6635 = vld [vmem:[%s22 + $0x104] sm:$0xff]
      %v6636 = vld [vmem:[%s22 + $0x10c] sm:$0xff]
      %v6637 = vld [vmem:[%s22 + $0x114] sm:$0xff]
      %v6638 = vld [vmem:[%s22 + $0x11c] sm:$0xff]
      %v6639 = vld [vmem:[%s22 + $0x124] sm:$0xff]
      %v6640 = vld [vmem:[%s22 + $0x12c] sm:$0xff]
      %v6641 = vld [vmem:[%s22 + $0x134] sm:$0xf]
      %v6642 = vld [vmem:[%s22 + $0x138] sm:$0xff]
      %v6643 = vld [vmem:[%s22 + $0x140] sm:$0xff]
      %v6644 = vld [vmem:[%s22 + $0x148] sm:$0xff]
      %v6645 = vld [vmem:[%s22 + $0x150] sm:$0xff]
      %v6646 = vld [vmem:[%s22 + $0x158] sm:$0xff]
      %v6647 = vld [vmem:[%s22 + $0x160] sm:$0xff]
      %v6648 = vld [vmem:[%s22 + $0x168] sm:$0xf]
      %v6649 = vld [vmem:[%s22 + $0x16c] sm:$0xff]
      %v6650 = vld [vmem:[%s22 + $0x174] sm:$0xff]
      %v6651 = vld [vmem:[%s22 + $0x17c] sm:$0xff]
      %v6652 = vld [vmem:[%s22 + $0x184] sm:$0xff]
      %v6653 = vld [vmem:[%s22 + $0x18c] sm:$0xff]
      %v6654 = vld [vmem:[%s22 + $0x194] sm:$0xff]
      %v6655 = vld [vmem:[%s22 + $0x19c] sm:$0xf]
      %6672 = vrot.lane.b32.xlu0 %v6584, 42
      %v6673 = vpop.permute.xlu0 %6672
      %6674 = vrot.lane.b32.xlu0 %v6585, 42
      %v6675 = vpop.permute.xlu0 %6674
      %6676 = vrot.lane.b32.xlu0 %v6586, 42
      %v6677 = vpop.permute.xlu0 %6676
      %6678 = vrot.lane.b32.xlu0 %v6587, 42
      %v6679 = vpop.permute.xlu0 %6678
      %6680 = vrot.lane.b32.xlu0 %v6588, 42
      %v6681 = vpop.permute.xlu0 %6680
      %6682 = vrot.lane.b32.xlu0 %v6589, 42
      %v6683 = vpop.permute.xlu0 %6682
      %6684 = vrot.lane.b32.xlu0 %v6590, 42
      %v6685 = vpop.permute.xlu0 %6684
      %6686 = vrot.lane.b32.xlu0 %v6591, 42
      %v6687 = vpop.permute.xlu0 %6686
      %6688 = vrot.lane.b32.xlu0 %v6592, 42
      %v6689 = vpop.permute.xlu0 %6688
      %6690 = vrot.lane.b32.xlu0 %v6593, 42
      %v6691 = vpop.permute.xlu0 %6690
      %6692 = vrot.lane.b32.xlu0 %v6594, 42
      %v6693 = vpop.permute.xlu0 %6692
      %6694 = vrot.lane.b32.xlu0 %v6595, 42
      %v6695 = vpop.permute.xlu0 %6694
      %6696 = vrot.lane.b32.xlu0 %v6596, 42
      %v6697 = vpop.permute.xlu0 %6696
      %6698 = vrot.lane.b32.xlu0 %v6597, 42
      %v6699 = vpop.permute.xlu0 %6698
      %6700 = vrot.lane.b32.xlu0 %v6598, 42
      %v6701 = vpop.permute.xlu0 %6700
      %6702 = vrot.lane.b32.xlu0 %v6599, 42
      %v6703 = vpop.permute.xlu0 %6702
      %v6704 = vsel %vm1172, %v6673, %v6675
      %v6705 = vsel %vm1172, %v6675, %v6677
      %v6706 = vsel %vm1172, %v6677, %v6679
      %v6707 = vsel %vm1172, %v6681, %v6683
      %v6708 = vsel %vm1172, %v6683, %v6685
      %v6709 = vsel %vm1172, %v6685, %v6687
      %v6710 = vsel %vm1172, %v6689, %v6691
      %v6711 = vsel %vm1172, %v6691, %v6693
      %v6712 = vsel %vm1172, %v6693, %v6695
      %v6713 = vsel %vm1172, %v6697, %v6699
      %v6714 = vsel %vm1172, %v6699, %v6701
      %v6715 = vsel %vm1172, %v6701, %v6703
      %v6725 = vsel %vm1179, 0, %v6673
      %v6728 = vsel %vm1179, 0, %v6681
      %v6731 = vsel %vm1179, 0, %v6689
      %v6734 = vsel %vm1179, 0, %v6697
      %v6737 = vsel %vm1185, %v6706, 0
      %v6740 = vsel %vm1185, %v6709, 0
      %v6743 = vsel %vm1185, %v6712, 0
      %v6746 = vsel %vm1185, %v6715, 0
      %6756 = vrot.lane.b32.xlu0 %v6725, 127
      %v6757 = vpop.permute.xlu0 %6756
      %6758 = vrot.lane.b32.xlu0 %v6704, 127
      %v6759 = vpop.permute.xlu0 %6758
      %6760 = vrot.lane.b32.xlu0 %v6705, 127
      %v6761 = vpop.permute.xlu0 %6760
      %6762 = vrot.lane.b32.xlu0 %v6737, 127
      %v6763 = vpop.permute.xlu0 %6762
      %6764 = vrot.lane.b32.xlu0 %v6728, 127
      %v6765 = vpop.permute.xlu0 %6764
      %6766 = vrot.lane.b32.xlu0 %v6707, 127
      %v6767 = vpop.permute.xlu0 %6766
      %6768 = vrot.lane.b32.xlu0 %v6708, 127
      %v6769 = vpop.permute.xlu0 %6768
      %6770 = vrot.lane.b32.xlu0 %v6740, 127
      %v6771 = vpop.permute.xlu0 %6770
      %6772 = vrot.lane.b32.xlu0 %v6731, 127
      %v6773 = vpop.permute.xlu0 %6772
      %6774 = vrot.lane.b32.xlu0 %v6710, 127
      %v6775 = vpop.permute.xlu0 %6774
      %6776 = vrot.lane.b32.xlu0 %v6711, 127
      %v6777 = vpop.permute.xlu0 %6776
      %6778 = vrot.lane.b32.xlu0 %v6743, 127
      %v6779 = vpop.permute.xlu0 %6778
      %6780 = vrot.lane.b32.xlu0 %v6734, 127
      %v6781 = vpop.permute.xlu0 %6780
      %6782 = vrot.lane.b32.xlu0 %v6713, 127
      %v6783 = vpop.permute.xlu0 %6782
      %6784 = vrot.lane.b32.xlu0 %v6714, 127
      %v6785 = vpop.permute.xlu0 %6784
      %6786 = vrot.lane.b32.xlu0 %v6746, 127
      %v6787 = vpop.permute.xlu0 %6786
      %v6788 = vsel %vm1210, %v6757, %v6759
      %v6789 = vsel %vm1210, %v6759, %v6761
      %v6790 = vsel %vm1210, %v6761, %v6763
      %v6791 = vsel %vm1210, %v6765, %v6767
      %v6792 = vsel %vm1210, %v6767, %v6769
      %v6793 = vsel %vm1210, %v6769, %v6771
      %v6794 = vsel %vm1210, %v6773, %v6775
      %v6795 = vsel %vm1210, %v6775, %v6777
      %v6796 = vsel %vm1210, %v6777, %v6779
      %v6797 = vsel %vm1210, %v6781, %v6783
      %v6798 = vsel %vm1210, %v6783, %v6785
      %v6799 = vsel %vm1210, %v6785, %v6787
      %6816 = vrot.lane.b32.xlu0 %v6725, 126
      %v6817 = vpop.permute.xlu0 %6816
      %6818 = vrot.lane.b32.xlu0 %v6704, 126
      %v6819 = vpop.permute.xlu0 %6818
      %6820 = vrot.lane.b32.xlu0 %v6705, 126
      %v6821 = vpop.permute.xlu0 %6820
      %6822 = vrot.lane.b32.xlu0 %v6737, 126
      %v6823 = vpop.permute.xlu0 %6822
      %6824 = vrot.lane.b32.xlu0 %v6728, 126
      %v6825 = vpop.permute.xlu0 %6824
      %6826 = vrot.lane.b32.xlu0 %v6707, 126
      %v6827 = vpop.permute.xlu0 %6826
      %6828 = vrot.lane.b32.xlu0 %v6708, 126
      %v6829 = vpop.permute.xlu0 %6828
      %6830 = vrot.lane.b32.xlu0 %v6740, 126
      %v6831 = vpop.permute.xlu0 %6830
      %6832 = vrot.lane.b32.xlu0 %v6731, 126
      %v6833 = vpop.permute.xlu0 %6832
      %6834 = vrot.lane.b32.xlu0 %v6710, 126
      %v6835 = vpop.permute.xlu0 %6834
      %6836 = vrot.lane.b32.xlu0 %v6711, 126
      %v6837 = vpop.permute.xlu0 %6836
      %6838 = vrot.lane.b32.xlu0 %v6743, 126
      %v6839 = vpop.permute.xlu0 %6838
      %6840 = vrot.lane.b32.xlu0 %v6734, 126
      %v6841 = vpop.permute.xlu0 %6840
      %6842 = vrot.lane.b32.xlu0 %v6713, 126
      %v6843 = vpop.permute.xlu0 %6842
      %6844 = vrot.lane.b32.xlu0 %v6714, 126
      %v6845 = vpop.permute.xlu0 %6844
      %6846 = vrot.lane.b32.xlu0 %v6746, 126
      %v6847 = vpop.permute.xlu0 %6846
      %v6848 = vsel %vm1233, %v6817, %v6819
      %v6849 = vsel %vm1233, %v6819, %v6821
      %v6850 = vsel %vm1233, %v6821, %v6823
      %v6851 = vsel %vm1233, %v6825, %v6827
      %v6852 = vsel %vm1233, %v6827, %v6829
      %v6853 = vsel %vm1233, %v6829, %v6831
      %v6854 = vsel %vm1233, %v6833, %v6835
      %v6855 = vsel %vm1233, %v6835, %v6837
      %v6856 = vsel %vm1233, %v6837, %v6839
      %v6857 = vsel %vm1233, %v6841, %v6843
      %v6858 = vsel %vm1233, %v6843, %v6845
      %v6859 = vsel %vm1233, %v6845, %v6847
      %6876 = vrot.lane.b32.xlu0 %v6725, 125
      %v6877 = vpop.permute.xlu0 %6876
      %6878 = vrot.lane.b32.xlu0 %v6704, 125
      %v6879 = vpop.permute.xlu0 %6878
      %6880 = vrot.lane.b32.xlu0 %v6705, 125
      %v6881 = vpop.permute.xlu0 %6880
      %6882 = vrot.lane.b32.xlu0 %v6737, 125
      %v6883 = vpop.permute.xlu0 %6882
      %6884 = vrot.lane.b32.xlu0 %v6728, 125
      %v6885 = vpop.permute.xlu0 %6884
      %6886 = vrot.lane.b32.xlu0 %v6707, 125
      %v6887 = vpop.permute.xlu0 %6886
      %6888 = vrot.lane.b32.xlu0 %v6708, 125
      %v6889 = vpop.permute.xlu0 %6888
      %6890 = vrot.lane.b32.xlu0 %v6740, 125
      %v6891 = vpop.permute.xlu0 %6890
      %6892 = vrot.lane.b32.xlu0 %v6731, 125
      %v6893 = vpop.permute.xlu0 %6892
      %6894 = vrot.lane.b32.xlu0 %v6710, 125
      %v6895 = vpop.permute.xlu0 %6894
      %6896 = vrot.lane.b32.xlu0 %v6711, 125
      %v6897 = vpop.permute.xlu0 %6896
      %6898 = vrot.lane.b32.xlu0 %v6743, 125
      %v6899 = vpop.permute.xlu0 %6898
      %6900 = vrot.lane.b32.xlu0 %v6734, 125
      %v6901 = vpop.permute.xlu0 %6900
      %6902 = vrot.lane.b32.xlu0 %v6713, 125
      %v6903 = vpop.permute.xlu0 %6902
      %6904 = vrot.lane.b32.xlu0 %v6714, 125
      %v6905 = vpop.permute.xlu0 %6904
      %6906 = vrot.lane.b32.xlu0 %v6746, 125
      %v6907 = vpop.permute.xlu0 %6906
      %v6908 = vsel %vm2192, %v6877, %v6879
      %v6909 = vsel %vm2192, %v6879, %v6881
      %v6910 = vsel %vm2192, %v6881, %v6883
      %v6911 = vsel %vm2192, %v6885, %v6887
      %v6912 = vsel %vm2192, %v6887, %v6889
      %v6913 = vsel %vm2192, %v6889, %v6891
      %v6914 = vsel %vm2192, %v6893, %v6895
      %v6915 = vsel %vm2192, %v6895, %v6897
      %v6916 = vsel %vm2192, %v6897, %v6899
      %v6917 = vsel %vm2192, %v6901, %v6903
      %v6918 = vsel %vm2192, %v6903, %v6905
      %v6919 = vsel %vm2192, %v6905, %v6907
      %6936 = vrot.lane.b32.xlu0 %v6725, 124
      %v6937 = vpop.permute.xlu0 %6936
      %6938 = vrot.lane.b32.xlu0 %v6704, 124
      %v6939 = vpop.permute.xlu0 %6938
      %6940 = vrot.lane.b32.xlu0 %v6705, 124
      %v6941 = vpop.permute.xlu0 %6940
      %6942 = vrot.lane.b32.xlu0 %v6737, 124
      %v6943 = vpop.permute.xlu0 %6942
      %6944 = vrot.lane.b32.xlu0 %v6728, 124
      %v6945 = vpop.permute.xlu0 %6944
      %6946 = vrot.lane.b32.xlu0 %v6707, 124
      %v6947 = vpop.permute.xlu0 %6946
      %6948 = vrot.lane.b32.xlu0 %v6708, 124
      %v6949 = vpop.permute.xlu0 %6948
      %6950 = vrot.lane.b32.xlu0 %v6740, 124
      %v6951 = vpop.permute.xlu0 %6950
      %6952 = vrot.lane.b32.xlu0 %v6731, 124
      %v6953 = vpop.permute.xlu0 %6952
      %6954 = vrot.lane.b32.xlu0 %v6710, 124
      %v6955 = vpop.permute.xlu0 %6954
      %6956 = vrot.lane.b32.xlu0 %v6711, 124
      %v6957 = vpop.permute.xlu0 %6956
      %6958 = vrot.lane.b32.xlu0 %v6743, 124
      %v6959 = vpop.permute.xlu0 %6958
      %6960 = vrot.lane.b32.xlu0 %v6734, 124
      %v6961 = vpop.permute.xlu0 %6960
      %6962 = vrot.lane.b32.xlu0 %v6713, 124
      %v6963 = vpop.permute.xlu0 %6962
      %6964 = vrot.lane.b32.xlu0 %v6714, 124
      %v6965 = vpop.permute.xlu0 %6964
      %6966 = vrot.lane.b32.xlu0 %v6746, 124
      %v6967 = vpop.permute.xlu0 %6966
      %v6968 = vsel %vm2223, %v6937, %v6939
      %v6969 = vsel %vm2223, %v6939, %v6941
      %v6970 = vsel %vm2223, %v6941, %v6943
      %v6971 = vsel %vm2223, %v6945, %v6947
      %v6972 = vsel %vm2223, %v6947, %v6949
      %v6973 = vsel %vm2223, %v6949, %v6951
      %v6974 = vsel %vm2223, %v6953, %v6955
      %v6975 = vsel %vm2223, %v6955, %v6957
      %v6976 = vsel %vm2223, %v6957, %v6959
      %v6977 = vsel %vm2223, %v6961, %v6963
      %v6978 = vsel %vm2223, %v6963, %v6965
      %v6979 = vsel %vm2223, %v6965, %v6967
      %6996 = vrot.lane.b32.xlu0 %v6725, 108
      %v6997 = vpop.permute.xlu0 %6996
      %6998 = vrot.lane.b32.xlu0 %v6704, 108
      %v6999 = vpop.permute.xlu0 %6998
      %7000 = vrot.lane.b32.xlu0 %v6705, 108
      %v7001 = vpop.permute.xlu0 %7000
      %7002 = vrot.lane.b32.xlu0 %v6737, 108
      %v7003 = vpop.permute.xlu0 %7002
      %7004 = vrot.lane.b32.xlu0 %v6728, 108
      %v7005 = vpop.permute.xlu0 %7004
      %7006 = vrot.lane.b32.xlu0 %v6707, 108
      %v7007 = vpop.permute.xlu0 %7006
      %7008 = vrot.lane.b32.xlu0 %v6708, 108
      %v7009 = vpop.permute.xlu0 %7008
      %7010 = vrot.lane.b32.xlu0 %v6740, 108
      %v7011 = vpop.permute.xlu0 %7010
      %7012 = vrot.lane.b32.xlu0 %v6731, 108
      %v7013 = vpop.permute.xlu0 %7012
      %7014 = vrot.lane.b32.xlu0 %v6710, 108
      %v7015 = vpop.permute.xlu0 %7014
      %7016 = vrot.lane.b32.xlu0 %v6711, 108
      %v7017 = vpop.permute.xlu0 %7016
      %7018 = vrot.lane.b32.xlu0 %v6743, 108
      %v7019 = vpop.permute.xlu0 %7018
      %7020 = vrot.lane.b32.xlu0 %v6734, 108
      %v7021 = vpop.permute.xlu0 %7020
      %7022 = vrot.lane.b32.xlu0 %v6713, 108
      %v7023 = vpop.permute.xlu0 %7022
      %7024 = vrot.lane.b32.xlu0 %v6714, 108
      %v7025 = vpop.permute.xlu0 %7024
      %7026 = vrot.lane.b32.xlu0 %v6746, 108
      %v7027 = vpop.permute.xlu0 %7026
      %v7028 = vsel %vm1256, %v6997, %v6999
      %v7029 = vsel %vm1256, %v6999, %v7001
      %v7030 = vsel %vm1256, %v7001, %v7003
      %v7031 = vsel %vm1256, %v7005, %v7007
      %v7032 = vsel %vm1256, %v7007, %v7009
      %v7033 = vsel %vm1256, %v7009, %v7011
      %v7034 = vsel %vm1256, %v7013, %v7015
      %v7035 = vsel %vm1256, %v7015, %v7017
      %v7036 = vsel %vm1256, %v7017, %v7019
      %v7037 = vsel %vm1256, %v7021, %v7023
      %v7038 = vsel %vm1256, %v7023, %v7025
      %v7039 = vsel %vm1256, %v7025, %v7027
      %7056 = vrot.lane.b32.xlu0 %v6725, 107
      %v7057 = vpop.permute.xlu0 %7056
      %7058 = vrot.lane.b32.xlu0 %v6704, 107
      %v7059 = vpop.permute.xlu0 %7058
      %7060 = vrot.lane.b32.xlu0 %v6705, 107
      %v7061 = vpop.permute.xlu0 %7060
      %7062 = vrot.lane.b32.xlu0 %v6737, 107
      %v7063 = vpop.permute.xlu0 %7062
      %7064 = vrot.lane.b32.xlu0 %v6728, 107
      %v7065 = vpop.permute.xlu0 %7064
      %7066 = vrot.lane.b32.xlu0 %v6707, 107
      %v7067 = vpop.permute.xlu0 %7066
      %7068 = vrot.lane.b32.xlu0 %v6708, 107
      %v7069 = vpop.permute.xlu0 %7068
      %7070 = vrot.lane.b32.xlu0 %v6740, 107
      %v7071 = vpop.permute.xlu0 %7070
      %7072 = vrot.lane.b32.xlu0 %v6731, 107
      %v7073 = vpop.permute.xlu0 %7072
      %7074 = vrot.lane.b32.xlu0 %v6710, 107
      %v7075 = vpop.permute.xlu0 %7074
      %7076 = vrot.lane.b32.xlu0 %v6711, 107
      %v7077 = vpop.permute.xlu0 %7076
      %7078 = vrot.lane.b32.xlu0 %v6743, 107
      %v7079 = vpop.permute.xlu0 %7078
      %7080 = vrot.lane.b32.xlu0 %v6734, 107
      %v7081 = vpop.permute.xlu0 %7080
      %7082 = vrot.lane.b32.xlu0 %v6713, 107
      %v7083 = vpop.permute.xlu0 %7082
      %7084 = vrot.lane.b32.xlu0 %v6714, 107
      %v7085 = vpop.permute.xlu0 %7084
      %7086 = vrot.lane.b32.xlu0 %v6746, 107
      %v7087 = vpop.permute.xlu0 %7086
      %v7088 = vsel %vm1279, %v7057, %v7059
      %v7089 = vsel %vm1279, %v7059, %v7061
      %v7090 = vsel %vm1279, %v7061, %v7063
      %v7091 = vsel %vm1279, %v7065, %v7067
      %v7092 = vsel %vm1279, %v7067, %v7069
      %v7093 = vsel %vm1279, %v7069, %v7071
      %v7094 = vsel %vm1279, %v7073, %v7075
      %v7095 = vsel %vm1279, %v7075, %v7077
      %v7096 = vsel %vm1279, %v7077, %v7079
      %v7097 = vsel %vm1279, %v7081, %v7083
      %v7098 = vsel %vm1279, %v7083, %v7085
      %v7099 = vsel %vm1279, %v7085, %v7087
      %7116 = vrot.lane.b32.xlu0 %v6725, 106
      %v7117 = vpop.permute.xlu0 %7116
      %7118 = vrot.lane.b32.xlu0 %v6704, 106
      %v7119 = vpop.permute.xlu0 %7118
      %7120 = vrot.lane.b32.xlu0 %v6705, 106
      %v7121 = vpop.permute.xlu0 %7120
      %7122 = vrot.lane.b32.xlu0 %v6737, 106
      %v7123 = vpop.permute.xlu0 %7122
      %7124 = vrot.lane.b32.xlu0 %v6728, 106
      %v7125 = vpop.permute.xlu0 %7124
      %7126 = vrot.lane.b32.xlu0 %v6707, 106
      %v7127 = vpop.permute.xlu0 %7126
      %7128 = vrot.lane.b32.xlu0 %v6708, 106
      %v7129 = vpop.permute.xlu0 %7128
      %7130 = vrot.lane.b32.xlu0 %v6740, 106
      %v7131 = vpop.permute.xlu0 %7130
      %7132 = vrot.lane.b32.xlu0 %v6731, 106
      %v7133 = vpop.permute.xlu0 %7132
      %7134 = vrot.lane.b32.xlu0 %v6710, 106
      %v7135 = vpop.permute.xlu0 %7134
      %7136 = vrot.lane.b32.xlu0 %v6711, 106
      %v7137 = vpop.permute.xlu0 %7136
      %7138 = vrot.lane.b32.xlu0 %v6743, 106
      %v7139 = vpop.permute.xlu0 %7138
      %7140 = vrot.lane.b32.xlu0 %v6734, 106
      %v7141 = vpop.permute.xlu0 %7140
      %7142 = vrot.lane.b32.xlu0 %v6713, 106
      %v7143 = vpop.permute.xlu0 %7142
      %7144 = vrot.lane.b32.xlu0 %v6714, 106
      %v7145 = vpop.permute.xlu0 %7144
      %7146 = vrot.lane.b32.xlu0 %v6746, 106
      %v7147 = vpop.permute.xlu0 %7146
      %v7148 = vsel %vm1302, %v7117, %v7119
      %v7149 = vsel %vm1302, %v7119, %v7121
      %v7150 = vsel %vm1302, %v7121, %v7123
      %v7151 = vsel %vm1302, %v7125, %v7127
      %v7152 = vsel %vm1302, %v7127, %v7129
      %v7153 = vsel %vm1302, %v7129, %v7131
      %v7154 = vsel %vm1302, %v7133, %v7135
      %v7155 = vsel %vm1302, %v7135, %v7137
      %v7156 = vsel %vm1302, %v7137, %v7139
      %v7157 = vsel %vm1302, %v7141, %v7143
      %v7158 = vsel %vm1302, %v7143, %v7145
      %v7159 = vsel %vm1302, %v7145, %v7147
      %7176 = vrot.lane.b32.xlu0 %v6725, 105
      %v7177 = vpop.permute.xlu0 %7176
      %7178 = vrot.lane.b32.xlu0 %v6704, 105
      %v7179 = vpop.permute.xlu0 %7178
      %7180 = vrot.lane.b32.xlu0 %v6705, 105
      %v7181 = vpop.permute.xlu0 %7180
      %7182 = vrot.lane.b32.xlu0 %v6737, 105
      %v7183 = vpop.permute.xlu0 %7182
      %7184 = vrot.lane.b32.xlu0 %v6728, 105
      %v7185 = vpop.permute.xlu0 %7184
      %7186 = vrot.lane.b32.xlu0 %v6707, 105
      %v7187 = vpop.permute.xlu0 %7186
      %7188 = vrot.lane.b32.xlu0 %v6708, 105
      %v7189 = vpop.permute.xlu0 %7188
      %7190 = vrot.lane.b32.xlu0 %v6740, 105
      %v7191 = vpop.permute.xlu0 %7190
      %7192 = vrot.lane.b32.xlu0 %v6731, 105
      %v7193 = vpop.permute.xlu0 %7192
      %7194 = vrot.lane.b32.xlu0 %v6710, 105
      %v7195 = vpop.permute.xlu0 %7194
      %7196 = vrot.lane.b32.xlu0 %v6711, 105
      %v7197 = vpop.permute.xlu0 %7196
      %7198 = vrot.lane.b32.xlu0 %v6743, 105
      %v7199 = vpop.permute.xlu0 %7198
      %7200 = vrot.lane.b32.xlu0 %v6734, 105
      %v7201 = vpop.permute.xlu0 %7200
      %7202 = vrot.lane.b32.xlu0 %v6713, 105
      %v7203 = vpop.permute.xlu0 %7202
      %7204 = vrot.lane.b32.xlu0 %v6714, 105
      %v7205 = vpop.permute.xlu0 %7204
      %7206 = vrot.lane.b32.xlu0 %v6746, 105
      %v7207 = vpop.permute.xlu0 %7206
      %v7208 = vsel %vm2344, %v7177, %v7179
      %v7209 = vsel %vm2344, %v7179, %v7181
      %v7210 = vsel %vm2344, %v7181, %v7183
      %v7211 = vsel %vm2344, %v7185, %v7187
      %v7212 = vsel %vm2344, %v7187, %v7189
      %v7213 = vsel %vm2344, %v7189, %v7191
      %v7214 = vsel %vm2344, %v7193, %v7195
      %v7215 = vsel %vm2344, %v7195, %v7197
      %v7216 = vsel %vm2344, %v7197, %v7199
      %v7217 = vsel %vm2344, %v7201, %v7203
      %v7218 = vsel %vm2344, %v7203, %v7205
      %v7219 = vsel %vm2344, %v7205, %v7207
      %7236 = vrot.lane.b32.xlu0 %v6725, 104
      %v7237 = vpop.permute.xlu0 %7236
      %7238 = vrot.lane.b32.xlu0 %v6704, 104
      %v7239 = vpop.permute.xlu0 %7238
      %7240 = vrot.lane.b32.xlu0 %v6705, 104
      %v7241 = vpop.permute.xlu0 %7240
      %7242 = vrot.lane.b32.xlu0 %v6737, 104
      %v7243 = vpop.permute.xlu0 %7242
      %7244 = vrot.lane.b32.xlu0 %v6728, 104
      %v7245 = vpop.permute.xlu0 %7244
      %7246 = vrot.lane.b32.xlu0 %v6707, 104
      %v7247 = vpop.permute.xlu0 %7246
      %7248 = vrot.lane.b32.xlu0 %v6708, 104
      %v7249 = vpop.permute.xlu0 %7248
      %7250 = vrot.lane.b32.xlu0 %v6740, 104
      %v7251 = vpop.permute.xlu0 %7250
      %7252 = vrot.lane.b32.xlu0 %v6731, 104
      %v7253 = vpop.permute.xlu0 %7252
      %7254 = vrot.lane.b32.xlu0 %v6710, 104
      %v7255 = vpop.permute.xlu0 %7254
      %7256 = vrot.lane.b32.xlu0 %v6711, 104
      %v7257 = vpop.permute.xlu0 %7256
      %7258 = vrot.lane.b32.xlu0 %v6743, 104
      %v7259 = vpop.permute.xlu0 %7258
      %7260 = vrot.lane.b32.xlu0 %v6734, 104
      %v7261 = vpop.permute.xlu0 %7260
      %7262 = vrot.lane.b32.xlu0 %v6713, 104
      %v7263 = vpop.permute.xlu0 %7262
      %7264 = vrot.lane.b32.xlu0 %v6714, 104
      %v7265 = vpop.permute.xlu0 %7264
      %7266 = vrot.lane.b32.xlu0 %v6746, 104
      %v7267 = vpop.permute.xlu0 %7266
      %v7268 = vsel %vm2375, %v7237, %v7239
      %v7269 = vsel %vm2375, %v7239, %v7241
      %v7270 = vsel %vm2375, %v7241, %v7243
      %v7271 = vsel %vm2375, %v7245, %v7247
      %v7272 = vsel %vm2375, %v7247, %v7249
      %v7273 = vsel %vm2375, %v7249, %v7251
      %v7274 = vsel %vm2375, %v7253, %v7255
      %v7275 = vsel %vm2375, %v7255, %v7257
      %v7276 = vsel %vm2375, %v7257, %v7259
      %v7277 = vsel %vm2375, %v7261, %v7263
      %v7278 = vsel %vm2375, %v7263, %v7265
      %v7279 = vsel %vm2375, %v7265, %v7267
      %7296 = vrot.lane.b32.xlu0 %v6725, 88
      %v7297 = vpop.permute.xlu0 %7296
      %7298 = vrot.lane.b32.xlu0 %v6704, 88
      %v7299 = vpop.permute.xlu0 %7298
      %7300 = vrot.lane.b32.xlu0 %v6705, 88
      %v7301 = vpop.permute.xlu0 %7300
      %7302 = vrot.lane.b32.xlu0 %v6737, 88
      %v7303 = vpop.permute.xlu0 %7302
      %7304 = vrot.lane.b32.xlu0 %v6728, 88
      %v7305 = vpop.permute.xlu0 %7304
      %7306 = vrot.lane.b32.xlu0 %v6707, 88
      %v7307 = vpop.permute.xlu0 %7306
      %7308 = vrot.lane.b32.xlu0 %v6708, 88
      %v7309 = vpop.permute.xlu0 %7308
      %7310 = vrot.lane.b32.xlu0 %v6740, 88
      %v7311 = vpop.permute.xlu0 %7310
      %7312 = vrot.lane.b32.xlu0 %v6731, 88
      %v7313 = vpop.permute.xlu0 %7312
      %7314 = vrot.lane.b32.xlu0 %v6710, 88
      %v7315 = vpop.permute.xlu0 %7314
      %7316 = vrot.lane.b32.xlu0 %v6711, 88
      %v7317 = vpop.permute.xlu0 %7316
      %7318 = vrot.lane.b32.xlu0 %v6743, 88
      %v7319 = vpop.permute.xlu0 %7318
      %7320 = vrot.lane.b32.xlu0 %v6734, 88
      %v7321 = vpop.permute.xlu0 %7320
      %7322 = vrot.lane.b32.xlu0 %v6713, 88
      %v7323 = vpop.permute.xlu0 %7322
      %7324 = vrot.lane.b32.xlu0 %v6714, 88
      %v7325 = vpop.permute.xlu0 %7324
      %7326 = vrot.lane.b32.xlu0 %v6746, 88
      %v7327 = vpop.permute.xlu0 %7326
      %v7328 = vsel %vm1325, %v7297, %v7299
      %v7329 = vsel %vm1325, %v7299, %v7301
      %v7330 = vsel %vm1325, %v7301, %v7303
      %v7331 = vsel %vm1325, %v7305, %v7307
      %v7332 = vsel %vm1325, %v7307, %v7309
      %v7333 = vsel %vm1325, %v7309, %v7311
      %v7334 = vsel %vm1325, %v7313, %v7315
      %v7335 = vsel %vm1325, %v7315, %v7317
      %v7336 = vsel %vm1325, %v7317, %v7319
      %v7337 = vsel %vm1325, %v7321, %v7323
      %v7338 = vsel %vm1325, %v7323, %v7325
      %v7339 = vsel %vm1325, %v7325, %v7327
      %7356 = vrot.lane.b32.xlu0 %v6725, 87
      %v7357 = vpop.permute.xlu0 %7356
      %7358 = vrot.lane.b32.xlu0 %v6704, 87
      %v7359 = vpop.permute.xlu0 %7358
      %7360 = vrot.lane.b32.xlu0 %v6705, 87
      %v7361 = vpop.permute.xlu0 %7360
      %7362 = vrot.lane.b32.xlu0 %v6737, 87
      %v7363 = vpop.permute.xlu0 %7362
      %7364 = vrot.lane.b32.xlu0 %v6728, 87
      %v7365 = vpop.permute.xlu0 %7364
      %7366 = vrot.lane.b32.xlu0 %v6707, 87
      %v7367 = vpop.permute.xlu0 %7366
      %7368 = vrot.lane.b32.xlu0 %v6708, 87
      %v7369 = vpop.permute.xlu0 %7368
      %7370 = vrot.lane.b32.xlu0 %v6740, 87
      %v7371 = vpop.permute.xlu0 %7370
      %7372 = vrot.lane.b32.xlu0 %v6731, 87
      %v7373 = vpop.permute.xlu0 %7372
      %7374 = vrot.lane.b32.xlu0 %v6710, 87
      %v7375 = vpop.permute.xlu0 %7374
      %7376 = vrot.lane.b32.xlu0 %v6711, 87
      %v7377 = vpop.permute.xlu0 %7376
      %7378 = vrot.lane.b32.xlu0 %v6743, 87
      %v7379 = vpop.permute.xlu0 %7378
      %7380 = vrot.lane.b32.xlu0 %v6734, 87
      %v7381 = vpop.permute.xlu0 %7380
      %7382 = vrot.lane.b32.xlu0 %v6713, 87
      %v7383 = vpop.permute.xlu0 %7382
      %7384 = vrot.lane.b32.xlu0 %v6714, 87
      %v7385 = vpop.permute.xlu0 %7384
      %7386 = vrot.lane.b32.xlu0 %v6746, 87
      %v7387 = vpop.permute.xlu0 %7386
      %v7388 = vsel %vm1348, %v7357, %v7359
      %v7389 = vsel %vm1348, %v7359, %v7361
      %v7390 = vsel %vm1348, %v7361, %v7363
      %v7391 = vsel %vm1348, %v7365, %v7367
      %v7392 = vsel %vm1348, %v7367, %v7369
      %v7393 = vsel %vm1348, %v7369, %v7371
      %v7394 = vsel %vm1348, %v7373, %v7375
      %v7395 = vsel %vm1348, %v7375, %v7377
      %v7396 = vsel %vm1348, %v7377, %v7379
      %v7397 = vsel %vm1348, %v7381, %v7383
      %v7398 = vsel %vm1348, %v7383, %v7385
      %v7399 = vsel %vm1348, %v7385, %v7387
      %7416 = vrot.lane.b32.xlu0 %v6725, 86
      %v7417 = vpop.permute.xlu0 %7416
      %7418 = vrot.lane.b32.xlu0 %v6704, 86
      %v7419 = vpop.permute.xlu0 %7418
      %7420 = vrot.lane.b32.xlu0 %v6705, 86
      %v7421 = vpop.permute.xlu0 %7420
      %7422 = vrot.lane.b32.xlu0 %v6737, 86
      %v7423 = vpop.permute.xlu0 %7422
      %7424 = vrot.lane.b32.xlu0 %v6728, 86
      %v7425 = vpop.permute.xlu0 %7424
      %7426 = vrot.lane.b32.xlu0 %v6707, 86
      %v7427 = vpop.permute.xlu0 %7426
      %7428 = vrot.lane.b32.xlu0 %v6708, 86
      %v7429 = vpop.permute.xlu0 %7428
      %7430 = vrot.lane.b32.xlu0 %v6740, 86
      %v7431 = vpop.permute.xlu0 %7430
      %7432 = vrot.lane.b32.xlu0 %v6731, 86
      %v7433 = vpop.permute.xlu0 %7432
      %7434 = vrot.lane.b32.xlu0 %v6710, 86
      %v7435 = vpop.permute.xlu0 %7434
      %7436 = vrot.lane.b32.xlu0 %v6711, 86
      %v7437 = vpop.permute.xlu0 %7436
      %7438 = vrot.lane.b32.xlu0 %v6743, 86
      %v7439 = vpop.permute.xlu0 %7438
      %7440 = vrot.lane.b32.xlu0 %v6734, 86
      %v7441 = vpop.permute.xlu0 %7440
      %7442 = vrot.lane.b32.xlu0 %v6713, 86
      %v7443 = vpop.permute.xlu0 %7442
      %7444 = vrot.lane.b32.xlu0 %v6714, 86
      %v7445 = vpop.permute.xlu0 %7444
      %7446 = vrot.lane.b32.xlu0 %v6746, 86
      %v7447 = vpop.permute.xlu0 %7446
      %v7448 = vsel %vm1371, %v7417, %v7419
      %v7449 = vsel %vm1371, %v7419, %v7421
      %v7450 = vsel %vm1371, %v7421, %v7423
      %v7451 = vsel %vm1371, %v7425, %v7427
      %v7452 = vsel %vm1371, %v7427, %v7429
      %v7453 = vsel %vm1371, %v7429, %v7431
      %v7454 = vsel %vm1371, %v7433, %v7435
      %v7455 = vsel %vm1371, %v7435, %v7437
      %v7456 = vsel %vm1371, %v7437, %v7439
      %v7457 = vsel %vm1371, %v7441, %v7443
      %v7458 = vsel %vm1371, %v7443, %v7445
      %v7459 = vsel %vm1371, %v7445, %v7447
      %7476 = vrot.lane.b32.xlu0 %v6725, 85
      %v7477 = vpop.permute.xlu0 %7476
      %7478 = vrot.lane.b32.xlu0 %v6704, 85
      %v7479 = vpop.permute.xlu0 %7478
      %7480 = vrot.lane.b32.xlu0 %v6705, 85
      %v7481 = vpop.permute.xlu0 %7480
      %7482 = vrot.lane.b32.xlu0 %v6737, 85
      %v7483 = vpop.permute.xlu0 %7482
      %7484 = vrot.lane.b32.xlu0 %v6728, 85
      %v7485 = vpop.permute.xlu0 %7484
      %7486 = vrot.lane.b32.xlu0 %v6707, 85
      %v7487 = vpop.permute.xlu0 %7486
      %7488 = vrot.lane.b32.xlu0 %v6708, 85
      %v7489 = vpop.permute.xlu0 %7488
      %7490 = vrot.lane.b32.xlu0 %v6740, 85
      %v7491 = vpop.permute.xlu0 %7490
      %7492 = vrot.lane.b32.xlu0 %v6731, 85
      %v7493 = vpop.permute.xlu0 %7492
      %7494 = vrot.lane.b32.xlu0 %v6710, 85
      %v7495 = vpop.permute.xlu0 %7494
      %7496 = vrot.lane.b32.xlu0 %v6711, 85
      %v7497 = vpop.permute.xlu0 %7496
      %7498 = vrot.lane.b32.xlu0 %v6743, 85
      %v7499 = vpop.permute.xlu0 %7498
      %7500 = vrot.lane.b32.xlu0 %v6734, 85
      %v7501 = vpop.permute.xlu0 %7500
      %7502 = vrot.lane.b32.xlu0 %v6713, 85
      %v7503 = vpop.permute.xlu0 %7502
      %7504 = vrot.lane.b32.xlu0 %v6714, 85
      %v7505 = vpop.permute.xlu0 %7504
      %7506 = vrot.lane.b32.xlu0 %v6746, 85
      %v7507 = vpop.permute.xlu0 %7506
      %v7508 = vsel %vm2496, %v7477, %v7479
      %v7509 = vsel %vm2496, %v7479, %v7481
      %v7510 = vsel %vm2496, %v7481, %v7483
      %v7511 = vsel %vm2496, %v7485, %v7487
      %v7512 = vsel %vm2496, %v7487, %v7489
      %v7513 = vsel %vm2496, %v7489, %v7491
      %v7514 = vsel %vm2496, %v7493, %v7495
      %v7515 = vsel %vm2496, %v7495, %v7497
      %v7516 = vsel %vm2496, %v7497, %v7499
      %v7517 = vsel %vm2496, %v7501, %v7503
      %v7518 = vsel %vm2496, %v7503, %v7505
      %v7519 = vsel %vm2496, %v7505, %v7507
      %7536 = vrot.lane.b32.xlu0 %v6725, 84
      %v7537 = vpop.permute.xlu0 %7536
      %7538 = vrot.lane.b32.xlu0 %v6704, 84
      %v7539 = vpop.permute.xlu0 %7538
      %7540 = vrot.lane.b32.xlu0 %v6705, 84
      %v7541 = vpop.permute.xlu0 %7540
      %7542 = vrot.lane.b32.xlu0 %v6737, 84
      %v7543 = vpop.permute.xlu0 %7542
      %7544 = vrot.lane.b32.xlu0 %v6728, 84
      %v7545 = vpop.permute.xlu0 %7544
      %7546 = vrot.lane.b32.xlu0 %v6707, 84
      %v7547 = vpop.permute.xlu0 %7546
      %7548 = vrot.lane.b32.xlu0 %v6708, 84
      %v7549 = vpop.permute.xlu0 %7548
      %7550 = vrot.lane.b32.xlu0 %v6740, 84
      %v7551 = vpop.permute.xlu0 %7550
      %7552 = vrot.lane.b32.xlu0 %v6731, 84
      %v7553 = vpop.permute.xlu0 %7552
      %7554 = vrot.lane.b32.xlu0 %v6710, 84
      %v7555 = vpop.permute.xlu0 %7554
      %7556 = vrot.lane.b32.xlu0 %v6711, 84
      %v7557 = vpop.permute.xlu0 %7556
      %7558 = vrot.lane.b32.xlu0 %v6743, 84
      %v7559 = vpop.permute.xlu0 %7558
      %7560 = vrot.lane.b32.xlu0 %v6734, 84
      %v7561 = vpop.permute.xlu0 %7560
      %7562 = vrot.lane.b32.xlu0 %v6713, 84
      %v7563 = vpop.permute.xlu0 %7562
      %7564 = vrot.lane.b32.xlu0 %v6714, 84
      %v7565 = vpop.permute.xlu0 %7564
      %7566 = vrot.lane.b32.xlu0 %v6746, 84
      %v7567 = vpop.permute.xlu0 %7566
      %v7568 = vsel %vm2527, %v7537, %v7539
      %v7569 = vsel %vm2527, %v7539, %v7541
      %v7570 = vsel %vm2527, %v7541, %v7543
      %v7571 = vsel %vm2527, %v7545, %v7547
      %v7572 = vsel %vm2527, %v7547, %v7549
      %v7573 = vsel %vm2527, %v7549, %v7551
      %v7574 = vsel %vm2527, %v7553, %v7555
      %v7575 = vsel %vm2527, %v7555, %v7557
      %v7576 = vsel %vm2527, %v7557, %v7559
      %v7577 = vsel %vm2527, %v7561, %v7563
      %v7578 = vsel %vm2527, %v7563, %v7565
      %v7579 = vsel %vm2527, %v7565, %v7567
      %7596 = vrot.lane.b32.xlu0 %v6725, 68
      %v7597 = vpop.permute.xlu0 %7596
      %7598 = vrot.lane.b32.xlu0 %v6704, 68
      %v7599 = vpop.permute.xlu0 %7598
      %7600 = vrot.lane.b32.xlu0 %v6705, 68
      %v7601 = vpop.permute.xlu0 %7600
      %7602 = vrot.lane.b32.xlu0 %v6737, 68
      %v7603 = vpop.permute.xlu0 %7602
      %7604 = vrot.lane.b32.xlu0 %v6728, 68
      %v7605 = vpop.permute.xlu0 %7604
      %7606 = vrot.lane.b32.xlu0 %v6707, 68
      %v7607 = vpop.permute.xlu0 %7606
      %7608 = vrot.lane.b32.xlu0 %v6708, 68
      %v7609 = vpop.permute.xlu0 %7608
      %7610 = vrot.lane.b32.xlu0 %v6740, 68
      %v7611 = vpop.permute.xlu0 %7610
      %7612 = vrot.lane.b32.xlu0 %v6731, 68
      %v7613 = vpop.permute.xlu0 %7612
      %7614 = vrot.lane.b32.xlu0 %v6710, 68
      %v7615 = vpop.permute.xlu0 %7614
      %7616 = vrot.lane.b32.xlu0 %v6711, 68
      %v7617 = vpop.permute.xlu0 %7616
      %7618 = vrot.lane.b32.xlu0 %v6743, 68
      %v7619 = vpop.permute.xlu0 %7618
      %7620 = vrot.lane.b32.xlu0 %v6734, 68
      %v7621 = vpop.permute.xlu0 %7620
      %7622 = vrot.lane.b32.xlu0 %v6713, 68
      %v7623 = vpop.permute.xlu0 %7622
      %7624 = vrot.lane.b32.xlu0 %v6714, 68
      %v7625 = vpop.permute.xlu0 %7624
      %7626 = vrot.lane.b32.xlu0 %v6746, 68
      %v7627 = vpop.permute.xlu0 %7626
      %v7628 = vsel %vm2558, %v7597, %v7599
      %v7629 = vsel %vm2558, %v7599, %v7601
      %v7630 = vsel %vm2558, %v7601, %v7603
      %v7631 = vsel %vm2558, %v7605, %v7607
      %v7632 = vsel %vm2558, %v7607, %v7609
      %v7633 = vsel %vm2558, %v7609, %v7611
      %v7634 = vsel %vm2558, %v7613, %v7615
      %v7635 = vsel %vm2558, %v7615, %v7617
      %v7636 = vsel %vm2558, %v7617, %v7619
      %v7637 = vsel %vm2558, %v7621, %v7623
      %v7638 = vsel %vm2558, %v7623, %v7625
      %v7639 = vsel %vm2558, %v7625, %v7627
      %7656 = vrot.lane.b32.xlu0 %v6725, 109
      %v7657 = vpop.permute.xlu0 %7656
      %7658 = vrot.lane.b32.xlu0 %v6704, 109
      %v7659 = vpop.permute.xlu0 %7658
      %7660 = vrot.lane.b32.xlu0 %v6705, 109
      %v7661 = vpop.permute.xlu0 %7660
      %7662 = vrot.lane.b32.xlu0 %v6737, 109
      %v7663 = vpop.permute.xlu0 %7662
      %7664 = vrot.lane.b32.xlu0 %v6728, 109
      %v7665 = vpop.permute.xlu0 %7664
      %7666 = vrot.lane.b32.xlu0 %v6707, 109
      %v7667 = vpop.permute.xlu0 %7666
      %7668 = vrot.lane.b32.xlu0 %v6708, 109
      %v7669 = vpop.permute.xlu0 %7668
      %7670 = vrot.lane.b32.xlu0 %v6740, 109
      %v7671 = vpop.permute.xlu0 %7670
      %7672 = vrot.lane.b32.xlu0 %v6731, 109
      %v7673 = vpop.permute.xlu0 %7672
      %7674 = vrot.lane.b32.xlu0 %v6710, 109
      %v7675 = vpop.permute.xlu0 %7674
      %7676 = vrot.lane.b32.xlu0 %v6711, 109
      %v7677 = vpop.permute.xlu0 %7676
      %7678 = vrot.lane.b32.xlu0 %v6743, 109
      %v7679 = vpop.permute.xlu0 %7678
      %7680 = vrot.lane.b32.xlu0 %v6734, 109
      %v7681 = vpop.permute.xlu0 %7680
      %7682 = vrot.lane.b32.xlu0 %v6713, 109
      %v7683 = vpop.permute.xlu0 %7682
      %7684 = vrot.lane.b32.xlu0 %v6714, 109
      %v7685 = vpop.permute.xlu0 %7684
      %7686 = vrot.lane.b32.xlu0 %v6746, 109
      %v7687 = vpop.permute.xlu0 %7686
      %v7688 = vsel %vm2589, %v7657, %v7659
      %v7689 = vsel %vm2589, %v7659, %v7661
      %v7690 = vsel %vm2589, %v7661, %v7663
      %v7691 = vsel %vm2589, %v7665, %v7667
      %v7692 = vsel %vm2589, %v7667, %v7669
      %v7693 = vsel %vm2589, %v7669, %v7671
      %v7694 = vsel %vm2589, %v7673, %v7675
      %v7695 = vsel %vm2589, %v7675, %v7677
      %v7696 = vsel %vm2589, %v7677, %v7679
      %v7697 = vsel %vm2589, %v7681, %v7683
      %v7698 = vsel %vm2589, %v7683, %v7685
      %v7699 = vsel %vm2589, %v7685, %v7687
      %7700 = vrot.lane.b32.xlu0 %v6725, 67
      %v7701 = vpop.permute.xlu0 %7700
      %7702 = vrot.lane.b32.xlu0 %v6704, 67
      %v7703 = vpop.permute.xlu0 %7702
      %7704 = vrot.lane.b32.xlu0 %v6705, 67
      %v7705 = vpop.permute.xlu0 %7704
      %7706 = vrot.lane.b32.xlu0 %v6737, 67
      %v7707 = vpop.permute.xlu0 %7706
      %7708 = vrot.lane.b32.xlu0 %v6728, 67
      %v7709 = vpop.permute.xlu0 %7708
      %7710 = vrot.lane.b32.xlu0 %v6707, 67
      %v7711 = vpop.permute.xlu0 %7710
      %7712 = vrot.lane.b32.xlu0 %v6708, 67
      %v7713 = vpop.permute.xlu0 %7712
      %7714 = vrot.lane.b32.xlu0 %v6740, 67
      %v7715 = vpop.permute.xlu0 %7714
      %7716 = vrot.lane.b32.xlu0 %v6731, 67
      %v7717 = vpop.permute.xlu0 %7716
      %7718 = vrot.lane.b32.xlu0 %v6710, 67
      %v7719 = vpop.permute.xlu0 %7718
      %7720 = vrot.lane.b32.xlu0 %v6711, 67
      %v7721 = vpop.permute.xlu0 %7720
      %7722 = vrot.lane.b32.xlu0 %v6743, 67
      %v7723 = vpop.permute.xlu0 %7722
      %7724 = vrot.lane.b32.xlu0 %v6734, 67
      %v7725 = vpop.permute.xlu0 %7724
      %7726 = vrot.lane.b32.xlu0 %v6713, 67
      %v7727 = vpop.permute.xlu0 %7726
      %7728 = vrot.lane.b32.xlu0 %v6714, 67
      %v7729 = vpop.permute.xlu0 %7728
      %7730 = vrot.lane.b32.xlu0 %v6746, 67
      %v7731 = vpop.permute.xlu0 %7730
      %7732 = vrot.lane.b32.xlu0 %v6788, 67
      %v7733 = vpop.permute.xlu0 %7732
      %7734 = vrot.lane.b32.xlu0 %v6789, 67
      %v7735 = vpop.permute.xlu0 %7734
      %7736 = vrot.lane.b32.xlu0 %v6790, 67
      %v7737 = vpop.permute.xlu0 %7736
      %7738 = vrot.lane.b32.xlu0 %v6763, 67
      %v7739 = vpop.permute.xlu0 %7738
      %7740 = vrot.lane.b32.xlu0 %v6791, 67
      %v7741 = vpop.permute.xlu0 %7740
      %7742 = vrot.lane.b32.xlu0 %v6792, 67
      %v7743 = vpop.permute.xlu0 %7742
      %7744 = vrot.lane.b32.xlu0 %v6793, 67
      %v7745 = vpop.permute.xlu0 %7744
      %7746 = vrot.lane.b32.xlu0 %v6771, 67
      %v7747 = vpop.permute.xlu0 %7746
      %7748 = vrot.lane.b32.xlu0 %v6794, 67
      %v7749 = vpop.permute.xlu0 %7748
      %7750 = vrot.lane.b32.xlu0 %v6795, 67
      %v7751 = vpop.permute.xlu0 %7750
      %7752 = vrot.lane.b32.xlu0 %v6796, 67
      %v7753 = vpop.permute.xlu0 %7752
      %7754 = vrot.lane.b32.xlu0 %v6779, 67
      %v7755 = vpop.permute.xlu0 %7754
      %7756 = vrot.lane.b32.xlu0 %v6797, 67
      %v7757 = vpop.permute.xlu0 %7756
      %7758 = vrot.lane.b32.xlu0 %v6798, 67
      %v7759 = vpop.permute.xlu0 %7758
      %7760 = vrot.lane.b32.xlu0 %v6799, 67
      %v7761 = vpop.permute.xlu0 %7760
      %7762 = vrot.lane.b32.xlu0 %v6787, 67
      %v7763 = vpop.permute.xlu0 %7762
      %7764 = vrot.lane.b32.xlu0 %v6848, 67
      %v7765 = vpop.permute.xlu0 %7764
      %7766 = vrot.lane.b32.xlu0 %v6849, 67
      %v7767 = vpop.permute.xlu0 %7766
      %7768 = vrot.lane.b32.xlu0 %v6850, 67
      %v7769 = vpop.permute.xlu0 %7768
      %7770 = vrot.lane.b32.xlu0 %v6823, 67
      %v7771 = vpop.permute.xlu0 %7770
      %7772 = vrot.lane.b32.xlu0 %v6851, 67
      %v7773 = vpop.permute.xlu0 %7772
      %7774 = vrot.lane.b32.xlu0 %v6852, 67
      %v7775 = vpop.permute.xlu0 %7774
      %7776 = vrot.lane.b32.xlu0 %v6853, 67
      %v7777 = vpop.permute.xlu0 %7776
      %7778 = vrot.lane.b32.xlu0 %v6831, 67
      %v7779 = vpop.permute.xlu0 %7778
      %7780 = vrot.lane.b32.xlu0 %v6854, 67
      %v7781 = vpop.permute.xlu0 %7780
      %7782 = vrot.lane.b32.xlu0 %v6855, 67
      %v7783 = vpop.permute.xlu0 %7782
      %7784 = vrot.lane.b32.xlu0 %v6856, 67
      %v7785 = vpop.permute.xlu0 %7784
      %7786 = vrot.lane.b32.xlu0 %v6839, 67
      %v7787 = vpop.permute.xlu0 %7786
      %7788 = vrot.lane.b32.xlu0 %v6857, 67
      %v7789 = vpop.permute.xlu0 %7788
      %7790 = vrot.lane.b32.xlu0 %v6858, 67
      %v7791 = vpop.permute.xlu0 %7790
      %7792 = vrot.lane.b32.xlu0 %v6859, 67
      %v7793 = vpop.permute.xlu0 %7792
      %7794 = vrot.lane.b32.xlu0 %v6847, 67
      %v7795 = vpop.permute.xlu0 %7794
      %7796 = vrot.lane.b32.xlu0 %v6908, 67
      %v7797 = vpop.permute.xlu0 %7796
      %7798 = vrot.lane.b32.xlu0 %v6909, 67
      %v7799 = vpop.permute.xlu0 %7798
      %7800 = vrot.lane.b32.xlu0 %v6910, 67
      %v7801 = vpop.permute.xlu0 %7800
      %7802 = vrot.lane.b32.xlu0 %v6883, 67
      %v7803 = vpop.permute.xlu0 %7802
      %7804 = vrot.lane.b32.xlu0 %v6911, 67
      %v7805 = vpop.permute.xlu0 %7804
      %7806 = vrot.lane.b32.xlu0 %v6912, 67
      %v7807 = vpop.permute.xlu0 %7806
      %7808 = vrot.lane.b32.xlu0 %v6913, 67
      %v7809 = vpop.permute.xlu0 %7808
      %7810 = vrot.lane.b32.xlu0 %v6891, 67
      %v7811 = vpop.permute.xlu0 %7810
      %7812 = vrot.lane.b32.xlu0 %v6914, 67
      %v7813 = vpop.permute.xlu0 %7812
      %7814 = vrot.lane.b32.xlu0 %v6915, 67
      %v7815 = vpop.permute.xlu0 %7814
      %7816 = vrot.lane.b32.xlu0 %v6916, 67
      %v7817 = vpop.permute.xlu0 %7816
      %7818 = vrot.lane.b32.xlu0 %v6899, 67
      %v7819 = vpop.permute.xlu0 %7818
      %7820 = vrot.lane.b32.xlu0 %v6917, 67
      %v7821 = vpop.permute.xlu0 %7820
      %7822 = vrot.lane.b32.xlu0 %v6918, 67
      %v7823 = vpop.permute.xlu0 %7822
      %7824 = vrot.lane.b32.xlu0 %v6919, 67
      %v7825 = vpop.permute.xlu0 %7824
      %7826 = vrot.lane.b32.xlu0 %v6907, 67
      %v7827 = vpop.permute.xlu0 %7826
      %7828 = vrot.lane.b32.xlu0 %v7688, 67
      %v7829 = vpop.permute.xlu0 %7828
      %7830 = vrot.lane.b32.xlu0 %v7689, 67
      %v7831 = vpop.permute.xlu0 %7830
      %7832 = vrot.lane.b32.xlu0 %v7690, 67
      %v7833 = vpop.permute.xlu0 %7832
      %7834 = vrot.lane.b32.xlu0 %v7663, 67
      %v7835 = vpop.permute.xlu0 %7834
      %7836 = vrot.lane.b32.xlu0 %v7691, 67
      %v7837 = vpop.permute.xlu0 %7836
      %7838 = vrot.lane.b32.xlu0 %v7692, 67
      %v7839 = vpop.permute.xlu0 %7838
      %7840 = vrot.lane.b32.xlu0 %v7693, 67
      %v7841 = vpop.permute.xlu0 %7840
      %7842 = vrot.lane.b32.xlu0 %v7671, 67
      %v7843 = vpop.permute.xlu0 %7842
      %7844 = vrot.lane.b32.xlu0 %v7694, 67
      %v7845 = vpop.permute.xlu0 %7844
      %7846 = vrot.lane.b32.xlu0 %v7695, 67
      %v7847 = vpop.permute.xlu0 %7846
      %7848 = vrot.lane.b32.xlu0 %v7696, 67
      %v7849 = vpop.permute.xlu0 %7848
      %7850 = vrot.lane.b32.xlu0 %v7679, 67
      %v7851 = vpop.permute.xlu0 %7850
      %7852 = vrot.lane.b32.xlu0 %v7697, 67
      %v7853 = vpop.permute.xlu0 %7852
      %7854 = vrot.lane.b32.xlu0 %v7698, 67
      %v7855 = vpop.permute.xlu0 %7854
      %7856 = vrot.lane.b32.xlu0 %v7699, 67
      %v7857 = vpop.permute.xlu0 %7856
      %7858 = vrot.lane.b32.xlu0 %v7687, 67
      %v7859 = vpop.permute.xlu0 %7858
      %7860 = vrot.lane.b32.xlu0 %v7028, 67
      %v7861 = vpop.permute.xlu0 %7860
      %7862 = vrot.lane.b32.xlu0 %v7029, 67
      %v7863 = vpop.permute.xlu0 %7862
      %7864 = vrot.lane.b32.xlu0 %v7030, 67
      %v7865 = vpop.permute.xlu0 %7864
      %7866 = vrot.lane.b32.xlu0 %v7003, 67
      %v7867 = vpop.permute.xlu0 %7866
      %7868 = vrot.lane.b32.xlu0 %v7031, 67
      %v7869 = vpop.permute.xlu0 %7868
      %7870 = vrot.lane.b32.xlu0 %v7032, 67
      %v7871 = vpop.permute.xlu0 %7870
      %7872 = vrot.lane.b32.xlu0 %v7033, 67
      %v7873 = vpop.permute.xlu0 %7872
      %7874 = vrot.lane.b32.xlu0 %v7011, 67
      %v7875 = vpop.permute.xlu0 %7874
      %7876 = vrot.lane.b32.xlu0 %v7034, 67
      %v7877 = vpop.permute.xlu0 %7876
      %7878 = vrot.lane.b32.xlu0 %v7035, 67
      %v7879 = vpop.permute.xlu0 %7878
      %7880 = vrot.lane.b32.xlu0 %v7036, 67
      %v7881 = vpop.permute.xlu0 %7880
      %7882 = vrot.lane.b32.xlu0 %v7019, 67
      %v7883 = vpop.permute.xlu0 %7882
      %7884 = vrot.lane.b32.xlu0 %v7037, 67
      %v7885 = vpop.permute.xlu0 %7884
      %7886 = vrot.lane.b32.xlu0 %v7038, 67
      %v7887 = vpop.permute.xlu0 %7886
      %7888 = vrot.lane.b32.xlu0 %v7039, 67
      %v7889 = vpop.permute.xlu0 %7888
      %7890 = vrot.lane.b32.xlu0 %v7027, 67
      %v7891 = vpop.permute.xlu0 %7890
      %7892 = vrot.lane.b32.xlu0 %v7088, 67
      %v7893 = vpop.permute.xlu0 %7892
      %7894 = vrot.lane.b32.xlu0 %v7089, 67
      %v7895 = vpop.permute.xlu0 %7894
      %7896 = vrot.lane.b32.xlu0 %v7090, 67
      %v7897 = vpop.permute.xlu0 %7896
      %7898 = vrot.lane.b32.xlu0 %v7063, 67
      %v7899 = vpop.permute.xlu0 %7898
      %7900 = vrot.lane.b32.xlu0 %v7091, 67
      %v7901 = vpop.permute.xlu0 %7900
      %7902 = vrot.lane.b32.xlu0 %v7092, 67
      %v7903 = vpop.permute.xlu0 %7902
      %7904 = vrot.lane.b32.xlu0 %v7093, 67
      %v7905 = vpop.permute.xlu0 %7904
      %7906 = vrot.lane.b32.xlu0 %v7071, 67
      %v7907 = vpop.permute.xlu0 %7906
      %7908 = vrot.lane.b32.xlu0 %v7094, 67
      %v7909 = vpop.permute.xlu0 %7908
      %7910 = vrot.lane.b32.xlu0 %v7095, 67
      %v7911 = vpop.permute.xlu0 %7910
      %7912 = vrot.lane.b32.xlu0 %v7096, 67
      %v7913 = vpop.permute.xlu0 %7912
      %7914 = vrot.lane.b32.xlu0 %v7079, 67
      %v7915 = vpop.permute.xlu0 %7914
      %7916 = vrot.lane.b32.xlu0 %v7097, 67
      %v7917 = vpop.permute.xlu0 %7916
      %7918 = vrot.lane.b32.xlu0 %v7098, 67
      %v7919 = vpop.permute.xlu0 %7918
      %7920 = vrot.lane.b32.xlu0 %v7099, 67
      %v7921 = vpop.permute.xlu0 %7920
      %7922 = vrot.lane.b32.xlu0 %v7087, 67
      %v7923 = vpop.permute.xlu0 %7922
      %7924 = vrot.lane.b32.xlu0 %v7148, 67
      %v7925 = vpop.permute.xlu0 %7924
      %7926 = vrot.lane.b32.xlu0 %v7149, 67
      %v7927 = vpop.permute.xlu0 %7926
      %7928 = vrot.lane.b32.xlu0 %v7150, 67
      %v7929 = vpop.permute.xlu0 %7928
      %7930 = vrot.lane.b32.xlu0 %v7123, 67
      %v7931 = vpop.permute.xlu0 %7930
      %7932 = vrot.lane.b32.xlu0 %v7151, 67
      %v7933 = vpop.permute.xlu0 %7932
      %7934 = vrot.lane.b32.xlu0 %v7152, 67
      %v7935 = vpop.permute.xlu0 %7934
      %7936 = vrot.lane.b32.xlu0 %v7153, 67
      %v7937 = vpop.permute.xlu0 %7936
      %7938 = vrot.lane.b32.xlu0 %v7131, 67
      %v7939 = vpop.permute.xlu0 %7938
      %7940 = vrot.lane.b32.xlu0 %v7154, 67
      %v7941 = vpop.permute.xlu0 %7940
      %7942 = vrot.lane.b32.xlu0 %v7155, 67
      %v7943 = vpop.permute.xlu0 %7942
      %7944 = vrot.lane.b32.xlu0 %v7156, 67
      %v7945 = vpop.permute.xlu0 %7944
      %7946 = vrot.lane.b32.xlu0 %v7139, 67
      %v7947 = vpop.permute.xlu0 %7946
      %7948 = vrot.lane.b32.xlu0 %v7157, 67
      %v7949 = vpop.permute.xlu0 %7948
      %7950 = vrot.lane.b32.xlu0 %v7158, 67
      %v7951 = vpop.permute.xlu0 %7950
      %7952 = vrot.lane.b32.xlu0 %v7159, 67
      %v7953 = vpop.permute.xlu0 %7952
      %7954 = vrot.lane.b32.xlu0 %v7147, 67
      %v7955 = vpop.permute.xlu0 %7954
      %7956 = vrot.lane.b32.xlu0 %v7208, 67
      %v7957 = vpop.permute.xlu0 %7956
      %7958 = vrot.lane.b32.xlu0 %v7209, 67
      %v7959 = vpop.permute.xlu0 %7958
      %7960 = vrot.lane.b32.xlu0 %v7210, 67
      %v7961 = vpop.permute.xlu0 %7960
      %7962 = vrot.lane.b32.xlu0 %v7183, 67
      %v7963 = vpop.permute.xlu0 %7962
      %7964 = vrot.lane.b32.xlu0 %v7211, 67
      %v7965 = vpop.permute.xlu0 %7964
      %7966 = vrot.lane.b32.xlu0 %v7212, 67
      %v7967 = vpop.permute.xlu0 %7966
      %7968 = vrot.lane.b32.xlu0 %v7213, 67
      %v7969 = vpop.permute.xlu0 %7968
      %7970 = vrot.lane.b32.xlu0 %v7191, 67
      %v7971 = vpop.permute.xlu0 %7970
      %7972 = vrot.lane.b32.xlu0 %v7214, 67
      %v7973 = vpop.permute.xlu0 %7972
      %7974 = vrot.lane.b32.xlu0 %v7215, 67
      %v7975 = vpop.permute.xlu0 %7974
      %7976 = vrot.lane.b32.xlu0 %v7216, 67
      %v7977 = vpop.permute.xlu0 %7976
      %7978 = vrot.lane.b32.xlu0 %v7199, 67
      %v7979 = vpop.permute.xlu0 %7978
      %7980 = vrot.lane.b32.xlu0 %v7217, 67
      %v7981 = vpop.permute.xlu0 %7980
      %7982 = vrot.lane.b32.xlu0 %v7218, 67
      %v7983 = vpop.permute.xlu0 %7982
      %7984 = vrot.lane.b32.xlu0 %v7219, 67
      %v7985 = vpop.permute.xlu0 %7984
      %7986 = vrot.lane.b32.xlu0 %v7207, 67
      %v7987 = vpop.permute.xlu0 %7986
      %v7988 = vsel %vm2740, %v7701, %v7703
      %v7989 = vsel %vm2740, %v7703, %v7705
      %v7990 = vsel %vm2740, %v7705, %v7707
      %v7991 = vsel %vm2740, %v7709, %v7711
      %v7992 = vsel %vm2740, %v7711, %v7713
      %v7993 = vsel %vm2740, %v7713, %v7715
      %v7994 = vsel %vm2740, %v7717, %v7719
      %v7995 = vsel %vm2740, %v7719, %v7721
      %v7996 = vsel %vm2740, %v7721, %v7723
      %v7997 = vsel %vm2740, %v7725, %v7727
      %v7998 = vsel %vm2740, %v7727, %v7729
      %v7999 = vsel %vm2740, %v7729, %v7731
      %v8000 = vsel %vm2740, %v7733, %v7735
      %v8001 = vsel %vm2740, %v7735, %v7737
      %v8002 = vsel %vm2740, %v7737, %v7739
      %v8003 = vsel %vm2740, %v7741, %v7743
      %v8004 = vsel %vm2740, %v7743, %v7745
      %v8005 = vsel %vm2740, %v7745, %v7747
      %v8006 = vsel %vm2740, %v7749, %v7751
      %v8007 = vsel %vm2740, %v7751, %v7753
      %v8008 = vsel %vm2740, %v7753, %v7755
      %v8009 = vsel %vm2740, %v7757, %v7759
      %v8010 = vsel %vm2740, %v7759, %v7761
      %v8011 = vsel %vm2740, %v7761, %v7763
      %v8012 = vsel %vm2740, %v7765, %v7767
      %v8013 = vsel %vm2740, %v7767, %v7769
      %v8014 = vsel %vm2740, %v7769, %v7771
      %v8015 = vsel %vm2740, %v7773, %v7775
      %v8016 = vsel %vm2740, %v7775, %v7777
      %v8017 = vsel %vm2740, %v7777, %v7779
      %v8018 = vsel %vm2740, %v7781, %v7783
      %v8019 = vsel %vm2740, %v7783, %v7785
      %v8020 = vsel %vm2740, %v7785, %v7787
      %v8021 = vsel %vm2740, %v7789, %v7791
      %v8022 = vsel %vm2740, %v7791, %v7793
      %v8023 = vsel %vm2740, %v7793, %v7795
      %v8024 = vsel %vm2740, %v7797, %v7799
      %v8025 = vsel %vm2740, %v7799, %v7801
      %v8026 = vsel %vm2740, %v7801, %v7803
      %v8027 = vsel %vm2740, %v7805, %v7807
      %v8028 = vsel %vm2740, %v7807, %v7809
      %v8029 = vsel %vm2740, %v7809, %v7811
      %v8030 = vsel %vm2740, %v7813, %v7815
      %v8031 = vsel %vm2740, %v7815, %v7817
      %v8032 = vsel %vm2740, %v7817, %v7819
      %v8033 = vsel %vm2740, %v7821, %v7823
      %v8034 = vsel %vm2740, %v7823, %v7825
      %v8035 = vsel %vm2740, %v7825, %v7827
      %v8036 = vsel %vm2740, %v7829, %v7831
      %v8037 = vsel %vm2740, %v7831, %v7833
      %v8038 = vsel %vm2740, %v7833, %v7835
      %v8039 = vsel %vm2740, %v7837, %v7839
      %v8040 = vsel %vm2740, %v7839, %v7841
      %v8041 = vsel %vm2740, %v7841, %v7843
      %v8042 = vsel %vm2740, %v7845, %v7847
      %v8043 = vsel %vm2740, %v7847, %v7849
      %v8044 = vsel %vm2740, %v7849, %v7851
      %v8045 = vsel %vm2740, %v7853, %v7855
      %v8046 = vsel %vm2740, %v7855, %v7857
      %v8047 = vsel %vm2740, %v7857, %v7859
      %v8048 = vsel %vm2740, %v7861, %v7863
      %v8049 = vsel %vm2740, %v7863, %v7865
      %v8050 = vsel %vm2740, %v7865, %v7867
      %v8051 = vsel %vm2740, %v7869, %v7871
      %v8052 = vsel %vm2740, %v7871, %v7873
      %v8053 = vsel %vm2740, %v7873, %v7875
      %v8054 = vsel %vm2740, %v7877, %v7879
      %v8055 = vsel %vm2740, %v7879, %v7881
      %v8056 = vsel %vm2740, %v7881, %v7883
      %v8057 = vsel %vm2740, %v7885, %v7887
      %v8058 = vsel %vm2740, %v7887, %v7889
      %v8059 = vsel %vm2740, %v7889, %v7891
      %v8060 = vsel %vm2740, %v7893, %v7895
      %v8061 = vsel %vm2740, %v7895, %v7897
      %v8062 = vsel %vm2740, %v7897, %v7899
      %v8063 = vsel %vm2740, %v7901, %v7903
      %v8064 = vsel %vm2740, %v7903, %v7905
      %v8065 = vsel %vm2740, %v7905, %v7907
      %v8066 = vsel %vm2740, %v7909, %v7911
      %v8067 = vsel %vm2740, %v7911, %v7913
      %v8068 = vsel %vm2740, %v7913, %v7915
      %v8069 = vsel %vm2740, %v7917, %v7919
      %v8070 = vsel %vm2740, %v7919, %v7921
      %v8071 = vsel %vm2740, %v7921, %v7923
      %v8072 = vsel %vm2740, %v7925, %v7927
      %v8073 = vsel %vm2740, %v7927, %v7929
      %v8074 = vsel %vm2740, %v7929, %v7931
      %v8075 = vsel %vm2740, %v7933, %v7935
      %v8076 = vsel %vm2740, %v7935, %v7937
      %v8077 = vsel %vm2740, %v7937, %v7939
      %v8078 = vsel %vm2740, %v7941, %v7943
      %v8079 = vsel %vm2740, %v7943, %v7945
      %v8080 = vsel %vm2740, %v7945, %v7947
      %v8081 = vsel %vm2740, %v7949, %v7951
      %v8082 = vsel %vm2740, %v7951, %v7953
      %v8083 = vsel %vm2740, %v7953, %v7955
      %v8084 = vsel %vm2740, %v7957, %v7959
      %v8085 = vsel %vm2740, %v7959, %v7961
      %v8086 = vsel %vm2740, %v7961, %v7963
      %v8087 = vsel %vm2740, %v7965, %v7967
      %v8088 = vsel %vm2740, %v7967, %v7969
      %v8089 = vsel %vm2740, %v7969, %v7971
      %v8090 = vsel %vm2740, %v7973, %v7975
      %v8091 = vsel %vm2740, %v7975, %v7977
      %v8092 = vsel %vm2740, %v7977, %v7979
      %v8093 = vsel %vm2740, %v7981, %v7983
      %v8094 = vsel %vm2740, %v7983, %v7985
      %v8095 = vsel %vm2740, %v7985, %v7987
      %v8240 = vld [vmem:[%s23] sm:$0xff]
      %v8241 = vld [vmem:[%s23 + $0x8] sm:$0xff]
      %v8242 = vld [vmem:[%s23 + $0x10] sm:$0xff]
      %v8243 = vld [vmem:[%s23 + $0x18] sm:$0xff]
      %v8244 = vld [vmem:[%s23 + $0x20] sm:$0xff]
      %v8245 = vld [vmem:[%s23 + $0x28] sm:$0xff]
      %v8246 = vld [vmem:[%s23 + $0x30] sm:$0xff]
      %v8247 = vld [vmem:[%s23 + $0x38] sm:$0xff]
      %8249 = vset.pattern.permute.xlu0 0
      %8250 = vperm.xlu0 %8249, %v8240
      %v8251 = vpop.permute.xlu0 %8250
      %8254 = vset.pattern.permute.xlu0 0
      %8255 = vperm.xlu0 %8254, %v8241
      %v8256 = vpop.permute.xlu0 %8255
      %8259 = vset.pattern.permute.xlu0 0
      %8260 = vperm.xlu0 %8259, %v8242
      %v8261 = vpop.permute.xlu0 %8260
      %8264 = vset.pattern.permute.xlu0 0
      %8265 = vperm.xlu0 %8264, %v8243
      %v8266 = vpop.permute.xlu0 %8265
      %8269 = vset.pattern.permute.xlu0 0
      %8270 = vperm.xlu0 %8269, %v8244
      %v8271 = vpop.permute.xlu0 %8270
      %8274 = vset.pattern.permute.xlu0 0
      %8275 = vperm.xlu0 %8274, %v8245
      %v8276 = vpop.permute.xlu0 %8275
      %8279 = vset.pattern.permute.xlu0 0
      %8280 = vperm.xlu0 %8279, %v8246
      %v8281 = vpop.permute.xlu0 %8280
      %8284 = vset.pattern.permute.xlu0 0
      %8285 = vperm.xlu0 %8284, %v8247
      %v8286 = vpop.permute.xlu0 %8285
      %v8344 = vunpack.c.l.b16 %v6600
      %v8345 = vunpack.c.h.b16 %v6600
      %v8346 = vunpack.c.l.b16 %v6601
      %v8347 = vunpack.c.h.b16 %v6601
      %v8348 = vunpack.c.l.b16 %v6602
      %v8349 = vunpack.c.h.b16 %v6602
      %v8350 = vunpack.c.l.b16 %v6603
      %v8351 = vunpack.c.h.b16 %v6603
      %v8352 = vunpack.c.l.b16 %v6604
      %v8353 = vunpack.c.h.b16 %v6604
      %v8354 = vunpack.c.l.b16 %v6605
      %v8355 = vunpack.c.h.b16 %v6605
      %v8356 = vunpack.c.l.b16 %v6606
      %v8357 = vunpack.c.l.b16 %v6607
      %v8358 = vunpack.c.h.b16 %v6607
      %v8359 = vunpack.c.l.b16 %v6608
      %v8360 = vunpack.c.h.b16 %v6608
      %v8361 = vunpack.c.l.b16 %v6609
      %v8362 = vunpack.c.h.b16 %v6609
      %v8363 = vunpack.c.l.b16 %v6610
      %v8364 = vunpack.c.h.b16 %v6610
      %v8365 = vunpack.c.l.b16 %v6611
      %v8366 = vunpack.c.h.b16 %v6611
      %v8367 = vunpack.c.l.b16 %v6612
      %v8368 = vunpack.c.h.b16 %v6612
      %v8369 = vunpack.c.l.b16 %v6613
      %v8370 = vunpack.c.l.b16 %v6614
      %v8371 = vunpack.c.h.b16 %v6614
      %v8372 = vunpack.c.l.b16 %v6615
      %v8373 = vunpack.c.h.b16 %v6615
      %v8374 = vunpack.c.l.b16 %v6616
      %v8375 = vunpack.c.h.b16 %v6616
      %v8376 = vunpack.c.l.b16 %v6617
      %v8377 = vunpack.c.h.b16 %v6617
      %v8378 = vunpack.c.l.b16 %v6618
      %v8379 = vunpack.c.h.b16 %v6618
      %v8380 = vunpack.c.l.b16 %v6619
      %v8381 = vunpack.c.h.b16 %v6619
      %v8382 = vunpack.c.l.b16 %v6620
      %v8383 = vunpack.c.l.b16 %v6621
      %v8384 = vunpack.c.h.b16 %v6621
      %v8385 = vunpack.c.l.b16 %v6622
      %v8386 = vunpack.c.h.b16 %v6622
      %v8387 = vunpack.c.l.b16 %v6623
      %v8388 = vunpack.c.h.b16 %v6623
      %v8389 = vunpack.c.l.b16 %v6624
      %v8390 = vunpack.c.h.b16 %v6624
      %v8391 = vunpack.c.l.b16 %v6625
      %v8392 = vunpack.c.h.b16 %v6625
      %v8393 = vunpack.c.l.b16 %v6626
      %v8394 = vunpack.c.h.b16 %v6626
      %v8395 = vunpack.c.l.b16 %v6627
      %v8396 = vunpack.c.l.b16 %v6628
      %v8397 = vunpack.c.h.b16 %v6628
      %v8398 = vunpack.c.l.b16 %v6629
      %v8399 = vunpack.c.h.b16 %v6629
      %v8400 = vunpack.c.l.b16 %v6630
      %v8401 = vunpack.c.h.b16 %v6630
      %v8402 = vunpack.c.l.b16 %v6631
      %v8403 = vunpack.c.h.b16 %v6631
      %v8404 = vunpack.c.l.b16 %v6632
      %v8405 = vunpack.c.h.b16 %v6632
      %v8406 = vunpack.c.l.b16 %v6633
      %v8407 = vunpack.c.h.b16 %v6633
      %v8408 = vunpack.c.l.b16 %v6634
      %v8409 = vunpack.c.l.b16 %v6635
      %v8410 = vunpack.c.h.b16 %v6635
      %v8411 = vunpack.c.l.b16 %v6636
      %v8412 = vunpack.c.h.b16 %v6636
      %v8413 = vunpack.c.l.b16 %v6637
      %v8414 = vunpack.c.h.b16 %v6637
      %v8415 = vunpack.c.l.b16 %v6638
      %v8416 = vunpack.c.h.b16 %v6638
      %v8417 = vunpack.c.l.b16 %v6639
      %v8418 = vunpack.c.h.b16 %v6639
      %v8419 = vunpack.c.l.b16 %v6640
      %v8420 = vunpack.c.h.b16 %v6640
      %v8421 = vunpack.c.l.b16 %v6641
      %v8422 = vunpack.c.l.b16 %v6642
      %v8423 = vunpack.c.h.b16 %v6642
      %v8424 = vunpack.c.l.b16 %v6643
      %v8425 = vunpack.c.h.b16 %v6643
      %v8426 = vunpack.c.l.b16 %v6644
      %v8427 = vunpack.c.h.b16 %v6644
      %v8428 = vunpack.c.l.b16 %v6645
      %v8429 = vunpack.c.h.b16 %v6645
      %v8430 = vunpack.c.l.b16 %v6646
      %v8431 = vunpack.c.h.b16 %v6646
      %v8432 = vunpack.c.l.b16 %v6647
      %v8433 = vunpack.c.h.b16 %v6647
      %v8434 = vunpack.c.l.b16 %v6648
      %v8435 = vunpack.c.l.b16 %v6649
      %v8436 = vunpack.c.h.b16 %v6649
      %v8437 = vunpack.c.l.b16 %v6650
      %v8438 = vunpack.c.h.b16 %v6650
      %v8439 = vunpack.c.l.b16 %v6651
      %v8440 = vunpack.c.h.b16 %v6651
      %v8441 = vunpack.c.l.b16 %v6652
      %v8442 = vunpack.c.h.b16 %v6652
      %v8443 = vunpack.c.l.b16 %v6653
      %v8444 = vunpack.c.h.b16 %v6653
      %v8445 = vunpack.c.l.b16 %v6654
      %v8446 = vunpack.c.h.b16 %v6654
      %v8447 = vunpack.c.l.b16 %v6655
      %v8448 = vpack.c.b16 %v8357, %v8344
      %v8449 = vpack.c.b16 %v8358, %v8345
      %v8450 = vpack.c.b16 %v8359, %v8346
      %v8451 = vpack.c.b16 %v8360, %v8347
      %v8452 = vpack.c.b16 %v8361, %v8348
      %v8453 = vpack.c.b16 %v8362, %v8349
      %v8454 = vpack.c.b16 %v8363, %v8350
      %v8455 = vpack.c.b16 %v8364, %v8351
      %v8456 = vpack.c.b16 %v8365, %v8352
      %v8457 = vpack.c.b16 %v8366, %v8353
      %v8458 = vpack.c.b16 %v8367, %v8354
      %v8459 = vpack.c.b16 %v8368, %v8355
      %v8460 = vpack.c.b16 %v8369, %v8356
      %v8461 = vpack.c.b16 %v8383, %v8370
      %v8462 = vpack.c.b16 %v8384, %v8371
      %v8463 = vpack.c.b16 %v8385, %v8372
      %v8464 = vpack.c.b16 %v8386, %v8373
      %v8465 = vpack.c.b16 %v8387, %v8374
      %v8466 = vpack.c.b16 %v8388, %v8375
      %v8467 = vpack.c.b16 %v8389, %v8376
      %v8468 = vpack.c.b16 %v8390, %v8377
      %v8469 = vpack.c.b16 %v8391, %v8378
      %v8470 = vpack.c.b16 %v8392, %v8379
      %v8471 = vpack.c.b16 %v8393, %v8380
      %v8472 = vpack.c.b16 %v8394, %v8381
      %v8473 = vpack.c.b16 %v8395, %v8382
      %v8474 = vpack.c.b16 %v8409, %v8396
      %v8475 = vpack.c.b16 %v8410, %v8397
      %v8476 = vpack.c.b16 %v8411, %v8398
      %v8477 = vpack.c.b16 %v8412, %v8399
      %v8478 = vpack.c.b16 %v8413, %v8400
      %v8479 = vpack.c.b16 %v8414, %v8401
      %v8480 = vpack.c.b16 %v8415, %v8402
      %v8481 = vpack.c.b16 %v8416, %v8403
      %v8482 = vpack.c.b16 %v8417, %v8404
      %v8483 = vpack.c.b16 %v8418, %v8405
      %v8484 = vpack.c.b16 %v8419, %v8406
      %v8485 = vpack.c.b16 %v8420, %v8407
      %v8486 = vpack.c.b16 %v8421, %v8408
      %v8487 = vpack.c.b16 %v8435, %v8422
      %v8488 = vpack.c.b16 %v8436, %v8423
      %v8489 = vpack.c.b16 %v8437, %v8424
      %v8490 = vpack.c.b16 %v8438, %v8425
      %v8491 = vpack.c.b16 %v8439, %v8426
      %v8492 = vpack.c.b16 %v8440, %v8427
      %v8493 = vpack.c.b16 %v8441, %v8428
      %v8494 = vpack.c.b16 %v8442, %v8429
      %v8495 = vpack.c.b16 %v8443, %v8430
      %v8496 = vpack.c.b16 %v8444, %v8431
      %v8497 = vpack.c.b16 %v8445, %v8432
      %v8498 = vpack.c.b16 %v8446, %v8433
      %v8499 = vpack.c.b16 %v8447, %v8434
      %v8549 = vsel %vm5845, %v8460, 0
      %v8552 = vsel %vm5845, %v8473, 0
      %v8555 = vsel %vm5845, %v8486, 0
      %v8558 = vsel %vm5845, %v8499, 0
      %8560 = vmatprep.subr.bf16.mxu0 %v6704
      %8561 = vmatpush1.bf16.msra.mxu0 %v6725
      %8562 = vmatprep.subr.bf16.mxu0 %v6707
      %8563 = vmatpush1.bf16.msra.mxu0 %v6728
      %8564 = vmatprep.subr.bf16.mxu0 %v6710
      %8565 = vmatpush1.bf16.msra.mxu0 %v6731
      %8566 = vmatprep.subr.bf16.mxu0 %v6713
      %8567 = vmatpush1.bf16.msra.mxu0 %v6734
      %8568 = vmatprep.subr.bf16.mxu0 %v6789
      %8569 = vmatpush1.bf16.msra.mxu0 %v6788
      %8570 = vmatprep.subr.bf16.mxu0 %v6792
      %8571 = vmatpush1.bf16.msra.mxu0 %v6791
      %8572 = vmatprep.subr.bf16.mxu0 %v6795
      %8573 = vmatpush1.bf16.msra.mxu0 %v6794
      %8574 = vmatprep.subr.bf16.mxu0 %v6798
      %8575 = vmatpush1.bf16.msra.mxu0 %v6797
      %8576 = vmatprep.subr.bf16.mxu0 %v6849
      %8577 = vmatpush1.bf16.msra.mxu0 %v6848
      %8578 = vmatprep.subr.bf16.mxu0 %v6852
      %8579 = vmatpush1.bf16.msra.mxu0 %v6851
      %8580 = vmatprep.subr.bf16.mxu0 %v6855
      %8581 = vmatpush1.bf16.msra.mxu0 %v6854
      %8582 = vmatprep.subr.bf16.mxu0 %v6858
      %8583 = vmatpush1.bf16.msra.mxu0 %v6857
      %8584 = vmatprep.subr.bf16.mxu0 %v6909
      %8585 = vmatpush1.bf16.msra.mxu0 %v6908
      %8586 = vmatprep.subr.bf16.mxu0 %v6912
      %8587 = vmatpush1.bf16.msra.mxu0 %v6911
      %8588 = vmatprep.subr.bf16.mxu0 %v6915
      %8589 = vmatpush1.bf16.msra.mxu0 %v6914
      %8590 = vmatprep.subr.bf16.mxu0 %v6918
      %8591 = vmatpush1.bf16.msra.mxu0 %v6917
      %8592 = vmatprep.mubr.bf16.mxu0 %v8449
      %8593 = vmatmul.mubr.bf16.gmra.mrb[0].mxu0 %v8448
      %v8594 = vpop.f32.mrb[0].mxu0
      %v8595 = vadd.f32 %v8251, %v8594
      %v8596 = vpop.f32.mrb[0].mxu0
      %v8597 = vadd.f32 %v8251, %v8596
      %v8598 = vpop.f32.mrb[0].mxu0
      %v8599 = vadd.f32 %v8256, %v8598
      %v8600 = vpop.f32.mrb[0].mxu0
      %v8601 = vadd.f32 %v8256, %v8600
      %8602 = vmatprep.mubr.bf16.mxu0 %v8462
      %8603 = vmatmul.mubr.bf16.gmra.mrb[0].mxu0 %v8461
      %v8604 = vpop.f32.mrb[0].mxu0
      %v8605 = vadd.f32 %v8261, %v8604
      %v8606 = vpop.f32.mrb[0].mxu0
      %v8607 = vadd.f32 %v8261, %v8606
      %v8608 = vpop.f32.mrb[0].mxu0
      %v8609 = vadd.f32 %v8266, %v8608
      %v8610 = vpop.f32.mrb[0].mxu0
      %v8611 = vadd.f32 %v8266, %v8610
      %8612 = vmatprep.mubr.bf16.mxu0 %v8475
      %8613 = vmatmul.mubr.bf16.gmra.mrb[0].mxu0 %v8474
      %v8614 = vpop.f32.mrb[0].mxu0
      %v8615 = vadd.f32 %v8271, %v8614
      %v8616 = vpop.f32.mrb[0].mxu0
      %v8617 = vadd.f32 %v8271, %v8616
      %v8618 = vpop.f32.mrb[0].mxu0
      %v8619 = vadd.f32 %v8276, %v8618
      %v8620 = vpop.f32.mrb[0].mxu0
      %v8621 = vadd.f32 %v8276, %v8620
      %8622 = vmatprep.mubr.bf16.mxu0 %v8488
      %8623 = vmatmul.mubr.bf16.gmra.mrb[0].mxu0 %v8487
      %v8624 = vpop.f32.mrb[0].mxu0
      %v8625 = vadd.f32 %v8281, %v8624
      %v8626 = vpop.f32.mrb[0].mxu0
      %v8627 = vadd.f32 %v8281, %v8626
      %v8628 = vpop.f32.mrb[0].mxu0
      %v8629 = vadd.f32 %v8286, %v8628
      %v8630 = vpop.f32.mrb[0].mxu0
      %v8631 = vadd.f32 %v8286, %v8630
      %8632 = vdwg.mxu0
      %8633 = vmatprep.subr.bf16.mxu0 %v6969
      %8634 = vmatpush1.bf16.msra.mxu0 %v6968
      %8635 = vmatprep.subr.bf16.mxu0 %v6972
      %8636 = vmatpush1.bf16.msra.mxu0 %v6971
      %8637 = vmatprep.subr.bf16.mxu0 %v6975
      %8638 = vmatpush1.bf16.msra.mxu0 %v6974
      %8639 = vmatprep.subr.bf16.mxu0 %v6978
      %8640 = vmatpush1.bf16.msra.mxu0 %v6977
      %8641 = vmatprep.subr.bf16.mxu0 %v7029
      %8642 = vmatpush1.bf16.msra.mxu0 %v7028
      %8643 = vmatprep.subr.bf16.mxu0 %v7032
      %8644 = vmatpush1.bf16.msra.mxu0 %v7031
      %8645 = vmatprep.subr.bf16.mxu0 %v7035
      %8646 = vmatpush1.bf16.msra.mxu0 %v7034
      %8647 = vmatprep.subr.bf16.mxu0 %v7038
      %8648 = vmatpush1.bf16.msra.mxu0 %v7037
      %8649 = vmatprep.subr.bf16.mxu0 %v7089
      %8650 = vmatpush1.bf16.msra.mxu0 %v7088
      %8651 = vmatprep.subr.bf16.mxu0 %v7092
      %8652 = vmatpush1.bf16.msra.mxu0 %v7091
      %8653 = vmatprep.subr.bf16.mxu0 %v7095
      %8654 = vmatpush1.bf16.msra.mxu0 %v7094
      %8655 = vmatprep.subr.bf16.mxu0 %v7098
      %8656 = vmatpush1.bf16.msra.mxu0 %v7097
      %8657 = vmatprep.subr.bf16.mxu0 %v7149
      %8658 = vmatpush1.bf16.msra.mxu0 %v7148
      %8659 = vmatprep.subr.bf16.mxu0 %v7152
      %8660 = vmatpush1.bf16.msra.mxu0 %v7151
      %8661 = vmatprep.subr.bf16.mxu0 %v7155
      %8662 = vmatpush1.bf16.msra.mxu0 %v7154
      %8663 = vmatprep.subr.bf16.mxu0 %v7158
      %8664 = vmatpush1.bf16.msra.mxu0 %v7157
      %8665 = vmatprep.mubr.bf16.mxu0 %v8451
      %8666 = vmatmul.mubr.bf16.gmra.mrb[0].mxu0 %v8450
      %v8667 = vpop.f32.mrb[0].mxu0
      %v8668 = vadd.f32 %v8595, %v8667
      %v8669 = vpop.f32.mrb[0].mxu0
      %v8670 = vadd.f32 %v8597, %v8669
      %v8671 = vpop.f32.mrb[0].mxu0
      %v8672 = vadd.f32 %v8599, %v8671
      %v8673 = vpop.f32.mrb[0].mxu0
      %v8674 = vadd.f32 %v8601, %v8673
      %8675 = vmatprep.mubr.bf16.mxu0 %v8464
      %8676 = vmatmul.mubr.bf16.gmra.mrb[0].mxu0 %v8463
      %v8677 = vpop.f32.mrb[0].mxu0
      %v8678 = vadd.f32 %v8605, %v8677
      %v8679 = vpop.f32.mrb[0].mxu0
      %v8680 = vadd.f32 %v8607, %v8679
      %v8681 = vpop.f32.mrb[0].mxu0
      %v8682 = vadd.f32 %v8609, %v8681
      %v8683 = vpop.f32.mrb[0].mxu0
      %v8684 = vadd.f32 %v8611, %v8683
      %8685 = vmatprep.mubr.bf16.mxu0 %v8477
      %8686 = vmatmul.mubr.bf16.gmra.mrb[0].mxu0 %v8476
      %v8687 = vpop.f32.mrb[0].mxu0
      %v8688 = vadd.f32 %v8615, %v8687
      %v8689 = vpop.f32.mrb[0].mxu0
      %v8690 = vadd.f32 %v8617, %v8689
      %v8691 = vpop.f32.mrb[0].mxu0
      %v8692 = vadd.f32 %v8619, %v8691
      %v8693 = vpop.f32.mrb[0].mxu0
      %v8694 = vadd.f32 %v8621, %v8693
      %8695 = vmatprep.mubr.bf16.mxu0 %v8490
      %8696 = vmatmul.mubr.bf16.gmra.mrb[0].mxu0 %v8489
      %v8697 = vpop.f32.mrb[0].mxu0
      %v8698 = vadd.f32 %v8625, %v8697
      %v8699 = vpop.f32.mrb[0].mxu0
      %v8700 = vadd.f32 %v8627, %v8699
      %v8701 = vpop.f32.mrb[0].mxu0
      %v8702 = vadd.f32 %v8629, %v8701
      %v8703 = vpop.f32.mrb[0].mxu0
      %v8704 = vadd.f32 %v8631, %v8703
      %8705 = vdwg.mxu0
      %8706 = vmatprep.subr.bf16.mxu0 %v7209
      %8707 = vmatpush1.bf16.msra.mxu0 %v7208
      %8708 = vmatprep.subr.bf16.mxu0 %v7212
      %8709 = vmatpush1.bf16.msra.mxu0 %v7211
      %8710 = vmatprep.subr.bf16.mxu0 %v7215
      %8711 = vmatpush1.bf16.msra.mxu0 %v7214
      %8712 = vmatprep.subr.bf16.mxu0 %v7218
      %8713 = vmatpush1.bf16.msra.mxu0 %v7217
      %8714 = vmatprep.subr.bf16.mxu0 %v7269
      %8715 = vmatpush1.bf16.msra.mxu0 %v7268
      %8716 = vmatprep.subr.bf16.mxu0 %v7272
      %8717 = vmatpush1.bf16.msra.mxu0 %v7271
      %8718 = vmatprep.subr.bf16.mxu0 %v7275
      %8719 = vmatpush1.bf16.msra.mxu0 %v7274
      %8720 = vmatprep.subr.bf16.mxu0 %v7278
      %8721 = vmatpush1.bf16.msra.mxu0 %v7277
      %8722 = vmatprep.subr.bf16.mxu0 %v7329
      %8723 = vmatpush1.bf16.msra.mxu0 %v7328
      %8724 = vmatprep.subr.bf16.mxu0 %v7332
      %8725 = vmatpush1.bf16.msra.mxu0 %v7331
      %8726 = vmatprep.subr.bf16.mxu0 %v7335
      %8727 = vmatpush1.bf16.msra.mxu0 %v7334
      %8728 = vmatprep.subr.bf16.mxu0 %v7338
      %8729 = vmatpush1.bf16.msra.mxu0 %v7337
      %8730 = vmatprep.subr.bf16.mxu0 %v7389
      %8731 = vmatpush1.bf16.msra.mxu0 %v7388
      %8732 = vmatprep.subr.bf16.mxu0 %v7392
      %8733 = vmatpush1.bf16.msra.mxu0 %v7391
      %8734 = vmatprep.subr.bf16.mxu0 %v7395
      %8735 = vmatpush1.bf16.msra.mxu0 %v7394
      %8736 = vmatprep.subr.bf16.mxu0 %v7398
      %8737 = vmatpush1.bf16.msra.mxu0 %v7397
      %8738 = vmatprep.mubr.bf16.mxu0 %v8453
      %8739 = vmatmul.mubr.bf16.gmra.mrb[0].mxu0 %v8452
      %v8740 = vpop.f32.mrb[0].mxu0
      %v8741 = vadd.f32 %v8668, %v8740
      %v8742 = vpop.f32.mrb[0].mxu0
      %v8743 = vadd.f32 %v8670, %v8742
      %v8744 = vpop.f32.mrb[0].mxu0
      %v8745 = vadd.f32 %v8672, %v8744
      %v8746 = vpop.f32.mrb[0].mxu0
      %v8747 = vadd.f32 %v8674, %v8746
      %8748 = vmatprep.mubr.bf16.mxu0 %v8466
      %8749 = vmatmul.mubr.bf16.gmra.mrb[0].mxu0 %v8465
      %v8750 = vpop.f32.mrb[0].mxu0
      %v8751 = vadd.f32 %v8678, %v8750
      %v8752 = vpop.f32.mrb[0].mxu0
      %v8753 = vadd.f32 %v8680, %v8752
      %v8754 = vpop.f32.mrb[0].mxu0
      %v8755 = vadd.f32 %v8682, %v8754
      %v8756 = vpop.f32.mrb[0].mxu0
      %v8757 = vadd.f32 %v8684, %v8756
      %8758 = vmatprep.mubr.bf16.mxu0 %v8479
      %8759 = vmatmul.mubr.bf16.gmra.mrb[0].mxu0 %v8478
      %v8760 = vpop.f32.mrb[0].mxu0
      %v8761 = vadd.f32 %v8688, %v8760
      %v8762 = vpop.f32.mrb[0].mxu0
      %v8763 = vadd.f32 %v8690, %v8762
      %v8764 = vpop.f32.mrb[0].mxu0
      %v8765 = vadd.f32 %v8692, %v8764
      %v8766 = vpop.f32.mrb[0].mxu0
      %v8767 = vadd.f32 %v8694, %v8766
      %8768 = vmatprep.mubr.bf16.mxu0 %v8492
      %8769 = vmatmul.mubr.bf16.gmra.mrb[0].mxu0 %v8491
      %v8770 = vpop.f32.mrb[0].mxu0
      %v8771 = vadd.f32 %v8698, %v8770
      %v8772 = vpop.f32.mrb[0].mxu0
      %v8773 = vadd.f32 %v8700, %v8772
      %v8774 = vpop.f32.mrb[0].mxu0
      %v8775 = vadd.f32 %v8702, %v8774
      %v8776 = vpop.f32.mrb[0].mxu0
      %v8777 = vadd.f32 %v8704, %v8776
      %8778 = vdwg.mxu0
      %8779 = vmatprep.subr.bf16.mxu0 %v7449
      %8780 = vmatpush1.bf16.msra.mxu0 %v7448
      %8781 = vmatprep.subr.bf16.mxu0 %v7452
      %8782 = vmatpush1.bf16.msra.mxu0 %v7451
      %8783 = vmatprep.subr.bf16.mxu0 %v7455
      %8784 = vmatpush1.bf16.msra.mxu0 %v7454
      %8785 = vmatprep.subr.bf16.mxu0 %v7458
      %8786 = vmatpush1.bf16.msra.mxu0 %v7457
      %8787 = vmatprep.subr.bf16.mxu0 %v7509
      %8788 = vmatpush1.bf16.msra.mxu0 %v7508
      %8789 = vmatprep.subr.bf16.mxu0 %v7512
      %8790 = vmatpush1.bf16.msra.mxu0 %v7511
      %8791 = vmatprep.subr.bf16.mxu0 %v7515
      %8792 = vmatpush1.bf16.msra.mxu0 %v7514
      %8793 = vmatprep.subr.bf16.mxu0 %v7518
      %8794 = vmatpush1.bf16.msra.mxu0 %v7517
      %8795 = vmatprep.subr.bf16.mxu0 %v7569
      %8796 = vmatpush1.bf16.msra.mxu0 %v7568
      %8797 = vmatprep.subr.bf16.mxu0 %v7572
      %8798 = vmatpush1.bf16.msra.mxu0 %v7571
      %8799 = vmatprep.subr.bf16.mxu0 %v7575
      %8800 = vmatpush1.bf16.msra.mxu0 %v7574
      %8801 = vmatprep.subr.bf16.mxu0 %v7578
      %8802 = vmatpush1.bf16.msra.mxu0 %v7577
      %8803 = vmatprep.subr.bf16.mxu0 %v7629
      %8804 = vmatpush1.bf16.msra.mxu0 %v7628
      %8805 = vmatprep.subr.bf16.mxu0 %v7632
      %8806 = vmatpush1.bf16.msra.mxu0 %v7631
      %8807 = vmatprep.subr.bf16.mxu0 %v7635
      %8808 = vmatpush1.bf16.msra.mxu0 %v7634
      %8809 = vmatprep.subr.bf16.mxu0 %v7638
      %8810 = vmatpush1.bf16.msra.mxu0 %v7637
      %8811 = vmatprep.mubr.bf16.mxu0 %v8455
      %8812 = vmatmul.mubr.bf16.gmra.mrb[0].mxu0 %v8454
      %v8813 = vpop.f32.mrb[0].mxu0
      %v8814 = vadd.f32 %v8741, %v8813
      %v8815 = vpop.f32.mrb[0].mxu0
      %v8816 = vadd.f32 %v8743, %v8815
      %v8817 = vpop.f32.mrb[0].mxu0
      %v8818 = vadd.f32 %v8745, %v8817
      %v8819 = vpop.f32.mrb[0].mxu0
      %v8820 = vadd.f32 %v8747, %v8819
      %8821 = vmatprep.mubr.bf16.mxu0 %v8468
      %8822 = vmatmul.mubr.bf16.gmra.mrb[0].mxu0 %v8467
      %v8823 = vpop.f32.mrb[0].mxu0
      %v8824 = vadd.f32 %v8751, %v8823
      %v8825 = vpop.f32.mrb[0].mxu0
      %v8826 = vadd.f32 %v8753, %v8825
      %v8827 = vpop.f32.mrb[0].mxu0
      %v8828 = vadd.f32 %v8755, %v8827
      %v8829 = vpop.f32.mrb[0].mxu0
      %v8830 = vadd.f32 %v8757, %v8829
      %8831 = vmatprep.mubr.bf16.mxu0 %v8481
      %8832 = vmatmul.mubr.bf16.gmra.mrb[0].mxu0 %v8480
      %v8833 = vpop.f32.mrb[0].mxu0
      %v8834 = vadd.f32 %v8761, %v8833
      %v8835 = vpop.f32.mrb[0].mxu0
      %v8836 = vadd.f32 %v8763, %v8835
      %v8837 = vpop.f32.mrb[0].mxu0
      %v8838 = vadd.f32 %v8765, %v8837
      %v8839 = vpop.f32.mrb[0].mxu0
      %v8840 = vadd.f32 %v8767, %v8839
      %8841 = vmatprep.mubr.bf16.mxu0 %v8494
      %8842 = vmatmul.mubr.bf16.gmra.mrb[0].mxu0 %v8493
      %v8843 = vpop.f32.mrb[0].mxu0
      %v8844 = vadd.f32 %v8771, %v8843
      %v8845 = vpop.f32.mrb[0].mxu0
      %v8846 = vadd.f32 %v8773, %v8845
      %v8847 = vpop.f32.mrb[0].mxu0
      %v8848 = vadd.f32 %v8775, %v8847
      %v8849 = vpop.f32.mrb[0].mxu0
      %v8850 = vadd.f32 %v8777, %v8849
      %8851 = vdwg.mxu0
      %8852 = vmatprep.subr.bf16.mxu0 %v7989
      %8853 = vmatpush1.bf16.msra.mxu0 %v7988
      %8854 = vmatprep.subr.bf16.mxu0 %v7992
      %8855 = vmatpush1.bf16.msra.mxu0 %v7991
      %8856 = vmatprep.subr.bf16.mxu0 %v7995
      %8857 = vmatpush1.bf16.msra.mxu0 %v7994
      %8858 = vmatprep.subr.bf16.mxu0 %v7998
      %8859 = vmatpush1.bf16.msra.mxu0 %v7997
      %8860 = vmatprep.subr.bf16.mxu0 %v8001
      %8861 = vmatpush1.bf16.msra.mxu0 %v8000
      %8862 = vmatprep.subr.bf16.mxu0 %v8004
      %8863 = vmatpush1.bf16.msra.mxu0 %v8003
      %8864 = vmatprep.subr.bf16.mxu0 %v8007
      %8865 = vmatpush1.bf16.msra.mxu0 %v8006
      %8866 = vmatprep.subr.bf16.mxu0 %v8010
      %8867 = vmatpush1.bf16.msra.mxu0 %v8009
      %8868 = vmatprep.subr.bf16.mxu0 %v8013
      %8869 = vmatpush1.bf16.msra.mxu0 %v8012
      %8870 = vmatprep.subr.bf16.mxu0 %v8016
      %8871 = vmatpush1.bf16.msra.mxu0 %v8015
      %8872 = vmatprep.subr.bf16.mxu0 %v8019
      %8873 = vmatpush1.bf16.msra.mxu0 %v8018
      %8874 = vmatprep.subr.bf16.mxu0 %v8022
      %8875 = vmatpush1.bf16.msra.mxu0 %v8021
      %8876 = vmatprep.subr.bf16.mxu0 %v8025
      %8877 = vmatpush1.bf16.msra.mxu0 %v8024
      %8878 = vmatprep.subr.bf16.mxu0 %v8028
      %8879 = vmatpush1.bf16.msra.mxu0 %v8027
      %8880 = vmatprep.subr.bf16.mxu0 %v8031
      %8881 = vmatpush1.bf16.msra.mxu0 %v8030
      %8882 = vmatprep.subr.bf16.mxu0 %v8034
      %8883 = vmatpush1.bf16.msra.mxu0 %v8033
      %8884 = vmatprep.mubr.bf16.mxu0 %v8457
      %8885 = vmatmul.mubr.bf16.gmra.mrb[0].mxu0 %v8456
      %v8886 = vpop.f32.mrb[0].mxu0
      %v8887 = vadd.f32 %v8814, %v8886
      %v8888 = vpop.f32.mrb[0].mxu0
      %v8889 = vadd.f32 %v8816, %v8888
      %v8890 = vpop.f32.mrb[0].mxu0
      %v8891 = vadd.f32 %v8818, %v8890
      %v8892 = vpop.f32.mrb[0].mxu0
      %v8893 = vadd.f32 %v8820, %v8892
      %8894 = vmatprep.mubr.bf16.mxu0 %v8470
      %8895 = vmatmul.mubr.bf16.gmra.mrb[0].mxu0 %v8469
      %v8896 = vpop.f32.mrb[0].mxu0
      %v8897 = vadd.f32 %v8824, %v8896
      %v8898 = vpop.f32.mrb[0].mxu0
      %v8899 = vadd.f32 %v8826, %v8898
      %v8900 = vpop.f32.mrb[0].mxu0
      %v8901 = vadd.f32 %v8828, %v8900
      %v8902 = vpop.f32.mrb[0].mxu0
      %v8903 = vadd.f32 %v8830, %v8902
      %8904 = vmatprep.mubr.bf16.mxu0 %v8483
      %8905 = vmatmul.mubr.bf16.gmra.mrb[0].mxu0 %v8482
      %v8906 = vpop.f32.mrb[0].mxu0
      %v8907 = vadd.f32 %v8834, %v8906
      %v8908 = vpop.f32.mrb[0].mxu0
      %v8909 = vadd.f32 %v8836, %v8908
      %v8910 = vpop.f32.mrb[0].mxu0
      %v8911 = vadd.f32 %v8838, %v8910
      %v8912 = vpop.f32.mrb[0].mxu0
      %v8913 = vadd.f32 %v8840, %v8912
      %8914 = vmatprep.mubr.bf16.mxu0 %v8496
      %8915 = vmatmul.mubr.bf16.gmra.mrb[0].mxu0 %v8495
      %v8916 = vpop.f32.mrb[0].mxu0
      %v8917 = vadd.f32 %v8844, %v8916
      %v8918 = vpop.f32.mrb[0].mxu0
      %v8919 = vadd.f32 %v8846, %v8918
      %v8920 = vpop.f32.mrb[0].mxu0
      %v8921 = vadd.f32 %v8848, %v8920
      %v8922 = vpop.f32.mrb[0].mxu0
      %v8923 = vadd.f32 %v8850, %v8922
      %8924 = vdwg.mxu0
      %8925 = vmatprep.subr.bf16.mxu0 %v8037
      %8926 = vmatpush1.bf16.msra.mxu0 %v8036
      %8927 = vmatprep.subr.bf16.mxu0 %v8040
      %8928 = vmatpush1.bf16.msra.mxu0 %v8039
      %8929 = vmatprep.subr.bf16.mxu0 %v8043
      %8930 = vmatpush1.bf16.msra.mxu0 %v8042
      %8931 = vmatprep.subr.bf16.mxu0 %v8046
      %8932 = vmatpush1.bf16.msra.mxu0 %v8045
      %8933 = vmatprep.subr.bf16.mxu0 %v8049
      %8934 = vmatpush1.bf16.msra.mxu0 %v8048
      %8935 = vmatprep.subr.bf16.mxu0 %v8052
      %8936 = vmatpush1.bf16.msra.mxu0 %v8051
      %8937 = vmatprep.subr.bf16.mxu0 %v8055
      %8938 = vmatpush1.bf16.msra.mxu0 %v8054
      %8939 = vmatprep.subr.bf16.mxu0 %v8058
      %8940 = vmatpush1.bf16.msra.mxu0 %v8057
      %8941 = vmatprep.subr.bf16.mxu0 %v8061
      %8942 = vmatpush1.bf16.msra.mxu0 %v8060
      %8943 = vmatprep.subr.bf16.mxu0 %v8064
      %8944 = vmatpush1.bf16.msra.mxu0 %v8063
      %8945 = vmatprep.subr.bf16.mxu0 %v8067
      %8946 = vmatpush1.bf16.msra.mxu0 %v8066
      %8947 = vmatprep.subr.bf16.mxu0 %v8070
      %8948 = vmatpush1.bf16.msra.mxu0 %v8069
      %8949 = vmatprep.subr.bf16.mxu0 %v8073
      %8950 = vmatpush1.bf16.msra.mxu0 %v8072
      %8951 = vmatprep.subr.bf16.mxu0 %v8076
      %8952 = vmatpush1.bf16.msra.mxu0 %v8075
      %8953 = vmatprep.subr.bf16.mxu0 %v8079
      %8954 = vmatpush1.bf16.msra.mxu0 %v8078
      %8955 = vmatprep.subr.bf16.mxu0 %v8082
      %8956 = vmatpush1.bf16.msra.mxu0 %v8081
      %8957 = vmatprep.mubr.bf16.mxu0 %v8459
      %8958 = vmatmul.mubr.bf16.gmra.mrb[0].mxu0 %v8458
      %v8959 = vpop.f32.mrb[0].mxu0
      %v8960 = vadd.f32 %v8887, %v8959
      %v8961 = vpop.f32.mrb[0].mxu0
      %v8962 = vadd.f32 %v8889, %v8961
      %v8963 = vpop.f32.mrb[0].mxu0
      %v8964 = vadd.f32 %v8891, %v8963
      %v8965 = vpop.f32.mrb[0].mxu0
      %v8966 = vadd.f32 %v8893, %v8965
      %8967 = vmatprep.mubr.bf16.mxu0 %v8472
      %8968 = vmatmul.mubr.bf16.gmra.mrb[0].mxu0 %v8471
      %v8969 = vpop.f32.mrb[0].mxu0
      %v8970 = vadd.f32 %v8897, %v8969
      %v8971 = vpop.f32.mrb[0].mxu0
      %v8972 = vadd.f32 %v8899, %v8971
      %v8973 = vpop.f32.mrb[0].mxu0
      %v8974 = vadd.f32 %v8901, %v8973
      %v8975 = vpop.f32.mrb[0].mxu0
      %v8976 = vadd.f32 %v8903, %v8975
      %8977 = vmatprep.mubr.bf16.mxu0 %v8485
      %8978 = vmatmul.mubr.bf16.gmra.mrb[0].mxu0 %v8484
      %v8979 = vpop.f32.mrb[0].mxu0
      %v8980 = vadd.f32 %v8907, %v8979
      %v8981 = vpop.f32.mrb[0].mxu0
      %v8982 = vadd.f32 %v8909, %v8981
      %v8983 = vpop.f32.mrb[0].mxu0
      %v8984 = vadd.f32 %v8911, %v8983
      %v8985 = vpop.f32.mrb[0].mxu0
      %v8986 = vadd.f32 %v8913, %v8985
      %8987 = vmatprep.mubr.bf16.mxu0 %v8498
      %8988 = vmatmul.mubr.bf16.gmra.mrb[0].mxu0 %v8497
      %v8989 = vpop.f32.mrb[0].mxu0
      %v8990 = vadd.f32 %v8917, %v8989
      %v8991 = vpop.f32.mrb[0].mxu0
      %v8992 = vadd.f32 %v8919, %v8991
      %v8993 = vpop.f32.mrb[0].mxu0
      %v8994 = vadd.f32 %v8921, %v8993
      %v8995 = vpop.f32.mrb[0].mxu0
      %v8996 = vadd.f32 %v8923, %v8995
      %8997 = vdwg.mxu0
      %8998 = vmatprep.subr.bf16.mxu0 %v8085
      %8999 = vmatpush1.bf16.msra.mxu0 %v8084
      %9000 = vmatprep.subr.bf16.mxu0 %v8088
      %9001 = vmatpush1.bf16.msra.mxu0 %v8087
      %9002 = vmatprep.subr.bf16.mxu0 %v8091
      %9003 = vmatpush1.bf16.msra.mxu0 %v8090
      %9004 = vmatprep.subr.bf16.mxu0 %v8094
      %9005 = vmatpush1.bf16.msra.mxu0 %v8093
      %9006 = vmatprep.subr.bf16.mxu0 0
      %9007 = vmatpush1.bf16.msra.mxu0 0
      %9008 = vmatprep.subr.bf16.mxu0 0
      %9009 = vmatpush1.bf16.msra.mxu0 0
      %9010 = vmatprep.subr.bf16.mxu0 0
      %9011 = vmatpush1.bf16.msra.mxu0 0
      %9012 = vmatprep.subr.bf16.mxu0 0
      %9013 = vmatpush1.bf16.msra.mxu0 0
      %9014 = vmatprep.subr.bf16.mxu0 0
      %9015 = vmatpush1.bf16.msra.mxu0 0
      %9016 = vmatprep.subr.bf16.mxu0 0
      %9017 = vmatpush1.bf16.msra.mxu0 0
      %9018 = vmatprep.subr.bf16.mxu0 0
      %9019 = vmatpush1.bf16.msra.mxu0 0
      %9020 = vmatprep.subr.bf16.mxu0 0
      %9021 = vmatpush1.bf16.msra.mxu0 0
      %9022 = vmatprep.subr.bf16.mxu0 0
      %9023 = vmatpush1.bf16.msra.mxu0 0
      %9024 = vmatprep.subr.bf16.mxu0 0
      %9025 = vmatpush1.bf16.msra.mxu0 0
      %9026 = vmatprep.subr.bf16.mxu0 0
      %9027 = vmatpush1.bf16.msra.mxu0 0
      %9028 = vmatprep.subr.bf16.mxu0 0
      %9029 = vmatpush1.bf16.msra.mxu0 0
      %9030 = vmatprep.mubr.bf16.mxu0 0
      %9031 = vmatmul.mubr.bf16.gmra.mrb[0].mxu0 %v8549
      %v9032 = vpop.f32.mrb[0].mxu0
      %v9033 = vadd.f32 %v8960, %v9032
      %v9034 = vpop.f32.mrb[0].mxu0
      %v9035 = vadd.f32 %v8962, %v9034
      %v9036 = vpop.f32.mrb[0].mxu0
      %v9037 = vadd.f32 %v8964, %v9036
      %v9038 = vpop.f32.mrb[0].mxu0
      %v9039 = vadd.f32 %v8966, %v9038
      %9040 = vmatprep.mubr.bf16.mxu0 0
      %9041 = vmatmul.mubr.bf16.gmra.mrb[0].mxu0 %v8552
      %v9042 = vpop.f32.mrb[0].mxu0
      %v9043 = vadd.f32 %v8970, %v9042
      %v9044 = vpop.f32.mrb[0].mxu0
      %v9045 = vadd.f32 %v8972, %v9044
      %v9046 = vpop.f32.mrb[0].mxu0
      %v9047 = vadd.f32 %v8974, %v9046
      %v9048 = vpop.f32.mrb[0].mxu0
      %v9049 = vadd.f32 %v8976, %v9048
      %9050 = vmatprep.mubr.bf16.mxu0 0
      %9051 = vmatmul.mubr.bf16.gmra.mrb[0].mxu0 %v8555
      %v9052 = vpop.f32.mrb[0].mxu0
      %v9053 = vadd.f32 %v8980, %v9052
      %v9054 = vpop.f32.mrb[0].mxu0
      %v9055 = vadd.f32 %v8982, %v9054
      %v9056 = vpop.f32.mrb[0].mxu0
      %v9057 = vadd.f32 %v8984, %v9056
      %v9058 = vpop.f32.mrb[0].mxu0
      %v9059 = vadd.f32 %v8986, %v9058
      %9060 = vmatprep.mubr.bf16.mxu0 0
      %9061 = vmatmul.mubr.bf16.gmra.mrb[0].mxu0 %v8558
      %v9062 = vpop.f32.mrb[0].mxu0
      %v9063 = vadd.f32 %v8990, %v9062
      %v9064 = vpop.f32.mrb[0].mxu0
      %v9065 = vadd.f32 %v8992, %v9064
      %v9066 = vpop.f32.mrb[0].mxu0
      %v9067 = vadd.f32 %v8994, %v9066
      %v9068 = vpop.f32.mrb[0].mxu0
      %v9069 = vadd.f32 %v8996, %v9068
      %9070 = vdwg.mxu0
      %9071 = vmatprep.subr.bf16.mxu0 %v6737
      %9072 = vmatpush1.bf16.msra.mxu0 %v6705
      %9073 = vmatprep.subr.bf16.mxu0 %v6740
      %9074 = vmatpush1.bf16.msra.mxu0 %v6708
      %9075 = vmatprep.subr.bf16.mxu0 %v6743
      %9076 = vmatpush1.bf16.msra.mxu0 %v6711
      %9077 = vmatprep.subr.bf16.mxu0 %v6746
      %9078 = vmatpush1.bf16.msra.mxu0 %v6714
      %9079 = vmatprep.subr.bf16.mxu0 %v6763
      %9080 = vmatpush1.bf16.msra.mxu0 %v6790
      %9081 = vmatprep.subr.bf16.mxu0 %v6771
      %9082 = vmatpush1.bf16.msra.mxu0 %v6793
      %9083 = vmatprep.subr.bf16.mxu0 %v6779
      %9084 = vmatpush1.bf16.msra.mxu0 %v6796
      %9085 = vmatprep.subr.bf16.mxu0 %v6787
      %9086 = vmatpush1.bf16.msra.mxu0 %v6799
      %9087 = vmatprep.subr.bf16.mxu0 %v6823
      %9088 = vmatpush1.bf16.msra.mxu0 %v6850
      %9089 = vmatprep.subr.bf16.mxu0 %v6831
      %9090 = vmatpush1.bf16.msra.mxu0 %v6853
      %9091 = vmatprep.subr.bf16.mxu0 %v6839
      %9092 = vmatpush1.bf16.msra.mxu0 %v6856
      %9093 = vmatprep.subr.bf16.mxu0 %v6847
      %9094 = vmatpush1.bf16.msra.mxu0 %v6859
      %9095 = vmatprep.subr.bf16.mxu0 %v6883
      %9096 = vmatpush1.bf16.msra.mxu0 %v6910
      %9097 = vmatprep.subr.bf16.mxu0 %v6891
      %9098 = vmatpush1.bf16.msra.mxu0 %v6913
      %9099 = vmatprep.subr.bf16.mxu0 %v6899
      %9100 = vmatpush1.bf16.msra.mxu0 %v6916
      %9101 = vmatprep.subr.bf16.mxu0 %v6907
      %9102 = vmatpush1.bf16.msra.mxu0 %v6919
      %9103 = vmatprep.mubr.bf16.mxu0 %v8449
      %9104 = vmatmul.mubr.bf16.gmra.mrb[0].mxu0 %v8448
      %v9105 = vpop.f32.mrb[0].mxu0
      %v9106 = vadd.f32 %v8251, %v9105
      %v9107 = vpop.f32.mrb[0].mxu0
      %v9108 = vadd.f32 %v8251, %v9107
      %v9109 = vpop.f32.mrb[0].mxu0
      %v9110 = vadd.f32 %v8256, %v9109
      %v9111 = vpop.f32.mrb[0].mxu0
      %v9112 = vadd.f32 %v8256, %v9111
      %9113 = vmatprep.mubr.bf16.mxu0 %v8462
      %9114 = vmatmul.mubr.bf16.gmra.mrb[0].mxu0 %v8461
      %v9115 = vpop.f32.mrb[0].mxu0
      %v9116 = vadd.f32 %v8261, %v9115
      %v9117 = vpop.f32.mrb[0].mxu0
      %v9118 = vadd.f32 %v8261, %v9117
      %v9119 = vpop.f32.mrb[0].mxu0
      %v9120 = vadd.f32 %v8266, %v9119
      %v9121 = vpop.f32.mrb[0].mxu0
      %v9122 = vadd.f32 %v8266, %v9121
      %9123 = vmatprep.mubr.bf16.mxu0 %v8475
      %9124 = vmatmul.mubr.bf16.gmra.mrb[0].mxu0 %v8474
      %v9125 = vpop.f32.mrb[0].mxu0
      %v9126 = vadd.f32 %v8271, %v9125
      %v9127 = vpop.f32.mrb[0].mxu0
      %v9128 = vadd.f32 %v8271, %v9127
      %v9129 = vpop.f32.mrb[0].mxu0
      %v9130 = vadd.f32 %v8276, %v9129
      %v9131 = vpop.f32.mrb[0].mxu0
      %v9132 = vadd.f32 %v8276, %v9131
      %9133 = vmatprep.mubr.bf16.mxu0 %v8488
      %9134 = vmatmul.mubr.bf16.gmra.mrb[0].mxu0 %v8487
      %v9135 = vpop.f32.mrb[0].mxu0
      %v9136 = vadd.f32 %v8281, %v9135
      %v9137 = vpop.f32.mrb[0].mxu0
      %v9138 = vadd.f32 %v8281, %v9137
      %v9139 = vpop.f32.mrb[0].mxu0
      %v9140 = vadd.f32 %v8286, %v9139
      %v9141 = vpop.f32.mrb[0].mxu0
      %v9142 = vadd.f32 %v8286, %v9141
      %9143 = vdwg.mxu0
      %9144 = vmatprep.subr.bf16.mxu0 %v6943
      %9145 = vmatpush1.bf16.msra.mxu0 %v6970
      %9146 = vmatprep.subr.bf16.mxu0 %v6951
      %9147 = vmatpush1.bf16.msra.mxu0 %v6973
      %9148 = vmatprep.subr.bf16.mxu0 %v6959
      %9149 = vmatpush1.bf16.msra.mxu0 %v6976
      %9150 = vmatprep.subr.bf16.mxu0 %v6967
      %9151 = vmatpush1.bf16.msra.mxu0 %v6979
      %9152 = vmatprep.subr.bf16.mxu0 %v7003
      %9153 = vmatpush1.bf16.msra.mxu0 %v7030
      %9154 = vmatprep.subr.bf16.mxu0 %v7011
      %9155 = vmatpush1.bf16.msra.mxu0 %v7033
      %9156 = vmatprep.subr.bf16.mxu0 %v7019
      %9157 = vmatpush1.bf16.msra.mxu0 %v7036
      %9158 = vmatprep.subr.bf16.mxu0 %v7027
      %9159 = vmatpush1.bf16.msra.mxu0 %v7039
      %9160 = vmatprep.subr.bf16.mxu0 %v7063
      %9161 = vmatpush1.bf16.msra.mxu0 %v7090
      %9162 = vmatprep.subr.bf16.mxu0 %v7071
      %9163 = vmatpush1.bf16.msra.mxu0 %v7093
      %9164 = vmatprep.subr.bf16.mxu0 %v7079
      %9165 = vmatpush1.bf16.msra.mxu0 %v7096
      %9166 = vmatprep.subr.bf16.mxu0 %v7087
      %9167 = vmatpush1.bf16.msra.mxu0 %v7099
      %9168 = vmatprep.subr.bf16.mxu0 %v7123
      %9169 = vmatpush1.bf16.msra.mxu0 %v7150
      %9170 = vmatprep.subr.bf16.mxu0 %v7131
      %9171 = vmatpush1.bf16.msra.mxu0 %v7153
      %9172 = vmatprep.subr.bf16.mxu0 %v7139
      %9173 = vmatpush1.bf16.msra.mxu0 %v7156
      %9174 = vmatprep.subr.bf16.mxu0 %v7147
      %9175 = vmatpush1.bf16.msra.mxu0 %v7159
      %9176 = vmatprep.mubr.bf16.mxu0 %v8451
      %9177 = vmatmul.mubr.bf16.gmra.mrb[0].mxu0 %v8450
      %v9178 = vpop.f32.mrb[0].mxu0
      %v9179 = vadd.f32 %v9106, %v9178
      %v9180 = vpop.f32.mrb[0].mxu0
      %v9181 = vadd.f32 %v9108, %v9180
      %v9182 = vpop.f32.mrb[0].mxu0
      %v9183 = vadd.f32 %v9110, %v9182
      %v9184 = vpop.f32.mrb[0].mxu0
      %v9185 = vadd.f32 %v9112, %v9184
      %9186 = vmatprep.mubr.bf16.mxu0 %v8464
      %9187 = vmatmul.mubr.bf16.gmra.mrb[0].mxu0 %v8463
      %v9188 = vpop.f32.mrb[0].mxu0
      %v9189 = vadd.f32 %v9116, %v9188
      %v9190 = vpop.f32.mrb[0].mxu0
      %v9191 = vadd.f32 %v9118, %v9190
      %v9192 = vpop.f32.mrb[0].mxu0
      %v9193 = vadd.f32 %v9120, %v9192
      %v9194 = vpop.f32.mrb[0].mxu0
      %v9195 = vadd.f32 %v9122, %v9194
      %9196 = vmatprep.mubr.bf16.mxu0 %v8477
      %9197 = vmatmul.mubr.bf16.gmra.mrb[0].mxu0 %v8476
      %v9198 = vpop.f32.mrb[0].mxu0
      %v9199 = vadd.f32 %v9126, %v9198
      %v9200 = vpop.f32.mrb[0].mxu0
      %v9201 = vadd.f32 %v9128, %v9200
      %v9202 = vpop.f32.mrb[0].mxu0
      %v9203 = vadd.f32 %v9130, %v9202
      %v9204 = vpop.f32.mrb[0].mxu0
      %v9205 = vadd.f32 %v9132, %v9204
      %9206 = vmatprep.mubr.bf16.mxu0 %v8490
      %9207 = vmatmul.mubr.bf16.gmra.mrb[0].mxu0 %v8489
      %v9208 = vpop.f32.mrb[0].mxu0
      %v9209 = vadd.f32 %v9136, %v9208
      %v9210 = vpop.f32.mrb[0].mxu0
      %v9211 = vadd.f32 %v9138, %v9210
      %v9212 = vpop.f32.mrb[0].mxu0
      %v9213 = vadd.f32 %v9140, %v9212
      %v9214 = vpop.f32.mrb[0].mxu0
      %v9215 = vadd.f32 %v9142, %v9214
      %9216 = vdwg.mxu0
      %9217 = vmatprep.subr.bf16.mxu0 %v7183
      %9218 = vmatpush1.bf16.msra.mxu0 %v7210
      %9219 = vmatprep.subr.bf16.mxu0 %v7191
      %9220 = vmatpush1.bf16.msra.mxu0 %v7213
      %9221 = vmatprep.subr.bf16.mxu0 %v7199
      %9222 = vmatpush1.bf16.msra.mxu0 %v7216
      %9223 = vmatprep.subr.bf16.mxu0 %v7207
      %9224 = vmatpush1.bf16.msra.mxu0 %v7219
      %9225 = vmatprep.subr.bf16.mxu0 %v7243
      %9226 = vmatpush1.bf16.msra.mxu0 %v7270
      %9227 = vmatprep.subr.bf16.mxu0 %v7251
      %9228 = vmatpush1.bf16.msra.mxu0 %v7273
      %9229 = vmatprep.subr.bf16.mxu0 %v7259
      %9230 = vmatpush1.bf16.msra.mxu0 %v7276
      %9231 = vmatprep.subr.bf16.mxu0 %v7267
      %9232 = vmatpush1.bf16.msra.mxu0 %v7279
      %9233 = vmatprep.subr.bf16.mxu0 %v7303
      %9234 = vmatpush1.bf16.msra.mxu0 %v7330
      %9235 = vmatprep.subr.bf16.mxu0 %v7311
      %9236 = vmatpush1.bf16.msra.mxu0 %v7333
      %9237 = vmatprep.subr.bf16.mxu0 %v7319
      %9238 = vmatpush1.bf16.msra.mxu0 %v7336
      %9239 = vmatprep.subr.bf16.mxu0 %v7327
      %9240 = vmatpush1.bf16.msra.mxu0 %v7339
      %9241 = vmatprep.subr.bf16.mxu0 %v7363
      %9242 = vmatpush1.bf16.msra.mxu0 %v7390
      %9243 = vmatprep.subr.bf16.mxu0 %v7371
      %9244 = vmatpush1.bf16.msra.mxu0 %v7393
      %9245 = vmatprep.subr.bf16.mxu0 %v7379
      %9246 = vmatpush1.bf16.msra.mxu0 %v7396
      %9247 = vmatprep.subr.bf16.mxu0 %v7387
      %9248 = vmatpush1.bf16.msra.mxu0 %v7399
      %9249 = vmatprep.mubr.bf16.mxu0 %v8453
      %9250 = vmatmul.mubr.bf16.gmra.mrb[0].mxu0 %v8452
      %v9251 = vpop.f32.mrb[0].mxu0
      %v9252 = vadd.f32 %v9179, %v9251
      %v9253 = vpop.f32.mrb[0].mxu0
      %v9254 = vadd.f32 %v9181, %v9253
      %v9255 = vpop.f32.mrb[0].mxu0
      %v9256 = vadd.f32 %v9183, %v9255
      %v9257 = vpop.f32.mrb[0].mxu0
      %v9258 = vadd.f32 %v9185, %v9257
      %9259 = vmatprep.mubr.bf16.mxu0 %v8466
      %9260 = vmatmul.mubr.bf16.gmra.mrb[0].mxu0 %v8465
      %v9261 = vpop.f32.mrb[0].mxu0
      %v9262 = vadd.f32 %v9189, %v9261
      %v9263 = vpop.f32.mrb[0].mxu0
      %v9264 = vadd.f32 %v9191, %v9263
      %v9265 = vpop.f32.mrb[0].mxu0
      %v9266 = vadd.f32 %v9193, %v9265
      %v9267 = vpop.f32.mrb[0].mxu0
      %v9268 = vadd.f32 %v9195, %v9267
      %9269 = vmatprep.mubr.bf16.mxu0 %v8479
      %9270 = vmatmul.mubr.bf16.gmra.mrb[0].mxu0 %v8478
      %v9271 = vpop.f32.mrb[0].mxu0
      %v9272 = vadd.f32 %v9199, %v9271
      %v9273 = vpop.f32.mrb[0].mxu0
      %v9274 = vadd.f32 %v9201, %v9273
      %v9275 = vpop.f32.mrb[0].mxu0
      %v9276 = vadd.f32 %v9203, %v9275
      %v9277 = vpop.f32.mrb[0].mxu0
      %v9278 = vadd.f32 %v9205, %v9277
      %9279 = vmatprep.mubr.bf16.mxu0 %v8492
      %9280 = vmatmul.mubr.bf16.gmra.mrb[0].mxu0 %v8491
      %v9281 = vpop.f32.mrb[0].mxu0
      %v9282 = vadd.f32 %v9209, %v9281
      %v9283 = vpop.f32.mrb[0].mxu0
      %v9284 = vadd.f32 %v9211, %v9283
      %v9285 = vpop.f32.mrb[0].mxu0
      %v9286 = vadd.f32 %v9213, %v9285
      %v9287 = vpop.f32.mrb[0].mxu0
      %v9288 = vadd.f32 %v9215, %v9287
      %9289 = vdwg.mxu0
      %9290 = vmatprep.subr.bf16.mxu0 %v7423
      %9291 = vmatpush1.bf16.msra.mxu0 %v7450
      %9292 = vmatprep.subr.bf16.mxu0 %v7431
      %9293 = vmatpush1.bf16.msra.mxu0 %v7453
      %9294 = vmatprep.subr.bf16.mxu0 %v7439
      %9295 = vmatpush1.bf16.msra.mxu0 %v7456
      %9296 = vmatprep.subr.bf16.mxu0 %v7447
      %9297 = vmatpush1.bf16.msra.mxu0 %v7459
      %9298 = vmatprep.subr.bf16.mxu0 %v7483
      %9299 = vmatpush1.bf16.msra.mxu0 %v7510
      %9300 = vmatprep.subr.bf16.mxu0 %v7491
      %9301 = vmatpush1.bf16.msra.mxu0 %v7513
      %9302 = vmatprep.subr.bf16.mxu0 %v7499
      %9303 = vmatpush1.bf16.msra.mxu0 %v7516
      %9304 = vmatprep.subr.bf16.mxu0 %v7507
      %9305 = vmatpush1.bf16.msra.mxu0 %v7519
      %9306 = vmatprep.subr.bf16.mxu0 %v7543
      %9307 = vmatpush1.bf16.msra.mxu0 %v7570
      %9308 = vmatprep.subr.bf16.mxu0 %v7551
      %9309 = vmatpush1.bf16.msra.mxu0 %v7573
      %9310 = vmatprep.subr.bf16.mxu0 %v7559
      %9311 = vmatpush1.bf16.msra.mxu0 %v7576
      %9312 = vmatprep.subr.bf16.mxu0 %v7567
      %9313 = vmatpush1.bf16.msra.mxu0 %v7579
      %9314 = vmatprep.subr.bf16.mxu0 %v7603
      %9315 = vmatpush1.bf16.msra.mxu0 %v7630
      %9316 = vmatprep.subr.bf16.mxu0 %v7611
      %9317 = vmatpush1.bf16.msra.mxu0 %v7633
      %9318 = vmatprep.subr.bf16.mxu0 %v7619
      %9319 = vmatpush1.bf16.msra.mxu0 %v7636
      %9320 = vmatprep.subr.bf16.mxu0 %v7627
      %9321 = vmatpush1.bf16.msra.mxu0 %v7639
      %9322 = vmatprep.mubr.bf16.mxu0 %v8455
      %9323 = vmatmul.mubr.bf16.gmra.mrb[0].mxu0 %v8454
      %v9324 = vpop.f32.mrb[0].mxu0
      %v9325 = vadd.f32 %v9252, %v9324
      %v9326 = vpop.f32.mrb[0].mxu0
      %v9327 = vadd.f32 %v9254, %v9326
      %v9328 = vpop.f32.mrb[0].mxu0
      %v9329 = vadd.f32 %v9256, %v9328
      %v9330 = vpop.f32.mrb[0].mxu0
      %v9331 = vadd.f32 %v9258, %v9330
      %9332 = vmatprep.mubr.bf16.mxu0 %v8468
      %9333 = vmatmul.mubr.bf16.gmra.mrb[0].mxu0 %v8467
      %v9334 = vpop.f32.mrb[0].mxu0
      %v9335 = vadd.f32 %v9262, %v9334
      %v9336 = vpop.f32.mrb[0].mxu0
      %v9337 = vadd.f32 %v9264, %v9336
      %v9338 = vpop.f32.mrb[0].mxu0
      %v9339 = vadd.f32 %v9266, %v9338
      %v9340 = vpop.f32.mrb[0].mxu0
      %v9341 = vadd.f32 %v9268, %v9340
      %9342 = vmatprep.mubr.bf16.mxu0 %v8481
      %9343 = vmatmul.mubr.bf16.gmra.mrb[0].mxu0 %v8480
      %v9344 = vpop.f32.mrb[0].mxu0
      %v9345 = vadd.f32 %v9272, %v9344
      %v9346 = vpop.f32.mrb[0].mxu0
      %v9347 = vadd.f32 %v9274, %v9346
      %v9348 = vpop.f32.mrb[0].mxu0
      %v9349 = vadd.f32 %v9276, %v9348
      %v9350 = vpop.f32.mrb[0].mxu0
      %v9351 = vadd.f32 %v9278, %v9350
      %9352 = vmatprep.mubr.bf16.mxu0 %v8494
      %9353 = vmatmul.mubr.bf16.gmra.mrb[0].mxu0 %v8493
      %v9354 = vpop.f32.mrb[0].mxu0
      %v9355 = vadd.f32 %v9282, %v9354
      %v9356 = vpop.f32.mrb[0].mxu0
      %v9357 = vadd.f32 %v9284, %v9356
      %v9358 = vpop.f32.mrb[0].mxu0
      %v9359 = vadd.f32 %v9286, %v9358
      %v9360 = vpop.f32.mrb[0].mxu0
      %v9361 = vadd.f32 %v9288, %v9360
      %9362 = vdwg.mxu0
      %9363 = vmatprep.subr.bf16.mxu0 %v7707
      %9364 = vmatpush1.bf16.msra.mxu0 %v7990
      %9365 = vmatprep.subr.bf16.mxu0 %v7715
      %9366 = vmatpush1.bf16.msra.mxu0 %v7993
      %9367 = vmatprep.subr.bf16.mxu0 %v7723
      %9368 = vmatpush1.bf16.msra.mxu0 %v7996
      %9369 = vmatprep.subr.bf16.mxu0 %v7731
      %9370 = vmatpush1.bf16.msra.mxu0 %v7999
      %9371 = vmatprep.subr.bf16.mxu0 %v7739
      %9372 = vmatpush1.bf16.msra.mxu0 %v8002
      %9373 = vmatprep.subr.bf16.mxu0 %v7747
      %9374 = vmatpush1.bf16.msra.mxu0 %v8005
      %9375 = vmatprep.subr.bf16.mxu0 %v7755
      %9376 = vmatpush1.bf16.msra.mxu0 %v8008
      %9377 = vmatprep.subr.bf16.mxu0 %v7763
      %9378 = vmatpush1.bf16.msra.mxu0 %v8011
      %9379 = vmatprep.subr.bf16.mxu0 %v7771
      %9380 = vmatpush1.bf16.msra.mxu0 %v8014
      %9381 = vmatprep.subr.bf16.mxu0 %v7779
      %9382 = vmatpush1.bf16.msra.mxu0 %v8017
      %9383 = vmatprep.subr.bf16.mxu0 %v7787
      %9384 = vmatpush1.bf16.msra.mxu0 %v8020
      %9385 = vmatprep.subr.bf16.mxu0 %v7795
      %9386 = vmatpush1.bf16.msra.mxu0 %v8023
      %9387 = vmatprep.subr.bf16.mxu0 %v7803
      %9388 = vmatpush1.bf16.msra.mxu0 %v8026
      %9389 = vmatprep.subr.bf16.mxu0 %v7811
      %9390 = vmatpush1.bf16.msra.mxu0 %v8029
      %9391 = vmatprep.subr.bf16.mxu0 %v7819
      %9392 = vmatpush1.bf16.msra.mxu0 %v8032
      %9393 = vmatprep.subr.bf16.mxu0 %v7827
      %9394 = vmatpush1.bf16.msra.mxu0 %v8035
      %9395 = vmatprep.mubr.bf16.mxu0 %v8457
      %9396 = vmatmul.mubr.bf16.gmra.mrb[0].mxu0 %v8456
      %v9397 = vpop.f32.mrb[0].mxu0
      %v9398 = vadd.f32 %v9325, %v9397
      %v9399 = vpop.f32.mrb[0].mxu0
      %v9400 = vadd.f32 %v9327, %v9399
      %v9401 = vpop.f32.mrb[0].mxu0
      %v9402 = vadd.f32 %v9329, %v9401
      %v9403 = vpop.f32.mrb[0].mxu0
      %v9404 = vadd.f32 %v9331, %v9403
      %9405 = vmatprep.mubr.bf16.mxu0 %v8470
      %9406 = vmatmul.mubr.bf16.gmra.mrb[0].mxu0 %v8469
      %v9407 = vpop.f32.mrb[0].mxu0
      %v9408 = vadd.f32 %v9335, %v9407
      %v9409 = vpop.f32.mrb[0].mxu0
      %v9410 = vadd.f32 %v9337, %v9409
      %v9411 = vpop.f32.mrb[0].mxu0
      %v9412 = vadd.f32 %v9339, %v9411
      %v9413 = vpop.f32.mrb[0].mxu0
      %v9414 = vadd.f32 %v9341, %v9413
      %9415 = vmatprep.mubr.bf16.mxu0 %v8483
      %9416 = vmatmul.mubr.bf16.gmra.mrb[0].mxu0 %v8482
      %v9417 = vpop.f32.mrb[0].mxu0
      %v9418 = vadd.f32 %v9345, %v9417
      %v9419 = vpop.f32.mrb[0].mxu0
      %v9420 = vadd.f32 %v9347, %v9419
      %v9421 = vpop.f32.mrb[0].mxu0
      %v9422 = vadd.f32 %v9349, %v9421
      %v9423 = vpop.f32.mrb[0].mxu0
      %v9424 = vadd.f32 %v9351, %v9423
      %9425 = vmatprep.mubr.bf16.mxu0 %v8496
      %9426 = vmatmul.mubr.bf16.gmra.mrb[0].mxu0 %v8495
      %v9427 = vpop.f32.mrb[0].mxu0
      %v9428 = vadd.f32 %v9355, %v9427
      %v9429 = vpop.f32.mrb[0].mxu0
      %v9430 = vadd.f32 %v9357, %v9429
      %v9431 = vpop.f32.mrb[0].mxu0
      %v9432 = vadd.f32 %v9359, %v9431
      %v9433 = vpop.f32.mrb[0].mxu0
      %v9434 = vadd.f32 %v9361, %v9433
      %9435 = vdwg.mxu0
      %9436 = vmatprep.subr.bf16.mxu0 %v7835
      %9437 = vmatpush1.bf16.msra.mxu0 %v8038
      %9438 = vmatprep.subr.bf16.mxu0 %v7843
      %9439 = vmatpush1.bf16.msra.mxu0 %v8041
      %9440 = vmatprep.subr.bf16.mxu0 %v7851
      %9441 = vmatpush1.bf16.msra.mxu0 %v8044
      %9442 = vmatprep.subr.bf16.mxu0 %v7859
      %9443 = vmatpush1.bf16.msra.mxu0 %v8047
      %9444 = vmatprep.subr.bf16.mxu0 %v7867
      %9445 = vmatpush1.bf16.msra.mxu0 %v8050
      %9446 = vmatprep.subr.bf16.mxu0 %v7875
      %9447 = vmatpush1.bf16.msra.mxu0 %v8053
      %9448 = vmatprep.subr.bf16.mxu0 %v7883
      %9449 = vmatpush1.bf16.msra.mxu0 %v8056
      %9450 = vmatprep.subr.bf16.mxu0 %v7891
      %9451 = vmatpush1.bf16.msra.mxu0 %v8059
      %9452 = vmatprep.subr.bf16.mxu0 %v7899
      %9453 = vmatpush1.bf16.msra.mxu0 %v8062
      %9454 = vmatprep.subr.bf16.mxu0 %v7907
      %9455 = vmatpush1.bf16.msra.mxu0 %v8065
      %9456 = vmatprep.subr.bf16.mxu0 %v7915
      %9457 = vmatpush1.bf16.msra.mxu0 %v8068
      %9458 = vmatprep.subr.bf16.mxu0 %v7923
      %9459 = vmatpush1.bf16.msra.mxu0 %v8071
      %9460 = vmatprep.subr.bf16.mxu0 %v7931
      %9461 = vmatpush1.bf16.msra.mxu0 %v8074
      %9462 = vmatprep.subr.bf16.mxu0 %v7939
      %9463 = vmatpush1.bf16.msra.mxu0 %v8077
      %9464 = vmatprep.subr.bf16.mxu0 %v7947
      %9465 = vmatpush1.bf16.msra.mxu0 %v8080
      %9466 = vmatprep.subr.bf16.mxu0 %v7955
      %9467 = vmatpush1.bf16.msra.mxu0 %v8083
      %9468 = vmatprep.mubr.bf16.mxu0 %v8459
      %9469 = vmatmul.mubr.bf16.gmra.mrb[0].mxu0 %v8458
      %v9470 = vpop.f32.mrb[0].mxu0
      %v9471 = vadd.f32 %v9398, %v9470
      %v9472 = vpop.f32.mrb[0].mxu0
      %v9473 = vadd.f32 %v9400, %v9472
      %v9474 = vpop.f32.mrb[0].mxu0
      %v9475 = vadd.f32 %v9402, %v9474
      %v9476 = vpop.f32.mrb[0].mxu0
      %v9477 = vadd.f32 %v9404, %v9476
      %9478 = vmatprep.mubr.bf16.mxu0 %v8472
      %9479 = vmatmul.mubr.bf16.gmra.mrb[0].mxu0 %v8471
      %v9480 = vpop.f32.mrb[0].mxu0
      %v9481 = vadd.f32 %v9408, %v9480
      %v9482 = vpop.f32.mrb[0].mxu0
      %v9483 = vadd.f32 %v9410, %v9482
      %v9484 = vpop.f32.mrb[0].mxu0
      %v9485 = vadd.f32 %v9412, %v9484
      %v9486 = vpop.f32.mrb[0].mxu0
      %v9487 = vadd.f32 %v9414, %v9486
      %9488 = vmatprep.mubr.bf16.mxu0 %v8485
      %9489 = vmatmul.mubr.bf16.gmra.mrb[0].mxu0 %v8484
      %v9490 = vpop.f32.mrb[0].mxu0
      %v9491 = vadd.f32 %v9418, %v9490
      %v9492 = vpop.f32.mrb[0].mxu0
      %v9493 = vadd.f32 %v9420, %v9492
      %v9494 = vpop.f32.mrb[0].mxu0
      %v9495 = vadd.f32 %v9422, %v9494
      %v9496 = vpop.f32.mrb[0].mxu0
      %v9497 = vadd.f32 %v9424, %v9496
      %9498 = vmatprep.mubr.bf16.mxu0 %v8498
      %9499 = vmatmul.mubr.bf16.gmra.mrb[0].mxu0 %v8497
      %v9500 = vpop.f32.mrb[0].mxu0
      %v9501 = vadd.f32 %v9428, %v9500
      %v9502 = vpop.f32.mrb[0].mxu0
      %v9503 = vadd.f32 %v9430, %v9502
      %v9504 = vpop.f32.mrb[0].mxu0
      %v9505 = vadd.f32 %v9432, %v9504
      %v9506 = vpop.f32.mrb[0].mxu0
      %v9507 = vadd.f32 %v9434, %v9506
      %9508 = vdwg.mxu0
      %9509 = vmatprep.subr.bf16.mxu0 %v7963
      %9510 = vmatpush1.bf16.msra.mxu0 %v8086
      %9511 = vmatprep.subr.bf16.mxu0 %v7971
      %9512 = vmatpush1.bf16.msra.mxu0 %v8089
      %9513 = vmatprep.subr.bf16.mxu0 %v7979
      %9514 = vmatpush1.bf16.msra.mxu0 %v8092
      %9515 = vmatprep.subr.bf16.mxu0 %v7987
      %9516 = vmatpush1.bf16.msra.mxu0 %v8095
      %9517 = vmatprep.subr.bf16.mxu0 0
      %9518 = vmatpush1.bf16.msra.mxu0 0
      %9519 = vmatprep.subr.bf16.mxu0 0
      %9520 = vmatpush1.bf16.msra.mxu0 0
      %9521 = vmatprep.subr.bf16.mxu0 0
      %9522 = vmatpush1.bf16.msra.mxu0 0
      %9523 = vmatprep.subr.bf16.mxu0 0
      %9524 = vmatpush1.bf16.msra.mxu0 0
      %9525 = vmatprep.subr.bf16.mxu0 0
      %9526 = vmatpush1.bf16.msra.mxu0 0
      %9527 = vmatprep.subr.bf16.mxu0 0
      %9528 = vmatpush1.bf16.msra.mxu0 0
      %9529 = vmatprep.subr.bf16.mxu0 0
      %9530 = vmatpush1.bf16.msra.mxu0 0
      %9531 = vmatprep.subr.bf16.mxu0 0
      %9532 = vmatpush1.bf16.msra.mxu0 0
      %9533 = vmatprep.subr.bf16.mxu0 0
      %9534 = vmatpush1.bf16.msra.mxu0 0
      %9535 = vmatprep.subr.bf16.mxu0 0
      %9536 = vmatpush1.bf16.msra.mxu0 0
      %9537 = vmatprep.subr.bf16.mxu0 0
      %9538 = vmatpush1.bf16.msra.mxu0 0
      %9539 = vmatprep.subr.bf16.mxu0 0
      %9540 = vmatpush1.bf16.msra.mxu0 0
      %9541 = vmatprep.mubr.bf16.mxu0 0
      %9542 = vmatmul.mubr.bf16.gmra.mrb[0].mxu0 %v8549
      %v9543 = vpop.f32.mrb[0].mxu0
      %v9544 = vadd.f32 %v9471, %v9543
      %v9545 = vpop.f32.mrb[0].mxu0
      %v9546 = vadd.f32 %v9473, %v9545
      %v9547 = vpop.f32.mrb[0].mxu0
      %v9548 = vadd.f32 %v9475, %v9547
      %v9549 = vpop.f32.mrb[0].mxu0
      %v9550 = vadd.f32 %v9477, %v9549
      %9551 = vmatprep.mubr.bf16.mxu0 0
      %9552 = vmatmul.mubr.bf16.gmra.mrb[0].mxu0 %v8552
      %v9553 = vpop.f32.mrb[0].mxu0
      %v9554 = vadd.f32 %v9481, %v9553
      %v9555 = vpop.f32.mrb[0].mxu0
      %v9556 = vadd.f32 %v9483, %v9555
      %v9557 = vpop.f32.mrb[0].mxu0
      %v9558 = vadd.f32 %v9485, %v9557
      %v9559 = vpop.f32.mrb[0].mxu0
      %v9560 = vadd.f32 %v9487, %v9559
      %9561 = vmatprep.mubr.bf16.mxu0 0
      %9562 = vmatmul.mubr.bf16.gmra.mrb[0].mxu0 %v8555
      %v9563 = vpop.f32.mrb[0].mxu0
      %v9564 = vadd.f32 %v9491, %v9563
      %v9565 = vpop.f32.mrb[0].mxu0
      %v9566 = vadd.f32 %v9493, %v9565
      %v9567 = vpop.f32.mrb[0].mxu0
      %v9568 = vadd.f32 %v9495, %v9567
      %v9569 = vpop.f32.mrb[0].mxu0
      %v9570 = vadd.f32 %v9497, %v9569
      %9571 = vmatprep.mubr.bf16.mxu0 0
      %9572 = vmatmul.mubr.bf16.gmra.mrb[0].mxu0 %v8558
      %v9573 = vpop.f32.mrb[0].mxu0
      %v9574 = vadd.f32 %v9501, %v9573
      %v9575 = vpop.f32.mrb[0].mxu0
      %v9576 = vadd.f32 %v9503, %v9575
      %v9577 = vpop.f32.mrb[0].mxu0
      %v9578 = vadd.f32 %v9505, %v9577
      %v9579 = vpop.f32.mrb[0].mxu0
      %v9580 = vadd.f32 %v9507, %v9579
      %9581 = vdwg.mxu0
      %vm9582 = vcmp.ge.f32.partialorder %v9033, 0.0
      %vm9583 = vcmp.ge.f32.partialorder %v9035, 0.0
      %vm9584 = vcmp.ge.f32.partialorder %v9544, 0.0
      %vm9585 = vcmp.ge.f32.partialorder %v9546, 0.0
      %vm9586 = vcmp.ge.f32.partialorder %v9037, 0.0
      %vm9587 = vcmp.ge.f32.partialorder %v9039, 0.0
      %vm9588 = vcmp.ge.f32.partialorder %v9548, 0.0
      %vm9589 = vcmp.ge.f32.partialorder %v9550, 0.0
      %vm9590 = vcmp.ge.f32.partialorder %v9043, 0.0
      %vm9591 = vcmp.ge.f32.partialorder %v9045, 0.0
      %vm9592 = vcmp.ge.f32.partialorder %v9554, 0.0
      %vm9593 = vcmp.ge.f32.partialorder %v9556, 0.0
      %vm9594 = vcmp.ge.f32.partialorder %v9047, 0.0
      %vm9595 = vcmp.ge.f32.partialorder %v9049, 0.0
      %vm9596 = vcmp.ge.f32.partialorder %v9558, 0.0
      %vm9597 = vcmp.ge.f32.partialorder %v9560, 0.0
      %vm9598 = vcmp.ge.f32.partialorder %v9053, 0.0
      %vm9599 = vcmp.ge.f32.partialorder %v9055, 0.0
      %vm9600 = vcmp.ge.f32.partialorder %v9564, 0.0
      %vm9601 = vcmp.ge.f32.partialorder %v9566, 0.0
      %vm9602 = vcmp.ge.f32.partialorder %v9057, 0.0
      %vm9603 = vcmp.ge.f32.partialorder %v9059, 0.0
      %vm9604 = vcmp.ge.f32.partialorder %v9568, 0.0
      %vm9605 = vcmp.ge.f32.partialorder %v9570, 0.0
      %vm9606 = vcmp.ge.f32.partialorder %v9063, 0.0
      %vm9607 = vcmp.ge.f32.partialorder %v9065, 0.0
      %vm9608 = vcmp.ge.f32.partialorder %v9574, 0.0
      %vm9609 = vcmp.ge.f32.partialorder %v9576, 0.0
      %vm9610 = vcmp.ge.f32.partialorder %v9067, 0.0
      %vm9611 = vcmp.ge.f32.partialorder %v9069, 0.0
      %vm9612 = vcmp.ge.f32.partialorder %v9578, 0.0
      %vm9613 = vcmp.ge.f32.partialorder %v9580, 0.0
      %v9614 = vmul.f32 %v9033, 0.01
      %v9615 = vmul.f32 %v9035, 0.01
      %v9616 = vmul.f32 %v9544, 0.01
      %v9617 = vmul.f32 %v9546, 0.01
      %v9618 = vmul.f32 %v9037, 0.01
      %v9619 = vmul.f32 %v9039, 0.01
      %v9620 = vmul.f32 %v9548, 0.01
      %v9621 = vmul.f32 %v9550, 0.01
      %v9622 = vmul.f32 %v9043, 0.01
      %v9623 = vmul.f32 %v9045, 0.01
      %v9624 = vmul.f32 %v9554, 0.01
      %v9625 = vmul.f32 %v9556, 0.01
      %v9626 = vmul.f32 %v9047, 0.01
      %v9627 = vmul.f32 %v9049, 0.01
      %v9628 = vmul.f32 %v9558, 0.01
      %v9629 = vmul.f32 %v9560, 0.01
      %v9630 = vmul.f32 %v9053, 0.01
      %v9631 = vmul.f32 %v9055, 0.01
      %v9632 = vmul.f32 %v9564, 0.01
      %v9633 = vmul.f32 %v9566, 0.01
      %v9634 = vmul.f32 %v9057, 0.01
      %v9635 = vmul.f32 %v9059, 0.01
      %v9636 = vmul.f32 %v9568, 0.01
      %v9637 = vmul.f32 %v9570, 0.01
      %v9638 = vmul.f32 %v9063, 0.01
      %v9639 = vmul.f32 %v9065, 0.01
      %v9640 = vmul.f32 %v9574, 0.01
      %v9641 = vmul.f32 %v9576, 0.01
      %v9642 = vmul.f32 %v9067, 0.01
      %v9643 = vmul.f32 %v9069, 0.01
      %v9644 = vmul.f32 %v9578, 0.01
      %v9645 = vmul.f32 %v9580, 0.01
      %v9646 = vsel %vm9582, %v9033, %v9614
      %v9647 = vsel %vm9583, %v9035, %v9615
      %v9648 = vsel %vm9584, %v9544, %v9616
      %v9649 = vsel %vm9585, %v9546, %v9617
      %v9650 = vsel %vm9586, %v9037, %v9618
      %v9651 = vsel %vm9587, %v9039, %v9619
      %v9652 = vsel %vm9588, %v9548, %v9620
      %v9653 = vsel %vm9589, %v9550, %v9621
      %v9654 = vsel %vm9590, %v9043, %v9622
      %v9655 = vsel %vm9591, %v9045, %v9623
      %v9656 = vsel %vm9592, %v9554, %v9624
      %v9657 = vsel %vm9593, %v9556, %v9625
      %v9658 = vsel %vm9594, %v9047, %v9626
      %v9659 = vsel %vm9595, %v9049, %v9627
      %v9660 = vsel %vm9596, %v9558, %v9628
      %v9661 = vsel %vm9597, %v9560, %v9629
      %v9662 = vsel %vm9598, %v9053, %v9630
      %v9663 = vsel %vm9599, %v9055, %v9631
      %v9664 = vsel %vm9600, %v9564, %v9632
      %v9665 = vsel %vm9601, %v9566, %v9633
      %v9666 = vsel %vm9602, %v9057, %v9634
      %v9667 = vsel %vm9603, %v9059, %v9635
      %v9668 = vsel %vm9604, %v9568, %v9636
      %v9669 = vsel %vm9605, %v9570, %v9637
      %v9670 = vsel %vm9606, %v9063, %v9638
      %v9671 = vsel %vm9607, %v9065, %v9639
      %v9672 = vsel %vm9608, %v9574, %v9640
      %v9673 = vsel %vm9609, %v9576, %v9641
      %v9674 = vsel %vm9610, %v9067, %v9642
      %v9675 = vsel %vm9611, %v9069, %v9643
      %v9676 = vsel %vm9612, %v9578, %v9644
      %v9677 = vsel %vm9613, %v9580, %v9645
      %v9678 = vpack.c.bf16 %v9650, %v9646
      %v9679 = vpack.c.bf16 %v9651, %v9647
      %v9680 = vpack.c.bf16 %v9652, %v9648
      %v9681 = vpack.c.bf16 %v9653, %v9649
      %v9682 = vpack.c.bf16 %v9658, %v9654
      %v9683 = vpack.c.bf16 %v9659, %v9655
      %v9684 = vpack.c.bf16 %v9660, %v9656
      %v9685 = vpack.c.bf16 %v9661, %v9657
      %v9686 = vpack.c.bf16 %v9666, %v9662
      %v9687 = vpack.c.bf16 %v9667, %v9663
      %v9688 = vpack.c.bf16 %v9668, %v9664
      %v9689 = vpack.c.bf16 %v9669, %v9665
      %v9690 = vpack.c.bf16 %v9674, %v9670
      %v9691 = vpack.c.bf16 %v9675, %v9671
      %v9692 = vpack.c.bf16 %v9676, %v9672
      %v9693 = vpack.c.bf16 %v9677, %v9673
      %v9694 = vld [vmem:[%s24] sm:$0x1]
      %v9696 = vsel %vm5845, %v9694, 0
      %9698 = vmatprep.subr.bf16.mxu0 %v9679
      %9699 = vmatpush1.bf16.msra.mxu0 %v9678
      %9700 = vmatprep.subr.bf16.mxu0 %v9683
      %9701 = vmatpush1.bf16.msra.mxu0 %v9682
      %9702 = vmatprep.subr.bf16.mxu0 %v9687
      %9703 = vmatpush1.bf16.msra.mxu0 %v9686
      %9704 = vmatprep.subr.bf16.mxu0 %v9691
      %9705 = vmatpush1.bf16.msra.mxu0 %v9690
      %9706 = vmatprep.subr.bf16.mxu0 0
      %9707 = vmatpush1.bf16.msra.mxu0 0
      %9708 = vmatprep.subr.bf16.mxu0 0
      %9709 = vmatpush1.bf16.msra.mxu0 0
      %9710 = vmatprep.subr.bf16.mxu0 0
      %9711 = vmatpush1.bf16.msra.mxu0 0
      %9712 = vmatprep.subr.bf16.mxu0 0
      %9713 = vmatpush1.bf16.msra.mxu0 0
      %9714 = vmatprep.subr.bf16.mxu0 0
      %9715 = vmatpush1.bf16.msra.mxu0 0
      %9716 = vmatprep.subr.bf16.mxu0 0
      %9717 = vmatpush1.bf16.msra.mxu0 0
      %9718 = vmatprep.subr.bf16.mxu0 0
      %9719 = vmatpush1.bf16.msra.mxu0 0
      %9720 = vmatprep.subr.bf16.mxu0 0
      %9721 = vmatpush1.bf16.msra.mxu0 0
      %9722 = vmatprep.subr.bf16.mxu0 0
      %9723 = vmatpush1.bf16.msra.mxu0 0
      %9724 = vmatprep.subr.bf16.mxu0 0
      %9725 = vmatpush1.bf16.msra.mxu0 0
      %9726 = vmatprep.subr.bf16.mxu0 0
      %9727 = vmatpush1.bf16.msra.mxu0 0
      %9728 = vmatprep.subr.bf16.mxu0 0
      %9729 = vmatpush1.bf16.msra.mxu0 0
      %9730 = vmatprep.mubr.bf16.mxu0 0
      %9731 = vmatmul.mubr.bf16.gmra.mrb[0].mxu0 %v9696
      %v9732 = vpop.f32.mrb[0].mxu0
      %v9733 = vadd.f32 0.0, %v9732
      %v9734 = vpop.f32.mrb[0].mxu0
      %v9735 = vadd.f32 0.0, %v9734
      %v9736 = vpop.f32.mrb[0].mxu0
      %v9737 = vpop.f32.mrb[0].mxu0
      %9738 = vdwg.mxu0
      %9739 = vmatprep.subr.bf16.mxu0 %v9681
      %9740 = vmatpush1.bf16.msra.mxu0 %v9680
      %9741 = vmatprep.subr.bf16.mxu0 %v9685
      %9742 = vmatpush1.bf16.msra.mxu0 %v9684
      %9743 = vmatprep.subr.bf16.mxu0 %v9689
      %9744 = vmatpush1.bf16.msra.mxu0 %v9688
      %9745 = vmatprep.subr.bf16.mxu0 %v9693
      %9746 = vmatpush1.bf16.msra.mxu0 %v9692
      %9747 = vmatprep.subr.bf16.mxu0 0
      %9748 = vmatpush1.bf16.msra.mxu0 0
      %9749 = vmatprep.subr.bf16.mxu0 0
      %9750 = vmatpush1.bf16.msra.mxu0 0
      %9751 = vmatprep.subr.bf16.mxu0 0
      %9752 = vmatpush1.bf16.msra.mxu0 0
      %9753 = vmatprep.subr.bf16.mxu0 0
      %9754 = vmatpush1.bf16.msra.mxu0 0
      %9755 = vmatprep.subr.bf16.mxu0 0
      %9756 = vmatpush1.bf16.msra.mxu0 0
      %9757 = vmatprep.subr.bf16.mxu0 0
      %9758 = vmatpush1.bf16.msra.mxu0 0
      %9759 = vmatprep.subr.bf16.mxu0 0
      %9760 = vmatpush1.bf16.msra.mxu0 0
      %9761 = vmatprep.subr.bf16.mxu0 0
      %9762 = vmatpush1.bf16.msra.mxu0 0
      %9763 = vmatprep.subr.bf16.mxu0 0
      %9764 = vmatpush1.bf16.msra.mxu0 0
      %9765 = vmatprep.subr.bf16.mxu0 0
      %9766 = vmatpush1.bf16.msra.mxu0 0
      %9767 = vmatprep.subr.bf16.mxu0 0
      %9768 = vmatpush1.bf16.msra.mxu0 0
      %9769 = vmatprep.subr.bf16.mxu0 0
      %9770 = vmatpush1.bf16.msra.mxu0 0
      %9771 = vmatprep.mubr.bf16.mxu0 0
      %9772 = vmatmul.mubr.bf16.gmra.mrb[0].mxu0 %v9696
      %v9773 = vpop.f32.mrb[0].mxu0
      %v9774 = vadd.f32 0.0, %v9773
      %v9775 = vpop.f32.mrb[0].mxu0
      %v9776 = vadd.f32 0.0, %v9775
      %v9777 = vpop.f32.mrb[0].mxu0
      %v9778 = vpop.f32.mrb[0].mxu0
      %9779 = vdwg.mxu0
      %v9784 = vcombine.low %v9733, %v9735
      %v9785 = vcombine.low %v9774, %v9776
      %v9787 = vunpack.c.l.s4 1983009808
      %v9788 = vunpack.c.0.s8 %v9787
      %v9789 = vlaneseq
      %v9790 = vshrl.u32 %v9789, 7
      %v9791 = vsub.s32 %v9788, %v9790
      %v9792 = vrot.slane %v9784, %v9791
      %v9794 = vunpack.c.l.s4 1983009808
      %v9795 = vunpack.c.0.s8 %v9794
      %v9796 = vlaneseq
      %v9797 = vshrl.u32 %v9796, 7
      %v9798 = vsub.s32 %v9795, %v9797
      %v9799 = vrot.slane %v9785, %v9798
      %v9800 = vcombine.low %v9792, %v9799
      %vm9802 = vcmask 1041408
      %vm9803 = vcmask 1043458
      %vm9804 = vmor %vm9803, %vm9802
      %vm9805 = vcmask 1045508
      %vm9806 = vmor %vm9805, %vm9804
      %vm9807 = vcmask 130054
      %vm9808 = vmor %vm9807, %vm9806
      %9809 = vst.msk [vmem:[%s764] sm:$0xff] %vm9808, %v9800
      %p9810 = scmp.lt.s32.totalorder %s36, 1
      %s9811 = scalar_select %p9810, %s36, 1
      %s9812 = smul.addr %s9811, 4
      %s9813 = smul.addr %s9812, 2
      %s9814 = scalar_lea.vmem %s25, %s9813
      // Predicated region
      $region121: #{_lambda_.1} parent=119 // pred_check
        %p9815 = pneg %p584
      $region122: #{_lambda_.1} parent=119 // pred_check_branch
        %9817 = sbr.rel (%p9815) target = $region124
      $region123: #{_lambda_.1} parent=119 // pred_region
        _
      $region124: #{_lambda_.1} parent=119 // pred_fallthru
        _
    $region120: #{_lambda_.1} parent=5 // pred_fallthru
      _
    %p9818 = scmp.le.s32.totalorder 2, %s31
    // Predicated region
    $region125: #{_lambda_.1} parent=5 // pred_check
      %p9819 = pneg %p9818
    $region126: #{_lambda_.1} parent=5 // pred_check_branch
      %9821 = sbr.rel (%p9819) target = $region128
    $region127: #{_lambda_.1} parent=5 // pred_region
      %s9822 = ssub.s32 %s31, 2
      // Predicated region
      $region129: #{_lambda_.1} parent=127 // pred_check
        %p9823 = pneg %p590
      $region130: #{_lambda_.1} parent=127 // pred_check_branch
        %9825 = sbr.rel (%p9823) target = $region132
      $region131: #{_lambda_.1} parent=127 // pred_region
        %p9826 = scmp.lt.s32.totalorder %s37, 1
        %s9827 = scalar_select %p9826, %s37, 1
        %s9828 = smul.addr %s9827, 4
        %s9829 = smul.addr %s9828, 2
        %s9830 = scalar_lea.vmem %s25, %s9829
      $region132: #{_lambda_.1} parent=127 // pred_fallthru
        _
    $region128: #{_lambda_.1} parent=5 // pred_fallthru
      _
  $region6: #{_lambda_.1} parent=0 // loop_footer
    %s35 = sadd.s32 1, %s31
  $region7: #{_lambda_.1} parent=0 // loop_footer_branch
    %30 = sbr.rel target = $region3
  $region8: #{_lambda_.1} parent=0 // loop_exit
    _

</llo_original>
